<compile_context>
chip_gen: v5e
topology: v5e:2x2
jax: 0.10.0
libtpu: 0.0.40
codegen_flags: <defaults>
</compile_context>

<pallas_src>
import math
import functools

import jax
import jax.numpy as jnp
from jax.experimental import pallas as pl
from jax.experimental.pallas import tpu as pltpu


# ----------------------------------------------------------------------------
# Helpers (usable both inside kernels and on plain arrays for the reference).
# ----------------------------------------------------------------------------
def _layernorm(x, w, b, eps=1e-5):
    mu = jnp.mean(x, axis=-1, keepdims=True)
    var = jnp.mean((x - mu) ** 2, axis=-1, keepdims=True)
    return (x - mu) * jax.lax.rsqrt(var + eps) * w + b


def _gelu_exact(x):
    # Exact (erf-based) GELU, matching torch.nn.GELU() default.
    # TODO(synk): switch to tanh-approx GELU (EUP slot) if VALU-bound.
    return 0.5 * x * (1.0 + jax.lax.erf(x * 0.7071067811865476))


@functools.lru_cache(maxsize=None)
def _vmem_cap():
    try:
        return int(pltpu.get_tpu_info().vmem_capacity_bytes)
    except Exception:
        return 64 * 1024 * 1024          # conservative fallback (covers v7x)


@functools.lru_cache(maxsize=None)
def _vmem_limit_bytes():
    # ~100 MiB on 128-MiB parts (v5e/v6e), ~56 MiB on 64-MiB parts (v7x).
    return int(min(100 * 1024 * 1024, (_vmem_cap() * 7) // 8))


def _pick_bb(B, T):
    """Pack batch rows per grid step so M=bb*T fills the MXU without
    overflowing VMEM (smaller target on 64-MiB parts like v7x)."""
    target_rows = 256 if _vmem_cap() <= (64 << 20) else 512
    bb = max(1, min(B, target_rows // max(T, 1)))
    while B % bb:
        bb -= 1
    return bb


def _pick_tv(Vp):
    """LM-head vocab tile: large (lane-dense, few grid steps) but a divisor
    of the (pre-padded) vocab."""
    max_tv = 512 if _vmem_cap() <= (64 << 20) else 1024
    tv = max(128, (min(max_tv, Vp) // 128) * 128)
    while Vp % tv:
        tv -= 128
    return max(tv, 128)


def _full_spec(a, grid_ndim):
    zeros = (0,) * a.ndim
    if grid_ndim == 1:
        return pl.BlockSpec(a.shape, lambda i, _z=zeros: _z)
    return pl.BlockSpec(a.shape, lambda i, j, _z=zeros: _z)


# ----------------------------------------------------------------------------
# Head split / merge:  (Bb*T, H*hd)  <->  (Bb*H, T, hd)
# Primary: one reshape + transpose.  Fallback: lane-slice/concat (always
# lowers; selected automatically once if the transpose path fails to lower).
# ----------------------------------------------------------------------------
def _split_heads_t(t, Bb, T, H, hd):
    t = t.reshape(Bb, T, H, hd)
    return jnp.transpose(t, (0, 2, 1, 3)).reshape(Bb * H, T, hd)


def _merge_heads_t(y, Bb, T, H, hd):
    y = y.reshape(Bb, H, T, hd)
    return jnp.transpose(y, (0, 2, 1, 3)).reshape(Bb * T, H * hd)


def _split_heads_c(t, Bb, T, H, hd):
    t = t.reshape(Bb, T, H * hd)
    return jnp.concatenate(
        [t[:, :, h * hd:(h + 1) * hd] for h in range(H)], axis=0)


def _merge_heads_c(y, Bb, T, H, hd):
    return jnp.concatenate(
        [y[h * Bb:(h + 1) * Bb] for h in range(H)],
        axis=-1).reshape(Bb * T, H * hd)


# ----------------------------------------------------------------------------
# Fused transformer-stack kernel.
# Grid = (B // Bb, L); layer axis innermost ("arbitrary") so the residual
# block stays VMEM-resident across layers and layer l+1 weights prefetch
# (double-buffered BlockSpec DMA) while layer l computes.
# ----------------------------------------------------------------------------
def gpt_blocks_kernel(x_ref,
                      ln1_w_ref, ln1_b_ref, wqkv_ref, bqkv_ref,
                      wproj_ref, bproj_ref,
                      ln2_w_ref, ln2_b_ref, wfc_ref, bfc_ref,
                      wfc2_ref, bfc2_ref,
                      o_ref, res_ref, *, n_head, heads_via_transpose):
    l = pl.program_id(1)

    # First layer of each batch group: pull the embedding block into the
    # VMEM-resident residual scratch (it never round-trips HBM per layer).
    @pl.when(l == 0)
    def _():
        res_ref[...] = x_ref[...].astype(jnp.float32)

    Bb, T, C = res_ref.shape
    H = n_head
    hd = C // H
    M = Bb * T
    scale = 1.0 / math.sqrt(hd)

    x = res_ref[...].reshape(M, C)

    # ---- causal self-attention ----------------------------------------
    xn = _layernorm(x, ln1_w_ref[0], ln1_b_ref[0])
    qkv = jnp.dot(xn.astype(jnp.bfloat16), wqkv_ref[0],
                  preferred_element_type=jnp.float32) + bqkv_ref[0]  # (M,3C)

    # 1/sqrt(hd) folded into q: O(M*C) multiply instead of O(H*Bb*T^2).
    q = (qkv[:, :C] * scale).astype(jnp.bfloat16)
    k = qkv[:, C:2 * C].astype(jnp.bfloat16)
    v = qkv[:, 2 * C:].astype(jnp.bfloat16)

    split = _split_heads_t if heads_via_transpose else _split_heads_c
    merge = _merge_heads_t if heads_via_transpose else _merge_heads_c
    qh = split(q, Bb, T, H, hd)                      # (Bb*H, T, hd)
    kh = split(k, Bb, T, H, hd)
    vh = split(v, Bb, T, H, hd)

    att = jnp.einsum('nqd,nkd->nqk', qh, kh,
                     preferred_element_type=jnp.float32)     # (Bb*H, T, T)
    row = jax.lax.broadcasted_iota(jnp.int32, (T, T), 0)
    col = jax.lax.broadcasted_iota(jnp.int32, (T, T), 1)
    att = jnp.where((col <= row)[None, :, :], att, -1e30)
    att = att - jnp.max(att, axis=-1, keepdims=True)
    p = jnp.exp(att)
    # approx reciprocal (EUP slot): rows sum to ~1, documented tradeoff.
    p = p * pl.reciprocal(jnp.sum(p, axis=-1, keepdims=True), approx=True)
    yh = jnp.einsum('nqk,nkd->nqd', p.astype(jnp.bfloat16), vh,
                    preferred_element_type=jnp.float32)      # (Bb*H, T, hd)

    y = merge(yh, Bb, T, H, hd)                              # (M, C)
    attn = jnp.dot(y.astype(jnp.bfloat16), wproj_ref[0],
                   preferred_element_type=jnp.float32) + bproj_ref[0]
    x = x + attn
    # TODO(synk): for long contexts (T >= ~1k) replace the dense (T, T) score
    # tensor with a KV-tiled online-softmax (flash) loop; the dense score
    # tensor does not fit v7x's 56 MiB scoped VMEM at T~1k, H~12.

    # ---- MLP ------------------------------------------------------------
    xn2 = _layernorm(x, ln2_w_ref[0], ln2_b_ref[0])
    h1 = jnp.dot(xn2.astype(jnp.bfloat16), wfc_ref[0],
                 preferred_element_type=jnp.float32) + bfc_ref[0]
    h1 = _gelu_exact(h1)
    h2 = jnp.dot(h1.astype(jnp.bfloat16), wfc2_ref[0],
                 preferred_element_type=jnp.float32) + bfc2_ref[0]
    x = x + h2

    xb = x.reshape(Bb, T, C)
    res_ref[...] = xb

    @pl.when(l == pl.num_programs(1) - 1)
    def _():
        o_ref[...] = xb.astype(o_ref.dtype)


# ----------------------------------------------------------------------------
# Head kernel: xn = ln_f(x); logits = xn @ Wlm (vocab-tiled);
#              sent = mean_T(xn) @ Wsent + b (first vocab tile only).
# Grid = (B // Bb, Vp // TV); xn cached in VMEM scratch across vocab tiles.
# NOTE: correctness relies on the vocab axis staying innermost/"arbitrary".
# ----------------------------------------------------------------------------
def head_kernel(x_ref, lnf_w_ref, lnf_b_ref, wlm_ref, wsent_ref, bsent_ref,
                logits_ref, sent_ref, xn_ref):
    Bb, T, C = x_ref.shape
    j = pl.program_id(1)

    @pl.when(j == 0)
    def _():
        x = x_ref[...].astype(jnp.float32).reshape(Bb * T, C)
        xn = _layernorm(x, lnf_w_ref[...], lnf_b_ref[...])
        xn_ref[...] = xn.astype(jnp.bfloat16)
        x_avg = jnp.mean(xn.reshape(Bb, T, C), axis=1)       # (Bb, C)
        sent = jnp.dot(x_avg.astype(jnp.bfloat16), wsent_ref[...],
                       preferred_element_type=jnp.float32) + bsent_ref[...]
        sent_ref[...] = sent.astype(sent_ref.dtype)

    tv = logits_ref.shape[-1]
    logits = jnp.dot(xn_ref[...], wlm_ref[...],
                     preferred_element_type=jnp.float32)     # (Bb*T, tv)
    # TODO(synk): emit bf16 logits to halve the (B,T,V) HBM writeback if the
    # downstream loss tolerates it.
    logits_ref[...] = logits.reshape(Bb, T, tv).astype(logits_ref.dtype)


# ----------------------------------------------------------------------------
# Wrappers
# ----------------------------------------------------------------------------
_BLOCK_KEYS = ("ln1_w", "ln1_b", "wqkv", "bqkv", "wproj", "bproj",
               "ln2_w", "ln2_b", "wfc", "bfc", "wfc2", "bfc2")

_HEADS_VIA_TRANSPOSE = None        # probed once; True -> transpose path


def _layer_spec(w):
    # Stacked (L, a, b) weight: one layer per grid step along axis 1.
    return pl.BlockSpec((1,) + w.shape[1:], lambda i, l: (l, 0, 0))


def _blocks_call(x, blk, n_head, bb, heads_via_transpose):
    B, T, C = x.shape
    weights = [blk[k] for k in _BLOCK_KEYS]
    L = blk["wqkv"].shape[0]
    return pl.pallas_call(
        functools.partial(gpt_blocks_kernel, n_head=n_head,
                          heads_via_transpose=heads_via_transpose),
        grid=(B // bb, L),
        in_specs=[pl.BlockSpec((bb, T, C), lambda i, l: (i, 0, 0))]
                 + [_layer_spec(w) for w in weights],
        out_specs=pl.BlockSpec((bb, T, C), lambda i, l: (i, 0, 0)),
        out_shape=jax.ShapeDtypeStruct((B, T, C), jnp.float32),
        scratch_shapes=[pltpu.VMEM((bb, T, C), jnp.float32)],
        compiler_params=pltpu.CompilerParams(
            # NOTE(v7x): with >1 batch group the "parallel" axis duplicates
            # per-layer weight DMA across the two TensorCores; acceptable
            # here since weights are streamed/double-buffered.
            dimension_semantics=("parallel", "arbitrary"),
            vmem_limit_bytes=_vmem_limit_bytes()),
    )(x, *weights)


def run_blocks(x, blk, n_head, bb):
    """Run all transformer layers in one pallas_call.  Prefer the concat-free
    head-transpose kernel; fall back to the lane-slice variant if the current
    Mosaic version rejects the in-kernel 4-D transpose."""
    global _HEADS_VIA_TRANSPOSE
    if _HEADS_VIA_TRANSPOSE is not None:
        return _blocks_call(x, blk, n_head, bb, _HEADS_VIA_TRANSPOSE)
    try:
        out = _blocks_call(x, blk, n_head, bb, True)
        jax.block_until_ready(out)
        _HEADS_VIA_TRANSPOSE = True
        return out
    except Exception:
        _HEADS_VIA_TRANSPOSE = False
        return _blocks_call(x, blk, n_head, bb, False)


def run_head(x, params, bb):
    B, T, C = x.shape
    wlm = params["wlm_t"]                                    # (C, Vp), padded at init
    Vp = wlm.shape[1]
    tv = _pick_tv(Vp)
    logits, sent = pl.pallas_call(
        head_kernel,
        grid=(B // bb, Vp // tv),
        in_specs=[pl.BlockSpec((bb, T, C), lambda i, j: (i, 0, 0)),
                  _full_spec(params["lnf_w"], 2),
                  _full_spec(params["lnf_b"], 2),
                  pl.BlockSpec((C, tv), lambda i, j: (0, j)),
                  _full_spec(params["wsent_t"], 2),
                  _full_spec(params["bsent"], 2)],
        out_specs=[pl.BlockSpec((bb, T, tv), lambda i, j: (i, 0, j)),
                   pl.BlockSpec((bb, 3), lambda i, j: (i, 0))],
        out_shape=(jax.ShapeDtypeStruct((B, T, Vp), jnp.float32),
                   jax.ShapeDtypeStruct((B, 3), jnp.float32)),
        scratch_shapes=[pltpu.VMEM((bb * T, C), jnp.bfloat16)],
        compiler_params=pltpu.CompilerParams(
            dimension_semantics=("parallel", "arbitrary"),
            vmem_limit_bytes=_vmem_limit_bytes()),
    )(x, params["lnf_w"], params["lnf_b"], wlm,
      params["wsent_t"], params["bsent"])
    return logits, sent


def gpt_forward(idx, params, n_head):
    """Full GPT forward: returns (logits, sentiment_logits, loss=None)."""
    B, T = idx.shape
    # Embedding gather + positional add + dropout(identity) in plain JAX.
    tok_emb = jnp.take(params["wte"], idx, axis=0)           # (B, T, C)
    pos_emb = params["wpe"][:T][None, :, :]                  # (1, T, C)
    x = (tok_emb + pos_emb).astype(jnp.float32)
    bb = _pick_bb(B, T)
    x = run_blocks(x, params["blk"], n_head, bb)
    logits, sent_logits = run_head(x, params, bb)
    V = params["vocab_size"]
    if logits.shape[-1] != V:
        # Only reached when the vocab is not already a multiple of 128
        # (padding happens once at init; fast path has no slice).
        logits = logits[..., :V]
    # TODO(synk): cross-entropy losses (targets / sentiment_labels) are not
    # computed for the default forward call; returned loss is None.
    return logits, sent_logits, None


# ----------------------------------------------------------------------------
# Deterministic parameter init (matches GPT._init_weights: N(0, 0.02) for
# Linear/Embedding weights, zero biases, LayerNorm weight=1 bias=0).
# Matmul weights stored bf16, transposed vs. PyTorch (out,in) layout, and
# stacked per-layer into (L, ...) arrays for the fused layer-streaming call.
# The LM-head weight is vocab-padded ONCE here (multiple of 128).
# ----------------------------------------------------------------------------
def init_params(key, *, vocab_size, block_size, n_layer, n_embd):
    C = n_embd
    L = n_layer
    k_wte, k_wpe, k_sent, k_qkv, k_proj, k_fc, k_fc2 = jax.random.split(key, 7)

    def normal(k, shape):
        return 0.02 * jax.random.normal(k, shape, dtype=jnp.float32)

    wte = normal(k_wte, (vocab_size, C))
    Vp = ((vocab_size + 127) // 128) * 128
    wlm = wte.T                                              # tied lm head
    if Vp != vocab_size:
        wlm = jnp.pad(wlm, ((0, 0), (0, Vp - vocab_size)))

    params = {
        "vocab_size": vocab_size,
        "wte": wte,                                          # embedding (f32)
        "wpe": normal(k_wpe, (block_size, C)),
        "lnf_w": jnp.ones((1, C), jnp.float32),
        "lnf_b": jnp.zeros((1, C), jnp.float32),
        "wlm_t": wlm.astype(jnp.bfloat16),                   # (C, Vp)
        "wsent_t": normal(k_sent, (3, C)).T.astype(jnp.bfloat16),
        "bsent": jnp.zeros((1, 3), jnp.float32),
        "blk": {
            "ln1_w": jnp.ones((L, 1, C), jnp.float32),
            "ln1_b": jnp.zeros((L, 1, C), jnp.float32),
            "wqkv": normal(k_qkv, (L, C, 3 * C)).astype(jnp.bfloat16),
            "bqkv": jnp.zeros((L, 1, 3 * C), jnp.float32),
            "wproj": normal(k_proj, (L, C, C)).astype(jnp.bfloat16),
            "bproj": jnp.zeros((L, 1, C), jnp.float32),
            "ln2_w": jnp.ones((L, 1, C), jnp.float32),
            "ln2_b": jnp.zeros((L, 1, C), jnp.float32),
            "wfc": normal(k_fc, (L, C, 4 * C)).astype(jnp.bfloat16),
            "bfc": jnp.zeros((L, 1, 4 * C), jnp.float32),
            "wfc2": normal(k_fc2, (L, 4 * C, C)).astype(jnp.bfloat16),
            "bfc2": jnp.zeros((L, 1, C), jnp.float32),
        },
    }
    return params


# ----------------------------------------------------------------------------
# Pure-JAX reference (same math, f32, upcast weights) for validation.
# ----------------------------------------------------------------------------
def gpt_reference(idx, params, n_head):
    f32 = lambda a: a.astype(jnp.float32)
    B, T = idx.shape
    x = jnp.take(params["wte"], idx, axis=0) + params["wpe"][:T][None]
    C = x.shape[-1]
    hd = C // n_head
    mask = jnp.tril(jnp.ones((T, T), dtype=bool))
    blk = params["blk"]
    for l in range(blk["wqkv"].shape[0]):
        xn = _layernorm(x, blk["ln1_w"][l], blk["ln1_b"][l])
        qkv = xn @ f32(blk["wqkv"][l]) + blk["bqkv"][l]
        q, k, v = jnp.split(qkv, 3, axis=-1)
        q = q.reshape(B, T, n_head, hd).transpose(0, 2, 1, 3)
        k = k.reshape(B, T, n_head, hd).transpose(0, 2, 1, 3)
        v = v.reshape(B, T, n_head, hd).transpose(0, 2, 1, 3)
        att = (q @ jnp.swapaxes(k, -1, -2)) / math.sqrt(hd)
        att = jnp.where(mask, att, -jnp.inf)
        att = jax.nn.softmax(att, axis=-1)
        y = (att @ v).transpose(0, 2, 1, 3).reshape(B, T, C)
        x = x + (y @ f32(blk["wproj"][l]) + blk["bproj"][l])
        xn2 = _layernorm(x, blk["ln2_w"][l], blk["ln2_b"][l])
        h = _gelu_exact(xn2 @ f32(blk["wfc"][l]) + blk["bfc"][l])
        x = x + (h @ f32(blk["wfc2"][l]) + blk["bfc2"][l])
    xn = _layernorm(x, params["lnf_w"], params["lnf_b"])
    logits = xn @ f32(params["wte"]).T
    sent = xn.mean(axis=1) @ f32(params["wsent_t"]) + params["bsent"]
    return logits, sent


# ----------------------------------------------------------------------------
if __name__ == "__main__":
    # Small config consistent with GPTConfig (n_embd % n_head == 0);
    # lane-friendly C and vocab (multiple of 128 -> no logits slice).
    VOCAB, BLOCK_SIZE, N_LAYER, N_HEAD, N_EMBD = 512, 16, 2, 4, 128
    B, T = 2, 16

    key = jax.random.PRNGKey(0)
    k_params, k_idx = jax.random.split(key)
    params = init_params(k_params, vocab_size=VOCAB, block_size=BLOCK_SIZE,
                         n_layer=N_LAYER, n_embd=N_EMBD)
    idx = jax.random.randint(k_idx, (B, T), 0, VOCAB, dtype=jnp.int32)

    logits, sent_logits, loss = gpt_forward(idx, params, N_HEAD)
    jax.block_until_ready((logits, sent_logits))

    assert logits.shape == (B, T, VOCAB)
    assert sent_logits.shape == (B, 3)
    assert loss is None

    ref_logits, ref_sent = gpt_reference(idx, params, N_HEAD)
    assert jnp.allclose(logits, ref_logits, atol=5e-2, rtol=5e-2), \
        float(jnp.max(jnp.abs(logits - ref_logits)))
    assert jnp.allclose(sent_logits, ref_sent, atol=5e-2, rtol=5e-2), \
        float(jnp.max(jnp.abs(sent_logits - ref_sent)))

    print("KERNEL_OK")
</pallas_src>

<mosaic_0001>
module attributes {stable_mosaic.version = 11 : i64} {
  func.func @gpt_blocks_kernel(%arg0: i32, %arg1: i32, %arg2: memref<2x16x128xf32, #tpu.memory_space<vmem>>, %arg3: memref<1x1x128xf32, #tpu.memory_space<vmem>>, %arg4: memref<1x1x128xf32, #tpu.memory_space<vmem>>, %arg5: memref<1x128x384xbf16, #tpu.memory_space<vmem>>, %arg6: memref<1x1x384xf32, #tpu.memory_space<vmem>>, %arg7: memref<1x128x128xbf16, #tpu.memory_space<vmem>>, %arg8: memref<1x1x128xf32, #tpu.memory_space<vmem>>, %arg9: memref<1x1x128xf32, #tpu.memory_space<vmem>>, %arg10: memref<1x1x128xf32, #tpu.memory_space<vmem>>, %arg11: memref<1x128x512xbf16, #tpu.memory_space<vmem>>, %arg12: memref<1x1x512xf32, #tpu.memory_space<vmem>>, %arg13: memref<1x512x128xbf16, #tpu.memory_space<vmem>>, %arg14: memref<1x1x128xf32, #tpu.memory_space<vmem>>, %arg15: memref<2x16x128xf32, #tpu.memory_space<vmem>>, %arg16: memref<2x16x128xf32, #tpu.memory_space<vmem>>) attributes {dimension_semantics = [#tpu.dimension_semantics<parallel>, #tpu.dimension_semantics<arbitrary>], iteration_bounds = array<i64: 1, 2>, scalar_prefetch = 0 : i64, scratch_operands = 1 : i64, tpu.core_type = #tpu.core_type<tc>, window_params = [{transform_indices = @transform_0, window_bounds = array<i64: 2, 16, 128>}, {transform_indices = @transform_1, window_bounds = array<i64: 1, 1, 128>}, {transform_indices = @transform_2, window_bounds = array<i64: 1, 1, 128>}, {transform_indices = @transform_3, window_bounds = array<i64: 1, 128, 384>}, {transform_indices = @transform_4, window_bounds = array<i64: 1, 1, 384>}, {transform_indices = @transform_5, window_bounds = array<i64: 1, 128, 128>}, {transform_indices = @transform_6, window_bounds = array<i64: 1, 1, 128>}, {transform_indices = @transform_7, window_bounds = array<i64: 1, 1, 128>}, {transform_indices = @transform_8, window_bounds = array<i64: 1, 1, 128>}, {transform_indices = @transform_9, window_bounds = array<i64: 1, 128, 512>}, {transform_indices = @transform_10, window_bounds = array<i64: 1, 1, 512>}, {transform_indices = @transform_11, window_bounds = array<i64: 1, 512, 128>}, {transform_indices = @transform_12, window_bounds = array<i64: 1, 1, 128>}, {transform_indices = @transform_13, window_bounds = array<i64: 2, 16, 128>}]} {
    %c0_i32 = arith.constant 0 : i32
    %0 = arith.cmpi eq, %arg1, %c0_i32 : i32
    %1 = arith.extui %0 : i1 to i32
    %c0_i32_0 = arith.constant 0 : i32
    %2 = arith.cmpi ne, %1, %c0_i32_0 : i32
    scf.if %2 {
      %c0_65 = arith.constant 0 : index
      %c0_66 = arith.constant 0 : index
      %c0_67 = arith.constant 0 : index
      %145 = vector.load %arg2[%c0_65, %c0_66, %c0_67] : memref<2x16x128xf32, #tpu.memory_space<vmem>>, vector<2x16x128xf32>
      %c0_68 = arith.constant 0 : index
      %c0_69 = arith.constant 0 : index
      %c0_70 = arith.constant 0 : index
      %146 = vector.load %arg16[%c0_68, %c0_69, %c0_70] : memref<2x16x128xf32, #tpu.memory_space<vmem>>, vector<2x16x128xf32>
      tpu.vector_store %arg16[%c0_68, %c0_69, %c0_70], %145 {strides = array<i32>} : memref<2x16x128xf32, #tpu.memory_space<vmem>>, vector<2x16x128xf32>,
    } else {
    }
    %c0 = arith.constant 0 : index
    %c0_1 = arith.constant 0 : index
    %c0_2 = arith.constant 0 : index
    %3 = vector.load %arg16[%c0, %c0_1, %c0_2] : memref<2x16x128xf32, #tpu.memory_space<vmem>>, vector<2x16x128xf32>
    %4 = vector.shape_cast %3 : vector<2x16x128xf32> to vector<32x128xf32>
    %c0_3 = arith.constant 0 : index
    %c0_4 = arith.constant 0 : index
    %c0_5 = arith.constant 0 : index
    %5 = vector.load %arg3[%c0_3, %c0_4, %c0_5] : memref<1x1x128xf32, #tpu.memory_space<vmem>>, vector<1x1x128xf32>
    %6 = vector.shape_cast %5 : vector<1x1x128xf32> to vector<1x128xf32>
    %c0_6 = arith.constant 0 : index
    %c0_7 = arith.constant 0 : index
    %c0_8 = arith.constant 0 : index
    %7 = vector.load %arg4[%c0_6, %c0_7, %c0_8] : memref<1x1x128xf32, #tpu.memory_space<vmem>>, vector<1x1x128xf32>
    %8 = vector.shape_cast %7 : vector<1x1x128xf32> to vector<1x128xf32>
    %cst = arith.constant dense<0.000000e+00> : vector<32xf32>
    %9 = vector.multi_reduction <add>, %4, %cst [1] : vector<32x128xf32> to vector<32xf32>
    %10 = vector.shape_cast %9 : vector<32xf32> to vector<32x1xf32>
    %cst_9 = arith.constant 1.280000e+02 : f32
    %11 = vector.broadcast %cst_9 : f32 to vector<32x1xf32>
    %12 = arith.divf %10, %11 : vector<32x1xf32>
    %13 = vector.broadcast %12 : vector<32x1xf32> to vector<32x128xf32>
    %14 = arith.subf %4, %13 : vector<32x128xf32>
    %15 = arith.mulf %14, %14 : vector<32x128xf32>
    %cst_10 = arith.constant dense<0.000000e+00> : vector<32xf32>
    %16 = vector.multi_reduction <add>, %15, %cst_10 [1] : vector<32x128xf32> to vector<32xf32>
    %17 = vector.shape_cast %16 : vector<32xf32> to vector<32x1xf32>
    %cst_11 = arith.constant 1.280000e+02 : f32
    %18 = vector.broadcast %cst_11 : f32 to vector<32x1xf32>
    %19 = arith.divf %17, %18 : vector<32x1xf32>
    %20 = vector.broadcast %12 : vector<32x1xf32> to vector<32x128xf32>
    %21 = arith.subf %4, %20 : vector<32x128xf32>
    %cst_12 = arith.constant 9.99999974E-6 : f32
    %22 = vector.broadcast %cst_12 : f32 to vector<32x1xf32>
    %23 = arith.addf %19, %22 : vector<32x1xf32>
    %24 = math.rsqrt %23 : vector<32x1xf32>
    %25 = vector.broadcast %24 : vector<32x1xf32> to vector<32x128xf32>
    %26 = arith.mulf %21, %25 : vector<32x128xf32>
    %27 = vector.broadcast %6 : vector<1x128xf32> to vector<32x128xf32>
    %28 = arith.mulf %26, %27 : vector<32x128xf32>
    %29 = vector.broadcast %8 : vector<1x128xf32> to vector<32x128xf32>
    %30 = arith.addf %28, %29 : vector<32x128xf32>
    %31 = arith.truncf %30 : vector<32x128xf32> to vector<32x128xbf16>
    %c0_13 = arith.constant 0 : index
    %c0_14 = arith.constant 0 : index
    %c0_15 = arith.constant 0 : index
    %32 = vector.load %arg5[%c0_13, %c0_14, %c0_15] : memref<1x128x384xbf16, #tpu.memory_space<vmem>>, vector<1x128x384xbf16>
    %33 = vector.shape_cast %32 : vector<1x128x384xbf16> to vector<128x384xbf16>
    %cst_16 = arith.constant dense<0.000000e+00> : vector<32x384xf32>
    %34 = tpu.matmul %31, %33, %cst_16 {dimension_numbers = #tpu.dot_dimension_numbers<[1], [0], [0], [1], [0, 0, 1, 1], [], []>} : vector<32x128xbf16>, vector<128x384xbf16>, vector<32x384xf32> -> vector<32x384xf32>
    %c0_17 = arith.constant 0 : index
    %c0_18 = arith.constant 0 : index
    %c0_19 = arith.constant 0 : index
    %35 = vector.load %arg6[%c0_17, %c0_18, %c0_19] : memref<1x1x384xf32, #tpu.memory_space<vmem>>, vector<1x1x384xf32>
    %36 = vector.shape_cast %35 : vector<1x1x384xf32> to vector<1x384xf32>
    %37 = vector.broadcast %36 : vector<1x384xf32> to vector<32x384xf32>
    %38 = arith.addf %34, %37 : vector<32x384xf32>
    %39 = vector.extract_strided_slice %38 {offsets = [0, 0], sizes = [32, 128], strides = [1, 1]} : vector<32x384xf32> to vector<32x128xf32>
    %cst_20 = arith.constant 0.176776692 : f32
    %40 = vector.broadcast %cst_20 : f32 to vector<32x128xf32>
    %41 = arith.mulf %39, %40 : vector<32x128xf32>
    %42 = arith.truncf %41 : vector<32x128xf32> to vector<32x128xbf16>
    %43 = vector.extract_strided_slice %38 {offsets = [0, 128], sizes = [32, 128], strides = [1, 1]} : vector<32x384xf32> to vector<32x128xf32>
    %44 = arith.truncf %43 : vector<32x128xf32> to vector<32x128xbf16>
    %45 = vector.extract_strided_slice %38 {offsets = [0, 256], sizes = [32, 128], strides = [1, 1]} : vector<32x384xf32> to vector<32x128xf32>
    %46 = arith.truncf %45 : vector<32x128xf32> to vector<32x128xbf16>
    %47 = vector.shape_cast %42 : vector<32x128xbf16> to vector<2x16x4x32xbf16>
    %48 = tpu.transpose %47, [0, 2, 1, 3] : vector<2x16x4x32xbf16> -> vector<2x4x16x32xbf16>
    %49 = vector.shape_cast %48 : vector<2x4x16x32xbf16> to vector<8x16x32xbf16>
    %50 = vector.shape_cast %44 : vector<32x128xbf16> to vector<2x16x4x32xbf16>
    %51 = tpu.transpose %50, [0, 2, 1, 3] : vector<2x16x4x32xbf16> -> vector<2x4x16x32xbf16>
    %52 = vector.shape_cast %51 : vector<2x4x16x32xbf16> to vector<8x16x32xbf16>
    %53 = vector.shape_cast %46 : vector<32x128xbf16> to vector<2x16x4x32xbf16>
    %54 = tpu.transpose %53, [0, 2, 1, 3] : vector<2x16x4x32xbf16> -> vector<2x4x16x32xbf16>
    %55 = vector.shape_cast %54 : vector<2x4x16x32xbf16> to vector<8x16x32xbf16>
    "tpu.trace_start"() <{level = 10 : i32, message = "nqd,nkd->nqk"}> : () -> ()
    %cst_21 = arith.constant dense<0.000000e+00> : vector<8x16x16xf32>
    %56 = tpu.matmul %49, %52, %cst_21 {dimension_numbers = #tpu.dot_dimension_numbers<[2], [2], [1], [1], [0, 0, 0, 1, 1, 1], [0], [0]>} : vector<8x16x32xbf16>, vector<8x16x32xbf16>, vector<8x16x16xf32> -> vector<8x16x16xf32>
    "tpu.trace_stop"() : () -> ()
    %57 = tpu.iota {dimensions = array<i32: 0>} : vector<16x16xi32>
    %58 = tpu.iota {dimensions = array<i32: 1>} : vector<16x16xi32>
    %59 = arith.cmpi sle, %58, %57 : vector<16x16xi32>
    %60 = vector.shape_cast %59 : vector<16x16xi1> to vector<1x16x16xi1>
    %cst_22 = arith.constant -1.000000e+30 : f32
    %61 = vector.shape_cast %60 : vector<1x16x16xi1> to vector<1x16x16xi1>
    %62 = vector.broadcast %61 : vector<1x16x16xi1> to vector<8x16x16xi1>
    %63 = vector.broadcast %cst_22 : f32 to vector<8x16x16xf32>
    %64 = arith.select %62, %56, %63 : vector<8x16x16xi1>, vector<8x16x16xf32>
    %cst_23 = arith.constant dense<0xFF800000> : vector<8x16xf32>
    %65 = vector.multi_reduction <maximumf>, %64, %cst_23 [2] : vector<8x16x16xf32> to vector<8x16xf32>
    %66 = vector.shape_cast %65 : vector<8x16xf32> to vector<8x16x1xf32>
    %67 = vector.broadcast %66 : vector<8x16x1xf32> to vector<8x16x16xf32>
    %68 = arith.subf %64, %67 : vector<8x16x16xf32>
    %69 = math.exp %68 : vector<8x16x16xf32>
    %cst_24 = arith.constant dense<0.000000e+00> : vector<8x16xf32>
    %70 = vector.multi_reduction <add>, %69, %cst_24 [2] : vector<8x16x16xf32> to vector<8x16xf32>
    %71 = vector.shape_cast %70 : vector<8x16xf32> to vector<8x16x1xf32>
    %72 = tpu.reciprocal %71 {approx = true} : vector<8x16x1xf32> -> vector<8x16x1xf32>
    %73 = vector.broadcast %72 : vector<8x16x1xf32> to vector<8x16x16xf32>
    %74 = arith.mulf %69, %73 : vector<8x16x16xf32>
    %75 = arith.truncf %74 : vector<8x16x16xf32> to vector<8x16x16xbf16>
    "tpu.trace_start"() <{level = 10 : i32, message = "nqk,nkd->nqd"}> : () -> ()
    %cst_25 = arith.constant dense<0.000000e+00> : vector<8x16x32xf32>
    %76 = tpu.matmul %75, %55, %cst_25 {dimension_numbers = #tpu.dot_dimension_numbers<[2], [1], [1], [2], [0, 0, 0, 1, 1, 2], [0], [0]>} : vector<8x16x16xbf16>, vector<8x16x32xbf16>, vector<8x16x32xf32> -> vector<8x16x32xf32>
    "tpu.trace_stop"() : () -> ()
    %77 = vector.shape_cast %76 : vector<8x16x32xf32> to vector<2x4x16x32xf32>
    %78 = tpu.transpose %77, [0, 2, 1, 3] : vector<2x4x16x32xf32> -> vector<2x16x4x32xf32>
    %79 = vector.shape_cast %78 : vector<2x16x4x32xf32> to vector<32x128xf32>
    %80 = arith.truncf %79 : vector<32x128xf32> to vector<32x128xbf16>
    %c0_26 = arith.constant 0 : index
    %c0_27 = arith.constant 0 : index
    %c0_28 = arith.constant 0 : index
    %81 = vector.load %arg7[%c0_26, %c0_27, %c0_28] : memref<1x128x128xbf16, #tpu.memory_space<vmem>>, vector<1x128x128xbf16>
    %82 = vector.shape_cast %81 : vector<1x128x128xbf16> to vector<128x128xbf16>
    %cst_29 = arith.constant dense<0.000000e+00> : vector<32x128xf32>
    %83 = tpu.matmul %80, %82, %cst_29 {dimension_numbers = #tpu.dot_dimension_numbers<[1], [0], [0], [1], [0, 0, 1, 1], [], []>} : vector<32x128xbf16>, vector<128x128xbf16>, vector<32x128xf32> -> vector<32x128xf32>
    %c0_30 = arith.constant 0 : index
    %c0_31 = arith.constant 0 : index
    %c0_32 = arith.constant 0 : index
    %84 = vector.load %arg8[%c0_30, %c0_31, %c0_32] : memref<1x1x128xf32, #tpu.memory_space<vmem>>, vector<1x1x128xf32>
    %85 = vector.shape_cast %84 : vector<1x1x128xf32> to vector<1x128xf32>
    %86 = vector.broadcast %85 : vector<1x128xf32> to vector<32x128xf32>
    %87 = arith.addf %83, %86 : vector<32x128xf32>
    %88 = arith.addf %4, %87 : vector<32x128xf32>
    %c0_33 = arith.constant 0 : index
    %c0_34 = arith.constant 0 : index
    %c0_35 = arith.constant 0 : index
    %89 = vector.load %arg9[%c0_33, %c0_34, %c0_35] : memref<1x1x128xf32, #tpu.memory_space<vmem>>, vector<1x1x128xf32>
    %90 = vector.shape_cast %89 : vector<1x1x128xf32> to vector<1x128xf32>
    %c0_36 = arith.constant 0 : index
    %c0_37 = arith.constant 0 : index
    %c0_38 = arith.constant 0 : index
    %91 = vector.load %arg10[%c0_36, %c0_37, %c0_38] : memref<1x1x128xf32, #tpu.memory_space<vmem>>, vector<1x1x128xf32>
    %92 = vector.shape_cast %91 : vector<1x1x128xf32> to vector<1x128xf32>
    %cst_39 = arith.constant dense<0.000000e+00> : vector<32xf32>
    %93 = vector.multi_reduction <add>, %88, %cst_39 [1] : vector<32x128xf32> to vector<32xf32>
    %94 = vector.shape_cast %93 : vector<32xf32> to vector<32x1xf32>
    %cst_40 = arith.constant 1.280000e+02 : f32
    %95 = vector.broadcast %cst_40 : f32 to vector<32x1xf32>
    %96 = arith.divf %94, %95 : vector<32x1xf32>
    %97 = vector.broadcast %96 : vector<32x1xf32> to vector<32x128xf32>
    %98 = arith.subf %88, %97 : vector<32x128xf32>
    %99 = arith.mulf %98, %98 : vector<32x128xf32>
    %cst_41 = arith.constant dense<0.000000e+00> : vector<32xf32>
    %100 = vector.multi_reduction <add>, %99, %cst_41 [1] : vector<32x128xf32> to vector<32xf32>
    %101 = vector.shape_cast %100 : vector<32xf32> to vector<32x1xf32>
    %cst_42 = arith.constant 1.280000e+02 : f32
    %102 = vector.broadcast %cst_42 : f32 to vector<32x1xf32>
    %103 = arith.divf %101, %102 : vector<32x1xf32>
    %104 = vector.broadcast %96 : vector<32x1xf32> to vector<32x128xf32>
    %105 = arith.subf %88, %104 : vector<32x128xf32>
    %cst_43 = arith.constant 9.99999974E-6 : f32
    %106 = vector.broadcast %cst_43 : f32 to vector<32x1xf32>
    %107 = arith.addf %103, %106 : vector<32x1xf32>
    %108 = math.rsqrt %107 : vector<32x1xf32>
    %109 = vector.broadcast %108 : vector<32x1xf32> to vector<32x128xf32>
    %110 = arith.mulf %105, %109 : vector<32x128xf32>
    %111 = vector.broadcast %90 : vector<1x128xf32> to vector<32x128xf32>
    %112 = arith.mulf %110, %111 : vector<32x128xf32>
    %113 = vector.broadcast %92 : vector<1x128xf32> to vector<32x128xf32>
    %114 = arith.addf %112, %113 : vector<32x128xf32>
    %115 = arith.truncf %114 : vector<32x128xf32> to vector<32x128xbf16>
    %c0_44 = arith.constant 0 : index
    %c0_45 = arith.constant 0 : index
    %c0_46 = arith.constant 0 : index
    %116 = vector.load %arg11[%c0_44, %c0_45, %c0_46] : memref<1x128x512xbf16, #tpu.memory_space<vmem>>, vector<1x128x512xbf16>
    %117 = vector.shape_cast %116 : vector<1x128x512xbf16> to vector<128x512xbf16>
    %cst_47 = arith.constant dense<0.000000e+00> : vector<32x512xf32>
    %118 = tpu.matmul %115, %117, %cst_47 {dimension_numbers = #tpu.dot_dimension_numbers<[1], [0], [0], [1], [0, 0, 1, 1], [], []>} : vector<32x128xbf16>, vector<128x512xbf16>, vector<32x512xf32> -> vector<32x512xf32>
    %c0_48 = arith.constant 0 : index
    %c0_49 = arith.constant 0 : index
    %c0_50 = arith.constant 0 : index
    %119 = vector.load %arg12[%c0_48, %c0_49, %c0_50] : memref<1x1x512xf32, #tpu.memory_space<vmem>>, vector<1x1x512xf32>
    %120 = vector.shape_cast %119 : vector<1x1x512xf32> to vector<1x512xf32>
    %121 = vector.broadcast %120 : vector<1x512xf32> to vector<32x512xf32>
    %122 = arith.addf %118, %121 : vector<32x512xf32>
    %cst_51 = arith.constant 5.000000e-01 : f32
    %123 = vector.broadcast %cst_51 : f32 to vector<32x512xf32>
    %124 = arith.mulf %123, %122 : vector<32x512xf32>
    %cst_52 = arith.constant 0.707106769 : f32
    %125 = vector.broadcast %cst_52 : f32 to vector<32x512xf32>
    %126 = arith.mulf %122, %125 : vector<32x512xf32>
    %127 = math.erf %126 : vector<32x512xf32>
    %cst_53 = arith.constant 1.000000e+00 : f32
    %128 = vector.broadcast %cst_53 : f32 to vector<32x512xf32>
    %129 = arith.addf %128, %127 : vector<32x512xf32>
    %130 = arith.mulf %124, %129 : vector<32x512xf32>
    %131 = arith.truncf %130 : vector<32x512xf32> to vector<32x512xbf16>
    %c0_54 = arith.constant 0 : index
    %c0_55 = arith.constant 0 : index
    %c0_56 = arith.constant 0 : index
    %132 = vector.load %arg13[%c0_54, %c0_55, %c0_56] : memref<1x512x128xbf16, #tpu.memory_space<vmem>>, vector<1x512x128xbf16>
    %133 = vector.shape_cast %132 : vector<1x512x128xbf16> to vector<512x128xbf16>
    %cst_57 = arith.constant dense<0.000000e+00> : vector<32x128xf32>
    %134 = tpu.matmul %131, %133, %cst_57 {dimension_numbers = #tpu.dot_dimension_numbers<[1], [0], [0], [1], [0, 0, 1, 1], [], []>} : vector<32x512xbf16>, vector<512x128xbf16>, vector<32x128xf32> -> vector<32x128xf32>
    %c0_58 = arith.constant 0 : index
    %c0_59 = arith.constant 0 : index
    %c0_60 = arith.constant 0 : index
    %135 = vector.load %arg14[%c0_58, %c0_59, %c0_60] : memref<1x1x128xf32, #tpu.memory_space<vmem>>, vector<1x1x128xf32>
    %136 = vector.shape_cast %135 : vector<1x1x128xf32> to vector<1x128xf32>
    %137 = vector.broadcast %136 : vector<1x128xf32> to vector<32x128xf32>
    %138 = arith.addf %134, %137 : vector<32x128xf32>
    %139 = arith.addf %88, %138 : vector<32x128xf32>
    %140 = vector.shape_cast %139 : vector<32x128xf32> to vector<2x16x128xf32>
    %c0_61 = arith.constant 0 : index
    %c0_62 = arith.constant 0 : index
    %c0_63 = arith.constant 0 : index
    %141 = vector.load %arg16[%c0_61, %c0_62, %c0_63] : memref<2x16x128xf32, #tpu.memory_space<vmem>>, vector<2x16x128xf32>
    tpu.vector_store %arg16[%c0_61, %c0_62, %c0_63], %140 {strides = array<i32>} : memref<2x16x128xf32, #tpu.memory_space<vmem>>, vector<2x16x128xf32>,
    %c1_i32 = arith.constant 1 : i32
    %142 = arith.cmpi eq, %arg1, %c1_i32 : i32
    %143 = arith.extui %142 : i1 to i32
    %c0_i32_64 = arith.constant 0 : i32
    %144 = arith.cmpi ne, %143, %c0_i32_64 : i32
    scf.if %144 {
      %c0_65 = arith.constant 0 : index
      %c0_66 = arith.constant 0 : index
      %c0_67 = arith.constant 0 : index
      %145 = vector.load %arg15[%c0_65, %c0_66, %c0_67] : memref<2x16x128xf32, #tpu.memory_space<vmem>>, vector<2x16x128xf32>
      tpu.vector_store %arg15[%c0_65, %c0_66, %c0_67], %140 {strides = array<i32>} : memref<2x16x128xf32, #tpu.memory_space<vmem>>, vector<2x16x128xf32>,
    } else {
    }
    return
  }
  func.func @transform_0(%arg0: i32, %arg1: i32) -> (i32, i32, i32) {
    %c0_i32 = arith.constant 0 : i32
    %c0_i32_0 = arith.constant 0 : i32
    %c0_i32_1 = arith.constant 0 : i32
    return %arg0, %c0_i32, %c0_i32_0 : i32, i32, i32
  }
  func.func @transform_1(%arg0: i32, %arg1: i32) -> (i32, i32, i32) {
    %c0_i32 = arith.constant 0 : i32
    %c0_i32_0 = arith.constant 0 : i32
    %c0_i32_1 = arith.constant 0 : i32
    return %arg1, %c0_i32, %c0_i32_0 : i32, i32, i32
  }
  func.func @transform_2(%arg0: i32, %arg1: i32) -> (i32, i32, i32) {
    %c0_i32 = arith.constant 0 : i32
    %c0_i32_0 = arith.constant 0 : i32
    %c0_i32_1 = arith.constant 0 : i32
    return %arg1, %c0_i32, %c0_i32_0 : i32, i32, i32
  }
  func.func @transform_3(%arg0: i32, %arg1: i32) -> (i32, i32, i32) {
    %c0_i32 = arith.constant 0 : i32
    %c0_i32_0 = arith.constant 0 : i32
    %c0_i32_1 = arith.constant 0 : i32
    return %arg1, %c0_i32, %c0_i32_0 : i32, i32, i32
  }
  func.func @transform_4(%arg0: i32, %arg1: i32) -> (i32, i32, i32) {
    %c0_i32 = arith.constant 0 : i32
    %c0_i32_0 = arith.constant 0 : i32
    %c0_i32_1 = arith.constant 0 : i32
    return %arg1, %c0_i32, %c0_i32_0 : i32, i32, i32
  }
  func.func @transform_5(%arg0: i32, %arg1: i32) -> (i32, i32, i32) {
    %c0_i32 = arith.constant 0 : i32
    %c0_i32_0 = arith.constant 0 : i32
    %c0_i32_1 = arith.constant 0 : i32
    return %arg1, %c0_i32, %c0_i32_0 : i32, i32, i32
  }
  func.func @transform_6(%arg0: i32, %arg1: i32) -> (i32, i32, i32) {
    %c0_i32 = arith.constant 0 : i32
    %c0_i32_0 = arith.constant 0 : i32
    %c0_i32_1 = arith.constant 0 : i32
    return %arg1, %c0_i32, %c0_i32_0 : i32, i32, i32
  }
  func.func @transform_7(%arg0: i32, %arg1: i32) -> (i32, i32, i32) {
    %c0_i32 = arith.constant 0 : i32
    %c0_i32_0 = arith.constant 0 : i32
    %c0_i32_1 = arith.constant 0 : i32
    return %arg1, %c0_i32, %c0_i32_0 : i32, i32, i32
  }
  func.func @transform_8(%arg0: i32, %arg1: i32) -> (i32, i32, i32) {
    %c0_i32 = arith.constant 0 : i32
    %c0_i32_0 = arith.constant 0 : i32
    %c0_i32_1 = arith.constant 0 : i32
    return %arg1, %c0_i32, %c0_i32_0 : i32, i32, i32
  }
  func.func @transform_9(%arg0: i32, %arg1: i32) -> (i32, i32, i32) {
    %c0_i32 = arith.constant 0 : i32
    %c0_i32_0 = arith.constant 0 : i32
    %c0_i32_1 = arith.constant 0 : i32
    return %arg1, %c0_i32, %c0_i32_0 : i32, i32, i32
  }
  func.func @transform_10(%arg0: i32, %arg1: i32) -> (i32, i32, i32) {
    %c0_i32 = arith.constant 0 : i32
    %c0_i32_0 = arith.constant 0 : i32
    %c0_i32_1 = arith.constant 0 : i32
    return %arg1, %c0_i32, %c0_i32_0 : i32, i32, i32
  }
  func.func @transform_11(%arg0: i32, %arg1: i32) -> (i32, i32, i32) {
    %c0_i32 = arith.constant 0 : i32
    %c0_i32_0 = arith.constant 0 : i32
    %c0_i32_1 = arith.constant 0 : i32
    return %arg1, %c0_i32, %c0_i32_0 : i32, i32, i32
  }
  func.func @transform_12(%arg0: i32, %arg1: i32) -> (i32, i32, i32) {
    %c0_i32 = arith.constant 0 : i32
    %c0_i32_0 = arith.constant 0 : i32
    %c0_i32_1 = arith.constant 0 : i32
    return %arg1, %c0_i32, %c0_i32_0 : i32, i32, i32
  }
  func.func @transform_13(%arg0: i32, %arg1: i32) -> (i32, i32, i32) {
    %c0_i32 = arith.constant 0 : i32
    %c0_i32_0 = arith.constant 0 : i32
    %c0_i32_1 = arith.constant 0 : i32
    return %arg0, %c0_i32, %c0_i32_0 : i32, i32, i32
  }
}

module attributes {stable_mosaic.version = 11 : i64} {
  func.func @gpt_blocks_kernel(%arg0: i32, %arg1: i32, %arg2: memref<2x16x128xf32, #tpu.memory_space<vmem>>, %arg3: memref<1x1x128xf32, #tpu.memory_space<vmem>>, %arg4: memref<1x1x128xf32, #tpu.memory_space<vmem>>, %arg5: memref<1x128x384xbf16, #tpu.memory_space<vmem>>, %arg6: memref<1x1x384xf32, #tpu.memory_space<vmem>>, %arg7: memref<1x128x128xbf16, #tpu.memory_space<vmem>>, %arg8: memref<1x1x128xf32, #tpu.memory_space<vmem>>, %arg9: memref<1x1x128xf32, #tpu.memory_space<vmem>>, %arg10: memref<1x1x128xf32, #tpu.memory_space<vmem>>, %arg11: memref<1x128x512xbf16, #tpu.memory_space<vmem>>, %arg12: memref<1x1x512xf32, #tpu.memory_space<vmem>>, %arg13: memref<1x512x128xbf16, #tpu.memory_space<vmem>>, %arg14: memref<1x1x128xf32, #tpu.memory_space<vmem>>, %arg15: memref<2x16x128xf32, #tpu.memory_space<vmem>>, %arg16: memref<2x16x128xf32, #tpu.memory_space<vmem>>) attributes {dimension_semantics = [#tpu.dimension_semantics<parallel>, #tpu.dimension_semantics<arbitrary>], iteration_bounds = array<i64: 1, 2>, scalar_prefetch = 0 : i64, scratch_operands = 1 : i64, tpu.core_type = #tpu.core_type<tc>, window_params = [{transform_indices = @transform_0, window_bounds = array<i64: 2, 16, 128>}, {transform_indices = @transform_1, window_bounds = array<i64: 1, 1, 128>}, {transform_indices = @transform_2, window_bounds = array<i64: 1, 1, 128>}, {transform_indices = @transform_3, window_bounds = array<i64: 1, 128, 384>}, {transform_indices = @transform_4, window_bounds = array<i64: 1, 1, 384>}, {transform_indices = @transform_5, window_bounds = array<i64: 1, 128, 128>}, {transform_indices = @transform_6, window_bounds = array<i64: 1, 1, 128>}, {transform_indices = @transform_7, window_bounds = array<i64: 1, 1, 128>}, {transform_indices = @transform_8, window_bounds = array<i64: 1, 1, 128>}, {transform_indices = @transform_9, window_bounds = array<i64: 1, 128, 512>}, {transform_indices = @transform_10, window_bounds = array<i64: 1, 1, 512>}, {transform_indices = @transform_11, window_bounds = array<i64: 1, 512, 128>}, {transform_indices = @transform_12, window_bounds = array<i64: 1, 1, 128>}, {transform_indices = @transform_13, window_bounds = array<i64: 2, 16, 128>}]} {
    %c0_i32 = arith.constant 0 : i32
    %0 = arith.cmpi eq, %arg1, %c0_i32 : i32
    %1 = arith.extui %0 : i1 to i32
    %c0_i32_0 = arith.constant 0 : i32
    %2 = arith.cmpi ne, %1, %c0_i32_0 : i32
    scf.if %2 {
      %c0_65 = arith.constant 0 : index
      %c0_66 = arith.constant 0 : index
      %c0_67 = arith.constant 0 : index
      %157 = vector.load %arg2[%c0_65, %c0_66, %c0_67] : memref<2x16x128xf32, #tpu.memory_space<vmem>>, vector<2x16x128xf32>
      %c0_68 = arith.constant 0 : index
      %c0_69 = arith.constant 0 : index
      %c0_70 = arith.constant 0 : index
      %158 = vector.load %arg16[%c0_68, %c0_69, %c0_70] : memref<2x16x128xf32, #tpu.memory_space<vmem>>, vector<2x16x128xf32>
      tpu.vector_store %arg16[%c0_68, %c0_69, %c0_70], %157 {strides = array<i32>} : memref<2x16x128xf32, #tpu.memory_space<vmem>>, vector<2x16x128xf32>,
    } else {
    }
    %c0 = arith.constant 0 : index
    %c0_1 = arith.constant 0 : index
    %c0_2 = arith.constant 0 : index
    %3 = vector.load %arg16[%c0, %c0_1, %c0_2] : memref<2x16x128xf32, #tpu.memory_space<vmem>>, vector<2x16x128xf32>
    %4 = vector.shape_cast %3 : vector<2x16x128xf32> to vector<32x128xf32>
    %c0_3 = arith.constant 0 : index
    %c0_4 = arith.constant 0 : index
    %c0_5 = arith.constant 0 : index
    %5 = vector.load %arg3[%c0_3, %c0_4, %c0_5] : memref<1x1x128xf32, #tpu.memory_space<vmem>>, vector<1x1x128xf32>
    %6 = vector.shape_cast %5 : vector<1x1x128xf32> to vector<1x128xf32>
    %c0_6 = arith.constant 0 : index
    %c0_7 = arith.constant 0 : index
    %c0_8 = arith.constant 0 : index
    %7 = vector.load %arg4[%c0_6, %c0_7, %c0_8] : memref<1x1x128xf32, #tpu.memory_space<vmem>>, vector<1x1x128xf32>
    %8 = vector.shape_cast %7 : vector<1x1x128xf32> to vector<1x128xf32>
    %cst = arith.constant dense<0.000000e+00> : vector<32xf32>
    %9 = vector.multi_reduction <add>, %4, %cst [1] : vector<32x128xf32> to vector<32xf32>
    %10 = vector.shape_cast %9 : vector<32xf32> to vector<32x1xf32>
    %cst_9 = arith.constant 1.280000e+02 : f32
    %11 = vector.broadcast %cst_9 : f32 to vector<32x1xf32>
    %12 = arith.divf %10, %11 : vector<32x1xf32>
    %13 = vector.broadcast %12 : vector<32x1xf32> to vector<32x128xf32>
    %14 = arith.subf %4, %13 : vector<32x128xf32>
    %15 = arith.mulf %14, %14 : vector<32x128xf32>
    %cst_10 = arith.constant dense<0.000000e+00> : vector<32xf32>
    %16 = vector.multi_reduction <add>, %15, %cst_10 [1] : vector<32x128xf32> to vector<32xf32>
    %17 = vector.shape_cast %16 : vector<32xf32> to vector<32x1xf32>
    %cst_11 = arith.constant 1.280000e+02 : f32
    %18 = vector.broadcast %cst_11 : f32 to vector<32x1xf32>
    %19 = arith.divf %17, %18 : vector<32x1xf32>
    %20 = vector.broadcast %12 : vector<32x1xf32> to vector<32x128xf32>
    %21 = arith.subf %4, %20 : vector<32x128xf32>
    %cst_12 = arith.constant 9.99999974E-6 : f32
    %22 = vector.broadcast %cst_12 : f32 to vector<32x1xf32>
    %23 = arith.addf %19, %22 : vector<32x1xf32>
    %24 = math.rsqrt %23 : vector<32x1xf32>
    %25 = vector.broadcast %24 : vector<32x1xf32> to vector<32x128xf32>
    %26 = arith.mulf %21, %25 : vector<32x128xf32>
    %27 = vector.broadcast %6 : vector<1x128xf32> to vector<32x128xf32>
    %28 = arith.mulf %26, %27 : vector<32x128xf32>
    %29 = vector.broadcast %8 : vector<1x128xf32> to vector<32x128xf32>
    %30 = arith.addf %28, %29 : vector<32x128xf32>
    %31 = arith.truncf %30 : vector<32x128xf32> to vector<32x128xbf16>
    %c0_13 = arith.constant 0 : index
    %c0_14 = arith.constant 0 : index
    %c0_15 = arith.constant 0 : index
    %32 = vector.load %arg5[%c0_13, %c0_14, %c0_15] : memref<1x128x384xbf16, #tpu.memory_space<vmem>>, vector<1x128x384xbf16>
    %33 = vector.shape_cast %32 : vector<1x128x384xbf16> to vector<128x384xbf16>
    %cst_16 = arith.constant dense<0.000000e+00> : vector<32x384xf32>
    %34 = tpu.matmul %31, %33, %cst_16 {dimension_numbers = #tpu.dot_dimension_numbers<[1], [0], [0], [1], [0, 0, 1, 1], [], []>} : vector<32x128xbf16>, vector<128x384xbf16>, vector<32x384xf32> -> vector<32x384xf32>
    %c0_17 = arith.constant 0 : index
    %c0_18 = arith.constant 0 : index
    %c0_19 = arith.constant 0 : index
    %35 = vector.load %arg6[%c0_17, %c0_18, %c0_19] : memref<1x1x384xf32, #tpu.memory_space<vmem>>, vector<1x1x384xf32>
    %36 = vector.shape_cast %35 : vector<1x1x384xf32> to vector<1x384xf32>
    %37 = vector.broadcast %36 : vector<1x384xf32> to vector<32x384xf32>
    %38 = arith.addf %34, %37 : vector<32x384xf32>
    %39 = vector.extract_strided_slice %38 {offsets = [0, 0], sizes = [32, 128], strides = [1, 1]} : vector<32x384xf32> to vector<32x128xf32>
    %cst_20 = arith.constant 0.176776692 : f32
    %40 = vector.broadcast %cst_20 : f32 to vector<32x128xf32>
    %41 = arith.mulf %39, %40 : vector<32x128xf32>
    %42 = arith.truncf %41 : vector<32x128xf32> to vector<32x128xbf16>
    %43 = vector.extract_strided_slice %38 {offsets = [0, 128], sizes = [32, 128], strides = [1, 1]} : vector<32x384xf32> to vector<32x128xf32>
    %44 = arith.truncf %43 : vector<32x128xf32> to vector<32x128xbf16>
    %45 = vector.extract_strided_slice %38 {offsets = [0, 256], sizes = [32, 128], strides = [1, 1]} : vector<32x384xf32> to vector<32x128xf32>
    %46 = arith.truncf %45 : vector<32x128xf32> to vector<32x128xbf16>
    %47 = vector.shape_cast %42 : vector<32x128xbf16> to vector<2x16x128xbf16>
    %48 = vector.extract_strided_slice %47 {offsets = [0, 0, 0], sizes = [2, 16, 32], strides = [1, 1, 1]} : vector<2x16x128xbf16> to vector<2x16x32xbf16>
    %49 = vector.extract_strided_slice %47 {offsets = [0, 0, 32], sizes = [2, 16, 32], strides = [1, 1, 1]} : vector<2x16x128xbf16> to vector<2x16x32xbf16>
    %50 = vector.extract_strided_slice %47 {offsets = [0, 0, 64], sizes = [2, 16, 32], strides = [1, 1, 1]} : vector<2x16x128xbf16> to vector<2x16x32xbf16>
    %51 = vector.extract_strided_slice %47 {offsets = [0, 0, 96], sizes = [2, 16, 32], strides = [1, 1, 1]} : vector<2x16x128xbf16> to vector<2x16x32xbf16>
    %52 = tpu.concatenate %48, %49, %50, %51 in 0 : vector<2x16x32xbf16>, vector<2x16x32xbf16>, vector<2x16x32xbf16>, vector<2x16x32xbf16> -> vector<8x16x32xbf16>
    %53 = vector.shape_cast %44 : vector<32x128xbf16> to vector<2x16x128xbf16>
    %54 = vector.extract_strided_slice %53 {offsets = [0, 0, 0], sizes = [2, 16, 32], strides = [1, 1, 1]} : vector<2x16x128xbf16> to vector<2x16x32xbf16>
    %55 = vector.extract_strided_slice %53 {offsets = [0, 0, 32], sizes = [2, 16, 32], strides = [1, 1, 1]} : vector<2x16x128xbf16> to vector<2x16x32xbf16>
    %56 = vector.extract_strided_slice %53 {offsets = [0, 0, 64], sizes = [2, 16, 32], strides = [1, 1, 1]} : vector<2x16x128xbf16> to vector<2x16x32xbf16>
    %57 = vector.extract_strided_slice %53 {offsets = [0, 0, 96], sizes = [2, 16, 32], strides = [1, 1, 1]} : vector<2x16x128xbf16> to vector<2x16x32xbf16>
    %58 = tpu.concatenate %54, %55, %56, %57 in 0 : vector<2x16x32xbf16>, vector<2x16x32xbf16>, vector<2x16x32xbf16>, vector<2x16x32xbf16> -> vector<8x16x32xbf16>
    %59 = vector.shape_cast %46 : vector<32x128xbf16> to vector<2x16x128xbf16>
    %60 = vector.extract_strided_slice %59 {offsets = [0, 0, 0], sizes = [2, 16, 32], strides = [1, 1, 1]} : vector<2x16x128xbf16> to vector<2x16x32xbf16>
    %61 = vector.extract_strided_slice %59 {offsets = [0, 0, 32], sizes = [2, 16, 32], strides = [1, 1, 1]} : vector<2x16x128xbf16> to vector<2x16x32xbf16>
    %62 = vector.extract_strided_slice %59 {offsets = [0, 0, 64], sizes = [2, 16, 32], strides = [1, 1, 1]} : vector<2x16x128xbf16> to vector<2x16x32xbf16>
    %63 = vector.extract_strided_slice %59 {offsets = [0, 0, 96], sizes = [2, 16, 32], strides = [1, 1, 1]} : vector<2x16x128xbf16> to vector<2x16x32xbf16>
    %64 = tpu.concatenate %60, %61, %62, %63 in 0 : vector<2x16x32xbf16>, vector<2x16x32xbf16>, vector<2x16x32xbf16>, vector<2x16x32xbf16> -> vector<8x16x32xbf16>
    "tpu.trace_start"() <{level = 10 : i32, message = "nqd,nkd->nqk"}> : () -> ()
    %cst_21 = arith.constant dense<0.000000e+00> : vector<8x16x16xf32>
    %65 = tpu.matmul %52, %58, %cst_21 {dimension_numbers = #tpu.dot_dimension_numbers<[2], [2], [1], [1], [0, 0, 0, 1, 1, 1], [0], [0]>} : vector<8x16x32xbf16>, vector<8x16x32xbf16>, vector<8x16x16xf32> -> vector<8x16x16xf32>
    "tpu.trace_stop"() : () -> ()
    %66 = tpu.iota {dimensions = array<i32: 0>} : vector<16x16xi32>
    %67 = tpu.iota {dimensions = array<i32: 1>} : vector<16x16xi32>
    %68 = arith.cmpi sle, %67, %66 : vector<16x16xi32>
    %69 = vector.shape_cast %68 : vector<16x16xi1> to vector<1x16x16xi1>
    %cst_22 = arith.constant -1.000000e+30 : f32
    %70 = vector.shape_cast %69 : vector<1x16x16xi1> to vector<1x16x16xi1>
    %71 = vector.broadcast %70 : vector<1x16x16xi1> to vector<8x16x16xi1>
    %72 = vector.broadcast %cst_22 : f32 to vector<8x16x16xf32>
    %73 = arith.select %71, %65, %72 : vector<8x16x16xi1>, vector<8x16x16xf32>
    %cst_23 = arith.constant dense<0xFF800000> : vector<8x16xf32>
    %74 = vector.multi_reduction <maximumf>, %73, %cst_23 [2] : vector<8x16x16xf32> to vector<8x16xf32>
    %75 = vector.shape_cast %74 : vector<8x16xf32> to vector<8x16x1xf32>
    %76 = vector.broadcast %75 : vector<8x16x1xf32> to vector<8x16x16xf32>
    %77 = arith.subf %73, %76 : vector<8x16x16xf32>
    %78 = math.exp %77 : vector<8x16x16xf32>
    %cst_24 = arith.constant dense<0.000000e+00> : vector<8x16xf32>
    %79 = vector.multi_reduction <add>, %78, %cst_24 [2] : vector<8x16x16xf32> to vector<8x16xf32>
    %80 = vector.shape_cast %79 : vector<8x16xf32> to vector<8x16x1xf32>
    %81 = tpu.reciprocal %80 {approx = true} : vector<8x16x1xf32> -> vector<8x16x1xf32>
    %82 = vector.broadcast %81 : vector<8x16x1xf32> to vector<8x16x16xf32>
    %83 = arith.mulf %78, %82 : vector<8x16x16xf32>
    %84 = arith.truncf %83 : vector<8x16x16xf32> to vector<8x16x16xbf16>
    "tpu.trace_start"() <{level = 10 : i32, message = "nqk,nkd->nqd"}> : () -> ()
    %cst_25 = arith.constant dense<0.000000e+00> : vector<8x16x32xf32>
    %85 = tpu.matmul %84, %64, %cst_25 {dimension_numbers = #tpu.dot_dimension_numbers<[2], [1], [1], [2], [0, 0, 0, 1, 1, 2], [0], [0]>} : vector<8x16x16xbf16>, vector<8x16x32xbf16>, vector<8x16x32xf32> -> vector<8x16x32xf32>
    "tpu.trace_stop"() : () -> ()
    %86 = vector.extract_strided_slice %85 {offsets = [0, 0, 0], sizes = [2, 16, 32], strides = [1, 1, 1]} : vector<8x16x32xf32> to vector<2x16x32xf32>
    %87 = vector.extract_strided_slice %85 {offsets = [2, 0, 0], sizes = [2, 16, 32], strides = [1, 1, 1]} : vector<8x16x32xf32> to vector<2x16x32xf32>
    %88 = vector.extract_strided_slice %85 {offsets = [4, 0, 0], sizes = [2, 16, 32], strides = [1, 1, 1]} : vector<8x16x32xf32> to vector<2x16x32xf32>
    %89 = vector.extract_strided_slice %85 {offsets = [6, 0, 0], sizes = [2, 16, 32], strides = [1, 1, 1]} : vector<8x16x32xf32> to vector<2x16x32xf32>
    %90 = tpu.concatenate %86, %87, %88, %89 in 2 : vector<2x16x32xf32>, vector<2x16x32xf32>, vector<2x16x32xf32>, vector<2x16x32xf32> -> vector<2x16x128xf32>
    %91 = vector.shape_cast %90 : vector<2x16x128xf32> to vector<32x128xf32>
    %92 = arith.truncf %91 : vector<32x128xf32> to vector<32x128xbf16>
    %c0_26 = arith.constant 0 : index
    %c0_27 = arith.constant 0 : index
    %c0_28 = arith.constant 0 : index
    %93 = vector.load %arg7[%c0_26, %c0_27, %c0_28] : memref<1x128x128xbf16, #tpu.memory_space<vmem>>, vector<1x128x128xbf16>
    %94 = vector.shape_cast %93 : vector<1x128x128xbf16> to vector<128x128xbf16>
    %cst_29 = arith.constant dense<0.000000e+00> : vector<32x128xf32>
    %95 = tpu.matmul %92, %94, %cst_29 {dimension_numbers = #tpu.dot_dimension_numbers<[1], [0], [0], [1], [0, 0, 1, 1], [], []>} : vector<32x128xbf16>, vector<128x128xbf16>, vector<32x128xf32> -> vector<32x128xf32>
    %c0_30 = arith.constant 0 : index
    %c0_31 = arith.constant 0 : index
    %c0_32 = arith.constant 0 : index
    %96 = vector.load %arg8[%c0_30, %c0_31, %c0_32] : memref<1x1x128xf32, #tpu.memory_space<vmem>>, vector<1x1x128xf32>
    %97 = vector.shape_cast %96 : vector<1x1x128xf32> to vector<1x128xf32>
    %98 = vector.broadcast %97 : vector<1x128xf32> to vector<32x128xf32>
    %99 = arith.addf %95, %98 : vector<32x128xf32>
    %100 = arith.addf %4, %99 : vector<32x128xf32>
    %c0_33 = arith.constant 0 : index
    %c0_34 = arith.constant 0 : index
    %c0_35 = arith.constant 0 : index
    %101 = vector.load %arg9[%c0_33, %c0_34, %c0_35] : memref<1x1x128xf32, #tpu.memory_space<vmem>>, vector<1x1x128xf32>
    %102 = vector.shape_cast %101 : vector<1x1x128xf32> to vector<1x128xf32>
    %c0_36 = arith.constant 0 : index
    %c0_37 = arith.constant 0 : index
    %c0_38 = arith.constant 0 : index
    %103 = vector.load %arg10[%c0_36, %c0_37, %c0_38] : memref<1x1x128xf32, #tpu.memory_space<vmem>>, vector<1x1x128xf32>
    %104 = vector.shape_cast %103 : vector<1x1x128xf32> to vector<1x128xf32>
    %cst_39 = arith.constant dense<0.000000e+00> : vector<32xf32>
    %105 = vector.multi_reduction <add>, %100, %cst_39 [1] : vector<32x128xf32> to vector<32xf32>
    %106 = vector.shape_cast %105 : vector<32xf32> to vector<32x1xf32>
    %cst_40 = arith.constant 1.280000e+02 : f32
    %107 = vector.broadcast %cst_40 : f32 to vector<32x1xf32>
    %108 = arith.divf %106, %107 : vector<32x1xf32>
    %109 = vector.broadcast %108 : vector<32x1xf32> to vector<32x128xf32>
    %110 = arith.subf %100, %109 : vector<32x128xf32>
    %111 = arith.mulf %110, %110 : vector<32x128xf32>
    %cst_41 = arith.constant dense<0.000000e+00> : vector<32xf32>
    %112 = vector.multi_reduction <add>, %111, %cst_41 [1] : vector<32x128xf32> to vector<32xf32>
    %113 = vector.shape_cast %112 : vector<32xf32> to vector<32x1xf32>
    %cst_42 = arith.constant 1.280000e+02 : f32
    %114 = vector.broadcast %cst_42 : f32 to vector<32x1xf32>
    %115 = arith.divf %113, %114 : vector<32x1xf32>
    %116 = vector.broadcast %108 : vector<32x1xf32> to vector<32x128xf32>
    %117 = arith.subf %100, %116 : vector<32x128xf32>
    %cst_43 = arith.constant 9.99999974E-6 : f32
    %118 = vector.broadcast %cst_43 : f32 to vector<32x1xf32>
    %119 = arith.addf %115, %118 : vector<32x1xf32>
    %120 = math.rsqrt %119 : vector<32x1xf32>
    %121 = vector.broadcast %120 : vector<32x1xf32> to vector<32x128xf32>
    %122 = arith.mulf %117, %121 : vector<32x128xf32>
    %123 = vector.broadcast %102 : vector<1x128xf32> to vector<32x128xf32>
    %124 = arith.mulf %122, %123 : vector<32x128xf32>
    %125 = vector.broadcast %104 : vector<1x128xf32> to vector<32x128xf32>
    %126 = arith.addf %124, %125 : vector<32x128xf32>
    %127 = arith.truncf %126 : vector<32x128xf32> to vector<32x128xbf16>
    %c0_44 = arith.constant 0 : index
    %c0_45 = arith.constant 0 : index
    %c0_46 = arith.constant 0 : index
    %128 = vector.load %arg11[%c0_44, %c0_45, %c0_46] : memref<1x128x512xbf16, #tpu.memory_space<vmem>>, vector<1x128x512xbf16>
    %129 = vector.shape_cast %128 : vector<1x128x512xbf16> to vector<128x512xbf16>
    %cst_47 = arith.constant dense<0.000000e+00> : vector<32x512xf32>
    %130 = tpu.matmul %127, %129, %cst_47 {dimension_numbers = #tpu.dot_dimension_numbers<[1], [0], [0], [1], [0, 0, 1, 1], [], []>} : vector<32x128xbf16>, vector<128x512xbf16>, vector<32x512xf32> -> vector<32x512xf32>
    %c0_48 = arith.constant 0 : index
    %c0_49 = arith.constant 0 : index
    %c0_50 = arith.constant 0 : index
    %131 = vector.load %arg12[%c0_48, %c0_49, %c0_50] : memref<1x1x512xf32, #tpu.memory_space<vmem>>, vector<1x1x512xf32>
    %132 = vector.shape_cast %131 : vector<1x1x512xf32> to vector<1x512xf32>
    %133 = vector.broadcast %132 : vector<1x512xf32> to vector<32x512xf32>
    %134 = arith.addf %130, %133 : vector<32x512xf32>
    %cst_51 = arith.constant 5.000000e-01 : f32
    %135 = vector.broadcast %cst_51 : f32 to vector<32x512xf32>
    %136 = arith.mulf %135, %134 : vector<32x512xf32>
    %cst_52 = arith.constant 0.707106769 : f32
    %137 = vector.broadcast %cst_52 : f32 to vector<32x512xf32>
    %138 = arith.mulf %134, %137 : vector<32x512xf32>
    %139 = math.erf %138 : vector<32x512xf32>
    %cst_53 = arith.constant 1.000000e+00 : f32
    %140 = vector.broadcast %cst_53 : f32 to vector<32x512xf32>
    %141 = arith.addf %140, %139 : vector<32x512xf32>
    %142 = arith.mulf %136, %141 : vector<32x512xf32>
    %143 = arith.truncf %142 : vector<32x512xf32> to vector<32x512xbf16>
    %c0_54 = arith.constant 0 : index
    %c0_55 = arith.constant 0 : index
    %c0_56 = arith.constant 0 : index
    %144 = vector.load %arg13[%c0_54, %c0_55, %c0_56] : memref<1x512x128xbf16, #tpu.memory_space<vmem>>, vector<1x512x128xbf16>
    %145 = vector.shape_cast %144 : vector<1x512x128xbf16> to vector<512x128xbf16>
    %cst_57 = arith.constant dense<0.000000e+00> : vector<32x128xf32>
    %146 = tpu.matmul %143, %145, %cst_57 {dimension_numbers = #tpu.dot_dimension_numbers<[1], [0], [0], [1], [0, 0, 1, 1], [], []>} : vector<32x512xbf16>, vector<512x128xbf16>, vector<32x128xf32> -> vector<32x128xf32>
    %c0_58 = arith.constant 0 : index
    %c0_59 = arith.constant 0 : index
    %c0_60 = arith.constant 0 : index
    %147 = vector.load %arg14[%c0_58, %c0_59, %c0_60] : memref<1x1x128xf32, #tpu.memory_space<vmem>>, vector<1x1x128xf32>
    %148 = vector.shape_cast %147 : vector<1x1x128xf32> to vector<1x128xf32>
    %149 = vector.broadcast %148 : vector<1x128xf32> to vector<32x128xf32>
    %150 = arith.addf %146, %149 : vector<32x128xf32>
    %151 = arith.addf %100, %150 : vector<32x128xf32>
    %152 = vector.shape_cast %151 : vector<32x128xf32> to vector<2x16x128xf32>
    %c0_61 = arith.constant 0 : index
    %c0_62 = arith.constant 0 : index
    %c0_63 = arith.constant 0 : index
    %153 = vector.load %arg16[%c0_61, %c0_62, %c0_63] : memref<2x16x128xf32, #tpu.memory_space<vmem>>, vector<2x16x128xf32>
    tpu.vector_store %arg16[%c0_61, %c0_62, %c0_63], %152 {strides = array<i32>} : memref<2x16x128xf32, #tpu.memory_space<vmem>>, vector<2x16x128xf32>,
    %c1_i32 = arith.constant 1 : i32
    %154 = arith.cmpi eq, %arg1, %c1_i32 : i32
    %155 = arith.extui %154 : i1 to i32
    %c0_i32_64 = arith.constant 0 : i32
    %156 = arith.cmpi ne, %155, %c0_i32_64 : i32
    scf.if %156 {
      %c0_65 = arith.constant 0 : index
      %c0_66 = arith.constant 0 : index
      %c0_67 = arith.constant 0 : index
      %157 = vector.load %arg15[%c0_65, %c0_66, %c0_67] : memref<2x16x128xf32, #tpu.memory_space<vmem>>, vector<2x16x128xf32>
      tpu.vector_store %arg15[%c0_65, %c0_66, %c0_67], %152 {strides = array<i32>} : memref<2x16x128xf32, #tpu.memory_space<vmem>>, vector<2x16x128xf32>,
    } else {
    }
    return
  }
  func.func @transform_0(%arg0: i32, %arg1: i32) -> (i32, i32, i32) {
    %c0_i32 = arith.constant 0 : i32
    %c0_i32_0 = arith.constant 0 : i32
    %c0_i32_1 = arith.constant 0 : i32
    return %arg0, %c0_i32, %c0_i32_0 : i32, i32, i32
  }
  func.func @transform_1(%arg0: i32, %arg1: i32) -> (i32, i32, i32) {
    %c0_i32 = arith.constant 0 : i32
    %c0_i32_0 = arith.constant 0 : i32
    %c0_i32_1 = arith.constant 0 : i32
    return %arg1, %c0_i32, %c0_i32_0 : i32, i32, i32
  }
  func.func @transform_2(%arg0: i32, %arg1: i32) -> (i32, i32, i32) {
    %c0_i32 = arith.constant 0 : i32
    %c0_i32_0 = arith.constant 0 : i32
    %c0_i32_1 = arith.constant 0 : i32
    return %arg1, %c0_i32, %c0_i32_0 : i32, i32, i32
  }
  func.func @transform_3(%arg0: i32, %arg1: i32) -> (i32, i32, i32) {
    %c0_i32 = arith.constant 0 : i32
    %c0_i32_0 = arith.constant 0 : i32
    %c0_i32_1 = arith.constant 0 : i32
    return %arg1, %c0_i32, %c0_i32_0 : i32, i32, i32
  }
  func.func @transform_4(%arg0: i32, %arg1: i32) -> (i32, i32, i32) {
    %c0_i32 = arith.constant 0 : i32
    %c0_i32_0 = arith.constant 0 : i32
    %c0_i32_1 = arith.constant 0 : i32
    return %arg1, %c0_i32, %c0_i32_0 : i32, i32, i32
  }
  func.func @transform_5(%arg0: i32, %arg1: i32) -> (i32, i32, i32) {
    %c0_i32 = arith.constant 0 : i32
    %c0_i32_0 = arith.constant 0 : i32
    %c0_i32_1 = arith.constant 0 : i32
    return %arg1, %c0_i32, %c0_i32_0 : i32, i32, i32
  }
  func.func @transform_6(%arg0: i32, %arg1: i32) -> (i32, i32, i32) {
    %c0_i32 = arith.constant 0 : i32
    %c0_i32_0 = arith.constant 0 : i32
    %c0_i32_1 = arith.constant 0 : i32
    return %arg1, %c0_i32, %c0_i32_0 : i32, i32, i32
  }
  func.func @transform_7(%arg0: i32, %arg1: i32) -> (i32, i32, i32) {
    %c0_i32 = arith.constant 0 : i32
    %c0_i32_0 = arith.constant 0 : i32
    %c0_i32_1 = arith.constant 0 : i32
    return %arg1, %c0_i32, %c0_i32_0 : i32, i32, i32
  }
  func.func @transform_8(%arg0: i32, %arg1: i32) -> (i32, i32, i32) {
    %c0_i32 = arith.constant 0 : i32
    %c0_i32_0 = arith.constant 0 : i32
    %c0_i32_1 = arith.constant 0 : i32
    return %arg1, %c0_i32, %c0_i32_0 : i32, i32, i32
  }
  func.func @transform_9(%arg0: i32, %arg1: i32) -> (i32, i32, i32) {
    %c0_i32 = arith.constant 0 : i32
    %c0_i32_0 = arith.constant 0 : i32
    %c0_i32_1 = arith.constant 0 : i32
    return %arg1, %c0_i32, %c0_i32_0 : i32, i32, i32
  }
  func.func @transform_10(%arg0: i32, %arg1: i32) -> (i32, i32, i32) {
    %c0_i32 = arith.constant 0 : i32
    %c0_i32_0 = arith.constant 0 : i32
    %c0_i32_1 = arith.constant 0 : i32
    return %arg1, %c0_i32, %c0_i32_0 : i32, i32, i32
  }
  func.func @transform_11(%arg0: i32, %arg1: i32) -> (i32, i32, i32) {
    %c0_i32 = arith.constant 0 : i32
    %c0_i32_0 = arith.constant 0 : i32
    %c0_i32_1 = arith.constant 0 : i32
    return %arg1, %c0_i32, %c0_i32_0 : i32, i32, i32
  }
  func.func @transform_12(%arg0: i32, %arg1: i32) -> (i32, i32, i32) {
    %c0_i32 = arith.constant 0 : i32
    %c0_i32_0 = arith.constant 0 : i32
    %c0_i32_1 = arith.constant 0 : i32
    return %arg1, %c0_i32, %c0_i32_0 : i32, i32, i32
  }
  func.func @transform_13(%arg0: i32, %arg1: i32) -> (i32, i32, i32) {
    %c0_i32 = arith.constant 0 : i32
    %c0_i32_0 = arith.constant 0 : i32
    %c0_i32_1 = arith.constant 0 : i32
    return %arg0, %c0_i32, %c0_i32_0 : i32, i32, i32
  }
}

</mosaic_0001>

<llo_original>
// kernel: tpu_custom_call.1
$region0: #{tpu_custom_call.1}
  #allocation0 [shape = 'u32[]', space=smem, size = 0x4, offset = 0x4, fixed_abs, tag = 'smem constant byte address 0x4 - core index']
  #allocation1 [shape = 'u32[72,128]{1,0:T(1,128)}', space=vmem, size = 0x9000, scoped, tag = 'internal scratch']
  #allocation2 [shape = 'f32[2,16,128]{2,1,0:T(8,128)}', space=vmem, size = 0x4000, scoped, tag = 'scratch operand']
  %s0 = inlined_call_operand.hbm [shape: f32[2,16,128], index: 0, kind: input, shape index: {}]
  %s1 = inlined_call_operand.hbm [shape: f32[2,1,128], index: 1, kind: input, shape index: {}]
  %s2 = inlined_call_operand.hbm [shape: f32[2,1,128], index: 2, kind: input, shape index: {}]
  %s3 = inlined_call_operand.hbm [shape: bf16[2,128,384], index: 3, kind: input, shape index: {}]
  %s4 = inlined_call_operand.hbm [shape: f32[2,1,384], index: 4, kind: input, shape index: {}]
  %s5 = inlined_call_operand.hbm [shape: bf16[2,128,128], index: 5, kind: input, shape index: {}]
  %s6 = inlined_call_operand.hbm [shape: f32[2,1,128], index: 6, kind: input, shape index: {}]
  %s7 = inlined_call_operand.hbm [shape: f32[2,1,128], index: 7, kind: input, shape index: {}]
  %s8 = inlined_call_operand.hbm [shape: f32[2,1,128], index: 8, kind: input, shape index: {}]
  %s9 = inlined_call_operand.hbm [shape: bf16[2,128,512], index: 9, kind: input, shape index: {}]
  %s10 = inlined_call_operand.vmem [shape: f32[2,1,512], index: 10, kind: input, shape index: {}]
  %s11 = inlined_call_operand.hbm [shape: bf16[2,512,128], index: 11, kind: input, shape index: {}]
  %s12 = inlined_call_operand.vmem [shape: f32[2,1,128], index: 12, kind: input, shape index: {}]
  %s13 = inlined_call_operand.hbm [shape: f32[2,16,128], index: 13, kind: output, shape index: {}]
  %s14 = sld [smem:[#allocation0]]
  $region137: #{tpu_custom_call.1} parent=0
    _
  %s16 = ssub.s32 1, %s14
  %s17 = scalar_select 0, %s16, %s14
  $region1: #{tpu_custom_call.1} parent=0
    #allocation3 [shape = 'u8[16384]{0}', space=vmem, size = 0x4000, scoped, tag = 'input window, operand 0, single buffered']
    #allocation4 [shape = 's32[2]{0}', space=sflag, size = 0x8, scoped, tag = 'scoped memory for tpu_custom_call.1']
    #allocation5 [shape = 's32[2]{0}', space=sflag, size = 0x8, scoped, tag = 'scoped memory for tpu_custom_call.1']
    #allocation6 [shape = 'u8[1024]{0}', space=vmem, size = 0x400, scoped, tag = 'input window, operand 1']
    #allocation7 [shape = 's32[2]{0}', space=sflag, size = 0x8, scoped, tag = 'scoped memory for tpu_custom_call.1']
    #allocation8 [shape = 'u8[1024]{0}', space=vmem, size = 0x400, scoped, tag = 'input window, operand 2']
    #allocation9 [shape = 'u8[196608]{0}', space=vmem, size = 0x30000, scoped, tag = 'input window, operand 3']
    #allocation10 [shape = 's32[2]{0}', space=sflag, size = 0x8, scoped, tag = 'scoped memory for tpu_custom_call.1']
    #allocation11 [shape = 'u8[3072]{0}', space=vmem, size = 0xc00, scoped, tag = 'input window, operand 4']
    #allocation12 [shape = 'u8[65536]{0}', space=vmem, size = 0x10000, scoped, tag = 'input window, operand 5']
    #allocation13 [shape = 's32[2]{0}', space=sflag, size = 0x8, scoped, tag = 'scoped memory for tpu_custom_call.1']
    #allocation14 [shape = 'u8[1024]{0}', space=vmem, size = 0x400, scoped, tag = 'input window, operand 6']
    #allocation15 [shape = 'u8[1024]{0}', space=vmem, size = 0x400, scoped, tag = 'input window, operand 7']
    #allocation16 [shape = 's32[2]{0}', space=sflag, size = 0x8, scoped, tag = 'scoped memory for tpu_custom_call.1']
    #allocation17 [shape = 'u8[1024]{0}', space=vmem, size = 0x400, scoped, tag = 'input window, operand 8']
    #allocation18 [shape = 'u8[262144]{0}', space=vmem, size = 0x40000, scoped, tag = 'input window, operand 9']
    #allocation19 [shape = 's32[2]{0}', space=sflag, size = 0x8, scoped, tag = 'scoped memory for tpu_custom_call.1']
    #allocation20 [shape = 'u8[262144]{0}', space=vmem, size = 0x40000, scoped, tag = 'input window, operand 11']
    #allocation21 [shape = 'u8[16384]{0}', space=vmem, size = 0x4000, scoped, tag = 'output window, operand 0, single buffered']
    %18 = vsyncpa [#allocation4], 0
    %19 = vsyncpa [#allocation7], 0
    %s20 = scalar_lea.sflag [#allocation7], 1
    %21 = vsyncpa %s20, 0
    %22 = vsyncpa [#allocation10], 0
    %s23 = scalar_lea.sflag [#allocation10], 1
    %24 = vsyncpa %s23, 0
    %25 = vsyncpa [#allocation13], 0
    %s26 = scalar_lea.sflag [#allocation13], 1
    %27 = vsyncpa %s26, 0
    %28 = vsyncpa [#allocation16], 0
    %s29 = scalar_lea.sflag [#allocation16], 1
    %30 = vsyncpa %s29, 0
    %31 = vsyncpa [#allocation19], 0
    %s32 = scalar_lea.sflag [#allocation19], 1
    %33 = vsyncpa %s32, 0
    %34 = vsyncpa [#allocation5], 0
    loop: start=0, step=1, limit=4
    $region2: #{tpu_custom_call.1} parent=1 // loop_pre_header
      _
    $region3: #{tpu_custom_call.1} parent=1 // loop_header
      %s36 = sphi 0, %s40
      %p37 = scmp.ge.s32.totalorder %s36, 4
      %s43 = sphi 0, %s55
      %s44 = sphi 0, %s51
      %s45 = sphi 0, %s43
      %s46 = sphi 0, %s44
      %s47 = sphi 0, %s45
      %s48 = sphi 0, %s46
      %s58 = sphi 0, %s60
      %s61 = sphi 0, %s58
      %s62 = sphi 0, %s61
      %s78 = sphi 0, %s62
      %s84 = sphi 0, %s86
      %s87 = sphi 0, %s84
      %s88 = sphi 0, %s87
      %s104 = sphi 0, %s88
      %s110 = sphi 0, %s112
      %s113 = sphi 0, %s110
      %s114 = sphi 0, %s113
      %s130 = sphi 0, %s114
      %s136 = sphi 0, %s138
      %s139 = sphi 0, %s136
      %s140 = sphi 0, %s139
      %s156 = sphi 0, %s140
      %s162 = sphi 0, %s164
      %s165 = sphi 0, %s162
      %s166 = sphi 0, %s165
      %s182 = sphi 0, %s166
      %s188 = sphi 0, %s190
      %s191 = sphi 0, %s188
      %s192 = sphi 0, %s191
      %s208 = sphi 0, %s192
      %s214 = sphi 0, %s216
      %s217 = sphi 0, %s214
      %s218 = sphi 0, %s217
      %s234 = sphi 0, %s218
      %s240 = sphi 0, %s242
      %s243 = sphi 0, %s240
      %s244 = sphi 0, %s243
      %s260 = sphi 0, %s244
      %s266 = sphi 0, %s268
      %s269 = sphi 0, %s266
      %s270 = sphi 0, %s269
      %s286 = sphi 0, %s270
      %s292 = sphi 0, %s294
      %s295 = sphi 0, %s292
      %s296 = sphi 0, %s295
      %s312 = sphi 0, %s296
      %s318 = sphi 0, %s320
      %s321 = sphi 0, %s318
      %s322 = sphi 0, %s321
      %s338 = sphi 0, %s322
      %s344 = sphi 0, %s346
      %s347 = sphi 0, %s344
      %s348 = sphi 0, %s347
      %s364 = sphi 0, %s348
      %s370 = sphi 0, %s372
      %s373 = sphi 0, %s370
      %s374 = sphi 0, %s373
      %s390 = sphi 0, %s374
      %s396 = sphi 0, %s398
      %s399 = sphi 0, %s396
      %s400 = sphi 0, %s399
      %s416 = sphi 0, %s400
    $region4: #{tpu_custom_call.1} parent=1 // loop_header_branch
      %39 = sbr.rel (%p37) target = $region8
    $region5: #{tpu_custom_call.1} parent=1 // loop_body
      %s41 = ssub.s32 %s36, 1
      %s42 = ssub.s32 %s36, 2
      %s49 = sadd.s32 1, %s44
      %p50 = scmp.ge.s32.totalorder %s49, 2
      %s51 = scalar_select %p50, 0, %s49
      %s52 = sadd.s32 1, %s43
      %s53 = scalar_select %p50, %s52, %s43
      %p54 = scmp.ge.s32.totalorder %s53, 1
      %s55 = scalar_select %p54, 0, %s53
      %s56 = ssub.s32 %s43, %s55
      %p57 = scmp.eq.s32.totalorder %s56, 0
      %s59 = sadd.s32 %s58, 1
      %s60 = scalar_select %p57, %s58, %s59
      %p63 = pneg %p57
      %p64 = scmp.eq.s32.totalorder %s36, 1
      %p65 = por %p63, %p64
      %p66 = scmp.ne.s32.totalorder %s58, %s61
      %p67 = scmp.eq.s32.totalorder %s36, 0
      %p68 = por %p66, %p67
      %p69 = scmp.ne.s32.totalorder %s58, %s61
      %p70 = scmp.eq.s32.totalorder %s41, 1
      %p71 = por %p69, %p70
      %p72 = scmp.ne.s32.totalorder %s61, %s62
      %p73 = scmp.eq.s32.totalorder %s41, 0
      %p74 = por %p72, %p73
      %p75 = scmp.ne.s32.totalorder %s61, %s62
      %p76 = scmp.eq.s32.totalorder %s42, 1
      %p77 = por %p75, %p76
      %p79 = scmp.ne.s32.totalorder %s62, %s78
      %p80 = scmp.eq.s32.totalorder %s42, 0
      %p81 = por %p79, %p80
      %s82 = ssub.s32 %s44, %s51
      %p83 = scmp.eq.s32.totalorder %s82, 0
      %s85 = sadd.s32 %s84, 1
      %s86 = scalar_select %p83, %s84, %s85
      %p89 = pneg %p83
      %p90 = scmp.eq.s32.totalorder %s36, 1
      %p91 = por %p89, %p90
      %p92 = scmp.ne.s32.totalorder %s84, %s87
      %p93 = scmp.eq.s32.totalorder %s36, 0
      %p94 = por %p92, %p93
      %p95 = scmp.ne.s32.totalorder %s84, %s87
      %p96 = scmp.eq.s32.totalorder %s41, 1
      %p97 = por %p95, %p96
      %p98 = scmp.ne.s32.totalorder %s87, %s88
      %p99 = scmp.eq.s32.totalorder %s41, 0
      %p100 = por %p98, %p99
      %p101 = scmp.ne.s32.totalorder %s87, %s88
      %p102 = scmp.eq.s32.totalorder %s42, 1
      %p103 = por %p101, %p102
      %p105 = scmp.ne.s32.totalorder %s88, %s104
      %p106 = scmp.eq.s32.totalorder %s42, 0
      %p107 = por %p105, %p106
      %s108 = ssub.s32 %s44, %s51
      %p109 = scmp.eq.s32.totalorder %s108, 0
      %s111 = sadd.s32 %s110, 1
      %s112 = scalar_select %p109, %s110, %s111
      %p115 = pneg %p109
      %p116 = scmp.eq.s32.totalorder %s36, 1
      %p117 = por %p115, %p116
      %p118 = scmp.ne.s32.totalorder %s110, %s113
      %p119 = scmp.eq.s32.totalorder %s36, 0
      %p120 = por %p118, %p119
      %p121 = scmp.ne.s32.totalorder %s110, %s113
      %p122 = scmp.eq.s32.totalorder %s41, 1
      %p123 = por %p121, %p122
      %p124 = scmp.ne.s32.totalorder %s113, %s114
      %p125 = scmp.eq.s32.totalorder %s41, 0
      %p126 = por %p124, %p125
      %p127 = scmp.ne.s32.totalorder %s113, %s114
      %p128 = scmp.eq.s32.totalorder %s42, 1
      %p129 = por %p127, %p128
      %p131 = scmp.ne.s32.totalorder %s114, %s130
      %p132 = scmp.eq.s32.totalorder %s42, 0
      %p133 = por %p131, %p132
      %s134 = ssub.s32 %s44, %s51
      %p135 = scmp.eq.s32.totalorder %s134, 0
      %s137 = sadd.s32 %s136, 1
      %s138 = scalar_select %p135, %s136, %s137
      %p141 = pneg %p135
      %p142 = scmp.eq.s32.totalorder %s36, 1
      %p143 = por %p141, %p142
      %p144 = scmp.ne.s32.totalorder %s136, %s139
      %p145 = scmp.eq.s32.totalorder %s36, 0
      %p146 = por %p144, %p145
      %p147 = scmp.ne.s32.totalorder %s136, %s139
      %p148 = scmp.eq.s32.totalorder %s41, 1
      %p149 = por %p147, %p148
      %p150 = scmp.ne.s32.totalorder %s139, %s140
      %p151 = scmp.eq.s32.totalorder %s41, 0
      %p152 = por %p150, %p151
      %p153 = scmp.ne.s32.totalorder %s139, %s140
      %p154 = scmp.eq.s32.totalorder %s42, 1
      %p155 = por %p153, %p154
      %p157 = scmp.ne.s32.totalorder %s140, %s156
      %p158 = scmp.eq.s32.totalorder %s42, 0
      %p159 = por %p157, %p158
      %s160 = ssub.s32 %s44, %s51
      %p161 = scmp.eq.s32.totalorder %s160, 0
      %s163 = sadd.s32 %s162, 1
      %s164 = scalar_select %p161, %s162, %s163
      %p167 = pneg %p161
      %p168 = scmp.eq.s32.totalorder %s36, 1
      %p169 = por %p167, %p168
      %p170 = scmp.ne.s32.totalorder %s162, %s165
      %p171 = scmp.eq.s32.totalorder %s36, 0
      %p172 = por %p170, %p171
      %p173 = scmp.ne.s32.totalorder %s162, %s165
      %p174 = scmp.eq.s32.totalorder %s41, 1
      %p175 = por %p173, %p174
      %p176 = scmp.ne.s32.totalorder %s165, %s166
      %p177 = scmp.eq.s32.totalorder %s41, 0
      %p178 = por %p176, %p177
      %p179 = scmp.ne.s32.totalorder %s165, %s166
      %p180 = scmp.eq.s32.totalorder %s42, 1
      %p181 = por %p179, %p180
      %p183 = scmp.ne.s32.totalorder %s166, %s182
      %p184 = scmp.eq.s32.totalorder %s42, 0
      %p185 = por %p183, %p184
      %s186 = ssub.s32 %s44, %s51
      %p187 = scmp.eq.s32.totalorder %s186, 0
      %s189 = sadd.s32 %s188, 1
      %s190 = scalar_select %p187, %s188, %s189
      %p193 = pneg %p187
      %p194 = scmp.eq.s32.totalorder %s36, 1
      %p195 = por %p193, %p194
      %p196 = scmp.ne.s32.totalorder %s188, %s191
      %p197 = scmp.eq.s32.totalorder %s36, 0
      %p198 = por %p196, %p197
      %p199 = scmp.ne.s32.totalorder %s188, %s191
      %p200 = scmp.eq.s32.totalorder %s41, 1
      %p201 = por %p199, %p200
      %p202 = scmp.ne.s32.totalorder %s191, %s192
      %p203 = scmp.eq.s32.totalorder %s41, 0
      %p204 = por %p202, %p203
      %p205 = scmp.ne.s32.totalorder %s191, %s192
      %p206 = scmp.eq.s32.totalorder %s42, 1
      %p207 = por %p205, %p206
      %p209 = scmp.ne.s32.totalorder %s192, %s208
      %p210 = scmp.eq.s32.totalorder %s42, 0
      %p211 = por %p209, %p210
      %s212 = ssub.s32 %s44, %s51
      %p213 = scmp.eq.s32.totalorder %s212, 0
      %s215 = sadd.s32 %s214, 1
      %s216 = scalar_select %p213, %s214, %s215
      %p219 = pneg %p213
      %p220 = scmp.eq.s32.totalorder %s36, 1
      %p221 = por %p219, %p220
      %p222 = scmp.ne.s32.totalorder %s214, %s217
      %p223 = scmp.eq.s32.totalorder %s36, 0
      %p224 = por %p222, %p223
      %p225 = scmp.ne.s32.totalorder %s214, %s217
      %p226 = scmp.eq.s32.totalorder %s41, 1
      %p227 = por %p225, %p226
      %p228 = scmp.ne.s32.totalorder %s217, %s218
      %p229 = scmp.eq.s32.totalorder %s41, 0
      %p230 = por %p228, %p229
      %p231 = scmp.ne.s32.totalorder %s217, %s218
      %p232 = scmp.eq.s32.totalorder %s42, 1
      %p233 = por %p231, %p232
      %p235 = scmp.ne.s32.totalorder %s218, %s234
      %p236 = scmp.eq.s32.totalorder %s42, 0
      %p237 = por %p235, %p236
      %s238 = ssub.s32 %s44, %s51
      %p239 = scmp.eq.s32.totalorder %s238, 0
      %s241 = sadd.s32 %s240, 1
      %s242 = scalar_select %p239, %s240, %s241
      %p245 = pneg %p239
      %p246 = scmp.eq.s32.totalorder %s36, 1
      %p247 = por %p245, %p246
      %p248 = scmp.ne.s32.totalorder %s240, %s243
      %p249 = scmp.eq.s32.totalorder %s36, 0
      %p250 = por %p248, %p249
      %p251 = scmp.ne.s32.totalorder %s240, %s243
      %p252 = scmp.eq.s32.totalorder %s41, 1
      %p253 = por %p251, %p252
      %p254 = scmp.ne.s32.totalorder %s243, %s244
      %p255 = scmp.eq.s32.totalorder %s41, 0
      %p256 = por %p254, %p255
      %p257 = scmp.ne.s32.totalorder %s243, %s244
      %p258 = scmp.eq.s32.totalorder %s42, 1
      %p259 = por %p257, %p258
      %p261 = scmp.ne.s32.totalorder %s244, %s260
      %p262 = scmp.eq.s32.totalorder %s42, 0
      %p263 = por %p261, %p262
      %s264 = ssub.s32 %s44, %s51
      %p265 = scmp.eq.s32.totalorder %s264, 0
      %s267 = sadd.s32 %s266, 1
      %s268 = scalar_select %p265, %s266, %s267
      %p271 = pneg %p265
      %p272 = scmp.eq.s32.totalorder %s36, 1
      %p273 = por %p271, %p272
      %p274 = scmp.ne.s32.totalorder %s266, %s269
      %p275 = scmp.eq.s32.totalorder %s36, 0
      %p276 = por %p274, %p275
      %p277 = scmp.ne.s32.totalorder %s266, %s269
      %p278 = scmp.eq.s32.totalorder %s41, 1
      %p279 = por %p277, %p278
      %p280 = scmp.ne.s32.totalorder %s269, %s270
      %p281 = scmp.eq.s32.totalorder %s41, 0
      %p282 = por %p280, %p281
      %p283 = scmp.ne.s32.totalorder %s269, %s270
      %p284 = scmp.eq.s32.totalorder %s42, 1
      %p285 = por %p283, %p284
      %p287 = scmp.ne.s32.totalorder %s270, %s286
      %p288 = scmp.eq.s32.totalorder %s42, 0
      %p289 = por %p287, %p288
      %s290 = ssub.s32 %s44, %s51
      %p291 = scmp.eq.s32.totalorder %s290, 0
      %s293 = sadd.s32 %s292, 1
      %s294 = scalar_select %p291, %s292, %s293
      %p297 = pneg %p291
      %p298 = scmp.eq.s32.totalorder %s36, 1
      %p299 = por %p297, %p298
      %p300 = scmp.ne.s32.totalorder %s292, %s295
      %p301 = scmp.eq.s32.totalorder %s36, 0
      %p302 = por %p300, %p301
      %p303 = scmp.ne.s32.totalorder %s292, %s295
      %p304 = scmp.eq.s32.totalorder %s41, 1
      %p305 = por %p303, %p304
      %p306 = scmp.ne.s32.totalorder %s295, %s296
      %p307 = scmp.eq.s32.totalorder %s41, 0
      %p308 = por %p306, %p307
      %p309 = scmp.ne.s32.totalorder %s295, %s296
      %p310 = scmp.eq.s32.totalorder %s42, 1
      %p311 = por %p309, %p310
      %p313 = scmp.ne.s32.totalorder %s296, %s312
      %p314 = scmp.eq.s32.totalorder %s42, 0
      %p315 = por %p313, %p314
      %s316 = ssub.s32 %s44, %s51
      %p317 = scmp.eq.s32.totalorder %s316, 0
      %s319 = sadd.s32 %s318, 1
      %s320 = scalar_select %p317, %s318, %s319
      %p323 = pneg %p317
      %p324 = scmp.eq.s32.totalorder %s36, 1
      %p325 = por %p323, %p324
      %p326 = scmp.ne.s32.totalorder %s318, %s321
      %p327 = scmp.eq.s32.totalorder %s36, 0
      %p328 = por %p326, %p327
      %p329 = scmp.ne.s32.totalorder %s318, %s321
      %p330 = scmp.eq.s32.totalorder %s41, 1
      %p331 = por %p329, %p330
      %p332 = scmp.ne.s32.totalorder %s321, %s322
      %p333 = scmp.eq.s32.totalorder %s41, 0
      %p334 = por %p332, %p333
      %p335 = scmp.ne.s32.totalorder %s321, %s322
      %p336 = scmp.eq.s32.totalorder %s42, 1
      %p337 = por %p335, %p336
      %p339 = scmp.ne.s32.totalorder %s322, %s338
      %p340 = scmp.eq.s32.totalorder %s42, 0
      %p341 = por %p339, %p340
      %s342 = ssub.s32 %s44, %s51
      %p343 = scmp.eq.s32.totalorder %s342, 0
      %s345 = sadd.s32 %s344, 1
      %s346 = scalar_select %p343, %s344, %s345
      %p349 = pneg %p343
      %p350 = scmp.eq.s32.totalorder %s36, 1
      %p351 = por %p349, %p350
      %p352 = scmp.ne.s32.totalorder %s344, %s347
      %p353 = scmp.eq.s32.totalorder %s36, 0
      %p354 = por %p352, %p353
      %p355 = scmp.ne.s32.totalorder %s344, %s347
      %p356 = scmp.eq.s32.totalorder %s41, 1
      %p357 = por %p355, %p356
      %p358 = scmp.ne.s32.totalorder %s347, %s348
      %p359 = scmp.eq.s32.totalorder %s41, 0
      %p360 = por %p358, %p359
      %p361 = scmp.ne.s32.totalorder %s347, %s348
      %p362 = scmp.eq.s32.totalorder %s42, 1
      %p363 = por %p361, %p362
      %p365 = scmp.ne.s32.totalorder %s348, %s364
      %p366 = scmp.eq.s32.totalorder %s42, 0
      %p367 = por %p365, %p366
      %s368 = ssub.s32 %s44, %s51
      %p369 = scmp.eq.s32.totalorder %s368, 0
      %s371 = sadd.s32 %s370, 1
      %s372 = scalar_select %p369, %s370, %s371
      %p375 = pneg %p369
      %p376 = scmp.eq.s32.totalorder %s36, 1
      %p377 = por %p375, %p376
      %p378 = scmp.ne.s32.totalorder %s370, %s373
      %p379 = scmp.eq.s32.totalorder %s36, 0
      %p380 = por %p378, %p379
      %p381 = scmp.ne.s32.totalorder %s370, %s373
      %p382 = scmp.eq.s32.totalorder %s41, 1
      %p383 = por %p381, %p382
      %p384 = scmp.ne.s32.totalorder %s373, %s374
      %p385 = scmp.eq.s32.totalorder %s41, 0
      %p386 = por %p384, %p385
      %p387 = scmp.ne.s32.totalorder %s373, %s374
      %p388 = scmp.eq.s32.totalorder %s42, 1
      %p389 = por %p387, %p388
      %p391 = scmp.ne.s32.totalorder %s374, %s390
      %p392 = scmp.eq.s32.totalorder %s42, 0
      %p393 = por %p391, %p392
      %s394 = ssub.s32 %s43, %s55
      %p395 = scmp.eq.s32.totalorder %s394, 0
      %s397 = sadd.s32 %s396, 1
      %s398 = scalar_select %p395, %s396, %s397
      %p401 = pneg %p395
      %p402 = scmp.eq.s32.totalorder %s36, 1
      %p403 = por %p401, %p402
      %p404 = scmp.ne.s32.totalorder %s396, %s399
      %p405 = scmp.eq.s32.totalorder %s36, 0
      %p406 = por %p404, %p405
      %p407 = scmp.ne.s32.totalorder %s396, %s399
      %p408 = scmp.eq.s32.totalorder %s41, 1
      %p409 = por %p407, %p408
      %p410 = scmp.ne.s32.totalorder %s399, %s400
      %p411 = scmp.eq.s32.totalorder %s41, 0
      %p412 = por %p410, %p411
      %p413 = scmp.ne.s32.totalorder %s399, %s400
      %p414 = scmp.eq.s32.totalorder %s42, 1
      %p415 = por %p413, %p414
      %p417 = scmp.ne.s32.totalorder %s400, %s416
      %p418 = scmp.eq.s32.totalorder %s42, 0
      %p419 = por %p417, %p418
      %p420 = scmp.le.s32.totalorder 1, %s36
      %p421 = scmp.lt.s32.totalorder %s36, 3
      %p422 = pnand %p420, %p421
      %p423 = pneg %p422
      // Predicated region
      $region9: #{tpu_custom_call.1} parent=5 // pred_check
        _
      $region10: #{tpu_custom_call.1} parent=5 // pred_check_branch
        %425 = sbr.rel (%p422) target = $region12
      $region11: #{tpu_custom_call.1} parent=5 // pred_region
        %s426 = ssub.s32 %s36, 1
        // Predicated region
        $region13: #{tpu_custom_call.1} parent=11 // pred_check
          %p427 = pneg %p74
        $region14: #{tpu_custom_call.1} parent=11 // pred_check_branch
          %429 = sbr.rel (%p427) target = $region16
        $region15: #{tpu_custom_call.1} parent=11 // pred_region
          %s430 = smul.u32 2, %s45
          %432 = vsyncadd [#allocation4], 0
          %s433 = smul.addr %s430, 2
          %s434 = smul.addr %s433, 8
          %s435 = scalar_lea.hbm %s0, %s434
          %s436 = sshll.u32 %s435, 4
          %s437 = int_to_ptr.hbm [resolvable:$true] %s436
          %s438 = sshll.u32 [#allocation3], 4
          %s439 = int_to_ptr.vmem [resolvable:$true] %s438
          %444 = dma.hbm_to_vmem [thread:$0]  %s437, 512, %s439, [#allocation4], 128, 128, 8
        $region16: #{tpu_custom_call.1} parent=11 // pred_fallthru
          _
      $region12: #{tpu_custom_call.1} parent=5 // pred_fallthru
        _
      %p445 = scmp.lt.s32.totalorder %s36, 2
      // Predicated region
      $region17: #{tpu_custom_call.1} parent=5 // pred_check
        %p446 = pneg %p445
      $region18: #{tpu_custom_call.1} parent=5 // pred_check_branch
        %448 = sbr.rel (%p446) target = $region20
      $region19: #{tpu_custom_call.1} parent=5 // pred_region
        // Predicated region
        $region21: #{tpu_custom_call.1} parent=19 // pred_check
          %p449 = pneg %p94
        $region22: #{tpu_custom_call.1} parent=19 // pred_check_branch
          %451 = sbr.rel (%p449) target = $region24
        $region23: #{tpu_custom_call.1} parent=19 // pred_region
          %s452 = sand.u32 %s36, 1
          %s453 = scalar_lea.sflag [#allocation7], %s452
          %s454 = sand.u32 %s84, 1
          %s455 = scalar_lea.vmem [#allocation6], %s454
          %457 = vsyncadd %s453, 0
          %s458 = scalar_lea.hbm %s1, %s44
          %s460 = sshll.u32 %s458, 4
          %s461 = int_to_ptr.hbm [resolvable:$true] %s460
          %s462 = sshll.u32 %s455, 4
          %s463 = int_to_ptr.vmem [resolvable:$true] %s462
          %465 = dma.hbm_to_vmem [thread:$0]  %s461, 16, %s463, %s453
        $region24: #{tpu_custom_call.1} parent=19 // pred_fallthru
          _
        // Predicated region
        $region25: #{tpu_custom_call.1} parent=19 // pred_check
          %p466 = pneg %p120
        $region26: #{tpu_custom_call.1} parent=19 // pred_check_branch
          %468 = sbr.rel (%p466) target = $region28
        $region27: #{tpu_custom_call.1} parent=19 // pred_region
          %s469 = sand.u32 %s36, 1
          %s470 = scalar_lea.sflag [#allocation7], %s469
          %s471 = sand.u32 %s110, 1
          %s472 = scalar_lea.vmem [#allocation8], %s471
          %474 = vsyncadd %s470, 0
          %s475 = scalar_lea.hbm %s2, %s44
          %s477 = sshll.u32 %s475, 4
          %s478 = int_to_ptr.hbm [resolvable:$true] %s477
          %s479 = sshll.u32 %s472, 4
          %s480 = int_to_ptr.vmem [resolvable:$true] %s479
          %482 = dma.hbm_to_vmem [thread:$0]  %s478, 16, %s480, %s470
        $region28: #{tpu_custom_call.1} parent=19 // pred_fallthru
          _
        // Predicated region
        $region29: #{tpu_custom_call.1} parent=19 // pred_check
          %p483 = pneg %p146
        $region30: #{tpu_custom_call.1} parent=19 // pred_check_branch
          %485 = sbr.rel (%p483) target = $region32
        $region31: #{tpu_custom_call.1} parent=19 // pred_region
          %s486 = sand.u32 %s36, 1
          %s487 = scalar_lea.sflag [#allocation10], %s486
          %s488 = sand.u32 %s136, 1
          %s489 = smul.addr %s488, 192
          %s490 = scalar_lea.vmem [#allocation9], %s489
          %492 = vsyncadd %s487, 0
          %s493 = smul.addr %s44, 48
          %s494 = smul.addr %s493, 4
          %s495 = scalar_lea.hbm %s3, %s494
          %s496 = sshll.u32 %s495, 4
          %s497 = int_to_ptr.hbm [resolvable:$true] %s496
          %s498 = sshll.u32 %s490, 4
          %s499 = int_to_ptr.vmem [resolvable:$true] %s498
          %504 = dma.hbm_to_vmem [thread:$0]  %s497, 3072, %s499, %s487, 192, 192, 12
        $region32: #{tpu_custom_call.1} parent=19 // pred_fallthru
          _
        // Predicated region
        $region33: #{tpu_custom_call.1} parent=19 // pred_check
          %p505 = pneg %p172
        $region34: #{tpu_custom_call.1} parent=19 // pred_check_branch
          %507 = sbr.rel (%p505) target = $region36
        $region35: #{tpu_custom_call.1} parent=19 // pred_region
          %s508 = sand.u32 %s36, 1
          %s509 = scalar_lea.sflag [#allocation10], %s508
          %s510 = sand.u32 %s162, 1
          %s511 = smul.addr %s510, 3
          %s512 = scalar_lea.vmem [#allocation11], %s511
          %514 = vsyncadd %s509, 0
          %s515 = smul.addr %s44, 3
          %s516 = scalar_lea.hbm %s4, %s515
          %s518 = sshll.u32 %s516, 4
          %s519 = int_to_ptr.hbm [resolvable:$true] %s518
          %s520 = sshll.u32 %s512, 4
          %s521 = int_to_ptr.vmem [resolvable:$true] %s520
          %523 = dma.hbm_to_vmem [thread:$0]  %s519, 48, %s521, %s509
        $region36: #{tpu_custom_call.1} parent=19 // pred_fallthru
          _
        // Predicated region
        $region37: #{tpu_custom_call.1} parent=19 // pred_check
          %p524 = pneg %p198
        $region38: #{tpu_custom_call.1} parent=19 // pred_check_branch
          %526 = sbr.rel (%p524) target = $region40
        $region39: #{tpu_custom_call.1} parent=19 // pred_region
          %s527 = sand.u32 %s36, 1
          %s528 = scalar_lea.sflag [#allocation13], %s527
          %s529 = sand.u32 %s188, 1
          %s530 = smul.addr %s529, 64
          %s531 = scalar_lea.vmem [#allocation12], %s530
          %533 = vsyncadd %s528, 0
          %s534 = smul.addr %s44, 16
          %s535 = smul.addr %s534, 4
          %s536 = scalar_lea.hbm %s5, %s535
          %s537 = sshll.u32 %s536, 4
          %s538 = int_to_ptr.hbm [resolvable:$true] %s537
          %s539 = sshll.u32 %s531, 4
          %s540 = int_to_ptr.vmem [resolvable:$true] %s539
          %545 = dma.hbm_to_vmem [thread:$0]  %s538, 1024, %s540, %s528, 64, 64, 4
        $region40: #{tpu_custom_call.1} parent=19 // pred_fallthru
          _
        // Predicated region
        $region41: #{tpu_custom_call.1} parent=19 // pred_check
          %p546 = pneg %p224
        $region42: #{tpu_custom_call.1} parent=19 // pred_check_branch
          %548 = sbr.rel (%p546) target = $region44
        $region43: #{tpu_custom_call.1} parent=19 // pred_region
          %s549 = sand.u32 %s36, 1
          %s550 = scalar_lea.sflag [#allocation13], %s549
          %s551 = sand.u32 %s214, 1
          %s552 = scalar_lea.vmem [#allocation14], %s551
          %554 = vsyncadd %s550, 0
          %s555 = scalar_lea.hbm %s6, %s44
          %s557 = sshll.u32 %s555, 4
          %s558 = int_to_ptr.hbm [resolvable:$true] %s557
          %s559 = sshll.u32 %s552, 4
          %s560 = int_to_ptr.vmem [resolvable:$true] %s559
          %562 = dma.hbm_to_vmem [thread:$0]  %s558, 16, %s560, %s550
        $region44: #{tpu_custom_call.1} parent=19 // pred_fallthru
          _
        // Predicated region
        $region45: #{tpu_custom_call.1} parent=19 // pred_check
          %p563 = pneg %p250
        $region46: #{tpu_custom_call.1} parent=19 // pred_check_branch
          %565 = sbr.rel (%p563) target = $region48
        $region47: #{tpu_custom_call.1} parent=19 // pred_region
          %s566 = sand.u32 %s36, 1
          %s567 = scalar_lea.sflag [#allocation16], %s566
          %s568 = sand.u32 %s240, 1
          %s569 = scalar_lea.vmem [#allocation15], %s568
          %571 = vsyncadd %s567, 0
          %s572 = scalar_lea.hbm %s7, %s44
          %s574 = sshll.u32 %s572, 4
          %s575 = int_to_ptr.hbm [resolvable:$true] %s574
          %s576 = sshll.u32 %s569, 4
          %s577 = int_to_ptr.vmem [resolvable:$true] %s576
          %579 = dma.hbm_to_vmem [thread:$0]  %s575, 16, %s577, %s567
        $region48: #{tpu_custom_call.1} parent=19 // pred_fallthru
          _
        // Predicated region
        $region49: #{tpu_custom_call.1} parent=19 // pred_check
          %p580 = pneg %p276
        $region50: #{tpu_custom_call.1} parent=19 // pred_check_branch
          %582 = sbr.rel (%p580) target = $region52
        $region51: #{tpu_custom_call.1} parent=19 // pred_region
          %s583 = sand.u32 %s36, 1
          %s584 = scalar_lea.sflag [#allocation16], %s583
          %s585 = sand.u32 %s266, 1
          %s586 = scalar_lea.vmem [#allocation17], %s585
          %588 = vsyncadd %s584, 0
          %s589 = scalar_lea.hbm %s8, %s44
          %s591 = sshll.u32 %s589, 4
          %s592 = int_to_ptr.hbm [resolvable:$true] %s591
          %s593 = sshll.u32 %s586, 4
          %s594 = int_to_ptr.vmem [resolvable:$true] %s593
          %596 = dma.hbm_to_vmem [thread:$0]  %s592, 16, %s594, %s584
        $region52: #{tpu_custom_call.1} parent=19 // pred_fallthru
          _
        // Predicated region
        $region53: #{tpu_custom_call.1} parent=19 // pred_check
          %p597 = pneg %p302
        $region54: #{tpu_custom_call.1} parent=19 // pred_check_branch
          %599 = sbr.rel (%p597) target = $region56
        $region55: #{tpu_custom_call.1} parent=19 // pred_region
          %s600 = sand.u32 %s36, 1
          %s601 = scalar_lea.sflag [#allocation19], %s600
          %s602 = sand.u32 %s292, 1
          %s603 = smul.addr %s602, 256
          %s604 = scalar_lea.vmem [#allocation18], %s603
          %606 = vsyncadd %s601, 0
          %s607 = smul.addr %s44, 64
          %s608 = smul.addr %s607, 4
          %s609 = scalar_lea.hbm %s9, %s608
          %s610 = sshll.u32 %s609, 4
          %s611 = int_to_ptr.hbm [resolvable:$true] %s610
          %s612 = sshll.u32 %s604, 4
          %s613 = int_to_ptr.vmem [resolvable:$true] %s612
          %618 = dma.hbm_to_vmem [thread:$0]  %s611, 4096, %s613, %s601, 256, 256, 16
        $region56: #{tpu_custom_call.1} parent=19 // pred_fallthru
          _
        // Predicated region
        $region57: #{tpu_custom_call.1} parent=19 // pred_check
          %p619 = pneg %p328
        $region58: #{tpu_custom_call.1} parent=19 // pred_check_branch
          %621 = sbr.rel (%p619) target = $region60
        $region59: #{tpu_custom_call.1} parent=19 // pred_region
          %p622 = scmp.lt.s32.totalorder %s44, 1
          %s623 = scalar_select %p622, %s44, 1
          %s624 = smul.addr %s623, 4
          %s625 = scalar_lea.vmem %s10, %s624
        $region60: #{tpu_custom_call.1} parent=19 // pred_fallthru
          _
        // Predicated region
        $region61: #{tpu_custom_call.1} parent=19 // pred_check
          %p626 = pneg %p354
        $region62: #{tpu_custom_call.1} parent=19 // pred_check_branch
          %628 = sbr.rel (%p626) target = $region64
        $region63: #{tpu_custom_call.1} parent=19 // pred_region
          %s629 = sand.u32 %s36, 1
          %s630 = scalar_lea.sflag [#allocation19], %s629
          %s631 = sand.u32 %s344, 1
          %s632 = smul.addr %s631, 256
          %s633 = scalar_lea.vmem [#allocation20], %s632
          %635 = vsyncadd %s630, 0
          %s636 = smul.addr %s44, 64
          %s637 = smul.addr %s636, 4
          %s638 = scalar_lea.hbm %s11, %s637
          %s639 = sshll.u32 %s638, 4
          %s640 = int_to_ptr.hbm [resolvable:$true] %s639
          %s641 = sshll.u32 %s633, 4
          %s642 = int_to_ptr.vmem [resolvable:$true] %s641
          %647 = dma.hbm_to_vmem [thread:$0]  %s640, 4096, %s642, %s630, 64, 64, 4
        $region64: #{tpu_custom_call.1} parent=19 // pred_fallthru
          _
        // Predicated region
        $region65: #{tpu_custom_call.1} parent=19 // pred_check
          %p648 = pneg %p380
        $region66: #{tpu_custom_call.1} parent=19 // pred_check_branch
          %650 = sbr.rel (%p648) target = $region68
        $region67: #{tpu_custom_call.1} parent=19 // pred_region
          %p651 = scmp.lt.s32.totalorder %s44, 1
          %s652 = scalar_select %p651, %s44, 1
          %s653 = scalar_lea.vmem %s12, %s652
        $region68: #{tpu_custom_call.1} parent=19 // pred_fallthru
          _
      $region20: #{tpu_custom_call.1} parent=5 // pred_fallthru
        _
      %p654 = scmp.le.s32.totalorder 1, %s36
      %p655 = scmp.lt.s32.totalorder %s36, 3
      %p656 = pnand %p654, %p655
      %p657 = pneg %p656
      // Predicated region
      $region69: #{tpu_custom_call.1} parent=5 // pred_check
        _
      $region70: #{tpu_custom_call.1} parent=5 // pred_check_branch
        %659 = sbr.rel (%p656) target = $region72
      $region71: #{tpu_custom_call.1} parent=5 // pred_region
        %s660 = ssub.s32 %s36, 1
        // Predicated region
        $region73: #{tpu_custom_call.1} parent=71 // pred_check
          %p661 = pneg %p74
        $region74: #{tpu_custom_call.1} parent=71 // pred_check_branch
          %663 = sbr.rel (%p661) target = $region76
        $region75: #{tpu_custom_call.1} parent=71 // pred_region
          %665 = dma.done [#allocation4], 512
        $region76: #{tpu_custom_call.1} parent=71 // pred_fallthru
          _
        %s666 = sand.u32 %s41, 1
        %s667 = scalar_lea.sflag [#allocation7], %s666
        %s668 = sand.u32 %s87, 1
        %s669 = scalar_lea.vmem [#allocation6], %s668
        // Predicated region
        $region77: #{tpu_custom_call.1} parent=71 // pred_check
          %p670 = pneg %p100
        $region78: #{tpu_custom_call.1} parent=71 // pred_check_branch
          %672 = sbr.rel (%p670) target = $region80
        $region79: #{tpu_custom_call.1} parent=71 // pred_region
          %674 = dma.done %s667, 16
        $region80: #{tpu_custom_call.1} parent=71 // pred_fallthru
          _
        %s675 = sand.u32 %s41, 1
        %s676 = scalar_lea.sflag [#allocation7], %s675
        %s677 = sand.u32 %s113, 1
        %s678 = scalar_lea.vmem [#allocation8], %s677
        // Predicated region
        $region81: #{tpu_custom_call.1} parent=71 // pred_check
          %p679 = pneg %p126
        $region82: #{tpu_custom_call.1} parent=71 // pred_check_branch
          %681 = sbr.rel (%p679) target = $region84
        $region83: #{tpu_custom_call.1} parent=71 // pred_region
          %683 = dma.done %s676, 16
        $region84: #{tpu_custom_call.1} parent=71 // pred_fallthru
          _
        %s684 = sand.u32 %s41, 1
        %s685 = scalar_lea.sflag [#allocation10], %s684
        %s686 = sand.u32 %s139, 1
        %s687 = smul.addr %s686, 192
        %s688 = scalar_lea.vmem [#allocation9], %s687
        // Predicated region
        $region85: #{tpu_custom_call.1} parent=71 // pred_check
          %p689 = pneg %p152
        $region86: #{tpu_custom_call.1} parent=71 // pred_check_branch
          %691 = sbr.rel (%p689) target = $region88
        $region87: #{tpu_custom_call.1} parent=71 // pred_region
          %693 = dma.done %s685, 3072
        $region88: #{tpu_custom_call.1} parent=71 // pred_fallthru
          _
        %s694 = sand.u32 %s41, 1
        %s695 = scalar_lea.sflag [#allocation10], %s694
        %s696 = sand.u32 %s165, 1
        %s697 = smul.addr %s696, 3
        %s698 = scalar_lea.vmem [#allocation11], %s697
        // Predicated region
        $region89: #{tpu_custom_call.1} parent=71 // pred_check
          %p699 = pneg %p178
        $region90: #{tpu_custom_call.1} parent=71 // pred_check_branch
          %701 = sbr.rel (%p699) target = $region92
        $region91: #{tpu_custom_call.1} parent=71 // pred_region
          %703 = dma.done %s695, 48
        $region92: #{tpu_custom_call.1} parent=71 // pred_fallthru
          _
        %s704 = sand.u32 %s41, 1
        %s705 = scalar_lea.sflag [#allocation13], %s704
        %s706 = sand.u32 %s191, 1
        %s707 = smul.addr %s706, 64
        %s708 = scalar_lea.vmem [#allocation12], %s707
        // Predicated region
        $region93: #{tpu_custom_call.1} parent=71 // pred_check
          %p709 = pneg %p204
        $region94: #{tpu_custom_call.1} parent=71 // pred_check_branch
          %711 = sbr.rel (%p709) target = $region96
        $region95: #{tpu_custom_call.1} parent=71 // pred_region
          %713 = dma.done %s705, 1024
        $region96: #{tpu_custom_call.1} parent=71 // pred_fallthru
          _
        %s714 = sand.u32 %s41, 1
        %s715 = scalar_lea.sflag [#allocation13], %s714
        %s716 = sand.u32 %s217, 1
        %s717 = scalar_lea.vmem [#allocation14], %s716
        // Predicated region
        $region97: #{tpu_custom_call.1} parent=71 // pred_check
          %p718 = pneg %p230
        $region98: #{tpu_custom_call.1} parent=71 // pred_check_branch
          %720 = sbr.rel (%p718) target = $region100
        $region99: #{tpu_custom_call.1} parent=71 // pred_region
          %722 = dma.done %s715, 16
        $region100: #{tpu_custom_call.1} parent=71 // pred_fallthru
          _
        %s723 = sand.u32 %s41, 1
        %s724 = scalar_lea.sflag [#allocation16], %s723
        %s725 = sand.u32 %s243, 1
        %s726 = scalar_lea.vmem [#allocation15], %s725
        // Predicated region
        $region101: #{tpu_custom_call.1} parent=71 // pred_check
          %p727 = pneg %p256
        $region102: #{tpu_custom_call.1} parent=71 // pred_check_branch
          %729 = sbr.rel (%p727) target = $region104
        $region103: #{tpu_custom_call.1} parent=71 // pred_region
          %731 = dma.done %s724, 16
        $region104: #{tpu_custom_call.1} parent=71 // pred_fallthru
          _
        %s732 = sand.u32 %s41, 1
        %s733 = scalar_lea.sflag [#allocation16], %s732
        %s734 = sand.u32 %s269, 1
        %s735 = scalar_lea.vmem [#allocation17], %s734
        // Predicated region
        $region105: #{tpu_custom_call.1} parent=71 // pred_check
          %p736 = pneg %p282
        $region106: #{tpu_custom_call.1} parent=71 // pred_check_branch
          %738 = sbr.rel (%p736) target = $region108
        $region107: #{tpu_custom_call.1} parent=71 // pred_region
          %740 = dma.done %s733, 16
        $region108: #{tpu_custom_call.1} parent=71 // pred_fallthru
          _
        %s741 = sand.u32 %s41, 1
        %s742 = scalar_lea.sflag [#allocation19], %s741
        %s743 = sand.u32 %s295, 1
        %s744 = smul.addr %s743, 256
        %s745 = scalar_lea.vmem [#allocation18], %s744
        // Predicated region
        $region109: #{tpu_custom_call.1} parent=71 // pred_check
          %p746 = pneg %p308
        $region110: #{tpu_custom_call.1} parent=71 // pred_check_branch
          %748 = sbr.rel (%p746) target = $region112
        $region111: #{tpu_custom_call.1} parent=71 // pred_region
          %750 = dma.done %s742, 4096
        $region112: #{tpu_custom_call.1} parent=71 // pred_fallthru
          _
        %s751 = sand.u32 %s41, 1
        %s752 = scalar_lea.sflag [#allocation19], %s751
        %s753 = sand.u32 %s347, 1
        %s754 = smul.addr %s753, 256
        %s755 = scalar_lea.vmem [#allocation20], %s754
        // Predicated region
        $region113: #{tpu_custom_call.1} parent=71 // pred_check
          %p756 = pneg %p360
        $region114: #{tpu_custom_call.1} parent=71 // pred_check_branch
          %758 = sbr.rel (%p756) target = $region116
        $region115: #{tpu_custom_call.1} parent=71 // pred_region
          %760 = dma.done %s752, 4096
        $region116: #{tpu_custom_call.1} parent=71 // pred_fallthru
          _
        %p761 = pneg %p74
        %p762 = pneg %p71
        %s763 = sand.u32 %s41, 1
        %s764 = scalar_lea.sflag [#allocation7], %s763
        %s765 = sand.u32 %s87, 1
        %s766 = scalar_lea.vmem [#allocation6], %s765
        %p767 = pneg %p100
        %p768 = pneg %p97
        %s769 = sand.u32 %s41, 1
        %s770 = scalar_lea.sflag [#allocation7], %s769
        %s771 = sand.u32 %s113, 1
        %s772 = scalar_lea.vmem [#allocation8], %s771
        %p773 = pneg %p126
        %p774 = pneg %p123
        %s775 = sand.u32 %s41, 1
        %s776 = scalar_lea.sflag [#allocation10], %s775
        %s777 = sand.u32 %s139, 1
        %s778 = smul.addr %s777, 192
        %s779 = scalar_lea.vmem [#allocation9], %s778
        %p780 = pneg %p152
        %p781 = pneg %p149
        %s782 = sand.u32 %s41, 1
        %s783 = scalar_lea.sflag [#allocation10], %s782
        %s784 = sand.u32 %s165, 1
        %s785 = smul.addr %s784, 3
        %s786 = scalar_lea.vmem [#allocation11], %s785
        %p787 = pneg %p178
        %p788 = pneg %p175
        %s789 = sand.u32 %s41, 1
        %s790 = scalar_lea.sflag [#allocation13], %s789
        %s791 = sand.u32 %s191, 1
        %s792 = smul.addr %s791, 64
        %s793 = scalar_lea.vmem [#allocation12], %s792
        %p794 = pneg %p204
        %p795 = pneg %p201
        %s796 = sand.u32 %s41, 1
        %s797 = scalar_lea.sflag [#allocation13], %s796
        %s798 = sand.u32 %s217, 1
        %s799 = scalar_lea.vmem [#allocation14], %s798
        %p800 = pneg %p230
        %p801 = pneg %p227
        %s802 = sand.u32 %s41, 1
        %s803 = scalar_lea.sflag [#allocation16], %s802
        %s804 = sand.u32 %s243, 1
        %s805 = scalar_lea.vmem [#allocation15], %s804
        %p806 = pneg %p256
        %p807 = pneg %p253
        %s808 = sand.u32 %s41, 1
        %s809 = scalar_lea.sflag [#allocation16], %s808
        %s810 = sand.u32 %s269, 1
        %s811 = scalar_lea.vmem [#allocation17], %s810
        %p812 = pneg %p282
        %p813 = pneg %p279
        %s814 = sand.u32 %s41, 1
        %s815 = scalar_lea.sflag [#allocation19], %s814
        %s816 = sand.u32 %s295, 1
        %s817 = smul.addr %s816, 256
        %s818 = scalar_lea.vmem [#allocation18], %s817
        %p819 = pneg %p308
        %p820 = pneg %p305
        %p821 = scmp.lt.s32.totalorder %s46, 1
        %s822 = scalar_select %p821, %s46, 1
        %s823 = smul.addr %s822, 4
        %s824 = scalar_lea.vmem %s10, %s823
        %p825 = pneg %p334
        %p826 = pneg %p331
        %s827 = sand.u32 %s41, 1
        %s828 = scalar_lea.sflag [#allocation19], %s827
        %s829 = sand.u32 %s347, 1
        %s830 = smul.addr %s829, 256
        %s831 = scalar_lea.vmem [#allocation20], %s830
        %p832 = pneg %p360
        %p833 = pneg %p357
        %p834 = scmp.lt.s32.totalorder %s46, 1
        %s835 = scalar_select %p834, %s46, 1
        %s836 = scalar_lea.vmem %s12, %s835
        %p837 = pneg %p386
        %p838 = pneg %p383
        %p839 = pneg %p412
        %p840 = pneg %p409
        %s841 = smul.u32 2, %s45
        %p842 = scmp.lt.s32.totalorder %s46, 1
        %s843 = scalar_select %p842, %s46, 1
        %s844 = smul.addr %s843, 4
        %s845 = scalar_lea.vmem %s10, %s844
        %p846 = scmp.lt.s32.totalorder %s46, 1
        %s847 = scalar_select %p846, %s46, 1
        %s848 = scalar_lea.vmem %s12, %s847
        %s849 = smul.u32 2, %s45
        %p851 = scmp.eq.s32.totalorder %s46, 0
        // Predicated region
        $region117: #{tpu_custom_call.1} parent=71 // pred_check
          %p852 = pneg %p851
        $region118: #{tpu_custom_call.1} parent=71 // pred_check_branch
          %854 = sbr.rel (%p852) target = $region120
        $region119: #{tpu_custom_call.1} parent=71 // pred_region
          %v855 = vld [vmem:[#allocation3] sm:$0xff]
          %v856 = vld [vmem:[#allocation3 + $0x8] sm:$0xff]
          %v857 = vld [vmem:[#allocation3 + $0x10] sm:$0xff]
          %v858 = vld [vmem:[#allocation3 + $0x18] sm:$0xff]
          %859 = vst [vmem:[#allocation2] sm:$0xff] %v855
          %860 = vst [vmem:[#allocation2 + $0x8] sm:$0xff] %v856
          %861 = vst [vmem:[#allocation2 + $0x10] sm:$0xff] %v857
          %862 = vst [vmem:[#allocation2 + $0x18] sm:$0xff] %v858
        $region120: #{tpu_custom_call.1} parent=71 // pred_fallthru
          _
        %v863 = vld [vmem:[#allocation2] sm:$0xff]
        %v864 = vld [vmem:[#allocation2 + $0x8] sm:$0xff]
        %v865 = vld [vmem:[#allocation2 + $0x10] sm:$0xff]
        %v866 = vld [vmem:[#allocation2 + $0x18] sm:$0xff]
        %v867 = vld [vmem:[%s669] sm:$0x1]
        %v868 = vld [vmem:[%s678] sm:$0x1]
        %869 = vadd.xlane.f32.xlu0 %v863
        %v870 = vpop.xlane.xlu0 %869
        %871 = vadd.xlane.f32.xlu0 %v864
        %v872 = vpop.xlane.xlu0 %871
        %873 = vadd.xlane.f32.xlu0 %v865
        %v874 = vpop.xlane.xlu0 %873
        %875 = vadd.xlane.f32.xlu0 %v866
        %v876 = vpop.xlane.xlu0 %875
        %v877 = vrcp.pop 128.0
        %v878 = vmul.f32 128.0, %v877
        %v879 = vsub.f32 1.0, %v878
        %v880 = vmul.f32 %v877, %v879
        %v881 = vadd.f32 %v877, %v880
        %vm882 = vweird.f32 %v877
        %v883 = vsel %vm882, %v877, %v881
        %v884 = vmul.f32 %v870, %v883
        %v885 = vmul.f32 %v872, %v883
        %v886 = vmul.f32 %v874, %v883
        %v887 = vmul.f32 %v876, %v883
        %v888 = vsub.f32 %v863, %v884
        %v889 = vsub.f32 %v864, %v885
        %v890 = vsub.f32 %v865, %v886
        %v891 = vsub.f32 %v866, %v887
        %v892 = vmul.f32 %v888, %v888
        %v893 = vmul.f32 %v889, %v889
        %v894 = vmul.f32 %v890, %v890
        %v895 = vmul.f32 %v891, %v891
        %896 = vadd.xlane.f32.xlu0 %v892
        %v897 = vpop.xlane.xlu0 %896
        %898 = vadd.xlane.f32.xlu0 %v893
        %v899 = vpop.xlane.xlu0 %898
        %900 = vadd.xlane.f32.xlu0 %v894
        %v901 = vpop.xlane.xlu0 %900
        %902 = vadd.xlane.f32.xlu0 %v895
        %v903 = vpop.xlane.xlu0 %902
        %v904 = vmul.f32 %v897, %v883
        %v905 = vmul.f32 %v899, %v883
        %v906 = vmul.f32 %v901, %v883
        %v907 = vmul.f32 %v903, %v883
        %v908 = vadd.f32 %v904, 1e-05
        %v909 = vadd.f32 %v905, 1e-05
        %v910 = vadd.f32 %v906, 1e-05
        %v911 = vadd.f32 %v907, 1e-05
        %v912 = vrsqrt.pop %v908
        %v913 = vmul.f32 %v912, %v908
        %v914 = vmul.f32 %v913, %v912
        %v915 = vmul.f32 0.5, %v914
        %v916 = vsub.f32 1.5, %v915
        %v917 = vmul.f32 %v912, %v916
        %vm918 = vweird.f32 %v908
        %vm919 = vweird.f32 %v912
        %vm920 = vmor %vm918, %vm919
        %v921 = vsel %vm920, %v912, %v917
        %v922 = vrsqrt.pop %v909
        %v923 = vmul.f32 %v922, %v909
        %v924 = vmul.f32 %v923, %v922
        %v925 = vmul.f32 0.5, %v924
        %v926 = vsub.f32 1.5, %v925
        %v927 = vmul.f32 %v922, %v926
        %vm928 = vweird.f32 %v909
        %vm929 = vweird.f32 %v922
        %vm930 = vmor %vm928, %vm929
        %v931 = vsel %vm930, %v922, %v927
        %v932 = vrsqrt.pop %v910
        %v933 = vmul.f32 %v932, %v910
        %v934 = vmul.f32 %v933, %v932
        %v935 = vmul.f32 0.5, %v934
        %v936 = vsub.f32 1.5, %v935
        %v937 = vmul.f32 %v932, %v936
        %vm938 = vweird.f32 %v910
        %vm939 = vweird.f32 %v932
        %vm940 = vmor %vm938, %vm939
        %v941 = vsel %vm940, %v932, %v937
        %v942 = vrsqrt.pop %v911
        %v943 = vmul.f32 %v942, %v911
        %v944 = vmul.f32 %v943, %v942
        %v945 = vmul.f32 0.5, %v944
        %v946 = vsub.f32 1.5, %v945
        %v947 = vmul.f32 %v942, %v946
        %vm948 = vweird.f32 %v911
        %vm949 = vweird.f32 %v942
        %vm950 = vmor %vm948, %vm949
        %v951 = vsel %vm950, %v942, %v947
        %v952 = vmul.f32 %v888, %v921
        %v953 = vmul.f32 %v889, %v931
        %v954 = vmul.f32 %v890, %v941
        %v955 = vmul.f32 %v891, %v951
        %v957 = vperm.slane %v867, 0
        %v959 = vmul.f32 %v952, %v957
        %v960 = vmul.f32 %v953, %v957
        %v961 = vmul.f32 %v954, %v957
        %v962 = vmul.f32 %v955, %v957
        %v964 = vperm.slane %v868, 0
        %v966 = vadd.f32 %v959, %v964
        %v967 = vadd.f32 %v960, %v964
        %v968 = vadd.f32 %v961, %v964
        %v969 = vadd.f32 %v962, %v964
        %v970 = vpack.c.bf16 %v967, %v966
        %v971 = vpack.c.bf16 %v969, %v968
        %v972 = vld [vmem:[%s688] sm:$0xff]
        %v973 = vld [vmem:[%s688 + $0x8] sm:$0xf]
        %v974 = vld [vmem:[%s688 + $0xc] sm:$0xff]
        %v975 = vld [vmem:[%s688 + $0x14] sm:$0xf]
        %v976 = vld [vmem:[%s688 + $0x18] sm:$0xff]
        %v977 = vld [vmem:[%s688 + $0x20] sm:$0xf]
        %v978 = vld [vmem:[%s688 + $0x24] sm:$0xff]
        %v979 = vld [vmem:[%s688 + $0x2c] sm:$0xf]
        %v980 = vld [vmem:[%s688 + $0x30] sm:$0xff]
        %v981 = vld [vmem:[%s688 + $0x38] sm:$0xf]
        %v982 = vld [vmem:[%s688 + $0x3c] sm:$0xff]
        %v983 = vld [vmem:[%s688 + $0x44] sm:$0xf]
        %v984 = vld [vmem:[%s688 + $0x48] sm:$0xff]
        %v985 = vld [vmem:[%s688 + $0x50] sm:$0xf]
        %v986 = vld [vmem:[%s688 + $0x54] sm:$0xff]
        %v987 = vld [vmem:[%s688 + $0x5c] sm:$0xf]
        %v988 = vld [vmem:[%s688 + $0x60] sm:$0xff]
        %v989 = vld [vmem:[%s688 + $0x68] sm:$0xf]
        %v990 = vld [vmem:[%s688 + $0x6c] sm:$0xff]
        %v991 = vld [vmem:[%s688 + $0x74] sm:$0xf]
        %v992 = vld [vmem:[%s688 + $0x78] sm:$0xff]
        %v993 = vld [vmem:[%s688 + $0x80] sm:$0xf]
        %v994 = vld [vmem:[%s688 + $0x84] sm:$0xff]
        %v995 = vld [vmem:[%s688 + $0x8c] sm:$0xf]
        %v996 = vld [vmem:[%s688 + $0x90] sm:$0xff]
        %v997 = vld [vmem:[%s688 + $0x98] sm:$0xf]
        %v998 = vld [vmem:[%s688 + $0x9c] sm:$0xff]
        %v999 = vld [vmem:[%s688 + $0xa4] sm:$0xf]
        %v1000 = vld [vmem:[%s688 + $0xa8] sm:$0xff]
        %v1001 = vld [vmem:[%s688 + $0xb0] sm:$0xf]
        %v1002 = vld [vmem:[%s688 + $0xb4] sm:$0xff]
        %v1003 = vld [vmem:[%s688 + $0xbc] sm:$0xf]
        %v1004 = vld [vmem:[%s698] sm:$0x7]
        %v1006 = vperm.slane %v1004, 0
        %v1007 = vperm.slane %v1004, 1
        %v1008 = vperm.slane %v1004, 2
        %v1044 = vunpack.c.l.b16 %v972
        %v1045 = vunpack.c.h.b16 %v972
        %v1046 = vunpack.c.l.b16 %v973
        %v1047 = vunpack.c.l.b16 %v974
        %v1048 = vunpack.c.h.b16 %v974
        %v1049 = vunpack.c.l.b16 %v975
        %v1050 = vunpack.c.l.b16 %v976
        %v1051 = vunpack.c.h.b16 %v976
        %v1052 = vunpack.c.l.b16 %v977
        %v1053 = vunpack.c.l.b16 %v978
        %v1054 = vunpack.c.h.b16 %v978
        %v1055 = vunpack.c.l.b16 %v979
        %v1056 = vunpack.c.l.b16 %v980
        %v1057 = vunpack.c.h.b16 %v980
        %v1058 = vunpack.c.l.b16 %v981
        %v1059 = vunpack.c.l.b16 %v982
        %v1060 = vunpack.c.h.b16 %v982
        %v1061 = vunpack.c.l.b16 %v983
        %v1062 = vunpack.c.l.b16 %v984
        %v1063 = vunpack.c.h.b16 %v984
        %v1064 = vunpack.c.l.b16 %v985
        %v1065 = vunpack.c.l.b16 %v986
        %v1066 = vunpack.c.h.b16 %v986
        %v1067 = vunpack.c.l.b16 %v987
        %v1068 = vunpack.c.l.b16 %v988
        %v1069 = vunpack.c.h.b16 %v988
        %v1070 = vunpack.c.l.b16 %v989
        %v1071 = vunpack.c.l.b16 %v990
        %v1072 = vunpack.c.h.b16 %v990
        %v1073 = vunpack.c.l.b16 %v991
        %v1074 = vunpack.c.l.b16 %v992
        %v1075 = vunpack.c.h.b16 %v992
        %v1076 = vunpack.c.l.b16 %v993
        %v1077 = vunpack.c.l.b16 %v994
        %v1078 = vunpack.c.h.b16 %v994
        %v1079 = vunpack.c.l.b16 %v995
        %v1080 = vunpack.c.l.b16 %v996
        %v1081 = vunpack.c.h.b16 %v996
        %v1082 = vunpack.c.l.b16 %v997
        %v1083 = vunpack.c.l.b16 %v998
        %v1084 = vunpack.c.h.b16 %v998
        %v1085 = vunpack.c.l.b16 %v999
        %v1086 = vunpack.c.l.b16 %v1000
        %v1087 = vunpack.c.h.b16 %v1000
        %v1088 = vunpack.c.l.b16 %v1001
        %v1089 = vunpack.c.l.b16 %v1002
        %v1090 = vunpack.c.h.b16 %v1002
        %v1091 = vunpack.c.l.b16 %v1003
        %v1092 = vpack.c.b16 %v1047, %v1044
        %v1093 = vpack.c.b16 %v1048, %v1045
        %v1094 = vpack.c.b16 %v1049, %v1046
        %v1095 = vpack.c.b16 %v1053, %v1050
        %v1096 = vpack.c.b16 %v1054, %v1051
        %v1097 = vpack.c.b16 %v1055, %v1052
        %v1098 = vpack.c.b16 %v1059, %v1056
        %v1099 = vpack.c.b16 %v1060, %v1057
        %v1100 = vpack.c.b16 %v1061, %v1058
        %v1101 = vpack.c.b16 %v1065, %v1062
        %v1102 = vpack.c.b16 %v1066, %v1063
        %v1103 = vpack.c.b16 %v1067, %v1064
        %v1104 = vpack.c.b16 %v1071, %v1068
        %v1105 = vpack.c.b16 %v1072, %v1069
        %v1106 = vpack.c.b16 %v1073, %v1070
        %v1107 = vpack.c.b16 %v1077, %v1074
        %v1108 = vpack.c.b16 %v1078, %v1075
        %v1109 = vpack.c.b16 %v1079, %v1076
        %v1110 = vpack.c.b16 %v1083, %v1080
        %v1111 = vpack.c.b16 %v1084, %v1081
        %v1112 = vpack.c.b16 %v1085, %v1082
        %v1113 = vpack.c.b16 %v1089, %v1086
        %v1114 = vpack.c.b16 %v1090, %v1087
        %v1115 = vpack.c.b16 %v1091, %v1088
        %1140 = vmatpush.bf16.msra.mxu0 %v1113
        %1141 = vmatpush.bf16.msra.mxu0 %v1110
        %1142 = vmatpush.bf16.msra.mxu0 %v1107
        %1143 = vmatpush.bf16.msra.mxu0 %v1104
        %1144 = vmatpush.bf16.msra.mxu0 %v1101
        %1145 = vmatpush.bf16.msra.mxu0 %v1098
        %1146 = vmatpush.bf16.msra.mxu0 %v1095
        %1147 = vmatpush.bf16.msra.mxu0 %v1092
        %1148 = vmatmul.bf16.gmra.mxu0 %v970
        %v1149 = vpop.f32.mrf.mxu0
        %v1150 = vadd.f32 %v1006, %v1149
        %v1151 = vpop.f32.mrf.mxu0
        %v1152 = vadd.f32 %v1006, %v1151
        %1153 = vmatmul.bf16.gmra.mxu0 %v971
        %v1154 = vpop.f32.mrf.mxu0
        %v1155 = vadd.f32 %v1006, %v1154
        %v1156 = vpop.f32.mrf.mxu0
        %v1157 = vadd.f32 %v1006, %v1156
        %1158 = vdwg.mxu0
        %1159 = vmatpush.bf16.msra.mxu0 %v1114
        %1160 = vmatpush.bf16.msra.mxu0 %v1111
        %1161 = vmatpush.bf16.msra.mxu0 %v1108
        %1162 = vmatpush.bf16.msra.mxu0 %v1105
        %1163 = vmatpush.bf16.msra.mxu0 %v1102
        %1164 = vmatpush.bf16.msra.mxu0 %v1099
        %1165 = vmatpush.bf16.msra.mxu0 %v1096
        %1166 = vmatpush.bf16.msra.mxu0 %v1093
        %1167 = vmatmul.bf16.gmra.mxu0 %v970
        %v1168 = vpop.f32.mrf.mxu0
        %v1169 = vadd.f32 %v1007, %v1168
        %v1170 = vpop.f32.mrf.mxu0
        %v1171 = vadd.f32 %v1007, %v1170
        %1172 = vmatmul.bf16.gmra.mxu0 %v971
        %v1173 = vpop.f32.mrf.mxu0
        %v1174 = vadd.f32 %v1007, %v1173
        %v1175 = vpop.f32.mrf.mxu0
        %v1176 = vadd.f32 %v1007, %v1175
        %1177 = vdwg.mxu0
        %1178 = vmatpush.bf16.msra.mxu0 %v1115
        %1179 = vmatpush.bf16.msra.mxu0 %v1112
        %1180 = vmatpush.bf16.msra.mxu0 %v1109
        %1181 = vmatpush.bf16.msra.mxu0 %v1106
        %1182 = vmatpush.bf16.msra.mxu0 %v1103
        %1183 = vmatpush.bf16.msra.mxu0 %v1100
        %1184 = vmatpush.bf16.msra.mxu0 %v1097
        %1185 = vmatpush.bf16.msra.mxu0 %v1094
        %1186 = vmatmul.bf16.gmra.mxu0 %v970
        %v1187 = vpop.f32.mrf.mxu0
        %v1188 = vadd.f32 %v1008, %v1187
        %v1189 = vpop.f32.mrf.mxu0
        %v1190 = vadd.f32 %v1008, %v1189
        %1191 = vmatmul.bf16.gmra.mxu0 %v971
        %v1192 = vpop.f32.mrf.mxu0
        %v1193 = vadd.f32 %v1008, %v1192
        %v1194 = vpop.f32.mrf.mxu0
        %v1195 = vadd.f32 %v1008, %v1194
        %1196 = vdwg.mxu0
        %v1197 = vmul.f32 %v1150, 0.17677669
        %v1198 = vmul.f32 %v1152, 0.17677669
        %v1199 = vmul.f32 %v1155, 0.17677669
        %v1200 = vmul.f32 %v1157, 0.17677669
        %v1201 = vpack.c.bf16 %v1197, %v1197
        %v1202 = vpack.c.bf16 %v1198, %v1198
        %v1203 = vpack.c.bf16 %v1199, %v1199
        %v1204 = vpack.c.bf16 %v1200, %v1200
        %v1205 = vpack.c.bf16 %v1169, %v1169
        %v1206 = vpack.c.bf16 %v1171, %v1171
        %v1207 = vpack.c.bf16 %v1174, %v1174
        %v1208 = vpack.c.bf16 %v1176, %v1176
        %v1209 = vpack.c.bf16 %v1188, %v1188
        %v1210 = vpack.c.bf16 %v1190, %v1190
        %v1211 = vpack.c.bf16 %v1193, %v1193
        %v1212 = vpack.c.bf16 %v1195, %v1195
        %1217 = vrot.lane.b32.xlu0 %v1201, 96
        %v1218 = vpop.permute.xlu0 %1217
        %1219 = vrot.lane.b32.xlu0 %v1202, 96
        %v1220 = vpop.permute.xlu0 %1219
        %1221 = vrot.lane.b32.xlu0 %v1203, 96
        %v1222 = vpop.permute.xlu0 %1221
        %1223 = vrot.lane.b32.xlu0 %v1204, 96
        %v1224 = vpop.permute.xlu0 %1223
        %1225 = vrot.lane.b32.xlu0 %v1201, 64
        %v1226 = vpop.permute.xlu0 %1225
        %1227 = vrot.lane.b32.xlu0 %v1202, 64
        %v1228 = vpop.permute.xlu0 %1227
        %1229 = vrot.lane.b32.xlu0 %v1203, 64
        %v1230 = vpop.permute.xlu0 %1229
        %1231 = vrot.lane.b32.xlu0 %v1204, 64
        %v1232 = vpop.permute.xlu0 %1231
        %1233 = vrot.lane.b32.xlu0 %v1201, 32
        %v1234 = vpop.permute.xlu0 %1233
        %1235 = vrot.lane.b32.xlu0 %v1202, 32
        %v1236 = vpop.permute.xlu0 %1235
        %1237 = vrot.lane.b32.xlu0 %v1203, 32
        %v1238 = vpop.permute.xlu0 %1237
        %1239 = vrot.lane.b32.xlu0 %v1204, 32
        %v1240 = vpop.permute.xlu0 %1239
        %v1243 = vpack.i.b16 %v1218, %v1201
        %v1244 = vshrl.u32 %v1201, 16
        %v1245 = vshrl.u32 %v1218, 16
        %v1246 = vpack.i.b16 %v1245, %v1244
        %v1249 = vpack.i.b16 %v1234, %v1226
        %v1250 = vshrl.u32 %v1226, 16
        %v1251 = vshrl.u32 %v1234, 16
        %v1252 = vpack.i.b16 %v1251, %v1250
        %v1255 = vpack.i.b16 %v1220, %v1202
        %v1256 = vshrl.u32 %v1202, 16
        %v1257 = vshrl.u32 %v1220, 16
        %v1258 = vpack.i.b16 %v1257, %v1256
        %v1261 = vpack.i.b16 %v1236, %v1228
        %v1262 = vshrl.u32 %v1228, 16
        %v1263 = vshrl.u32 %v1236, 16
        %v1264 = vpack.i.b16 %v1263, %v1262
        %v1267 = vpack.i.b16 %v1222, %v1203
        %v1268 = vshrl.u32 %v1203, 16
        %v1269 = vshrl.u32 %v1222, 16
        %v1270 = vpack.i.b16 %v1269, %v1268
        %v1273 = vpack.i.b16 %v1238, %v1230
        %v1274 = vshrl.u32 %v1230, 16
        %v1275 = vshrl.u32 %v1238, 16
        %v1276 = vpack.i.b16 %v1275, %v1274
        %v1279 = vpack.i.b16 %v1224, %v1204
        %v1280 = vshrl.u32 %v1204, 16
        %v1281 = vshrl.u32 %v1224, 16
        %v1282 = vpack.i.b16 %v1281, %v1280
        %v1285 = vpack.i.b16 %v1240, %v1232
        %v1286 = vshrl.u32 %v1232, 16
        %v1287 = vshrl.u32 %v1240, 16
        %v1288 = vpack.i.b16 %v1287, %v1286
        %v1291 = vunpack.c.l.s4 1983009808
        %v1292 = vunpack.c.0.s8 %v1291
        %v1293 = vperm.slane %v1243, %v1292
        %v1296 = vunpack.c.l.s4 1983009808
        %v1297 = vunpack.c.0.s8 %v1296
        %v1298 = vperm.slane %v1249, %v1297
        %v1299 = vrot.slane %v1298, 4
        %vm1300 = vcmask 1047556
        %v1301 = vsel %vm1300, %v1299, %v1293
        %v1302 = vrot.slane %v1293, 4
        %v1303 = vsel %vm1300, %v1298, %v1302
        %v1305 = vunpack.c.l.s4 1934713408
        %v1306 = vunpack.c.0.s8 %v1305
        %v1307 = vperm.slane %v1301, %v1306
        %v1309 = vunpack.c.l.s4 1934713408
        %v1310 = vunpack.c.0.s8 %v1309
        %v1311 = vperm.slane %v1303, %v1310
        %v1312 = vrot.slane %v1307, 4
        %v1313 = vsel %vm1300, 0, %v1312
        %v1314 = vrot.slane %v1311, 4
        %v1315 = vsel %vm1300, 0, %v1314
        %v1318 = vunpack.c.l.s4 1983009808
        %v1319 = vunpack.c.0.s8 %v1318
        %v1320 = vperm.slane %v1246, %v1319
        %v1323 = vunpack.c.l.s4 1983009808
        %v1324 = vunpack.c.0.s8 %v1323
        %v1325 = vperm.slane %v1252, %v1324
        %v1326 = vrot.slane %v1325, 4
        %v1327 = vsel %vm1300, %v1326, %v1320
        %v1328 = vrot.slane %v1320, 4
        %v1329 = vsel %vm1300, %v1325, %v1328
        %v1331 = vunpack.c.l.s4 1934713408
        %v1332 = vunpack.c.0.s8 %v1331
        %v1333 = vperm.slane %v1327, %v1332
        %v1335 = vunpack.c.l.s4 1934713408
        %v1336 = vunpack.c.0.s8 %v1335
        %v1337 = vperm.slane %v1329, %v1336
        %v1338 = vrot.slane %v1333, 4
        %v1339 = vsel %vm1300, 0, %v1338
        %v1340 = vrot.slane %v1337, 4
        %v1341 = vsel %vm1300, 0, %v1340
        %v1344 = vunpack.c.l.s4 1983009808
        %v1345 = vunpack.c.0.s8 %v1344
        %v1346 = vperm.slane %v1255, %v1345
        %v1349 = vunpack.c.l.s4 1983009808
        %v1350 = vunpack.c.0.s8 %v1349
        %v1351 = vperm.slane %v1261, %v1350
        %v1352 = vrot.slane %v1351, 4
        %v1353 = vsel %vm1300, %v1352, %v1346
        %v1354 = vrot.slane %v1346, 4
        %v1355 = vsel %vm1300, %v1351, %v1354
        %v1357 = vunpack.c.l.s4 1934713408
        %v1358 = vunpack.c.0.s8 %v1357
        %v1359 = vperm.slane %v1353, %v1358
        %v1361 = vunpack.c.l.s4 1934713408
        %v1362 = vunpack.c.0.s8 %v1361
        %v1363 = vperm.slane %v1355, %v1362
        %v1364 = vrot.slane %v1359, 4
        %v1365 = vsel %vm1300, 0, %v1364
        %v1366 = vrot.slane %v1363, 4
        %v1367 = vsel %vm1300, 0, %v1366
        %v1370 = vunpack.c.l.s4 1983009808
        %v1371 = vunpack.c.0.s8 %v1370
        %v1372 = vperm.slane %v1258, %v1371
        %v1375 = vunpack.c.l.s4 1983009808
        %v1376 = vunpack.c.0.s8 %v1375
        %v1377 = vperm.slane %v1264, %v1376
        %v1378 = vrot.slane %v1377, 4
        %v1379 = vsel %vm1300, %v1378, %v1372
        %v1380 = vrot.slane %v1372, 4
        %v1381 = vsel %vm1300, %v1377, %v1380
        %v1383 = vunpack.c.l.s4 1934713408
        %v1384 = vunpack.c.0.s8 %v1383
        %v1385 = vperm.slane %v1379, %v1384
        %v1387 = vunpack.c.l.s4 1934713408
        %v1388 = vunpack.c.0.s8 %v1387
        %v1389 = vperm.slane %v1381, %v1388
        %v1390 = vrot.slane %v1385, 4
        %v1391 = vsel %vm1300, 0, %v1390
        %v1392 = vrot.slane %v1389, 4
        %v1393 = vsel %vm1300, 0, %v1392
        %v1396 = vunpack.c.l.s4 1983009808
        %v1397 = vunpack.c.0.s8 %v1396
        %v1398 = vperm.slane %v1267, %v1397
        %v1401 = vunpack.c.l.s4 1983009808
        %v1402 = vunpack.c.0.s8 %v1401
        %v1403 = vperm.slane %v1273, %v1402
        %v1404 = vrot.slane %v1403, 4
        %v1405 = vsel %vm1300, %v1404, %v1398
        %v1406 = vrot.slane %v1398, 4
        %v1407 = vsel %vm1300, %v1403, %v1406
        %v1409 = vunpack.c.l.s4 1934713408
        %v1410 = vunpack.c.0.s8 %v1409
        %v1411 = vperm.slane %v1405, %v1410
        %v1413 = vunpack.c.l.s4 1934713408
        %v1414 = vunpack.c.0.s8 %v1413
        %v1415 = vperm.slane %v1407, %v1414
        %v1416 = vrot.slane %v1411, 4
        %v1417 = vsel %vm1300, 0, %v1416
        %v1418 = vrot.slane %v1415, 4
        %v1419 = vsel %vm1300, 0, %v1418
        %v1422 = vunpack.c.l.s4 1983009808
        %v1423 = vunpack.c.0.s8 %v1422
        %v1424 = vperm.slane %v1270, %v1423
        %v1427 = vunpack.c.l.s4 1983009808
        %v1428 = vunpack.c.0.s8 %v1427
        %v1429 = vperm.slane %v1276, %v1428
        %v1430 = vrot.slane %v1429, 4
        %v1431 = vsel %vm1300, %v1430, %v1424
        %v1432 = vrot.slane %v1424, 4
        %v1433 = vsel %vm1300, %v1429, %v1432
        %v1435 = vunpack.c.l.s4 1934713408
        %v1436 = vunpack.c.0.s8 %v1435
        %v1437 = vperm.slane %v1431, %v1436
        %v1439 = vunpack.c.l.s4 1934713408
        %v1440 = vunpack.c.0.s8 %v1439
        %v1441 = vperm.slane %v1433, %v1440
        %v1442 = vrot.slane %v1437, 4
        %v1443 = vsel %vm1300, 0, %v1442
        %v1444 = vrot.slane %v1441, 4
        %v1445 = vsel %vm1300, 0, %v1444
        %v1448 = vunpack.c.l.s4 1983009808
        %v1449 = vunpack.c.0.s8 %v1448
        %v1450 = vperm.slane %v1279, %v1449
        %v1453 = vunpack.c.l.s4 1983009808
        %v1454 = vunpack.c.0.s8 %v1453
        %v1455 = vperm.slane %v1285, %v1454
        %v1456 = vrot.slane %v1455, 4
        %v1457 = vsel %vm1300, %v1456, %v1450
        %v1458 = vrot.slane %v1450, 4
        %v1459 = vsel %vm1300, %v1455, %v1458
        %v1461 = vunpack.c.l.s4 1934713408
        %v1462 = vunpack.c.0.s8 %v1461
        %v1463 = vperm.slane %v1457, %v1462
        %v1465 = vunpack.c.l.s4 1934713408
        %v1466 = vunpack.c.0.s8 %v1465
        %v1467 = vperm.slane %v1459, %v1466
        %v1468 = vrot.slane %v1463, 4
        %v1469 = vsel %vm1300, 0, %v1468
        %v1470 = vrot.slane %v1467, 4
        %v1471 = vsel %vm1300, 0, %v1470
        %v1474 = vunpack.c.l.s4 1983009808
        %v1475 = vunpack.c.0.s8 %v1474
        %v1476 = vperm.slane %v1282, %v1475
        %v1479 = vunpack.c.l.s4 1983009808
        %v1480 = vunpack.c.0.s8 %v1479
        %v1481 = vperm.slane %v1288, %v1480
        %v1482 = vrot.slane %v1481, 4
        %v1483 = vsel %vm1300, %v1482, %v1476
        %v1484 = vrot.slane %v1476, 4
        %v1485 = vsel %vm1300, %v1481, %v1484
        %v1487 = vunpack.c.l.s4 1934713408
        %v1488 = vunpack.c.0.s8 %v1487
        %v1489 = vperm.slane %v1483, %v1488
        %v1491 = vunpack.c.l.s4 1934713408
        %v1492 = vunpack.c.0.s8 %v1491
        %v1493 = vperm.slane %v1485, %v1492
        %v1494 = vrot.slane %v1489, 4
        %v1495 = vsel %vm1300, 0, %v1494
        %v1496 = vrot.slane %v1493, 4
        %v1497 = vsel %vm1300, 0, %v1496
        %v1498 = vsel %vm1300, %v1314, %v1307
        %v1500 = vunpack.c.l.s4 1983009808
        %v1501 = vunpack.c.0.s8 %v1500
        %v1502 = vperm.slane %v1498, %v1501
        %v1503 = vrot.slane %v1315, 4
        %v1504 = vsel %vm1300, %v1503, %v1313
        %v1506 = vunpack.c.l.s4 1983009808
        %v1507 = vunpack.c.0.s8 %v1506
        %v1508 = vperm.slane %v1504, %v1507
        %v1509 = vrot.slane %v1508, 4
        %v1510 = vsel %vm1300, %v1509, %v1502
        %v1512 = vunpack.c.l.s4 1934713408
        %v1513 = vunpack.c.0.s8 %v1512
        %v1514 = vperm.slane %v1510, %v1513
        %v1515 = vrot.slane %v1514, 4
        %v1516 = vsel %vm1300, 0, %v1515
        %v1517 = vsel %vm1300, %v1340, %v1333
        %v1519 = vunpack.c.l.s4 1983009808
        %v1520 = vunpack.c.0.s8 %v1519
        %v1521 = vperm.slane %v1517, %v1520
        %v1522 = vrot.slane %v1341, 4
        %v1523 = vsel %vm1300, %v1522, %v1339
        %v1525 = vunpack.c.l.s4 1983009808
        %v1526 = vunpack.c.0.s8 %v1525
        %v1527 = vperm.slane %v1523, %v1526
        %v1528 = vrot.slane %v1527, 4
        %v1529 = vsel %vm1300, %v1528, %v1521
        %v1531 = vunpack.c.l.s4 1934713408
        %v1532 = vunpack.c.0.s8 %v1531
        %v1533 = vperm.slane %v1529, %v1532
        %v1534 = vrot.slane %v1533, 4
        %v1535 = vsel %vm1300, 0, %v1534
        %v1536 = vsel %vm1300, %v1366, %v1359
        %v1538 = vunpack.c.l.s4 1983009808
        %v1539 = vunpack.c.0.s8 %v1538
        %v1540 = vperm.slane %v1536, %v1539
        %v1541 = vrot.slane %v1367, 4
        %v1542 = vsel %vm1300, %v1541, %v1365
        %v1544 = vunpack.c.l.s4 1983009808
        %v1545 = vunpack.c.0.s8 %v1544
        %v1546 = vperm.slane %v1542, %v1545
        %v1547 = vrot.slane %v1546, 4
        %v1548 = vsel %vm1300, %v1547, %v1540
        %v1550 = vunpack.c.l.s4 1934713408
        %v1551 = vunpack.c.0.s8 %v1550
        %v1552 = vperm.slane %v1548, %v1551
        %v1553 = vrot.slane %v1552, 4
        %v1554 = vsel %vm1300, 0, %v1553
        %v1555 = vsel %vm1300, %v1392, %v1385
        %v1557 = vunpack.c.l.s4 1983009808
        %v1558 = vunpack.c.0.s8 %v1557
        %v1559 = vperm.slane %v1555, %v1558
        %v1560 = vrot.slane %v1393, 4
        %v1561 = vsel %vm1300, %v1560, %v1391
        %v1563 = vunpack.c.l.s4 1983009808
        %v1564 = vunpack.c.0.s8 %v1563
        %v1565 = vperm.slane %v1561, %v1564
        %v1566 = vrot.slane %v1565, 4
        %v1567 = vsel %vm1300, %v1566, %v1559
        %v1569 = vunpack.c.l.s4 1934713408
        %v1570 = vunpack.c.0.s8 %v1569
        %v1571 = vperm.slane %v1567, %v1570
        %v1572 = vrot.slane %v1571, 4
        %v1573 = vsel %vm1300, 0, %v1572
        %v1574 = vsel %vm1300, %v1418, %v1411
        %v1576 = vunpack.c.l.s4 1983009808
        %v1577 = vunpack.c.0.s8 %v1576
        %v1578 = vperm.slane %v1574, %v1577
        %v1579 = vrot.slane %v1419, 4
        %v1580 = vsel %vm1300, %v1579, %v1417
        %v1582 = vunpack.c.l.s4 1983009808
        %v1583 = vunpack.c.0.s8 %v1582
        %v1584 = vperm.slane %v1580, %v1583
        %v1585 = vrot.slane %v1584, 4
        %v1586 = vsel %vm1300, %v1585, %v1578
        %v1588 = vunpack.c.l.s4 1934713408
        %v1589 = vunpack.c.0.s8 %v1588
        %v1590 = vperm.slane %v1586, %v1589
        %v1591 = vrot.slane %v1590, 4
        %v1592 = vsel %vm1300, 0, %v1591
        %v1593 = vsel %vm1300, %v1444, %v1437
        %v1595 = vunpack.c.l.s4 1983009808
        %v1596 = vunpack.c.0.s8 %v1595
        %v1597 = vperm.slane %v1593, %v1596
        %v1598 = vrot.slane %v1445, 4
        %v1599 = vsel %vm1300, %v1598, %v1443
        %v1601 = vunpack.c.l.s4 1983009808
        %v1602 = vunpack.c.0.s8 %v1601
        %v1603 = vperm.slane %v1599, %v1602
        %v1604 = vrot.slane %v1603, 4
        %v1605 = vsel %vm1300, %v1604, %v1597
        %v1607 = vunpack.c.l.s4 1934713408
        %v1608 = vunpack.c.0.s8 %v1607
        %v1609 = vperm.slane %v1605, %v1608
        %v1610 = vrot.slane %v1609, 4
        %v1611 = vsel %vm1300, 0, %v1610
        %v1612 = vsel %vm1300, %v1470, %v1463
        %v1614 = vunpack.c.l.s4 1983009808
        %v1615 = vunpack.c.0.s8 %v1614
        %v1616 = vperm.slane %v1612, %v1615
        %v1617 = vrot.slane %v1471, 4
        %v1618 = vsel %vm1300, %v1617, %v1469
        %v1620 = vunpack.c.l.s4 1983009808
        %v1621 = vunpack.c.0.s8 %v1620
        %v1622 = vperm.slane %v1618, %v1621
        %v1623 = vrot.slane %v1622, 4
        %v1624 = vsel %vm1300, %v1623, %v1616
        %v1626 = vunpack.c.l.s4 1934713408
        %v1627 = vunpack.c.0.s8 %v1626
        %v1628 = vperm.slane %v1624, %v1627
        %v1629 = vrot.slane %v1628, 4
        %v1630 = vsel %vm1300, 0, %v1629
        %v1631 = vsel %vm1300, %v1496, %v1489
        %v1633 = vunpack.c.l.s4 1983009808
        %v1634 = vunpack.c.0.s8 %v1633
        %v1635 = vperm.slane %v1631, %v1634
        %v1636 = vrot.slane %v1497, 4
        %v1637 = vsel %vm1300, %v1636, %v1495
        %v1639 = vunpack.c.l.s4 1983009808
        %v1640 = vunpack.c.0.s8 %v1639
        %v1641 = vperm.slane %v1637, %v1640
        %v1642 = vrot.slane %v1641, 4
        %v1643 = vsel %vm1300, %v1642, %v1635
        %v1645 = vunpack.c.l.s4 1934713408
        %v1646 = vunpack.c.0.s8 %v1645
        %v1647 = vperm.slane %v1643, %v1646
        %v1648 = vrot.slane %v1647, 4
        %v1649 = vsel %vm1300, 0, %v1648
        %v1652 = vpack.i.b16 %v1533, %v1514
        %v1653 = vshrl.u32 %v1514, 16
        %v1654 = vshrl.u32 %v1533, 16
        %v1655 = vpack.i.b16 %v1654, %v1653
        %v1658 = vpack.i.b16 %v1535, %v1516
        %v1659 = vshrl.u32 %v1516, 16
        %v1660 = vshrl.u32 %v1535, 16
        %v1661 = vpack.i.b16 %v1660, %v1659
        %v1664 = vpack.i.b16 %v1571, %v1552
        %v1665 = vshrl.u32 %v1552, 16
        %v1666 = vshrl.u32 %v1571, 16
        %v1667 = vpack.i.b16 %v1666, %v1665
        %v1670 = vpack.i.b16 %v1573, %v1554
        %v1671 = vshrl.u32 %v1554, 16
        %v1672 = vshrl.u32 %v1573, 16
        %v1673 = vpack.i.b16 %v1672, %v1671
        %v1676 = vpack.i.b16 %v1609, %v1590
        %v1677 = vshrl.u32 %v1590, 16
        %v1678 = vshrl.u32 %v1609, 16
        %v1679 = vpack.i.b16 %v1678, %v1677
        %v1682 = vpack.i.b16 %v1611, %v1592
        %v1683 = vshrl.u32 %v1592, 16
        %v1684 = vshrl.u32 %v1611, 16
        %v1685 = vpack.i.b16 %v1684, %v1683
        %v1688 = vpack.i.b16 %v1647, %v1628
        %v1689 = vshrl.u32 %v1628, 16
        %v1690 = vshrl.u32 %v1647, 16
        %v1691 = vpack.i.b16 %v1690, %v1689
        %v1694 = vpack.i.b16 %v1649, %v1630
        %v1695 = vshrl.u32 %v1630, 16
        %v1696 = vshrl.u32 %v1649, 16
        %v1697 = vpack.i.b16 %v1696, %v1695
        %1702 = vrot.lane.b32.xlu0 %v1205, 96
        %v1703 = vpop.permute.xlu0 %1702
        %1704 = vrot.lane.b32.xlu0 %v1206, 96
        %v1705 = vpop.permute.xlu0 %1704
        %1706 = vrot.lane.b32.xlu0 %v1207, 96
        %v1707 = vpop.permute.xlu0 %1706
        %1708 = vrot.lane.b32.xlu0 %v1208, 96
        %v1709 = vpop.permute.xlu0 %1708
        %1710 = vrot.lane.b32.xlu0 %v1205, 64
        %v1711 = vpop.permute.xlu0 %1710
        %1712 = vrot.lane.b32.xlu0 %v1206, 64
        %v1713 = vpop.permute.xlu0 %1712
        %1714 = vrot.lane.b32.xlu0 %v1207, 64
        %v1715 = vpop.permute.xlu0 %1714
        %1716 = vrot.lane.b32.xlu0 %v1208, 64
        %v1717 = vpop.permute.xlu0 %1716
        %1718 = vrot.lane.b32.xlu0 %v1205, 32
        %v1719 = vpop.permute.xlu0 %1718
        %1720 = vrot.lane.b32.xlu0 %v1206, 32
        %v1721 = vpop.permute.xlu0 %1720
        %1722 = vrot.lane.b32.xlu0 %v1207, 32
        %v1723 = vpop.permute.xlu0 %1722
        %1724 = vrot.lane.b32.xlu0 %v1208, 32
        %v1725 = vpop.permute.xlu0 %1724
        %v1728 = vpack.i.b16 %v1703, %v1205
        %v1729 = vshrl.u32 %v1205, 16
        %v1730 = vshrl.u32 %v1703, 16
        %v1731 = vpack.i.b16 %v1730, %v1729
        %v1734 = vpack.i.b16 %v1719, %v1711
        %v1735 = vshrl.u32 %v1711, 16
        %v1736 = vshrl.u32 %v1719, 16
        %v1737 = vpack.i.b16 %v1736, %v1735
        %v1740 = vpack.i.b16 %v1705, %v1206
        %v1741 = vshrl.u32 %v1206, 16
        %v1742 = vshrl.u32 %v1705, 16
        %v1743 = vpack.i.b16 %v1742, %v1741
        %v1746 = vpack.i.b16 %v1721, %v1713
        %v1747 = vshrl.u32 %v1713, 16
        %v1748 = vshrl.u32 %v1721, 16
        %v1749 = vpack.i.b16 %v1748, %v1747
        %v1752 = vpack.i.b16 %v1707, %v1207
        %v1753 = vshrl.u32 %v1207, 16
        %v1754 = vshrl.u32 %v1707, 16
        %v1755 = vpack.i.b16 %v1754, %v1753
        %v1758 = vpack.i.b16 %v1723, %v1715
        %v1759 = vshrl.u32 %v1715, 16
        %v1760 = vshrl.u32 %v1723, 16
        %v1761 = vpack.i.b16 %v1760, %v1759
        %v1764 = vpack.i.b16 %v1709, %v1208
        %v1765 = vshrl.u32 %v1208, 16
        %v1766 = vshrl.u32 %v1709, 16
        %v1767 = vpack.i.b16 %v1766, %v1765
        %v1770 = vpack.i.b16 %v1725, %v1717
        %v1771 = vshrl.u32 %v1717, 16
        %v1772 = vshrl.u32 %v1725, 16
        %v1773 = vpack.i.b16 %v1772, %v1771
        %v1776 = vunpack.c.l.s4 1983009808
        %v1777 = vunpack.c.0.s8 %v1776
        %v1778 = vperm.slane %v1728, %v1777
        %v1781 = vunpack.c.l.s4 1983009808
        %v1782 = vunpack.c.0.s8 %v1781
        %v1783 = vperm.slane %v1734, %v1782
        %v1784 = vrot.slane %v1783, 4
        %v1785 = vsel %vm1300, %v1784, %v1778
        %v1786 = vrot.slane %v1778, 4
        %v1787 = vsel %vm1300, %v1783, %v1786
        %v1789 = vunpack.c.l.s4 1934713408
        %v1790 = vunpack.c.0.s8 %v1789
        %v1791 = vperm.slane %v1785, %v1790
        %v1793 = vunpack.c.l.s4 1934713408
        %v1794 = vunpack.c.0.s8 %v1793
        %v1795 = vperm.slane %v1787, %v1794
        %v1796 = vrot.slane %v1791, 4
        %v1797 = vsel %vm1300, 0, %v1796
        %v1798 = vrot.slane %v1795, 4
        %v1799 = vsel %vm1300, 0, %v1798
        %v1802 = vunpack.c.l.s4 1983009808
        %v1803 = vunpack.c.0.s8 %v1802
        %v1804 = vperm.slane %v1731, %v1803
        %v1807 = vunpack.c.l.s4 1983009808
        %v1808 = vunpack.c.0.s8 %v1807
        %v1809 = vperm.slane %v1737, %v1808
        %v1810 = vrot.slane %v1809, 4
        %v1811 = vsel %vm1300, %v1810, %v1804
        %v1812 = vrot.slane %v1804, 4
        %v1813 = vsel %vm1300, %v1809, %v1812
        %v1815 = vunpack.c.l.s4 1934713408
        %v1816 = vunpack.c.0.s8 %v1815
        %v1817 = vperm.slane %v1811, %v1816
        %v1819 = vunpack.c.l.s4 1934713408
        %v1820 = vunpack.c.0.s8 %v1819
        %v1821 = vperm.slane %v1813, %v1820
        %v1822 = vrot.slane %v1817, 4
        %v1823 = vsel %vm1300, 0, %v1822
        %v1824 = vrot.slane %v1821, 4
        %v1825 = vsel %vm1300, 0, %v1824
        %v1828 = vunpack.c.l.s4 1983009808
        %v1829 = vunpack.c.0.s8 %v1828
        %v1830 = vperm.slane %v1740, %v1829
        %v1833 = vunpack.c.l.s4 1983009808
        %v1834 = vunpack.c.0.s8 %v1833
        %v1835 = vperm.slane %v1746, %v1834
        %v1836 = vrot.slane %v1835, 4
        %v1837 = vsel %vm1300, %v1836, %v1830
        %v1838 = vrot.slane %v1830, 4
        %v1839 = vsel %vm1300, %v1835, %v1838
        %v1841 = vunpack.c.l.s4 1934713408
        %v1842 = vunpack.c.0.s8 %v1841
        %v1843 = vperm.slane %v1837, %v1842
        %v1845 = vunpack.c.l.s4 1934713408
        %v1846 = vunpack.c.0.s8 %v1845
        %v1847 = vperm.slane %v1839, %v1846
        %v1848 = vrot.slane %v1843, 4
        %v1849 = vsel %vm1300, 0, %v1848
        %v1850 = vrot.slane %v1847, 4
        %v1851 = vsel %vm1300, 0, %v1850
        %v1854 = vunpack.c.l.s4 1983009808
        %v1855 = vunpack.c.0.s8 %v1854
        %v1856 = vperm.slane %v1743, %v1855
        %v1859 = vunpack.c.l.s4 1983009808
        %v1860 = vunpack.c.0.s8 %v1859
        %v1861 = vperm.slane %v1749, %v1860
        %v1862 = vrot.slane %v1861, 4
        %v1863 = vsel %vm1300, %v1862, %v1856
        %v1864 = vrot.slane %v1856, 4
        %v1865 = vsel %vm1300, %v1861, %v1864
        %v1867 = vunpack.c.l.s4 1934713408
        %v1868 = vunpack.c.0.s8 %v1867
        %v1869 = vperm.slane %v1863, %v1868
        %v1871 = vunpack.c.l.s4 1934713408
        %v1872 = vunpack.c.0.s8 %v1871
        %v1873 = vperm.slane %v1865, %v1872
        %v1874 = vrot.slane %v1869, 4
        %v1875 = vsel %vm1300, 0, %v1874
        %v1876 = vrot.slane %v1873, 4
        %v1877 = vsel %vm1300, 0, %v1876
        %v1880 = vunpack.c.l.s4 1983009808
        %v1881 = vunpack.c.0.s8 %v1880
        %v1882 = vperm.slane %v1752, %v1881
        %v1885 = vunpack.c.l.s4 1983009808
        %v1886 = vunpack.c.0.s8 %v1885
        %v1887 = vperm.slane %v1758, %v1886
        %v1888 = vrot.slane %v1887, 4
        %v1889 = vsel %vm1300, %v1888, %v1882
        %v1890 = vrot.slane %v1882, 4
        %v1891 = vsel %vm1300, %v1887, %v1890
        %v1893 = vunpack.c.l.s4 1934713408
        %v1894 = vunpack.c.0.s8 %v1893
        %v1895 = vperm.slane %v1889, %v1894
        %v1897 = vunpack.c.l.s4 1934713408
        %v1898 = vunpack.c.0.s8 %v1897
        %v1899 = vperm.slane %v1891, %v1898
        %v1900 = vrot.slane %v1895, 4
        %v1901 = vsel %vm1300, 0, %v1900
        %v1902 = vrot.slane %v1899, 4
        %v1903 = vsel %vm1300, 0, %v1902
        %v1906 = vunpack.c.l.s4 1983009808
        %v1907 = vunpack.c.0.s8 %v1906
        %v1908 = vperm.slane %v1755, %v1907
        %v1911 = vunpack.c.l.s4 1983009808
        %v1912 = vunpack.c.0.s8 %v1911
        %v1913 = vperm.slane %v1761, %v1912
        %v1914 = vrot.slane %v1913, 4
        %v1915 = vsel %vm1300, %v1914, %v1908
        %v1916 = vrot.slane %v1908, 4
        %v1917 = vsel %vm1300, %v1913, %v1916
        %v1919 = vunpack.c.l.s4 1934713408
        %v1920 = vunpack.c.0.s8 %v1919
        %v1921 = vperm.slane %v1915, %v1920
        %v1923 = vunpack.c.l.s4 1934713408
        %v1924 = vunpack.c.0.s8 %v1923
        %v1925 = vperm.slane %v1917, %v1924
        %v1926 = vrot.slane %v1921, 4
        %v1927 = vsel %vm1300, 0, %v1926
        %v1928 = vrot.slane %v1925, 4
        %v1929 = vsel %vm1300, 0, %v1928
        %v1932 = vunpack.c.l.s4 1983009808
        %v1933 = vunpack.c.0.s8 %v1932
        %v1934 = vperm.slane %v1764, %v1933
        %v1937 = vunpack.c.l.s4 1983009808
        %v1938 = vunpack.c.0.s8 %v1937
        %v1939 = vperm.slane %v1770, %v1938
        %v1940 = vrot.slane %v1939, 4
        %v1941 = vsel %vm1300, %v1940, %v1934
        %v1942 = vrot.slane %v1934, 4
        %v1943 = vsel %vm1300, %v1939, %v1942
        %v1945 = vunpack.c.l.s4 1934713408
        %v1946 = vunpack.c.0.s8 %v1945
        %v1947 = vperm.slane %v1941, %v1946
        %v1949 = vunpack.c.l.s4 1934713408
        %v1950 = vunpack.c.0.s8 %v1949
        %v1951 = vperm.slane %v1943, %v1950
        %v1952 = vrot.slane %v1947, 4
        %v1953 = vsel %vm1300, 0, %v1952
        %v1954 = vrot.slane %v1951, 4
        %v1955 = vsel %vm1300, 0, %v1954
        %v1958 = vunpack.c.l.s4 1983009808
        %v1959 = vunpack.c.0.s8 %v1958
        %v1960 = vperm.slane %v1767, %v1959
        %v1963 = vunpack.c.l.s4 1983009808
        %v1964 = vunpack.c.0.s8 %v1963
        %v1965 = vperm.slane %v1773, %v1964
        %v1966 = vrot.slane %v1965, 4
        %v1967 = vsel %vm1300, %v1966, %v1960
        %v1968 = vrot.slane %v1960, 4
        %v1969 = vsel %vm1300, %v1965, %v1968
        %v1971 = vunpack.c.l.s4 1934713408
        %v1972 = vunpack.c.0.s8 %v1971
        %v1973 = vperm.slane %v1967, %v1972
        %v1975 = vunpack.c.l.s4 1934713408
        %v1976 = vunpack.c.0.s8 %v1975
        %v1977 = vperm.slane %v1969, %v1976
        %v1978 = vrot.slane %v1973, 4
        %v1979 = vsel %vm1300, 0, %v1978
        %v1980 = vrot.slane %v1977, 4
        %v1981 = vsel %vm1300, 0, %v1980
        %v1982 = vsel %vm1300, %v1798, %v1791
        %v1984 = vunpack.c.l.s4 1983009808
        %v1985 = vunpack.c.0.s8 %v1984
        %v1986 = vperm.slane %v1982, %v1985
        %v1987 = vrot.slane %v1799, 4
        %v1988 = vsel %vm1300, %v1987, %v1797
        %v1990 = vunpack.c.l.s4 1983009808
        %v1991 = vunpack.c.0.s8 %v1990
        %v1992 = vperm.slane %v1988, %v1991
        %v1993 = vrot.slane %v1992, 4
        %v1994 = vsel %vm1300, %v1993, %v1986
        %v1996 = vunpack.c.l.s4 1934713408
        %v1997 = vunpack.c.0.s8 %v1996
        %v1998 = vperm.slane %v1994, %v1997
        %v1999 = vrot.slane %v1998, 4
        %v2000 = vsel %vm1300, 0, %v1999
        %v2001 = vsel %vm1300, %v1824, %v1817
        %v2003 = vunpack.c.l.s4 1983009808
        %v2004 = vunpack.c.0.s8 %v2003
        %v2005 = vperm.slane %v2001, %v2004
        %v2006 = vrot.slane %v1825, 4
        %v2007 = vsel %vm1300, %v2006, %v1823
        %v2009 = vunpack.c.l.s4 1983009808
        %v2010 = vunpack.c.0.s8 %v2009
        %v2011 = vperm.slane %v2007, %v2010
        %v2012 = vrot.slane %v2011, 4
        %v2013 = vsel %vm1300, %v2012, %v2005
        %v2015 = vunpack.c.l.s4 1934713408
        %v2016 = vunpack.c.0.s8 %v2015
        %v2017 = vperm.slane %v2013, %v2016
        %v2018 = vrot.slane %v2017, 4
        %v2019 = vsel %vm1300, 0, %v2018
        %v2020 = vsel %vm1300, %v1850, %v1843
        %v2022 = vunpack.c.l.s4 1983009808
        %v2023 = vunpack.c.0.s8 %v2022
        %v2024 = vperm.slane %v2020, %v2023
        %v2025 = vrot.slane %v1851, 4
        %v2026 = vsel %vm1300, %v2025, %v1849
        %v2028 = vunpack.c.l.s4 1983009808
        %v2029 = vunpack.c.0.s8 %v2028
        %v2030 = vperm.slane %v2026, %v2029
        %v2031 = vrot.slane %v2030, 4
        %v2032 = vsel %vm1300, %v2031, %v2024
        %v2034 = vunpack.c.l.s4 1934713408
        %v2035 = vunpack.c.0.s8 %v2034
        %v2036 = vperm.slane %v2032, %v2035
        %v2037 = vrot.slane %v2036, 4
        %v2038 = vsel %vm1300, 0, %v2037
        %v2039 = vsel %vm1300, %v1876, %v1869
        %v2041 = vunpack.c.l.s4 1983009808
        %v2042 = vunpack.c.0.s8 %v2041
        %v2043 = vperm.slane %v2039, %v2042
        %v2044 = vrot.slane %v1877, 4
        %v2045 = vsel %vm1300, %v2044, %v1875
        %v2047 = vunpack.c.l.s4 1983009808
        %v2048 = vunpack.c.0.s8 %v2047
        %v2049 = vperm.slane %v2045, %v2048
        %v2050 = vrot.slane %v2049, 4
        %v2051 = vsel %vm1300, %v2050, %v2043
        %v2053 = vunpack.c.l.s4 1934713408
        %v2054 = vunpack.c.0.s8 %v2053
        %v2055 = vperm.slane %v2051, %v2054
        %v2056 = vrot.slane %v2055, 4
        %v2057 = vsel %vm1300, 0, %v2056
        %v2058 = vsel %vm1300, %v1902, %v1895
        %v2060 = vunpack.c.l.s4 1983009808
        %v2061 = vunpack.c.0.s8 %v2060
        %v2062 = vperm.slane %v2058, %v2061
        %v2063 = vrot.slane %v1903, 4
        %v2064 = vsel %vm1300, %v2063, %v1901
        %v2066 = vunpack.c.l.s4 1983009808
        %v2067 = vunpack.c.0.s8 %v2066
        %v2068 = vperm.slane %v2064, %v2067
        %v2069 = vrot.slane %v2068, 4
        %v2070 = vsel %vm1300, %v2069, %v2062
        %v2072 = vunpack.c.l.s4 1934713408
        %v2073 = vunpack.c.0.s8 %v2072
        %v2074 = vperm.slane %v2070, %v2073
        %v2075 = vrot.slane %v2074, 4
        %v2076 = vsel %vm1300, 0, %v2075
        %v2077 = vsel %vm1300, %v1928, %v1921
        %v2079 = vunpack.c.l.s4 1983009808
        %v2080 = vunpack.c.0.s8 %v2079
        %v2081 = vperm.slane %v2077, %v2080
        %v2082 = vrot.slane %v1929, 4
        %v2083 = vsel %vm1300, %v2082, %v1927
        %v2085 = vunpack.c.l.s4 1983009808
        %v2086 = vunpack.c.0.s8 %v2085
        %v2087 = vperm.slane %v2083, %v2086
        %v2088 = vrot.slane %v2087, 4
        %v2089 = vsel %vm1300, %v2088, %v2081
        %v2091 = vunpack.c.l.s4 1934713408
        %v2092 = vunpack.c.0.s8 %v2091
        %v2093 = vperm.slane %v2089, %v2092
        %v2094 = vrot.slane %v2093, 4
        %v2095 = vsel %vm1300, 0, %v2094
        %v2096 = vsel %vm1300, %v1954, %v1947
        %v2098 = vunpack.c.l.s4 1983009808
        %v2099 = vunpack.c.0.s8 %v2098
        %v2100 = vperm.slane %v2096, %v2099
        %v2101 = vrot.slane %v1955, 4
        %v2102 = vsel %vm1300, %v2101, %v1953
        %v2104 = vunpack.c.l.s4 1983009808
        %v2105 = vunpack.c.0.s8 %v2104
        %v2106 = vperm.slane %v2102, %v2105
        %v2107 = vrot.slane %v2106, 4
        %v2108 = vsel %vm1300, %v2107, %v2100
        %v2110 = vunpack.c.l.s4 1934713408
        %v2111 = vunpack.c.0.s8 %v2110
        %v2112 = vperm.slane %v2108, %v2111
        %v2113 = vrot.slane %v2112, 4
        %v2114 = vsel %vm1300, 0, %v2113
        %v2115 = vsel %vm1300, %v1980, %v1973
        %v2117 = vunpack.c.l.s4 1983009808
        %v2118 = vunpack.c.0.s8 %v2117
        %v2119 = vperm.slane %v2115, %v2118
        %v2120 = vrot.slane %v1981, 4
        %v2121 = vsel %vm1300, %v2120, %v1979
        %v2123 = vunpack.c.l.s4 1983009808
        %v2124 = vunpack.c.0.s8 %v2123
        %v2125 = vperm.slane %v2121, %v2124
        %v2126 = vrot.slane %v2125, 4
        %v2127 = vsel %vm1300, %v2126, %v2119
        %v2129 = vunpack.c.l.s4 1934713408
        %v2130 = vunpack.c.0.s8 %v2129
        %v2131 = vperm.slane %v2127, %v2130
        %v2132 = vrot.slane %v2131, 4
        %v2133 = vsel %vm1300, 0, %v2132
        %v2136 = vpack.i.b16 %v2017, %v1998
        %v2137 = vshrl.u32 %v1998, 16
        %v2138 = vshrl.u32 %v2017, 16
        %v2139 = vpack.i.b16 %v2138, %v2137
        %v2142 = vpack.i.b16 %v2019, %v2000
        %v2143 = vshrl.u32 %v2000, 16
        %v2144 = vshrl.u32 %v2019, 16
        %v2145 = vpack.i.b16 %v2144, %v2143
        %v2148 = vpack.i.b16 %v2055, %v2036
        %v2149 = vshrl.u32 %v2036, 16
        %v2150 = vshrl.u32 %v2055, 16
        %v2151 = vpack.i.b16 %v2150, %v2149
        %v2154 = vpack.i.b16 %v2057, %v2038
        %v2155 = vshrl.u32 %v2038, 16
        %v2156 = vshrl.u32 %v2057, 16
        %v2157 = vpack.i.b16 %v2156, %v2155
        %v2160 = vpack.i.b16 %v2093, %v2074
        %v2161 = vshrl.u32 %v2074, 16
        %v2162 = vshrl.u32 %v2093, 16
        %v2163 = vpack.i.b16 %v2162, %v2161
        %v2166 = vpack.i.b16 %v2095, %v2076
        %v2167 = vshrl.u32 %v2076, 16
        %v2168 = vshrl.u32 %v2095, 16
        %v2169 = vpack.i.b16 %v2168, %v2167
        %v2172 = vpack.i.b16 %v2131, %v2112
        %v2173 = vshrl.u32 %v2112, 16
        %v2174 = vshrl.u32 %v2131, 16
        %v2175 = vpack.i.b16 %v2174, %v2173
        %v2178 = vpack.i.b16 %v2133, %v2114
        %v2179 = vshrl.u32 %v2114, 16
        %v2180 = vshrl.u32 %v2133, 16
        %v2181 = vpack.i.b16 %v2180, %v2179
        %2186 = vrot.lane.b32.xlu0 %v1209, 96
        %v2187 = vpop.permute.xlu0 %2186
        %2188 = vrot.lane.b32.xlu0 %v1210, 96
        %v2189 = vpop.permute.xlu0 %2188
        %2190 = vrot.lane.b32.xlu0 %v1211, 96
        %v2191 = vpop.permute.xlu0 %2190
        %2192 = vrot.lane.b32.xlu0 %v1212, 96
        %v2193 = vpop.permute.xlu0 %2192
        %2194 = vrot.lane.b32.xlu0 %v1209, 64
        %v2195 = vpop.permute.xlu0 %2194
        %2196 = vrot.lane.b32.xlu0 %v1210, 64
        %v2197 = vpop.permute.xlu0 %2196
        %2198 = vrot.lane.b32.xlu0 %v1211, 64
        %v2199 = vpop.permute.xlu0 %2198
        %2200 = vrot.lane.b32.xlu0 %v1212, 64
        %v2201 = vpop.permute.xlu0 %2200
        %2202 = vrot.lane.b32.xlu0 %v1209, 32
        %v2203 = vpop.permute.xlu0 %2202
        %2204 = vrot.lane.b32.xlu0 %v1210, 32
        %v2205 = vpop.permute.xlu0 %2204
        %2206 = vrot.lane.b32.xlu0 %v1211, 32
        %v2207 = vpop.permute.xlu0 %2206
        %2208 = vrot.lane.b32.xlu0 %v1212, 32
        %v2209 = vpop.permute.xlu0 %2208
        %v2212 = vpack.i.b16 %v2187, %v1209
        %v2213 = vshrl.u32 %v1209, 16
        %v2214 = vshrl.u32 %v2187, 16
        %v2215 = vpack.i.b16 %v2214, %v2213
        %v2218 = vpack.i.b16 %v2203, %v2195
        %v2219 = vshrl.u32 %v2195, 16
        %v2220 = vshrl.u32 %v2203, 16
        %v2221 = vpack.i.b16 %v2220, %v2219
        %v2224 = vpack.i.b16 %v2189, %v1210
        %v2225 = vshrl.u32 %v1210, 16
        %v2226 = vshrl.u32 %v2189, 16
        %v2227 = vpack.i.b16 %v2226, %v2225
        %v2230 = vpack.i.b16 %v2205, %v2197
        %v2231 = vshrl.u32 %v2197, 16
        %v2232 = vshrl.u32 %v2205, 16
        %v2233 = vpack.i.b16 %v2232, %v2231
        %v2236 = vpack.i.b16 %v2191, %v1211
        %v2237 = vshrl.u32 %v1211, 16
        %v2238 = vshrl.u32 %v2191, 16
        %v2239 = vpack.i.b16 %v2238, %v2237
        %v2242 = vpack.i.b16 %v2207, %v2199
        %v2243 = vshrl.u32 %v2199, 16
        %v2244 = vshrl.u32 %v2207, 16
        %v2245 = vpack.i.b16 %v2244, %v2243
        %v2248 = vpack.i.b16 %v2193, %v1212
        %v2249 = vshrl.u32 %v1212, 16
        %v2250 = vshrl.u32 %v2193, 16
        %v2251 = vpack.i.b16 %v2250, %v2249
        %v2254 = vpack.i.b16 %v2209, %v2201
        %v2255 = vshrl.u32 %v2201, 16
        %v2256 = vshrl.u32 %v2209, 16
        %v2257 = vpack.i.b16 %v2256, %v2255
        %v2260 = vunpack.c.l.s4 1983009808
        %v2261 = vunpack.c.0.s8 %v2260
        %v2262 = vperm.slane %v2212, %v2261
        %v2265 = vunpack.c.l.s4 1983009808
        %v2266 = vunpack.c.0.s8 %v2265
        %v2267 = vperm.slane %v2218, %v2266
        %v2268 = vrot.slane %v2267, 4
        %v2269 = vsel %vm1300, %v2268, %v2262
        %v2270 = vrot.slane %v2262, 4
        %v2271 = vsel %vm1300, %v2267, %v2270
        %v2273 = vunpack.c.l.s4 1934713408
        %v2274 = vunpack.c.0.s8 %v2273
        %v2275 = vperm.slane %v2269, %v2274
        %v2277 = vunpack.c.l.s4 1934713408
        %v2278 = vunpack.c.0.s8 %v2277
        %v2279 = vperm.slane %v2271, %v2278
        %v2280 = vrot.slane %v2275, 4
        %v2281 = vsel %vm1300, 0, %v2280
        %v2282 = vrot.slane %v2279, 4
        %v2283 = vsel %vm1300, 0, %v2282
        %v2286 = vunpack.c.l.s4 1983009808
        %v2287 = vunpack.c.0.s8 %v2286
        %v2288 = vperm.slane %v2215, %v2287
        %v2291 = vunpack.c.l.s4 1983009808
        %v2292 = vunpack.c.0.s8 %v2291
        %v2293 = vperm.slane %v2221, %v2292
        %v2294 = vrot.slane %v2293, 4
        %v2295 = vsel %vm1300, %v2294, %v2288
        %v2296 = vrot.slane %v2288, 4
        %v2297 = vsel %vm1300, %v2293, %v2296
        %v2299 = vunpack.c.l.s4 1934713408
        %v2300 = vunpack.c.0.s8 %v2299
        %v2301 = vperm.slane %v2295, %v2300
        %v2303 = vunpack.c.l.s4 1934713408
        %v2304 = vunpack.c.0.s8 %v2303
        %v2305 = vperm.slane %v2297, %v2304
        %v2306 = vrot.slane %v2301, 4
        %v2307 = vsel %vm1300, 0, %v2306
        %v2308 = vrot.slane %v2305, 4
        %v2309 = vsel %vm1300, 0, %v2308
        %v2312 = vunpack.c.l.s4 1983009808
        %v2313 = vunpack.c.0.s8 %v2312
        %v2314 = vperm.slane %v2224, %v2313
        %v2317 = vunpack.c.l.s4 1983009808
        %v2318 = vunpack.c.0.s8 %v2317
        %v2319 = vperm.slane %v2230, %v2318
        %v2320 = vrot.slane %v2319, 4
        %v2321 = vsel %vm1300, %v2320, %v2314
        %v2322 = vrot.slane %v2314, 4
        %v2323 = vsel %vm1300, %v2319, %v2322
        %v2325 = vunpack.c.l.s4 1934713408
        %v2326 = vunpack.c.0.s8 %v2325
        %v2327 = vperm.slane %v2321, %v2326
        %v2329 = vunpack.c.l.s4 1934713408
        %v2330 = vunpack.c.0.s8 %v2329
        %v2331 = vperm.slane %v2323, %v2330
        %v2332 = vrot.slane %v2327, 4
        %v2333 = vsel %vm1300, 0, %v2332
        %v2334 = vrot.slane %v2331, 4
        %v2335 = vsel %vm1300, 0, %v2334
        %v2338 = vunpack.c.l.s4 1983009808
        %v2339 = vunpack.c.0.s8 %v2338
        %v2340 = vperm.slane %v2227, %v2339
        %v2343 = vunpack.c.l.s4 1983009808
        %v2344 = vunpack.c.0.s8 %v2343
        %v2345 = vperm.slane %v2233, %v2344
        %v2346 = vrot.slane %v2345, 4
        %v2347 = vsel %vm1300, %v2346, %v2340
        %v2348 = vrot.slane %v2340, 4
        %v2349 = vsel %vm1300, %v2345, %v2348
        %v2351 = vunpack.c.l.s4 1934713408
        %v2352 = vunpack.c.0.s8 %v2351
        %v2353 = vperm.slane %v2347, %v2352
        %v2355 = vunpack.c.l.s4 1934713408
        %v2356 = vunpack.c.0.s8 %v2355
        %v2357 = vperm.slane %v2349, %v2356
        %v2358 = vrot.slane %v2353, 4
        %v2359 = vsel %vm1300, 0, %v2358
        %v2360 = vrot.slane %v2357, 4
        %v2361 = vsel %vm1300, 0, %v2360
        %v2364 = vunpack.c.l.s4 1983009808
        %v2365 = vunpack.c.0.s8 %v2364
        %v2366 = vperm.slane %v2236, %v2365
        %v2369 = vunpack.c.l.s4 1983009808
        %v2370 = vunpack.c.0.s8 %v2369
        %v2371 = vperm.slane %v2242, %v2370
        %v2372 = vrot.slane %v2371, 4
        %v2373 = vsel %vm1300, %v2372, %v2366
        %v2374 = vrot.slane %v2366, 4
        %v2375 = vsel %vm1300, %v2371, %v2374
        %v2377 = vunpack.c.l.s4 1934713408
        %v2378 = vunpack.c.0.s8 %v2377
        %v2379 = vperm.slane %v2373, %v2378
        %v2381 = vunpack.c.l.s4 1934713408
        %v2382 = vunpack.c.0.s8 %v2381
        %v2383 = vperm.slane %v2375, %v2382
        %v2384 = vrot.slane %v2379, 4
        %v2385 = vsel %vm1300, 0, %v2384
        %v2386 = vrot.slane %v2383, 4
        %v2387 = vsel %vm1300, 0, %v2386
        %v2390 = vunpack.c.l.s4 1983009808
        %v2391 = vunpack.c.0.s8 %v2390
        %v2392 = vperm.slane %v2239, %v2391
        %v2395 = vunpack.c.l.s4 1983009808
        %v2396 = vunpack.c.0.s8 %v2395
        %v2397 = vperm.slane %v2245, %v2396
        %v2398 = vrot.slane %v2397, 4
        %v2399 = vsel %vm1300, %v2398, %v2392
        %v2400 = vrot.slane %v2392, 4
        %v2401 = vsel %vm1300, %v2397, %v2400
        %v2403 = vunpack.c.l.s4 1934713408
        %v2404 = vunpack.c.0.s8 %v2403
        %v2405 = vperm.slane %v2399, %v2404
        %v2407 = vunpack.c.l.s4 1934713408
        %v2408 = vunpack.c.0.s8 %v2407
        %v2409 = vperm.slane %v2401, %v2408
        %v2410 = vrot.slane %v2405, 4
        %v2411 = vsel %vm1300, 0, %v2410
        %v2412 = vrot.slane %v2409, 4
        %v2413 = vsel %vm1300, 0, %v2412
        %v2416 = vunpack.c.l.s4 1983009808
        %v2417 = vunpack.c.0.s8 %v2416
        %v2418 = vperm.slane %v2248, %v2417
        %v2421 = vunpack.c.l.s4 1983009808
        %v2422 = vunpack.c.0.s8 %v2421
        %v2423 = vperm.slane %v2254, %v2422
        %v2424 = vrot.slane %v2423, 4
        %v2425 = vsel %vm1300, %v2424, %v2418
        %v2426 = vrot.slane %v2418, 4
        %v2427 = vsel %vm1300, %v2423, %v2426
        %v2429 = vunpack.c.l.s4 1934713408
        %v2430 = vunpack.c.0.s8 %v2429
        %v2431 = vperm.slane %v2425, %v2430
        %v2433 = vunpack.c.l.s4 1934713408
        %v2434 = vunpack.c.0.s8 %v2433
        %v2435 = vperm.slane %v2427, %v2434
        %v2436 = vrot.slane %v2431, 4
        %v2437 = vsel %vm1300, 0, %v2436
        %v2438 = vrot.slane %v2435, 4
        %v2439 = vsel %vm1300, 0, %v2438
        %v2442 = vunpack.c.l.s4 1983009808
        %v2443 = vunpack.c.0.s8 %v2442
        %v2444 = vperm.slane %v2251, %v2443
        %v2447 = vunpack.c.l.s4 1983009808
        %v2448 = vunpack.c.0.s8 %v2447
        %v2449 = vperm.slane %v2257, %v2448
        %v2450 = vrot.slane %v2449, 4
        %v2451 = vsel %vm1300, %v2450, %v2444
        %v2452 = vrot.slane %v2444, 4
        %v2453 = vsel %vm1300, %v2449, %v2452
        %v2455 = vunpack.c.l.s4 1934713408
        %v2456 = vunpack.c.0.s8 %v2455
        %v2457 = vperm.slane %v2451, %v2456
        %v2459 = vunpack.c.l.s4 1934713408
        %v2460 = vunpack.c.0.s8 %v2459
        %v2461 = vperm.slane %v2453, %v2460
        %v2462 = vrot.slane %v2457, 4
        %v2463 = vsel %vm1300, 0, %v2462
        %v2464 = vrot.slane %v2461, 4
        %v2465 = vsel %vm1300, 0, %v2464
        %v2466 = vsel %vm1300, %v2282, %v2275
        %v2468 = vunpack.c.l.s4 1983009808
        %v2469 = vunpack.c.0.s8 %v2468
        %v2470 = vperm.slane %v2466, %v2469
        %v2471 = vrot.slane %v2283, 4
        %v2472 = vsel %vm1300, %v2471, %v2281
        %v2474 = vunpack.c.l.s4 1983009808
        %v2475 = vunpack.c.0.s8 %v2474
        %v2476 = vperm.slane %v2472, %v2475
        %v2477 = vrot.slane %v2476, 4
        %v2478 = vsel %vm1300, %v2477, %v2470
        %v2480 = vunpack.c.l.s4 1934713408
        %v2481 = vunpack.c.0.s8 %v2480
        %v2482 = vperm.slane %v2478, %v2481
        %v2483 = vrot.slane %v2482, 4
        %v2484 = vsel %vm1300, 0, %v2483
        %v2485 = vsel %vm1300, %v2308, %v2301
        %v2487 = vunpack.c.l.s4 1983009808
        %v2488 = vunpack.c.0.s8 %v2487
        %v2489 = vperm.slane %v2485, %v2488
        %v2490 = vrot.slane %v2309, 4
        %v2491 = vsel %vm1300, %v2490, %v2307
        %v2493 = vunpack.c.l.s4 1983009808
        %v2494 = vunpack.c.0.s8 %v2493
        %v2495 = vperm.slane %v2491, %v2494
        %v2496 = vrot.slane %v2495, 4
        %v2497 = vsel %vm1300, %v2496, %v2489
        %v2499 = vunpack.c.l.s4 1934713408
        %v2500 = vunpack.c.0.s8 %v2499
        %v2501 = vperm.slane %v2497, %v2500
        %v2502 = vrot.slane %v2501, 4
        %v2503 = vsel %vm1300, 0, %v2502
        %v2504 = vsel %vm1300, %v2334, %v2327
        %v2506 = vunpack.c.l.s4 1983009808
        %v2507 = vunpack.c.0.s8 %v2506
        %v2508 = vperm.slane %v2504, %v2507
        %v2509 = vrot.slane %v2335, 4
        %v2510 = vsel %vm1300, %v2509, %v2333
        %v2512 = vunpack.c.l.s4 1983009808
        %v2513 = vunpack.c.0.s8 %v2512
        %v2514 = vperm.slane %v2510, %v2513
        %v2515 = vrot.slane %v2514, 4
        %v2516 = vsel %vm1300, %v2515, %v2508
        %v2518 = vunpack.c.l.s4 1934713408
        %v2519 = vunpack.c.0.s8 %v2518
        %v2520 = vperm.slane %v2516, %v2519
        %v2521 = vrot.slane %v2520, 4
        %v2522 = vsel %vm1300, 0, %v2521
        %v2523 = vsel %vm1300, %v2360, %v2353
        %v2525 = vunpack.c.l.s4 1983009808
        %v2526 = vunpack.c.0.s8 %v2525
        %v2527 = vperm.slane %v2523, %v2526
        %v2528 = vrot.slane %v2361, 4
        %v2529 = vsel %vm1300, %v2528, %v2359
        %v2531 = vunpack.c.l.s4 1983009808
        %v2532 = vunpack.c.0.s8 %v2531
        %v2533 = vperm.slane %v2529, %v2532
        %v2534 = vrot.slane %v2533, 4
        %v2535 = vsel %vm1300, %v2534, %v2527
        %v2537 = vunpack.c.l.s4 1934713408
        %v2538 = vunpack.c.0.s8 %v2537
        %v2539 = vperm.slane %v2535, %v2538
        %v2540 = vrot.slane %v2539, 4
        %v2541 = vsel %vm1300, 0, %v2540
        %v2542 = vsel %vm1300, %v2386, %v2379
        %v2544 = vunpack.c.l.s4 1983009808
        %v2545 = vunpack.c.0.s8 %v2544
        %v2546 = vperm.slane %v2542, %v2545
        %v2547 = vrot.slane %v2387, 4
        %v2548 = vsel %vm1300, %v2547, %v2385
        %v2550 = vunpack.c.l.s4 1983009808
        %v2551 = vunpack.c.0.s8 %v2550
        %v2552 = vperm.slane %v2548, %v2551
        %v2553 = vrot.slane %v2552, 4
        %v2554 = vsel %vm1300, %v2553, %v2546
        %v2556 = vunpack.c.l.s4 1934713408
        %v2557 = vunpack.c.0.s8 %v2556
        %v2558 = vperm.slane %v2554, %v2557
        %v2559 = vrot.slane %v2558, 4
        %v2560 = vsel %vm1300, 0, %v2559
        %v2561 = vsel %vm1300, %v2412, %v2405
        %v2563 = vunpack.c.l.s4 1983009808
        %v2564 = vunpack.c.0.s8 %v2563
        %v2565 = vperm.slane %v2561, %v2564
        %v2566 = vrot.slane %v2413, 4
        %v2567 = vsel %vm1300, %v2566, %v2411
        %v2569 = vunpack.c.l.s4 1983009808
        %v2570 = vunpack.c.0.s8 %v2569
        %v2571 = vperm.slane %v2567, %v2570
        %v2572 = vrot.slane %v2571, 4
        %v2573 = vsel %vm1300, %v2572, %v2565
        %v2575 = vunpack.c.l.s4 1934713408
        %v2576 = vunpack.c.0.s8 %v2575
        %v2577 = vperm.slane %v2573, %v2576
        %v2578 = vrot.slane %v2577, 4
        %v2579 = vsel %vm1300, 0, %v2578
        %v2580 = vsel %vm1300, %v2438, %v2431
        %v2582 = vunpack.c.l.s4 1983009808
        %v2583 = vunpack.c.0.s8 %v2582
        %v2584 = vperm.slane %v2580, %v2583
        %v2585 = vrot.slane %v2439, 4
        %v2586 = vsel %vm1300, %v2585, %v2437
        %v2588 = vunpack.c.l.s4 1983009808
        %v2589 = vunpack.c.0.s8 %v2588
        %v2590 = vperm.slane %v2586, %v2589
        %v2591 = vrot.slane %v2590, 4
        %v2592 = vsel %vm1300, %v2591, %v2584
        %v2594 = vunpack.c.l.s4 1934713408
        %v2595 = vunpack.c.0.s8 %v2594
        %v2596 = vperm.slane %v2592, %v2595
        %v2597 = vrot.slane %v2596, 4
        %v2598 = vsel %vm1300, 0, %v2597
        %v2599 = vsel %vm1300, %v2464, %v2457
        %v2601 = vunpack.c.l.s4 1983009808
        %v2602 = vunpack.c.0.s8 %v2601
        %v2603 = vperm.slane %v2599, %v2602
        %v2604 = vrot.slane %v2465, 4
        %v2605 = vsel %vm1300, %v2604, %v2463
        %v2607 = vunpack.c.l.s4 1983009808
        %v2608 = vunpack.c.0.s8 %v2607
        %v2609 = vperm.slane %v2605, %v2608
        %v2610 = vrot.slane %v2609, 4
        %v2611 = vsel %vm1300, %v2610, %v2603
        %v2613 = vunpack.c.l.s4 1934713408
        %v2614 = vunpack.c.0.s8 %v2613
        %v2615 = vperm.slane %v2611, %v2614
        %v2616 = vrot.slane %v2615, 4
        %v2617 = vsel %vm1300, 0, %v2616
        %v2620 = vpack.i.b16 %v2501, %v2482
        %v2621 = vshrl.u32 %v2482, 16
        %v2622 = vshrl.u32 %v2501, 16
        %v2623 = vpack.i.b16 %v2622, %v2621
        %v2626 = vpack.i.b16 %v2503, %v2484
        %v2627 = vshrl.u32 %v2484, 16
        %v2628 = vshrl.u32 %v2503, 16
        %v2629 = vpack.i.b16 %v2628, %v2627
        %v2632 = vpack.i.b16 %v2539, %v2520
        %v2633 = vshrl.u32 %v2520, 16
        %v2634 = vshrl.u32 %v2539, 16
        %v2635 = vpack.i.b16 %v2634, %v2633
        %v2638 = vpack.i.b16 %v2541, %v2522
        %v2639 = vshrl.u32 %v2522, 16
        %v2640 = vshrl.u32 %v2541, 16
        %v2641 = vpack.i.b16 %v2640, %v2639
        %v2644 = vpack.i.b16 %v2577, %v2558
        %v2645 = vshrl.u32 %v2558, 16
        %v2646 = vshrl.u32 %v2577, 16
        %v2647 = vpack.i.b16 %v2646, %v2645
        %v2650 = vpack.i.b16 %v2579, %v2560
        %v2651 = vshrl.u32 %v2560, 16
        %v2652 = vshrl.u32 %v2579, 16
        %v2653 = vpack.i.b16 %v2652, %v2651
        %v2656 = vpack.i.b16 %v2615, %v2596
        %v2657 = vshrl.u32 %v2596, 16
        %v2658 = vshrl.u32 %v2615, 16
        %v2659 = vpack.i.b16 %v2658, %v2657
        %v2662 = vpack.i.b16 %v2617, %v2598
        %v2663 = vshrl.u32 %v2598, 16
        %v2664 = vshrl.u32 %v2617, 16
        %v2665 = vpack.i.b16 %v2664, %v2663
        %v2666 = vunpack.c.l.b16 %v1652
        %v2667 = vunpack.c.l.b16 %v1664
        %v2668 = vpack.c.b16 %v2667, %v2666
        %v2669 = vunpack.c.l.b16 %v2136
        %v2670 = vunpack.c.l.b16 %v2148
        %v2671 = vpack.c.b16 %v2670, %v2669
        %vm2672 = vcmask 261120
        %v2674 = vsel %vm2672, %v2668, 0
        %v2677 = vsel %vm2672, %v2671, 0
        %2679 = vmatpush.bf16.xpose.msra.mxu0 0
        %2680 = vmatpush.bf16.xpose.msra.mxu0 0
        %2681 = vmatpush.bf16.xpose.msra.mxu0 0
        %2682 = vmatpush.bf16.xpose.msra.mxu0 0
        %2683 = vmatpush.bf16.xpose.msra.mxu0 0
        %2684 = vmatpush.bf16.xpose.msra.mxu0 0
        %2685 = vmatpush.bf16.xpose.msra.mxu0 0
        %2686 = vmatpush.bf16.xpose.msra.mxu0 %v2677
        %2687 = vmatmul.bf16.gmra.mxu0 %v2674
        %v2688 = vpop.f32.mrf.mxu0
        %v2689 = vadd.f32 0.0, %v2688
        %v2690 = vpop.f32.mrf.mxu0
        %v2691 = vadd.f32 0.0, %v2690
        %2692 = vdwg.mxu0
        %v2693 = vunpack.c.l.b16 %v1655
        %v2694 = vunpack.c.l.b16 %v1667
        %v2695 = vpack.c.b16 %v2694, %v2693
        %v2696 = vunpack.c.l.b16 %v2139
        %v2697 = vunpack.c.l.b16 %v2151
        %v2698 = vpack.c.b16 %v2697, %v2696
        %v2700 = vsel %vm2672, %v2695, 0
        %v2703 = vsel %vm2672, %v2698, 0
        %2705 = vmatpush.bf16.xpose.msra.mxu0 0
        %2706 = vmatpush.bf16.xpose.msra.mxu0 0
        %2707 = vmatpush.bf16.xpose.msra.mxu0 0
        %2708 = vmatpush.bf16.xpose.msra.mxu0 0
        %2709 = vmatpush.bf16.xpose.msra.mxu0 0
        %2710 = vmatpush.bf16.xpose.msra.mxu0 0
        %2711 = vmatpush.bf16.xpose.msra.mxu0 0
        %2712 = vmatpush.bf16.xpose.msra.mxu0 %v2703
        %2713 = vmatmul.bf16.gmra.mxu0 %v2700
        %v2714 = vpop.f32.mrf.mxu0
        %v2715 = vadd.f32 0.0, %v2714
        %v2716 = vpop.f32.mrf.mxu0
        %v2717 = vadd.f32 0.0, %v2716
        %2718 = vdwg.mxu0
        %v2719 = vunpack.c.l.b16 %v1658
        %v2720 = vunpack.c.l.b16 %v1670
        %v2721 = vpack.c.b16 %v2720, %v2719
        %v2722 = vunpack.c.l.b16 %v2142
        %v2723 = vunpack.c.l.b16 %v2154
        %v2724 = vpack.c.b16 %v2723, %v2722
        %v2726 = vsel %vm2672, %v2721, 0
        %v2729 = vsel %vm2672, %v2724, 0
        %2731 = vmatpush.bf16.xpose.msra.mxu0 0
        %2732 = vmatpush.bf16.xpose.msra.mxu0 0
        %2733 = vmatpush.bf16.xpose.msra.mxu0 0
        %2734 = vmatpush.bf16.xpose.msra.mxu0 0
        %2735 = vmatpush.bf16.xpose.msra.mxu0 0
        %2736 = vmatpush.bf16.xpose.msra.mxu0 0
        %2737 = vmatpush.bf16.xpose.msra.mxu0 0
        %2738 = vmatpush.bf16.xpose.msra.mxu0 %v2729
        %2739 = vmatmul.bf16.gmra.mxu0 %v2726
        %v2740 = vpop.f32.mrf.mxu0
        %v2741 = vadd.f32 0.0, %v2740
        %v2742 = vpop.f32.mrf.mxu0
        %v2743 = vadd.f32 0.0, %v2742
        %2744 = vdwg.mxu0
        %v2745 = vunpack.c.l.b16 %v1661
        %v2746 = vunpack.c.l.b16 %v1673
        %v2747 = vpack.c.b16 %v2746, %v2745
        %v2748 = vunpack.c.l.b16 %v2145
        %v2749 = vunpack.c.l.b16 %v2157
        %v2750 = vpack.c.b16 %v2749, %v2748
        %v2752 = vsel %vm2672, %v2747, 0
        %v2755 = vsel %vm2672, %v2750, 0
        %2757 = vmatpush.bf16.xpose.msra.mxu0 0
        %2758 = vmatpush.bf16.xpose.msra.mxu0 0
        %2759 = vmatpush.bf16.xpose.msra.mxu0 0
        %2760 = vmatpush.bf16.xpose.msra.mxu0 0
        %2761 = vmatpush.bf16.xpose.msra.mxu0 0
        %2762 = vmatpush.bf16.xpose.msra.mxu0 0
        %2763 = vmatpush.bf16.xpose.msra.mxu0 0
        %2764 = vmatpush.bf16.xpose.msra.mxu0 %v2755
        %2765 = vmatmul.bf16.gmra.mxu0 %v2752
        %v2766 = vpop.f32.mrf.mxu0
        %v2767 = vadd.f32 0.0, %v2766
        %v2768 = vpop.f32.mrf.mxu0
        %v2769 = vadd.f32 0.0, %v2768
        %2770 = vdwg.mxu0
        %v2771 = vunpack.c.l.b16 %v1676
        %v2772 = vunpack.c.l.b16 %v1688
        %v2773 = vpack.c.b16 %v2772, %v2771
        %v2774 = vunpack.c.l.b16 %v2160
        %v2775 = vunpack.c.l.b16 %v2172
        %v2776 = vpack.c.b16 %v2775, %v2774
        %v2778 = vsel %vm2672, %v2773, 0
        %v2781 = vsel %vm2672, %v2776, 0
        %2783 = vmatpush.bf16.xpose.msra.mxu0 0
        %2784 = vmatpush.bf16.xpose.msra.mxu0 0
        %2785 = vmatpush.bf16.xpose.msra.mxu0 0
        %2786 = vmatpush.bf16.xpose.msra.mxu0 0
        %2787 = vmatpush.bf16.xpose.msra.mxu0 0
        %2788 = vmatpush.bf16.xpose.msra.mxu0 0
        %2789 = vmatpush.bf16.xpose.msra.mxu0 0
        %2790 = vmatpush.bf16.xpose.msra.mxu0 %v2781
        %2791 = vmatmul.bf16.gmra.mxu0 %v2778
        %v2792 = vpop.f32.mrf.mxu0
        %v2793 = vadd.f32 0.0, %v2792
        %v2794 = vpop.f32.mrf.mxu0
        %v2795 = vadd.f32 0.0, %v2794
        %2796 = vdwg.mxu0
        %v2797 = vunpack.c.l.b16 %v1679
        %v2798 = vunpack.c.l.b16 %v1691
        %v2799 = vpack.c.b16 %v2798, %v2797
        %v2800 = vunpack.c.l.b16 %v2163
        %v2801 = vunpack.c.l.b16 %v2175
        %v2802 = vpack.c.b16 %v2801, %v2800
        %v2804 = vsel %vm2672, %v2799, 0
        %v2807 = vsel %vm2672, %v2802, 0
        %2809 = vmatpush.bf16.xpose.msra.mxu0 0
        %2810 = vmatpush.bf16.xpose.msra.mxu0 0
        %2811 = vmatpush.bf16.xpose.msra.mxu0 0
        %2812 = vmatpush.bf16.xpose.msra.mxu0 0
        %2813 = vmatpush.bf16.xpose.msra.mxu0 0
        %2814 = vmatpush.bf16.xpose.msra.mxu0 0
        %2815 = vmatpush.bf16.xpose.msra.mxu0 0
        %2816 = vmatpush.bf16.xpose.msra.mxu0 %v2807
        %2817 = vmatmul.bf16.gmra.mxu0 %v2804
        %v2818 = vpop.f32.mrf.mxu0
        %v2819 = vadd.f32 0.0, %v2818
        %v2820 = vpop.f32.mrf.mxu0
        %v2821 = vadd.f32 0.0, %v2820
        %2822 = vdwg.mxu0
        %v2823 = vunpack.c.l.b16 %v1682
        %v2824 = vunpack.c.l.b16 %v1694
        %v2825 = vpack.c.b16 %v2824, %v2823
        %v2826 = vunpack.c.l.b16 %v2166
        %v2827 = vunpack.c.l.b16 %v2178
        %v2828 = vpack.c.b16 %v2827, %v2826
        %v2830 = vsel %vm2672, %v2825, 0
        %v2833 = vsel %vm2672, %v2828, 0
        %2835 = vmatpush.bf16.xpose.msra.mxu0 0
        %2836 = vmatpush.bf16.xpose.msra.mxu0 0
        %2837 = vmatpush.bf16.xpose.msra.mxu0 0
        %2838 = vmatpush.bf16.xpose.msra.mxu0 0
        %2839 = vmatpush.bf16.xpose.msra.mxu0 0
        %2840 = vmatpush.bf16.xpose.msra.mxu0 0
        %2841 = vmatpush.bf16.xpose.msra.mxu0 0
        %2842 = vmatpush.bf16.xpose.msra.mxu0 %v2833
        %2843 = vmatmul.bf16.gmra.mxu0 %v2830
        %v2844 = vpop.f32.mrf.mxu0
        %v2845 = vadd.f32 0.0, %v2844
        %v2846 = vpop.f32.mrf.mxu0
        %v2847 = vadd.f32 0.0, %v2846
        %2848 = vdwg.mxu0
        %v2849 = vunpack.c.l.b16 %v1685
        %v2850 = vunpack.c.l.b16 %v1697
        %v2851 = vpack.c.b16 %v2850, %v2849
        %v2852 = vunpack.c.l.b16 %v2169
        %v2853 = vunpack.c.l.b16 %v2181
        %v2854 = vpack.c.b16 %v2853, %v2852
        %v2856 = vsel %vm2672, %v2851, 0
        %v2859 = vsel %vm2672, %v2854, 0
        %2861 = vmatpush.bf16.xpose.msra.mxu0 0
        %2862 = vmatpush.bf16.xpose.msra.mxu0 0
        %2863 = vmatpush.bf16.xpose.msra.mxu0 0
        %2864 = vmatpush.bf16.xpose.msra.mxu0 0
        %2865 = vmatpush.bf16.xpose.msra.mxu0 0
        %2866 = vmatpush.bf16.xpose.msra.mxu0 0
        %2867 = vmatpush.bf16.xpose.msra.mxu0 0
        %2868 = vmatpush.bf16.xpose.msra.mxu0 %v2859
        %2869 = vmatmul.bf16.gmra.mxu0 %v2856
        %v2870 = vpop.f32.mrf.mxu0
        %v2871 = vadd.f32 0.0, %v2870
        %v2872 = vpop.f32.mrf.mxu0
        %v2873 = vadd.f32 0.0, %v2872
        %2874 = vdwg.mxu0
        %v2875 = vlaneseq
        %v2876 = vshrl.u32 %v2875, 7
        %v2877 = vadd.s32 %v2876, 8
        %v2878 = vlaneseq
        %v2879 = vand.u32 %v2878, 127
        %vm2880 = vcmp.le.s32.totalorder %v2879, %v2876
        %vm2881 = vcmp.le.s32.totalorder %v2879, %v2877
        %v2882 = vsel %vm2880, 1, 0
        %v2883 = vsel %vm2881, 1, 0
        %vm2884 = vcmp.eq.s32.totalorder %v2882, 1
        %vm2885 = vcmp.eq.s32.totalorder %v2883, 1
        %v2886 = vsel %vm2884, %v2689, -1e+30
        %v2887 = vsel %vm2885, %v2691, -1e+30
        %v2888 = vsel %vm2884, %v2715, -1e+30
        %v2889 = vsel %vm2885, %v2717, -1e+30
        %v2890 = vsel %vm2884, %v2741, -1e+30
        %v2891 = vsel %vm2885, %v2743, -1e+30
        %v2892 = vsel %vm2884, %v2767, -1e+30
        %v2893 = vsel %vm2885, %v2769, -1e+30
        %v2894 = vsel %vm2884, %v2793, -1e+30
        %v2895 = vsel %vm2885, %v2795, -1e+30
        %v2896 = vsel %vm2884, %v2819, -1e+30
        %v2897 = vsel %vm2885, %v2821, -1e+30
        %v2898 = vsel %vm2884, %v2845, -1e+30
        %v2899 = vsel %vm2885, %v2847, -1e+30
        %v2900 = vsel %vm2884, %v2871, -1e+30
        %v2901 = vsel %vm2885, %v2873, -1e+30
        %vm2902 = vcmask 130048
        %v2903 = vsel %vm2902, %v2886, -inf
        %2904 = vmax.xlane.f32.xlu0 %v2903
        %v2905 = vpop.xlane.xlu0 %2904
        %v2906 = vsel %vm2902, %v2887, -inf
        %2907 = vmax.xlane.f32.xlu0 %v2906
        %v2908 = vpop.xlane.xlu0 %2907
        %v2909 = vsel %vm2902, %v2888, -inf
        %2910 = vmax.xlane.f32.xlu0 %v2909
        %v2911 = vpop.xlane.xlu0 %2910
        %v2912 = vsel %vm2902, %v2889, -inf
        %2913 = vmax.xlane.f32.xlu0 %v2912
        %v2914 = vpop.xlane.xlu0 %2913
        %v2915 = vsel %vm2902, %v2890, -inf
        %2916 = vmax.xlane.f32.xlu0 %v2915
        %v2917 = vpop.xlane.xlu0 %2916
        %v2918 = vsel %vm2902, %v2891, -inf
        %2919 = vmax.xlane.f32.xlu0 %v2918
        %v2920 = vpop.xlane.xlu0 %2919
        %v2921 = vsel %vm2902, %v2892, -inf
        %2922 = vmax.xlane.f32.xlu0 %v2921
        %v2923 = vpop.xlane.xlu0 %2922
        %v2924 = vsel %vm2902, %v2893, -inf
        %2925 = vmax.xlane.f32.xlu0 %v2924
        %v2926 = vpop.xlane.xlu0 %2925
        %v2927 = vsel %vm2902, %v2894, -inf
        %2928 = vmax.xlane.f32.xlu0 %v2927
        %v2929 = vpop.xlane.xlu0 %2928
        %v2930 = vsel %vm2902, %v2895, -inf
        %2931 = vmax.xlane.f32.xlu0 %v2930
        %v2932 = vpop.xlane.xlu0 %2931
        %v2933 = vsel %vm2902, %v2896, -inf
        %2934 = vmax.xlane.f32.xlu0 %v2933
        %v2935 = vpop.xlane.xlu0 %2934
        %v2936 = vsel %vm2902, %v2897, -inf
        %2937 = vmax.xlane.f32.xlu0 %v2936
        %v2938 = vpop.xlane.xlu0 %2937
        %v2939 = vsel %vm2902, %v2898, -inf
        %2940 = vmax.xlane.f32.xlu0 %v2939
        %v2941 = vpop.xlane.xlu0 %2940
        %v2942 = vsel %vm2902, %v2899, -inf
        %2943 = vmax.xlane.f32.xlu0 %v2942
        %v2944 = vpop.xlane.xlu0 %2943
        %v2945 = vsel %vm2902, %v2900, -inf
        %2946 = vmax.xlane.f32.xlu0 %v2945
        %v2947 = vpop.xlane.xlu0 %2946
        %v2948 = vsel %vm2902, %v2901, -inf
        %2949 = vmax.xlane.f32.xlu0 %v2948
        %v2950 = vpop.xlane.xlu0 %2949
        %v2951 = vsub.f32 %v2886, %v2905
        %v2952 = vsub.f32 %v2887, %v2908
        %v2953 = vsub.f32 %v2888, %v2911
        %v2954 = vsub.f32 %v2889, %v2914
        %v2955 = vsub.f32 %v2890, %v2917
        %v2956 = vsub.f32 %v2891, %v2920
        %v2957 = vsub.f32 %v2892, %v2923
        %v2958 = vsub.f32 %v2893, %v2926
        %v2959 = vsub.f32 %v2894, %v2929
        %v2960 = vsub.f32 %v2895, %v2932
        %v2961 = vsub.f32 %v2896, %v2935
        %v2962 = vsub.f32 %v2897, %v2938
        %v2963 = vsub.f32 %v2898, %v2941
        %v2964 = vsub.f32 %v2899, %v2944
        %v2965 = vsub.f32 %v2900, %v2947
        %v2966 = vsub.f32 %v2901, %v2950
        %v2967 = vmul.f32 %v2951, 1.442695
        %v2968 = vpow.pop %v2967
        %v2969 = vmul.f32 %v2952, 1.442695
        %v2970 = vpow.pop %v2969
        %v2971 = vmul.f32 %v2953, 1.442695
        %v2972 = vpow.pop %v2971
        %v2973 = vmul.f32 %v2954, 1.442695
        %v2974 = vpow.pop %v2973
        %v2975 = vmul.f32 %v2955, 1.442695
        %v2976 = vpow.pop %v2975
        %v2977 = vmul.f32 %v2956, 1.442695
        %v2978 = vpow.pop %v2977
        %v2979 = vmul.f32 %v2957, 1.442695
        %v2980 = vpow.pop %v2979
        %v2981 = vmul.f32 %v2958, 1.442695
        %v2982 = vpow.pop %v2981
        %v2983 = vmul.f32 %v2959, 1.442695
        %v2984 = vpow.pop %v2983
        %v2985 = vmul.f32 %v2960, 1.442695
        %v2986 = vpow.pop %v2985
        %v2987 = vmul.f32 %v2961, 1.442695
        %v2988 = vpow.pop %v2987
        %v2989 = vmul.f32 %v2962, 1.442695
        %v2990 = vpow.pop %v2989
        %v2991 = vmul.f32 %v2963, 1.442695
        %v2992 = vpow.pop %v2991
        %v2993 = vmul.f32 %v2964, 1.442695
        %v2994 = vpow.pop %v2993
        %v2995 = vmul.f32 %v2965, 1.442695
        %v2996 = vpow.pop %v2995
        %v2997 = vmul.f32 %v2966, 1.442695
        %v2998 = vpow.pop %v2997
        %v2999 = vsel %vm2902, %v2968, 0.0
        %3000 = vadd.xlane.f32.xlu0 %v2999
        %v3001 = vpop.xlane.xlu0 %3000
        %v3002 = vsel %vm2902, %v2970, 0.0
        %3003 = vadd.xlane.f32.xlu0 %v3002
        %v3004 = vpop.xlane.xlu0 %3003
        %v3005 = vsel %vm2902, %v2972, 0.0
        %3006 = vadd.xlane.f32.xlu0 %v3005
        %v3007 = vpop.xlane.xlu0 %3006
        %v3008 = vsel %vm2902, %v2974, 0.0
        %3009 = vadd.xlane.f32.xlu0 %v3008
        %v3010 = vpop.xlane.xlu0 %3009
        %v3011 = vsel %vm2902, %v2976, 0.0
        %3012 = vadd.xlane.f32.xlu0 %v3011
        %v3013 = vpop.xlane.xlu0 %3012
        %v3014 = vsel %vm2902, %v2978, 0.0
        %3015 = vadd.xlane.f32.xlu0 %v3014
        %v3016 = vpop.xlane.xlu0 %3015
        %v3017 = vsel %vm2902, %v2980, 0.0
        %3018 = vadd.xlane.f32.xlu0 %v3017
        %v3019 = vpop.xlane.xlu0 %3018
        %v3020 = vsel %vm2902, %v2982, 0.0
        %3021 = vadd.xlane.f32.xlu0 %v3020
        %v3022 = vpop.xlane.xlu0 %3021
        %v3023 = vsel %vm2902, %v2984, 0.0
        %3024 = vadd.xlane.f32.xlu0 %v3023
        %v3025 = vpop.xlane.xlu0 %3024
        %v3026 = vsel %vm2902, %v2986, 0.0
        %3027 = vadd.xlane.f32.xlu0 %v3026
        %v3028 = vpop.xlane.xlu0 %3027
        %v3029 = vsel %vm2902, %v2988, 0.0
        %3030 = vadd.xlane.f32.xlu0 %v3029
        %v3031 = vpop.xlane.xlu0 %3030
        %v3032 = vsel %vm2902, %v2990, 0.0
        %3033 = vadd.xlane.f32.xlu0 %v3032
        %v3034 = vpop.xlane.xlu0 %3033
        %v3035 = vsel %vm2902, %v2992, 0.0
        %3036 = vadd.xlane.f32.xlu0 %v3035
        %v3037 = vpop.xlane.xlu0 %3036
        %v3038 = vsel %vm2902, %v2994, 0.0
        %3039 = vadd.xlane.f32.xlu0 %v3038
        %v3040 = vpop.xlane.xlu0 %3039
        %v3041 = vsel %vm2902, %v2996, 0.0
        %3042 = vadd.xlane.f32.xlu0 %v3041
        %v3043 = vpop.xlane.xlu0 %3042
        %v3044 = vsel %vm2902, %v2998, 0.0
        %3045 = vadd.xlane.f32.xlu0 %v3044
        %v3046 = vpop.xlane.xlu0 %3045
        %v3047 = vrcp.pop %v3001
        %v3048 = vrcp.pop %v3004
        %v3049 = vrcp.pop %v3007
        %v3050 = vrcp.pop %v3010
        %v3051 = vrcp.pop %v3013
        %v3052 = vrcp.pop %v3016
        %v3053 = vrcp.pop %v3019
        %v3054 = vrcp.pop %v3022
        %v3055 = vrcp.pop %v3025
        %v3056 = vrcp.pop %v3028
        %v3057 = vrcp.pop %v3031
        %v3058 = vrcp.pop %v3034
        %v3059 = vrcp.pop %v3037
        %v3060 = vrcp.pop %v3040
        %v3061 = vrcp.pop %v3043
        %v3062 = vrcp.pop %v3046
        %v3063 = vmul.f32 %v2968, %v3047
        %v3064 = vmul.f32 %v2970, %v3048
        %v3065 = vmul.f32 %v2972, %v3049
        %v3066 = vmul.f32 %v2974, %v3050
        %v3067 = vmul.f32 %v2976, %v3051
        %v3068 = vmul.f32 %v2978, %v3052
        %v3069 = vmul.f32 %v2980, %v3053
        %v3070 = vmul.f32 %v2982, %v3054
        %v3071 = vmul.f32 %v2984, %v3055
        %v3072 = vmul.f32 %v2986, %v3056
        %v3073 = vmul.f32 %v2988, %v3057
        %v3074 = vmul.f32 %v2990, %v3058
        %v3075 = vmul.f32 %v2992, %v3059
        %v3076 = vmul.f32 %v2994, %v3060
        %v3077 = vmul.f32 %v2996, %v3061
        %v3078 = vmul.f32 %v2998, %v3062
        %v3079 = vpack.c.bf16 %v3063, %v3063
        %v3080 = vpack.c.bf16 %v3064, %v3064
        %v3081 = vpack.c.bf16 %v3065, %v3065
        %v3082 = vpack.c.bf16 %v3066, %v3066
        %v3083 = vpack.c.bf16 %v3067, %v3067
        %v3084 = vpack.c.bf16 %v3068, %v3068
        %v3085 = vpack.c.bf16 %v3069, %v3069
        %v3086 = vpack.c.bf16 %v3070, %v3070
        %v3087 = vpack.c.bf16 %v3071, %v3071
        %v3088 = vpack.c.bf16 %v3072, %v3072
        %v3089 = vpack.c.bf16 %v3073, %v3073
        %v3090 = vpack.c.bf16 %v3074, %v3074
        %v3091 = vpack.c.bf16 %v3075, %v3075
        %v3092 = vpack.c.bf16 %v3076, %v3076
        %v3093 = vpack.c.bf16 %v3077, %v3077
        %v3094 = vpack.c.bf16 %v3078, %v3078
        %v3097 = vunpack.c.l.b16 %v3079
        %v3098 = vunpack.c.l.b16 %v3080
        %v3099 = vpack.c.b16 %v3098, %v3097
        %v3100 = vunpack.c.l.b16 %v2620
        %v3101 = vunpack.c.l.b16 %v2632
        %v3102 = vpack.c.b16 %v3101, %v3100
        %v3105 = vsel %vm2902, %v3099, 0
        %3107 = vmatpush.bf16.msra.mxu0 0
        %3108 = vmatpush.bf16.msra.mxu0 0
        %3109 = vmatpush.bf16.msra.mxu0 0
        %3110 = vmatpush.bf16.msra.mxu0 0
        %3111 = vmatpush.bf16.msra.mxu0 0
        %3112 = vmatpush.bf16.msra.mxu0 0
        %3113 = vmatpush.bf16.msra.mxu0 0
        %3114 = vmatpush.bf16.msra.mxu0 %v3102
        %3115 = vmatmul.bf16.gmra.mxu0 %v3105
        %v3116 = vpop.f32.mrf.mxu0
        %v3117 = vadd.f32 0.0, %v3116
        %v3118 = vpop.f32.mrf.mxu0
        %v3119 = vadd.f32 0.0, %v3118
        %3120 = vdwg.mxu0
        %v3123 = vunpack.c.l.b16 %v3081
        %v3124 = vunpack.c.l.b16 %v3082
        %v3125 = vpack.c.b16 %v3124, %v3123
        %v3126 = vunpack.c.l.b16 %v2623
        %v3127 = vunpack.c.l.b16 %v2635
        %v3128 = vpack.c.b16 %v3127, %v3126
        %v3131 = vsel %vm2902, %v3125, 0
        %3133 = vmatpush.bf16.msra.mxu0 0
        %3134 = vmatpush.bf16.msra.mxu0 0
        %3135 = vmatpush.bf16.msra.mxu0 0
        %3136 = vmatpush.bf16.msra.mxu0 0
        %3137 = vmatpush.bf16.msra.mxu0 0
        %3138 = vmatpush.bf16.msra.mxu0 0
        %3139 = vmatpush.bf16.msra.mxu0 0
        %3140 = vmatpush.bf16.msra.mxu0 %v3128
        %3141 = vmatmul.bf16.gmra.mxu0 %v3131
        %v3142 = vpop.f32.mrf.mxu0
        %v3143 = vadd.f32 0.0, %v3142
        %v3144 = vpop.f32.mrf.mxu0
        %v3145 = vadd.f32 0.0, %v3144
        %3146 = vdwg.mxu0
        %v3149 = vunpack.c.l.b16 %v3083
        %v3150 = vunpack.c.l.b16 %v3084
        %v3151 = vpack.c.b16 %v3150, %v3149
        %v3152 = vunpack.c.l.b16 %v2626
        %v3153 = vunpack.c.l.b16 %v2638
        %v3154 = vpack.c.b16 %v3153, %v3152
        %v3157 = vsel %vm2902, %v3151, 0
        %3159 = vmatpush.bf16.msra.mxu0 0
        %3160 = vmatpush.bf16.msra.mxu0 0
        %3161 = vmatpush.bf16.msra.mxu0 0
        %3162 = vmatpush.bf16.msra.mxu0 0
        %3163 = vmatpush.bf16.msra.mxu0 0
        %3164 = vmatpush.bf16.msra.mxu0 0
        %3165 = vmatpush.bf16.msra.mxu0 0
        %3166 = vmatpush.bf16.msra.mxu0 %v3154
        %3167 = vmatmul.bf16.gmra.mxu0 %v3157
        %v3168 = vpop.f32.mrf.mxu0
        %v3169 = vadd.f32 0.0, %v3168
        %v3170 = vpop.f32.mrf.mxu0
        %v3171 = vadd.f32 0.0, %v3170
        %3172 = vdwg.mxu0
        %v3175 = vunpack.c.l.b16 %v3085
        %v3176 = vunpack.c.l.b16 %v3086
        %v3177 = vpack.c.b16 %v3176, %v3175
        %v3178 = vunpack.c.l.b16 %v2629
        %v3179 = vunpack.c.l.b16 %v2641
        %v3180 = vpack.c.b16 %v3179, %v3178
        %v3183 = vsel %vm2902, %v3177, 0
        %3185 = vmatpush.bf16.msra.mxu0 0
        %3186 = vmatpush.bf16.msra.mxu0 0
        %3187 = vmatpush.bf16.msra.mxu0 0
        %3188 = vmatpush.bf16.msra.mxu0 0
        %3189 = vmatpush.bf16.msra.mxu0 0
        %3190 = vmatpush.bf16.msra.mxu0 0
        %3191 = vmatpush.bf16.msra.mxu0 0
        %3192 = vmatpush.bf16.msra.mxu0 %v3180
        %3193 = vmatmul.bf16.gmra.mxu0 %v3183
        %v3194 = vpop.f32.mrf.mxu0
        %v3195 = vadd.f32 0.0, %v3194
        %v3196 = vpop.f32.mrf.mxu0
        %v3197 = vadd.f32 0.0, %v3196
        %3198 = vdwg.mxu0
        %v3201 = vunpack.c.l.b16 %v3087
        %v3202 = vunpack.c.l.b16 %v3088
        %v3203 = vpack.c.b16 %v3202, %v3201
        %v3204 = vunpack.c.l.b16 %v2644
        %v3205 = vunpack.c.l.b16 %v2656
        %v3206 = vpack.c.b16 %v3205, %v3204
        %v3209 = vsel %vm2902, %v3203, 0
        %3211 = vmatpush.bf16.msra.mxu0 0
        %3212 = vmatpush.bf16.msra.mxu0 0
        %3213 = vmatpush.bf16.msra.mxu0 0
        %3214 = vmatpush.bf16.msra.mxu0 0
        %3215 = vmatpush.bf16.msra.mxu0 0
        %3216 = vmatpush.bf16.msra.mxu0 0
        %3217 = vmatpush.bf16.msra.mxu0 0
        %3218 = vmatpush.bf16.msra.mxu0 %v3206
        %3219 = vmatmul.bf16.gmra.mxu0 %v3209
        %v3220 = vpop.f32.mrf.mxu0
        %v3221 = vadd.f32 0.0, %v3220
        %v3222 = vpop.f32.mrf.mxu0
        %v3223 = vadd.f32 0.0, %v3222
        %3224 = vdwg.mxu0
        %v3227 = vunpack.c.l.b16 %v3089
        %v3228 = vunpack.c.l.b16 %v3090
        %v3229 = vpack.c.b16 %v3228, %v3227
        %v3230 = vunpack.c.l.b16 %v2647
        %v3231 = vunpack.c.l.b16 %v2659
        %v3232 = vpack.c.b16 %v3231, %v3230
        %v3235 = vsel %vm2902, %v3229, 0
        %3237 = vmatpush.bf16.msra.mxu0 0
        %3238 = vmatpush.bf16.msra.mxu0 0
        %3239 = vmatpush.bf16.msra.mxu0 0
        %3240 = vmatpush.bf16.msra.mxu0 0
        %3241 = vmatpush.bf16.msra.mxu0 0
        %3242 = vmatpush.bf16.msra.mxu0 0
        %3243 = vmatpush.bf16.msra.mxu0 0
        %3244 = vmatpush.bf16.msra.mxu0 %v3232
        %3245 = vmatmul.bf16.gmra.mxu0 %v3235
        %v3246 = vpop.f32.mrf.mxu0
        %v3247 = vadd.f32 0.0, %v3246
        %v3248 = vpop.f32.mrf.mxu0
        %v3249 = vadd.f32 0.0, %v3248
        %3250 = vdwg.mxu0
        %v3253 = vunpack.c.l.b16 %v3091
        %v3254 = vunpack.c.l.b16 %v3092
        %v3255 = vpack.c.b16 %v3254, %v3253
        %v3256 = vunpack.c.l.b16 %v2650
        %v3257 = vunpack.c.l.b16 %v2662
        %v3258 = vpack.c.b16 %v3257, %v3256
        %v3261 = vsel %vm2902, %v3255, 0
        %3263 = vmatpush.bf16.msra.mxu0 0
        %3264 = vmatpush.bf16.msra.mxu0 0
        %3265 = vmatpush.bf16.msra.mxu0 0
        %3266 = vmatpush.bf16.msra.mxu0 0
        %3267 = vmatpush.bf16.msra.mxu0 0
        %3268 = vmatpush.bf16.msra.mxu0 0
        %3269 = vmatpush.bf16.msra.mxu0 0
        %3270 = vmatpush.bf16.msra.mxu0 %v3258
        %3271 = vmatmul.bf16.gmra.mxu0 %v3261
        %v3272 = vpop.f32.mrf.mxu0
        %v3273 = vadd.f32 0.0, %v3272
        %v3274 = vpop.f32.mrf.mxu0
        %v3275 = vadd.f32 0.0, %v3274
        %3276 = vdwg.mxu0
        %v3279 = vunpack.c.l.b16 %v3093
        %v3280 = vunpack.c.l.b16 %v3094
        %v3281 = vpack.c.b16 %v3280, %v3279
        %v3282 = vunpack.c.l.b16 %v2653
        %v3283 = vunpack.c.l.b16 %v2665
        %v3284 = vpack.c.b16 %v3283, %v3282
        %v3287 = vsel %vm2902, %v3281, 0
        %3289 = vmatpush.bf16.msra.mxu0 0
        %3290 = vmatpush.bf16.msra.mxu0 0
        %3291 = vmatpush.bf16.msra.mxu0 0
        %3292 = vmatpush.bf16.msra.mxu0 0
        %3293 = vmatpush.bf16.msra.mxu0 0
        %3294 = vmatpush.bf16.msra.mxu0 0
        %3295 = vmatpush.bf16.msra.mxu0 0
        %3296 = vmatpush.bf16.msra.mxu0 %v3284
        %3297 = vmatmul.bf16.gmra.mxu0 %v3287
        %v3298 = vpop.f32.mrf.mxu0
        %v3299 = vadd.f32 0.0, %v3298
        %v3300 = vpop.f32.mrf.mxu0
        %v3301 = vadd.f32 0.0, %v3300
        %3302 = vdwg.mxu0
        %v3303 = vrot.slane %v3169, 4
        %vm3304 = vcmask 1047556
        %v3305 = vsel %vm3304, %v3303, %v3117
        %v3306 = vrot.slane %v3117, 4
        %v3307 = vsel %vm3304, %v3169, %v3306
        %v3309 = vunpack.c.l.s4 1983009808
        %v3310 = vunpack.c.0.s8 %v3309
        %v3311 = vperm.slane %v3305, %v3310
        %v3313 = vunpack.c.l.s4 1983009808
        %v3314 = vunpack.c.0.s8 %v3313
        %v3315 = vperm.slane %v3307, %v3314
        %v3316 = vrot.slane %v3195, 4
        %v3317 = vsel %vm3304, %v3316, %v3143
        %v3318 = vrot.slane %v3143, 4
        %v3319 = vsel %vm3304, %v3195, %v3318
        %v3321 = vunpack.c.l.s4 1983009808
        %v3322 = vunpack.c.0.s8 %v3321
        %v3323 = vperm.slane %v3317, %v3322
        %v3325 = vunpack.c.l.s4 1983009808
        %v3326 = vunpack.c.0.s8 %v3325
        %v3327 = vperm.slane %v3319, %v3326
        %v3328 = vrot.slane %v3323, 4
        %v3329 = vsel %vm3304, %v3328, %v3311
        %v3330 = vrot.slane %v3311, 4
        %v3331 = vsel %vm3304, %v3323, %v3330
        %v3333 = vunpack.c.l.s4 1934713408
        %v3334 = vunpack.c.0.s8 %v3333
        %v3335 = vperm.slane %v3329, %v3334
        %v3337 = vunpack.c.l.s4 1934713408
        %v3338 = vunpack.c.0.s8 %v3337
        %v3339 = vperm.slane %v3331, %v3338
        %v3340 = vrot.slane %v3327, 4
        %v3341 = vsel %vm3304, %v3340, %v3315
        %v3342 = vrot.slane %v3315, 4
        %v3343 = vsel %vm3304, %v3327, %v3342
        %v3345 = vunpack.c.l.s4 1934713408
        %v3346 = vunpack.c.0.s8 %v3345
        %v3347 = vperm.slane %v3341, %v3346
        %v3349 = vunpack.c.l.s4 1934713408
        %v3350 = vunpack.c.0.s8 %v3349
        %v3351 = vperm.slane %v3343, %v3350
        %v3352 = vrot.slane %v3335, 4
        %v3353 = vsel %vm3304, 0.0, %v3352
        %v3354 = vrot.slane %v3339, 4
        %v3355 = vsel %vm3304, 0.0, %v3354
        %v3356 = vrot.slane %v3347, 4
        %v3357 = vsel %vm3304, 0.0, %v3356
        %v3358 = vrot.slane %v3351, 4
        %v3359 = vsel %vm3304, 0.0, %v3358
        %v3360 = vrot.slane %v3171, 4
        %v3361 = vsel %vm3304, %v3360, %v3119
        %v3362 = vrot.slane %v3119, 4
        %v3363 = vsel %vm3304, %v3171, %v3362
        %v3365 = vunpack.c.l.s4 1983009808
        %v3366 = vunpack.c.0.s8 %v3365
        %v3367 = vperm.slane %v3361, %v3366
        %v3369 = vunpack.c.l.s4 1983009808
        %v3370 = vunpack.c.0.s8 %v3369
        %v3371 = vperm.slane %v3363, %v3370
        %v3372 = vrot.slane %v3197, 4
        %v3373 = vsel %vm3304, %v3372, %v3145
        %v3374 = vrot.slane %v3145, 4
        %v3375 = vsel %vm3304, %v3197, %v3374
        %v3377 = vunpack.c.l.s4 1983009808
        %v3378 = vunpack.c.0.s8 %v3377
        %v3379 = vperm.slane %v3373, %v3378
        %v3381 = vunpack.c.l.s4 1983009808
        %v3382 = vunpack.c.0.s8 %v3381
        %v3383 = vperm.slane %v3375, %v3382
        %v3384 = vrot.slane %v3379, 4
        %v3385 = vsel %vm3304, %v3384, %v3367
        %v3386 = vrot.slane %v3367, 4
        %v3387 = vsel %vm3304, %v3379, %v3386
        %v3389 = vunpack.c.l.s4 1934713408
        %v3390 = vunpack.c.0.s8 %v3389
        %v3391 = vperm.slane %v3385, %v3390
        %v3393 = vunpack.c.l.s4 1934713408
        %v3394 = vunpack.c.0.s8 %v3393
        %v3395 = vperm.slane %v3387, %v3394
        %v3396 = vrot.slane %v3383, 4
        %v3397 = vsel %vm3304, %v3396, %v3371
        %v3398 = vrot.slane %v3371, 4
        %v3399 = vsel %vm3304, %v3383, %v3398
        %v3401 = vunpack.c.l.s4 1934713408
        %v3402 = vunpack.c.0.s8 %v3401
        %v3403 = vperm.slane %v3397, %v3402
        %v3405 = vunpack.c.l.s4 1934713408
        %v3406 = vunpack.c.0.s8 %v3405
        %v3407 = vperm.slane %v3399, %v3406
        %v3408 = vrot.slane %v3391, 4
        %v3409 = vsel %vm3304, 0.0, %v3408
        %v3410 = vrot.slane %v3395, 4
        %v3411 = vsel %vm3304, 0.0, %v3410
        %v3412 = vrot.slane %v3403, 4
        %v3413 = vsel %vm3304, 0.0, %v3412
        %v3414 = vrot.slane %v3407, 4
        %v3415 = vsel %vm3304, 0.0, %v3414
        %v3416 = vrot.slane %v3273, 4
        %v3417 = vsel %vm3304, %v3416, %v3221
        %v3418 = vrot.slane %v3221, 4
        %v3419 = vsel %vm3304, %v3273, %v3418
        %v3421 = vunpack.c.l.s4 1983009808
        %v3422 = vunpack.c.0.s8 %v3421
        %v3423 = vperm.slane %v3417, %v3422
        %v3425 = vunpack.c.l.s4 1983009808
        %v3426 = vunpack.c.0.s8 %v3425
        %v3427 = vperm.slane %v3419, %v3426
        %v3428 = vrot.slane %v3299, 4
        %v3429 = vsel %vm3304, %v3428, %v3247
        %v3430 = vrot.slane %v3247, 4
        %v3431 = vsel %vm3304, %v3299, %v3430
        %v3433 = vunpack.c.l.s4 1983009808
        %v3434 = vunpack.c.0.s8 %v3433
        %v3435 = vperm.slane %v3429, %v3434
        %v3437 = vunpack.c.l.s4 1983009808
        %v3438 = vunpack.c.0.s8 %v3437
        %v3439 = vperm.slane %v3431, %v3438
        %v3440 = vrot.slane %v3435, 4
        %v3441 = vsel %vm3304, %v3440, %v3423
        %v3442 = vrot.slane %v3423, 4
        %v3443 = vsel %vm3304, %v3435, %v3442
        %v3445 = vunpack.c.l.s4 1934713408
        %v3446 = vunpack.c.0.s8 %v3445
        %v3447 = vperm.slane %v3441, %v3446
        %v3449 = vunpack.c.l.s4 1934713408
        %v3450 = vunpack.c.0.s8 %v3449
        %v3451 = vperm.slane %v3443, %v3450
        %v3452 = vrot.slane %v3439, 4
        %v3453 = vsel %vm3304, %v3452, %v3427
        %v3454 = vrot.slane %v3427, 4
        %v3455 = vsel %vm3304, %v3439, %v3454
        %v3457 = vunpack.c.l.s4 1934713408
        %v3458 = vunpack.c.0.s8 %v3457
        %v3459 = vperm.slane %v3453, %v3458
        %v3461 = vunpack.c.l.s4 1934713408
        %v3462 = vunpack.c.0.s8 %v3461
        %v3463 = vperm.slane %v3455, %v3462
        %v3464 = vrot.slane %v3447, 4
        %v3465 = vsel %vm3304, 0.0, %v3464
        %v3466 = vrot.slane %v3451, 4
        %v3467 = vsel %vm3304, 0.0, %v3466
        %v3468 = vrot.slane %v3459, 4
        %v3469 = vsel %vm3304, 0.0, %v3468
        %v3470 = vrot.slane %v3463, 4
        %v3471 = vsel %vm3304, 0.0, %v3470
        %v3472 = vrot.slane %v3275, 4
        %v3473 = vsel %vm3304, %v3472, %v3223
        %v3474 = vrot.slane %v3223, 4
        %v3475 = vsel %vm3304, %v3275, %v3474
        %v3477 = vunpack.c.l.s4 1983009808
        %v3478 = vunpack.c.0.s8 %v3477
        %v3479 = vperm.slane %v3473, %v3478
        %v3481 = vunpack.c.l.s4 1983009808
        %v3482 = vunpack.c.0.s8 %v3481
        %v3483 = vperm.slane %v3475, %v3482
        %v3484 = vrot.slane %v3301, 4
        %v3485 = vsel %vm3304, %v3484, %v3249
        %v3486 = vrot.slane %v3249, 4
        %v3487 = vsel %vm3304, %v3301, %v3486
        %v3489 = vunpack.c.l.s4 1983009808
        %v3490 = vunpack.c.0.s8 %v3489
        %v3491 = vperm.slane %v3485, %v3490
        %v3493 = vunpack.c.l.s4 1983009808
        %v3494 = vunpack.c.0.s8 %v3493
        %v3495 = vperm.slane %v3487, %v3494
        %v3496 = vrot.slane %v3491, 4
        %v3497 = vsel %vm3304, %v3496, %v3479
        %v3498 = vrot.slane %v3479, 4
        %v3499 = vsel %vm3304, %v3491, %v3498
        %v3501 = vunpack.c.l.s4 1934713408
        %v3502 = vunpack.c.0.s8 %v3501
        %v3503 = vperm.slane %v3497, %v3502
        %v3505 = vunpack.c.l.s4 1934713408
        %v3506 = vunpack.c.0.s8 %v3505
        %v3507 = vperm.slane %v3499, %v3506
        %v3508 = vrot.slane %v3495, 4
        %v3509 = vsel %vm3304, %v3508, %v3483
        %v3510 = vrot.slane %v3483, 4
        %v3511 = vsel %vm3304, %v3495, %v3510
        %v3513 = vunpack.c.l.s4 1934713408
        %v3514 = vunpack.c.0.s8 %v3513
        %v3515 = vperm.slane %v3509, %v3514
        %v3517 = vunpack.c.l.s4 1934713408
        %v3518 = vunpack.c.0.s8 %v3517
        %v3519 = vperm.slane %v3511, %v3518
        %v3520 = vrot.slane %v3503, 4
        %v3521 = vsel %vm3304, 0.0, %v3520
        %v3522 = vrot.slane %v3507, 4
        %v3523 = vsel %vm3304, 0.0, %v3522
        %v3524 = vrot.slane %v3515, 4
        %v3525 = vsel %vm3304, 0.0, %v3524
        %v3526 = vrot.slane %v3519, 4
        %v3527 = vsel %vm3304, 0.0, %v3526
        %v3528 = vsel %vm3304, %v3354, %v3335
        %v3530 = vunpack.c.l.s4 1983009808
        %v3531 = vunpack.c.0.s8 %v3530
        %v3532 = vperm.slane %v3528, %v3531
        %v3533 = vrot.slane %v3355, 4
        %v3534 = vsel %vm3304, %v3533, %v3353
        %v3536 = vunpack.c.l.s4 1983009808
        %v3537 = vunpack.c.0.s8 %v3536
        %v3538 = vperm.slane %v3534, %v3537
        %v3539 = vsel %vm3304, %v3358, %v3347
        %v3541 = vunpack.c.l.s4 1983009808
        %v3542 = vunpack.c.0.s8 %v3541
        %v3543 = vperm.slane %v3539, %v3542
        %v3544 = vrot.slane %v3359, 4
        %v3545 = vsel %vm3304, %v3544, %v3357
        %v3547 = vunpack.c.l.s4 1983009808
        %v3548 = vunpack.c.0.s8 %v3547
        %v3549 = vperm.slane %v3545, %v3548
        %v3550 = vrot.slane %v3538, 4
        %v3551 = vsel %vm3304, %v3550, %v3532
        %v3552 = vrot.slane %v3532, 4
        %v3553 = vsel %vm3304, %v3538, %v3552
        %v3555 = vunpack.c.l.s4 1934713408
        %v3556 = vunpack.c.0.s8 %v3555
        %v3557 = vperm.slane %v3551, %v3556
        %v3559 = vunpack.c.l.s4 1934713408
        %v3560 = vunpack.c.0.s8 %v3559
        %v3561 = vperm.slane %v3553, %v3560
        %v3562 = vrot.slane %v3549, 4
        %v3563 = vsel %vm3304, %v3562, %v3543
        %v3564 = vrot.slane %v3543, 4
        %v3565 = vsel %vm3304, %v3549, %v3564
        %v3567 = vunpack.c.l.s4 1934713408
        %v3568 = vunpack.c.0.s8 %v3567
        %v3569 = vperm.slane %v3563, %v3568
        %v3571 = vunpack.c.l.s4 1934713408
        %v3572 = vunpack.c.0.s8 %v3571
        %v3573 = vperm.slane %v3565, %v3572
        %v3574 = vrot.slane %v3569, 4
        %v3575 = vsel %vm3304, %v3574, %v3557
        %v3576 = vrot.slane %v3557, 4
        %v3577 = vsel %vm3304, %v3569, %v3576
        %v3578 = vrot.slane %v3573, 4
        %v3579 = vsel %vm3304, %v3578, %v3561
        %v3580 = vrot.slane %v3561, 4
        %v3581 = vsel %vm3304, %v3573, %v3580
        %v3582 = vsel %vm3304, %v3410, %v3391
        %v3584 = vunpack.c.l.s4 1983009808
        %v3585 = vunpack.c.0.s8 %v3584
        %v3586 = vperm.slane %v3582, %v3585
        %v3587 = vrot.slane %v3411, 4
        %v3588 = vsel %vm3304, %v3587, %v3409
        %v3590 = vunpack.c.l.s4 1983009808
        %v3591 = vunpack.c.0.s8 %v3590
        %v3592 = vperm.slane %v3588, %v3591
        %v3593 = vsel %vm3304, %v3414, %v3403
        %v3595 = vunpack.c.l.s4 1983009808
        %v3596 = vunpack.c.0.s8 %v3595
        %v3597 = vperm.slane %v3593, %v3596
        %v3598 = vrot.slane %v3415, 4
        %v3599 = vsel %vm3304, %v3598, %v3413
        %v3601 = vunpack.c.l.s4 1983009808
        %v3602 = vunpack.c.0.s8 %v3601
        %v3603 = vperm.slane %v3599, %v3602
        %v3604 = vrot.slane %v3592, 4
        %v3605 = vsel %vm3304, %v3604, %v3586
        %v3606 = vrot.slane %v3586, 4
        %v3607 = vsel %vm3304, %v3592, %v3606
        %v3609 = vunpack.c.l.s4 1934713408
        %v3610 = vunpack.c.0.s8 %v3609
        %v3611 = vperm.slane %v3605, %v3610
        %v3613 = vunpack.c.l.s4 1934713408
        %v3614 = vunpack.c.0.s8 %v3613
        %v3615 = vperm.slane %v3607, %v3614
        %v3616 = vrot.slane %v3603, 4
        %v3617 = vsel %vm3304, %v3616, %v3597
        %v3618 = vrot.slane %v3597, 4
        %v3619 = vsel %vm3304, %v3603, %v3618
        %v3621 = vunpack.c.l.s4 1934713408
        %v3622 = vunpack.c.0.s8 %v3621
        %v3623 = vperm.slane %v3617, %v3622
        %v3625 = vunpack.c.l.s4 1934713408
        %v3626 = vunpack.c.0.s8 %v3625
        %v3627 = vperm.slane %v3619, %v3626
        %v3628 = vrot.slane %v3623, 4
        %v3629 = vsel %vm3304, %v3628, %v3611
        %v3630 = vrot.slane %v3611, 4
        %v3631 = vsel %vm3304, %v3623, %v3630
        %v3632 = vrot.slane %v3627, 4
        %v3633 = vsel %vm3304, %v3632, %v3615
        %v3634 = vrot.slane %v3615, 4
        %v3635 = vsel %vm3304, %v3627, %v3634
        %v3636 = vsel %vm3304, %v3466, %v3447
        %v3638 = vunpack.c.l.s4 1983009808
        %v3639 = vunpack.c.0.s8 %v3638
        %v3640 = vperm.slane %v3636, %v3639
        %v3641 = vrot.slane %v3467, 4
        %v3642 = vsel %vm3304, %v3641, %v3465
        %v3644 = vunpack.c.l.s4 1983009808
        %v3645 = vunpack.c.0.s8 %v3644
        %v3646 = vperm.slane %v3642, %v3645
        %v3647 = vsel %vm3304, %v3470, %v3459
        %v3649 = vunpack.c.l.s4 1983009808
        %v3650 = vunpack.c.0.s8 %v3649
        %v3651 = vperm.slane %v3647, %v3650
        %v3652 = vrot.slane %v3471, 4
        %v3653 = vsel %vm3304, %v3652, %v3469
        %v3655 = vunpack.c.l.s4 1983009808
        %v3656 = vunpack.c.0.s8 %v3655
        %v3657 = vperm.slane %v3653, %v3656
        %v3658 = vrot.slane %v3646, 4
        %v3659 = vsel %vm3304, %v3658, %v3640
        %v3660 = vrot.slane %v3640, 4
        %v3661 = vsel %vm3304, %v3646, %v3660
        %v3663 = vunpack.c.l.s4 1934713408
        %v3664 = vunpack.c.0.s8 %v3663
        %v3665 = vperm.slane %v3659, %v3664
        %v3667 = vunpack.c.l.s4 1934713408
        %v3668 = vunpack.c.0.s8 %v3667
        %v3669 = vperm.slane %v3661, %v3668
        %v3670 = vrot.slane %v3657, 4
        %v3671 = vsel %vm3304, %v3670, %v3651
        %v3672 = vrot.slane %v3651, 4
        %v3673 = vsel %vm3304, %v3657, %v3672
        %v3675 = vunpack.c.l.s4 1934713408
        %v3676 = vunpack.c.0.s8 %v3675
        %v3677 = vperm.slane %v3671, %v3676
        %v3679 = vunpack.c.l.s4 1934713408
        %v3680 = vunpack.c.0.s8 %v3679
        %v3681 = vperm.slane %v3673, %v3680
        %v3682 = vrot.slane %v3677, 4
        %v3683 = vsel %vm3304, %v3682, %v3665
        %v3684 = vrot.slane %v3665, 4
        %v3685 = vsel %vm3304, %v3677, %v3684
        %v3686 = vrot.slane %v3681, 4
        %v3687 = vsel %vm3304, %v3686, %v3669
        %v3688 = vrot.slane %v3669, 4
        %v3689 = vsel %vm3304, %v3681, %v3688
        %v3690 = vsel %vm3304, %v3522, %v3503
        %v3692 = vunpack.c.l.s4 1983009808
        %v3693 = vunpack.c.0.s8 %v3692
        %v3694 = vperm.slane %v3690, %v3693
        %v3695 = vrot.slane %v3523, 4
        %v3696 = vsel %vm3304, %v3695, %v3521
        %v3698 = vunpack.c.l.s4 1983009808
        %v3699 = vunpack.c.0.s8 %v3698
        %v3700 = vperm.slane %v3696, %v3699
        %v3701 = vsel %vm3304, %v3526, %v3515
        %v3703 = vunpack.c.l.s4 1983009808
        %v3704 = vunpack.c.0.s8 %v3703
        %v3705 = vperm.slane %v3701, %v3704
        %v3706 = vrot.slane %v3527, 4
        %v3707 = vsel %vm3304, %v3706, %v3525
        %v3709 = vunpack.c.l.s4 1983009808
        %v3710 = vunpack.c.0.s8 %v3709
        %v3711 = vperm.slane %v3707, %v3710
        %v3712 = vrot.slane %v3700, 4
        %v3713 = vsel %vm3304, %v3712, %v3694
        %v3714 = vrot.slane %v3694, 4
        %v3715 = vsel %vm3304, %v3700, %v3714
        %v3717 = vunpack.c.l.s4 1934713408
        %v3718 = vunpack.c.0.s8 %v3717
        %v3719 = vperm.slane %v3713, %v3718
        %v3721 = vunpack.c.l.s4 1934713408
        %v3722 = vunpack.c.0.s8 %v3721
        %v3723 = vperm.slane %v3715, %v3722
        %v3724 = vrot.slane %v3711, 4
        %v3725 = vsel %vm3304, %v3724, %v3705
        %v3726 = vrot.slane %v3705, 4
        %v3727 = vsel %vm3304, %v3711, %v3726
        %v3729 = vunpack.c.l.s4 1934713408
        %v3730 = vunpack.c.0.s8 %v3729
        %v3731 = vperm.slane %v3725, %v3730
        %v3733 = vunpack.c.l.s4 1934713408
        %v3734 = vunpack.c.0.s8 %v3733
        %v3735 = vperm.slane %v3727, %v3734
        %v3736 = vrot.slane %v3731, 4
        %v3737 = vsel %vm3304, %v3736, %v3719
        %v3738 = vrot.slane %v3719, 4
        %v3739 = vsel %vm3304, %v3731, %v3738
        %v3740 = vrot.slane %v3735, 4
        %v3741 = vsel %vm3304, %v3740, %v3723
        %v3742 = vrot.slane %v3723, 4
        %v3743 = vsel %vm3304, %v3735, %v3742
        %3748 = vrot.lane.b32.xlu0 %v3577, 32
        %v3749 = vpop.permute.xlu0 %3748
        %3750 = vrot.lane.b32.xlu0 %v3631, 32
        %v3751 = vpop.permute.xlu0 %3750
        %3752 = vrot.lane.b32.xlu0 %v3685, 32
        %v3753 = vpop.permute.xlu0 %3752
        %3754 = vrot.lane.b32.xlu0 %v3739, 32
        %v3755 = vpop.permute.xlu0 %3754
        %3764 = vrot.lane.b32.xlu0 %v3579, 64
        %v3765 = vpop.permute.xlu0 %3764
        %3766 = vrot.lane.b32.xlu0 %v3633, 64
        %v3767 = vpop.permute.xlu0 %3766
        %3768 = vrot.lane.b32.xlu0 %v3687, 64
        %v3769 = vpop.permute.xlu0 %3768
        %3770 = vrot.lane.b32.xlu0 %v3741, 64
        %v3771 = vpop.permute.xlu0 %3770
        %3780 = vrot.lane.b32.xlu0 %v3581, 96
        %v3781 = vpop.permute.xlu0 %3780
        %3782 = vrot.lane.b32.xlu0 %v3635, 96
        %v3783 = vpop.permute.xlu0 %3782
        %3784 = vrot.lane.b32.xlu0 %v3689, 96
        %v3785 = vpop.permute.xlu0 %3784
        %3786 = vrot.lane.b32.xlu0 %v3743, 96
        %v3787 = vpop.permute.xlu0 %3786
        %v3792 = vsel %vm2672, %v3575, %v3749
        %v3793 = vsel %vm2672, %v3629, %v3751
        %v3794 = vsel %vm2672, %v3683, %v3753
        %v3795 = vsel %vm2672, %v3737, %v3755
        %vm3796 = vcmask 523264
        %v3797 = vsel %vm3796, %v3792, %v3765
        %v3798 = vsel %vm3796, %v3793, %v3767
        %v3799 = vsel %vm3796, %v3794, %v3769
        %v3800 = vsel %vm3796, %v3795, %v3771
        %vm3801 = vcmask 785408
        %v3802 = vsel %vm3801, %v3797, %v3781
        %v3803 = vsel %vm3801, %v3798, %v3783
        %v3804 = vsel %vm3801, %v3799, %v3785
        %v3805 = vsel %vm3801, %v3800, %v3787
        %v3806 = vpack.c.bf16 %v3803, %v3802
        %v3807 = vpack.c.bf16 %v3805, %v3804
        %v3808 = vld [vmem:[%s708] sm:$0xf]
        %v3809 = vld [vmem:[%s708 + $0x4] sm:$0xf]
        %v3810 = vld [vmem:[%s708 + $0x8] sm:$0xf]
        %v3811 = vld [vmem:[%s708 + $0xc] sm:$0xf]
        %v3812 = vld [vmem:[%s708 + $0x10] sm:$0xf]
        %v3813 = vld [vmem:[%s708 + $0x14] sm:$0xf]
        %v3814 = vld [vmem:[%s708 + $0x18] sm:$0xf]
        %v3815 = vld [vmem:[%s708 + $0x1c] sm:$0xf]
        %v3816 = vld [vmem:[%s708 + $0x20] sm:$0xf]
        %v3817 = vld [vmem:[%s708 + $0x24] sm:$0xf]
        %v3818 = vld [vmem:[%s708 + $0x28] sm:$0xf]
        %v3819 = vld [vmem:[%s708 + $0x2c] sm:$0xf]
        %v3820 = vld [vmem:[%s708 + $0x30] sm:$0xf]
        %v3821 = vld [vmem:[%s708 + $0x34] sm:$0xf]
        %v3822 = vld [vmem:[%s708 + $0x38] sm:$0xf]
        %v3823 = vld [vmem:[%s708 + $0x3c] sm:$0xf]
        %v3824 = vld [vmem:[%s717] sm:$0x1]
        %v3826 = vperm.slane %v3824, 0
        %v3844 = vunpack.c.l.b16 %v3808
        %v3845 = vunpack.c.l.b16 %v3809
        %v3846 = vunpack.c.l.b16 %v3810
        %v3847 = vunpack.c.l.b16 %v3811
        %v3848 = vunpack.c.l.b16 %v3812
        %v3849 = vunpack.c.l.b16 %v3813
        %v3850 = vunpack.c.l.b16 %v3814
        %v3851 = vunpack.c.l.b16 %v3815
        %v3852 = vunpack.c.l.b16 %v3816
        %v3853 = vunpack.c.l.b16 %v3817
        %v3854 = vunpack.c.l.b16 %v3818
        %v3855 = vunpack.c.l.b16 %v3819
        %v3856 = vunpack.c.l.b16 %v3820
        %v3857 = vunpack.c.l.b16 %v3821
        %v3858 = vunpack.c.l.b16 %v3822
        %v3859 = vunpack.c.l.b16 %v3823
        %v3860 = vpack.c.b16 %v3845, %v3844
        %v3861 = vpack.c.b16 %v3847, %v3846
        %v3862 = vpack.c.b16 %v3849, %v3848
        %v3863 = vpack.c.b16 %v3851, %v3850
        %v3864 = vpack.c.b16 %v3853, %v3852
        %v3865 = vpack.c.b16 %v3855, %v3854
        %v3866 = vpack.c.b16 %v3857, %v3856
        %v3867 = vpack.c.b16 %v3859, %v3858
        %3876 = vmatpush.bf16.msra.mxu0 %v3867
        %3877 = vmatpush.bf16.msra.mxu0 %v3866
        %3878 = vmatpush.bf16.msra.mxu0 %v3865
        %3879 = vmatpush.bf16.msra.mxu0 %v3864
        %3880 = vmatpush.bf16.msra.mxu0 %v3863
        %3881 = vmatpush.bf16.msra.mxu0 %v3862
        %3882 = vmatpush.bf16.msra.mxu0 %v3861
        %3883 = vmatpush.bf16.msra.mxu0 %v3860
        %3884 = vmatmul.bf16.gmra.mxu0 %v3806
        %v3885 = vpop.f32.mrf.mxu0
        %v3886 = vadd.f32 %v3826, %v3885
        %v3887 = vpop.f32.mrf.mxu0
        %v3888 = vadd.f32 %v3826, %v3887
        %3889 = vmatmul.bf16.gmra.mxu0 %v3807
        %v3890 = vpop.f32.mrf.mxu0
        %v3891 = vadd.f32 %v3826, %v3890
        %v3892 = vpop.f32.mrf.mxu0
        %v3893 = vadd.f32 %v3826, %v3892
        %3894 = vdwg.mxu0
        %v3895 = vadd.f32 %v863, %v3886
        %v3896 = vadd.f32 %v864, %v3888
        %v3897 = vadd.f32 %v865, %v3891
        %v3898 = vadd.f32 %v866, %v3893
        %v3899 = vld [vmem:[%s726] sm:$0x1]
        %v3900 = vld [vmem:[%s735] sm:$0x1]
        %3901 = vadd.xlane.f32.xlu0 %v3895
        %v3902 = vpop.xlane.xlu0 %3901
        %3903 = vadd.xlane.f32.xlu0 %v3896
        %v3904 = vpop.xlane.xlu0 %3903
        %3905 = vadd.xlane.f32.xlu0 %v3897
        %v3906 = vpop.xlane.xlu0 %3905
        %3907 = vadd.xlane.f32.xlu0 %v3898
        %v3908 = vpop.xlane.xlu0 %3907
        %v3909 = vmul.f32 %v3902, %v883
        %v3910 = vmul.f32 %v3904, %v883
        %v3911 = vmul.f32 %v3906, %v883
        %v3912 = vmul.f32 %v3908, %v883
        %v3913 = vsub.f32 %v3895, %v3909
        %v3914 = vsub.f32 %v3896, %v3910
        %v3915 = vsub.f32 %v3897, %v3911
        %v3916 = vsub.f32 %v3898, %v3912
        %v3917 = vmul.f32 %v3913, %v3913
        %v3918 = vmul.f32 %v3914, %v3914
        %v3919 = vmul.f32 %v3915, %v3915
        %v3920 = vmul.f32 %v3916, %v3916
        %3921 = vadd.xlane.f32.xlu0 %v3917
        %v3922 = vpop.xlane.xlu0 %3921
        %3923 = vadd.xlane.f32.xlu0 %v3918
        %v3924 = vpop.xlane.xlu0 %3923
        %3925 = vadd.xlane.f32.xlu0 %v3919
        %v3926 = vpop.xlane.xlu0 %3925
        %3927 = vadd.xlane.f32.xlu0 %v3920
        %v3928 = vpop.xlane.xlu0 %3927
        %v3929 = vmul.f32 %v3922, %v883
        %v3930 = vmul.f32 %v3924, %v883
        %v3931 = vmul.f32 %v3926, %v883
        %v3932 = vmul.f32 %v3928, %v883
        %v3933 = vadd.f32 %v3929, 1e-05
        %v3934 = vadd.f32 %v3930, 1e-05
        %v3935 = vadd.f32 %v3931, 1e-05
        %v3936 = vadd.f32 %v3932, 1e-05
        %v3937 = vrsqrt.pop %v3933
        %v3938 = vmul.f32 %v3937, %v3933
        %v3939 = vmul.f32 %v3938, %v3937
        %v3940 = vmul.f32 0.5, %v3939
        %v3941 = vsub.f32 1.5, %v3940
        %v3942 = vmul.f32 %v3937, %v3941
        %vm3943 = vweird.f32 %v3933
        %vm3944 = vweird.f32 %v3937
        %vm3945 = vmor %vm3943, %vm3944
        %v3946 = vsel %vm3945, %v3937, %v3942
        %v3947 = vrsqrt.pop %v3934
        %v3948 = vmul.f32 %v3947, %v3934
        %v3949 = vmul.f32 %v3948, %v3947
        %v3950 = vmul.f32 0.5, %v3949
        %v3951 = vsub.f32 1.5, %v3950
        %v3952 = vmul.f32 %v3947, %v3951
        %vm3953 = vweird.f32 %v3934
        %vm3954 = vweird.f32 %v3947
        %vm3955 = vmor %vm3953, %vm3954
        %v3956 = vsel %vm3955, %v3947, %v3952
        %v3957 = vrsqrt.pop %v3935
        %v3958 = vmul.f32 %v3957, %v3935
        %v3959 = vmul.f32 %v3958, %v3957
        %v3960 = vmul.f32 0.5, %v3959
        %v3961 = vsub.f32 1.5, %v3960
        %v3962 = vmul.f32 %v3957, %v3961
        %vm3963 = vweird.f32 %v3935
        %vm3964 = vweird.f32 %v3957
        %vm3965 = vmor %vm3963, %vm3964
        %v3966 = vsel %vm3965, %v3957, %v3962
        %v3967 = vrsqrt.pop %v3936
        %v3968 = vmul.f32 %v3967, %v3936
        %v3969 = vmul.f32 %v3968, %v3967
        %v3970 = vmul.f32 0.5, %v3969
        %v3971 = vsub.f32 1.5, %v3970
        %v3972 = vmul.f32 %v3967, %v3971
        %vm3973 = vweird.f32 %v3936
        %vm3974 = vweird.f32 %v3967
        %vm3975 = vmor %vm3973, %vm3974
        %v3976 = vsel %vm3975, %v3967, %v3972
        %v3977 = vmul.f32 %v3913, %v3946
        %v3978 = vmul.f32 %v3914, %v3956
        %v3979 = vmul.f32 %v3915, %v3966
        %v3980 = vmul.f32 %v3916, %v3976
        %v3982 = vperm.slane %v3899, 0
        %v3984 = vmul.f32 %v3977, %v3982
        %v3985 = vmul.f32 %v3978, %v3982
        %v3986 = vmul.f32 %v3979, %v3982
        %v3987 = vmul.f32 %v3980, %v3982
        %v3989 = vperm.slane %v3900, 0
        %v3991 = vadd.f32 %v3984, %v3989
        %v3992 = vadd.f32 %v3985, %v3989
        %v3993 = vadd.f32 %v3986, %v3989
        %v3994 = vadd.f32 %v3987, %v3989
        %v3995 = vpack.c.bf16 %v3992, %v3991
        %v3996 = vpack.c.bf16 %v3994, %v3993
        %v3997 = vld [vmem:[%s745] sm:$0xff]
        %v3998 = vld [vmem:[%s745 + $0x8] sm:$0xff]
        %v3999 = vld [vmem:[%s745 + $0x10] sm:$0xff]
        %v4000 = vld [vmem:[%s745 + $0x18] sm:$0xff]
        %v4001 = vld [vmem:[%s745 + $0x20] sm:$0xff]
        %v4002 = vld [vmem:[%s745 + $0x28] sm:$0xff]
        %v4003 = vld [vmem:[%s745 + $0x30] sm:$0xff]
        %v4004 = vld [vmem:[%s745 + $0x38] sm:$0xff]
        %v4005 = vld [vmem:[%s745 + $0x40] sm:$0xff]
        %v4006 = vld [vmem:[%s745 + $0x48] sm:$0xff]
        %v4007 = vld [vmem:[%s745 + $0x50] sm:$0xff]
        %v4008 = vld [vmem:[%s745 + $0x58] sm:$0xff]
        %v4009 = vld [vmem:[%s745 + $0x60] sm:$0xff]
        %v4010 = vld [vmem:[%s745 + $0x68] sm:$0xff]
        %v4011 = vld [vmem:[%s745 + $0x70] sm:$0xff]
        %v4012 = vld [vmem:[%s745 + $0x78] sm:$0xff]
        %v4013 = vld [vmem:[%s745 + $0x80] sm:$0xff]
        %v4014 = vld [vmem:[%s745 + $0x88] sm:$0xff]
        %v4015 = vld [vmem:[%s745 + $0x90] sm:$0xff]
        %v4016 = vld [vmem:[%s745 + $0x98] sm:$0xff]
        %v4017 = vld [vmem:[%s745 + $0xa0] sm:$0xff]
        %v4018 = vld [vmem:[%s745 + $0xa8] sm:$0xff]
        %v4019 = vld [vmem:[%s745 + $0xb0] sm:$0xff]
        %v4020 = vld [vmem:[%s745 + $0xb8] sm:$0xff]
        %v4021 = vld [vmem:[%s745 + $0xc0] sm:$0xff]
        %v4022 = vld [vmem:[%s745 + $0xc8] sm:$0xff]
        %v4023 = vld [vmem:[%s745 + $0xd0] sm:$0xff]
        %v4024 = vld [vmem:[%s745 + $0xd8] sm:$0xff]
        %v4025 = vld [vmem:[%s745 + $0xe0] sm:$0xff]
        %v4026 = vld [vmem:[%s745 + $0xe8] sm:$0xff]
        %v4027 = vld [vmem:[%s745 + $0xf0] sm:$0xff]
        %v4028 = vld [vmem:[%s745 + $0xf8] sm:$0xff]
        %v4029 = vld [vmem:[%s845] sm:$0xf]
        %v4031 = vperm.slane %v4029, 0
        %v4032 = vperm.slane %v4029, 1
        %v4033 = vperm.slane %v4029, 2
        %v4034 = vperm.slane %v4029, 3
        %v4071 = vunpack.c.l.b16 %v3997
        %v4072 = vunpack.c.h.b16 %v3997
        %v4073 = vunpack.c.l.b16 %v3998
        %v4074 = vunpack.c.h.b16 %v3998
        %v4075 = vunpack.c.l.b16 %v3999
        %v4076 = vunpack.c.h.b16 %v3999
        %v4077 = vunpack.c.l.b16 %v4000
        %v4078 = vunpack.c.h.b16 %v4000
        %v4079 = vunpack.c.l.b16 %v4001
        %v4080 = vunpack.c.h.b16 %v4001
        %v4081 = vunpack.c.l.b16 %v4002
        %v4082 = vunpack.c.h.b16 %v4002
        %v4083 = vunpack.c.l.b16 %v4003
        %v4084 = vunpack.c.h.b16 %v4003
        %v4085 = vunpack.c.l.b16 %v4004
        %v4086 = vunpack.c.h.b16 %v4004
        %v4087 = vunpack.c.l.b16 %v4005
        %v4088 = vunpack.c.h.b16 %v4005
        %v4089 = vunpack.c.l.b16 %v4006
        %v4090 = vunpack.c.h.b16 %v4006
        %v4091 = vunpack.c.l.b16 %v4007
        %v4092 = vunpack.c.h.b16 %v4007
        %v4093 = vunpack.c.l.b16 %v4008
        %v4094 = vunpack.c.h.b16 %v4008
        %v4095 = vunpack.c.l.b16 %v4009
        %v4096 = vunpack.c.h.b16 %v4009
        %v4097 = vunpack.c.l.b16 %v4010
        %v4098 = vunpack.c.h.b16 %v4010
        %v4099 = vunpack.c.l.b16 %v4011
        %v4100 = vunpack.c.h.b16 %v4011
        %v4101 = vunpack.c.l.b16 %v4012
        %v4102 = vunpack.c.h.b16 %v4012
        %v4103 = vunpack.c.l.b16 %v4013
        %v4104 = vunpack.c.h.b16 %v4013
        %v4105 = vunpack.c.l.b16 %v4014
        %v4106 = vunpack.c.h.b16 %v4014
        %v4107 = vunpack.c.l.b16 %v4015
        %v4108 = vunpack.c.h.b16 %v4015
        %v4109 = vunpack.c.l.b16 %v4016
        %v4110 = vunpack.c.h.b16 %v4016
        %v4111 = vunpack.c.l.b16 %v4017
        %v4112 = vunpack.c.h.b16 %v4017
        %v4113 = vunpack.c.l.b16 %v4018
        %v4114 = vunpack.c.h.b16 %v4018
        %v4115 = vunpack.c.l.b16 %v4019
        %v4116 = vunpack.c.h.b16 %v4019
        %v4117 = vunpack.c.l.b16 %v4020
        %v4118 = vunpack.c.h.b16 %v4020
        %v4119 = vunpack.c.l.b16 %v4021
        %v4120 = vunpack.c.h.b16 %v4021
        %v4121 = vunpack.c.l.b16 %v4022
        %v4122 = vunpack.c.h.b16 %v4022
        %v4123 = vunpack.c.l.b16 %v4023
        %v4124 = vunpack.c.h.b16 %v4023
        %v4125 = vunpack.c.l.b16 %v4024
        %v4126 = vunpack.c.h.b16 %v4024
        %v4127 = vunpack.c.l.b16 %v4025
        %v4128 = vunpack.c.h.b16 %v4025
        %v4129 = vunpack.c.l.b16 %v4026
        %v4130 = vunpack.c.h.b16 %v4026
        %v4131 = vunpack.c.l.b16 %v4027
        %v4132 = vunpack.c.h.b16 %v4027
        %v4133 = vunpack.c.l.b16 %v4028
        %v4134 = vunpack.c.h.b16 %v4028
        %v4135 = vpack.c.b16 %v4075, %v4071
        %v4136 = vpack.c.b16 %v4076, %v4072
        %v4137 = vpack.c.b16 %v4077, %v4073
        %v4138 = vpack.c.b16 %v4078, %v4074
        %v4139 = vpack.c.b16 %v4083, %v4079
        %v4140 = vpack.c.b16 %v4084, %v4080
        %v4141 = vpack.c.b16 %v4085, %v4081
        %v4142 = vpack.c.b16 %v4086, %v4082
        %v4143 = vpack.c.b16 %v4091, %v4087
        %v4144 = vpack.c.b16 %v4092, %v4088
        %v4145 = vpack.c.b16 %v4093, %v4089
        %v4146 = vpack.c.b16 %v4094, %v4090
        %v4147 = vpack.c.b16 %v4099, %v4095
        %v4148 = vpack.c.b16 %v4100, %v4096
        %v4149 = vpack.c.b16 %v4101, %v4097
        %v4150 = vpack.c.b16 %v4102, %v4098
        %v4151 = vpack.c.b16 %v4107, %v4103
        %v4152 = vpack.c.b16 %v4108, %v4104
        %v4153 = vpack.c.b16 %v4109, %v4105
        %v4154 = vpack.c.b16 %v4110, %v4106
        %v4155 = vpack.c.b16 %v4115, %v4111
        %v4156 = vpack.c.b16 %v4116, %v4112
        %v4157 = vpack.c.b16 %v4117, %v4113
        %v4158 = vpack.c.b16 %v4118, %v4114
        %v4159 = vpack.c.b16 %v4123, %v4119
        %v4160 = vpack.c.b16 %v4124, %v4120
        %v4161 = vpack.c.b16 %v4125, %v4121
        %v4162 = vpack.c.b16 %v4126, %v4122
        %v4163 = vpack.c.b16 %v4131, %v4127
        %v4164 = vpack.c.b16 %v4132, %v4128
        %v4165 = vpack.c.b16 %v4133, %v4129
        %v4166 = vpack.c.b16 %v4134, %v4130
        %4199 = vmatpush.bf16.msra.mxu0 %v4163
        %4200 = vmatpush.bf16.msra.mxu0 %v4159
        %4201 = vmatpush.bf16.msra.mxu0 %v4155
        %4202 = vmatpush.bf16.msra.mxu0 %v4151
        %4203 = vmatpush.bf16.msra.mxu0 %v4147
        %4204 = vmatpush.bf16.msra.mxu0 %v4143
        %4205 = vmatpush.bf16.msra.mxu0 %v4139
        %4206 = vmatpush.bf16.msra.mxu0 %v4135
        %4207 = vmatmul.bf16.gmra.mxu0 %v3995
        %v4208 = vpop.f32.mrf.mxu0
        %v4209 = vadd.f32 %v4031, %v4208
        %v4210 = vpop.f32.mrf.mxu0
        %v4211 = vadd.f32 %v4031, %v4210
        %4212 = vmatmul.bf16.gmra.mxu0 %v3996
        %v4213 = vpop.f32.mrf.mxu0
        %v4214 = vadd.f32 %v4031, %v4213
        %v4215 = vpop.f32.mrf.mxu0
        %v4216 = vadd.f32 %v4031, %v4215
        %4217 = vdwg.mxu0
        %4218 = vmatpush.bf16.msra.mxu0 %v4164
        %4219 = vmatpush.bf16.msra.mxu0 %v4160
        %4220 = vmatpush.bf16.msra.mxu0 %v4156
        %4221 = vmatpush.bf16.msra.mxu0 %v4152
        %4222 = vmatpush.bf16.msra.mxu0 %v4148
        %4223 = vmatpush.bf16.msra.mxu0 %v4144
        %4224 = vmatpush.bf16.msra.mxu0 %v4140
        %4225 = vmatpush.bf16.msra.mxu0 %v4136
        %4226 = vmatmul.bf16.gmra.mxu0 %v3995
        %v4227 = vpop.f32.mrf.mxu0
        %v4228 = vadd.f32 %v4032, %v4227
        %v4229 = vpop.f32.mrf.mxu0
        %v4230 = vadd.f32 %v4032, %v4229
        %4231 = vmatmul.bf16.gmra.mxu0 %v3996
        %v4232 = vpop.f32.mrf.mxu0
        %v4233 = vadd.f32 %v4032, %v4232
        %v4234 = vpop.f32.mrf.mxu0
        %v4235 = vadd.f32 %v4032, %v4234
        %4236 = vdwg.mxu0
        %4237 = vmatpush.bf16.msra.mxu0 %v4165
        %4238 = vmatpush.bf16.msra.mxu0 %v4161
        %4239 = vmatpush.bf16.msra.mxu0 %v4157
        %4240 = vmatpush.bf16.msra.mxu0 %v4153
        %4241 = vmatpush.bf16.msra.mxu0 %v4149
        %4242 = vmatpush.bf16.msra.mxu0 %v4145
        %4243 = vmatpush.bf16.msra.mxu0 %v4141
        %4244 = vmatpush.bf16.msra.mxu0 %v4137
        %4245 = vmatmul.bf16.gmra.mxu0 %v3995
        %v4246 = vpop.f32.mrf.mxu0
        %v4247 = vadd.f32 %v4033, %v4246
        %v4248 = vpop.f32.mrf.mxu0
        %v4249 = vadd.f32 %v4033, %v4248
        %4250 = vmatmul.bf16.gmra.mxu0 %v3996
        %v4251 = vpop.f32.mrf.mxu0
        %v4252 = vadd.f32 %v4033, %v4251
        %v4253 = vpop.f32.mrf.mxu0
        %v4254 = vadd.f32 %v4033, %v4253
        %4255 = vdwg.mxu0
        %4256 = vmatpush.bf16.msra.mxu0 %v4166
        %4257 = vmatpush.bf16.msra.mxu0 %v4162
        %4258 = vmatpush.bf16.msra.mxu0 %v4158
        %4259 = vmatpush.bf16.msra.mxu0 %v4154
        %4260 = vmatpush.bf16.msra.mxu0 %v4150
        %4261 = vmatpush.bf16.msra.mxu0 %v4146
        %4262 = vmatpush.bf16.msra.mxu0 %v4142
        %4263 = vmatpush.bf16.msra.mxu0 %v4138
        %4264 = vmatmul.bf16.gmra.mxu0 %v3995
        %v4265 = vpop.f32.mrf.mxu0
        %v4266 = vadd.f32 %v4034, %v4265
        %v4267 = vpop.f32.mrf.mxu0
        %v4268 = vadd.f32 %v4034, %v4267
        %4269 = vmatmul.bf16.gmra.mxu0 %v3996
        %v4270 = vpop.f32.mrf.mxu0
        %v4271 = vadd.f32 %v4034, %v4270
        %v4272 = vpop.f32.mrf.mxu0
        %v4273 = vadd.f32 %v4034, %v4272
        %4274 = vdwg.mxu0
        %v4275 = vmul.f32 %v4209, 0.5
        %v4276 = vmul.f32 %v4228, 0.5
        %v4277 = vmul.f32 %v4247, 0.5
        %v4278 = vmul.f32 %v4266, 0.5
        %v4279 = vmul.f32 %v4211, 0.5
        %v4280 = vmul.f32 %v4230, 0.5
        %v4281 = vmul.f32 %v4249, 0.5
        %v4282 = vmul.f32 %v4268, 0.5
        %v4283 = vmul.f32 %v4214, 0.5
        %v4284 = vmul.f32 %v4233, 0.5
        %v4285 = vmul.f32 %v4252, 0.5
        %v4286 = vmul.f32 %v4271, 0.5
        %v4287 = vmul.f32 %v4216, 0.5
        %v4288 = vmul.f32 %v4235, 0.5
        %v4289 = vmul.f32 %v4254, 0.5
        %v4290 = vmul.f32 %v4273, 0.5
        %v4291 = vmul.f32 %v4209, 0.70710677
        %v4292 = vmul.f32 %v4228, 0.70710677
        %v4293 = vmul.f32 %v4247, 0.70710677
        %v4294 = vmul.f32 %v4266, 0.70710677
        %v4295 = vmul.f32 %v4211, 0.70710677
        %v4296 = vmul.f32 %v4230, 0.70710677
        %v4297 = vmul.f32 %v4249, 0.70710677
        %v4298 = vmul.f32 %v4268, 0.70710677
        %v4299 = vmul.f32 %v4214, 0.70710677
        %v4300 = vmul.f32 %v4233, 0.70710677
        %v4301 = vmul.f32 %v4252, 0.70710677
        %v4302 = vmul.f32 %v4271, 0.70710677
        %v4303 = vmul.f32 %v4216, 0.70710677
        %v4304 = vmul.f32 %v4235, 0.70710677
        %v4305 = vmul.f32 %v4254, 0.70710677
        %v4306 = vmul.f32 %v4273, 0.70710677
        %v4307 = vmul.f32 %v4291, %v4291
        %v4308 = vmin.f32 16.0, %v4307
        %v4309 = vmul.f32 %v4308, 2.1237322e-06
        %v4310 = vadd.f32 %v4309, 0.00028619796
        %v4311 = vmul.f32 %v4308, %v4310
        %v4312 = vadd.f32 %v4311, 0.0036580483
        %v4313 = vmul.f32 %v4308, %v4312
        %v4314 = vadd.f32 %v4313, 0.05243302
        %v4315 = vmul.f32 %v4308, %v4314
        %v4316 = vadd.f32 %v4315, 0.18741608
        %v4317 = vmul.f32 %v4308, %v4316
        %v4318 = vadd.f32 %v4317, 1.1283791
        %v4319 = vmul.f32 %v4291, %v4318
        %v4320 = vmul.f32 %v4308, 3.8918573e-05
        %v4321 = vadd.f32 %v4320, 0.001143296
        %v4322 = vmul.f32 %v4308, %v4321
        %v4323 = vadd.f32 %v4322, 0.014752088
        %v4324 = vmul.f32 %v4308, %v4323
        %v4325 = vadd.f32 %v4324, 0.112945676
        %v4326 = vmul.f32 %v4308, %v4325
        %v4327 = vadd.f32 %v4326, 0.4994258
        %v4328 = vmul.f32 %v4308, %v4327
        %v4329 = vadd.f32 %v4328, 1.0
        %v4330 = vrcp.pop %v4329
        %v4331 = vmul.f32 %v4329, %v4330
        %v4332 = vsub.f32 1.0, %v4331
        %v4333 = vmul.f32 %v4330, %v4332
        %v4334 = vadd.f32 %v4330, %v4333
        %vm4335 = vweird.f32 %v4329
        %vm4336 = vweird.f32 %v4330
        %vm4337 = vmor %vm4335, %vm4336
        %v4338 = vsel %vm4337, %v4330, %v4334
        %v4339 = vand.u32 2147483647, %v4329
        %vm4340 = vcmp.eq.f32.partialorder %v4339, 8.507059e+37
        %v4341 = vand.u32 %v4329, 2147483648
        %v4342 = vor.u32 1.1754944e-38, %v4341
        %v4343 = vsel %vm4340, %v4342, %v4338
        %v4344 = vmul.f32 %v4319, %v4343
        %v4345 = vmin.f32 %v4344, 1.0
        %v4346 = vmax.f32 %v4345, -1.0
        %v4347 = vmul.f32 %v4292, %v4292
        %v4348 = vmin.f32 16.0, %v4347
        %v4349 = vmul.f32 %v4348, 2.1237322e-06
        %v4350 = vadd.f32 %v4349, 0.00028619796
        %v4351 = vmul.f32 %v4348, %v4350
        %v4352 = vadd.f32 %v4351, 0.0036580483
        %v4353 = vmul.f32 %v4348, %v4352
        %v4354 = vadd.f32 %v4353, 0.05243302
        %v4355 = vmul.f32 %v4348, %v4354
        %v4356 = vadd.f32 %v4355, 0.18741608
        %v4357 = vmul.f32 %v4348, %v4356
        %v4358 = vadd.f32 %v4357, 1.1283791
        %v4359 = vmul.f32 %v4292, %v4358
        %v4360 = vmul.f32 %v4348, 3.8918573e-05
        %v4361 = vadd.f32 %v4360, 0.001143296
        %v4362 = vmul.f32 %v4348, %v4361
        %v4363 = vadd.f32 %v4362, 0.014752088
        %v4364 = vmul.f32 %v4348, %v4363
        %v4365 = vadd.f32 %v4364, 0.112945676
        %v4366 = vmul.f32 %v4348, %v4365
        %v4367 = vadd.f32 %v4366, 0.4994258
        %v4368 = vmul.f32 %v4348, %v4367
        %v4369 = vadd.f32 %v4368, 1.0
        %v4370 = vrcp.pop %v4369
        %v4371 = vmul.f32 %v4369, %v4370
        %v4372 = vsub.f32 1.0, %v4371
        %v4373 = vmul.f32 %v4370, %v4372
        %v4374 = vadd.f32 %v4370, %v4373
        %vm4375 = vweird.f32 %v4369
        %vm4376 = vweird.f32 %v4370
        %vm4377 = vmor %vm4375, %vm4376
        %v4378 = vsel %vm4377, %v4370, %v4374
        %v4379 = vand.u32 2147483647, %v4369
        %vm4380 = vcmp.eq.f32.partialorder %v4379, 8.507059e+37
        %v4381 = vand.u32 %v4369, 2147483648
        %v4382 = vor.u32 1.1754944e-38, %v4381
        %v4383 = vsel %vm4380, %v4382, %v4378
        %v4384 = vmul.f32 %v4359, %v4383
        %v4385 = vmin.f32 %v4384, 1.0
        %v4386 = vmax.f32 %v4385, -1.0
        %v4387 = vmul.f32 %v4293, %v4293
        %v4388 = vmin.f32 16.0, %v4387
        %v4389 = vmul.f32 %v4388, 2.1237322e-06
        %v4390 = vadd.f32 %v4389, 0.00028619796
        %v4391 = vmul.f32 %v4388, %v4390
        %v4392 = vadd.f32 %v4391, 0.0036580483
        %v4393 = vmul.f32 %v4388, %v4392
        %v4394 = vadd.f32 %v4393, 0.05243302
        %v4395 = vmul.f32 %v4388, %v4394
        %v4396 = vadd.f32 %v4395, 0.18741608
        %v4397 = vmul.f32 %v4388, %v4396
        %v4398 = vadd.f32 %v4397, 1.1283791
        %v4399 = vmul.f32 %v4293, %v4398
        %v4400 = vmul.f32 %v4388, 3.8918573e-05
        %v4401 = vadd.f32 %v4400, 0.001143296
        %v4402 = vmul.f32 %v4388, %v4401
        %v4403 = vadd.f32 %v4402, 0.014752088
        %v4404 = vmul.f32 %v4388, %v4403
        %v4405 = vadd.f32 %v4404, 0.112945676
        %v4406 = vmul.f32 %v4388, %v4405
        %v4407 = vadd.f32 %v4406, 0.4994258
        %v4408 = vmul.f32 %v4388, %v4407
        %v4409 = vadd.f32 %v4408, 1.0
        %v4410 = vrcp.pop %v4409
        %v4411 = vmul.f32 %v4409, %v4410
        %v4412 = vsub.f32 1.0, %v4411
        %v4413 = vmul.f32 %v4410, %v4412
        %v4414 = vadd.f32 %v4410, %v4413
        %vm4415 = vweird.f32 %v4409
        %vm4416 = vweird.f32 %v4410
        %vm4417 = vmor %vm4415, %vm4416
        %v4418 = vsel %vm4417, %v4410, %v4414
        %v4419 = vand.u32 2147483647, %v4409
        %vm4420 = vcmp.eq.f32.partialorder %v4419, 8.507059e+37
        %v4421 = vand.u32 %v4409, 2147483648
        %v4422 = vor.u32 1.1754944e-38, %v4421
        %v4423 = vsel %vm4420, %v4422, %v4418
        %v4424 = vmul.f32 %v4399, %v4423
        %v4425 = vmin.f32 %v4424, 1.0
        %v4426 = vmax.f32 %v4425, -1.0
        %v4427 = vmul.f32 %v4294, %v4294
        %v4428 = vmin.f32 16.0, %v4427
        %v4429 = vmul.f32 %v4428, 2.1237322e-06
        %v4430 = vadd.f32 %v4429, 0.00028619796
        %v4431 = vmul.f32 %v4428, %v4430
        %v4432 = vadd.f32 %v4431, 0.0036580483
        %v4433 = vmul.f32 %v4428, %v4432
        %v4434 = vadd.f32 %v4433, 0.05243302
        %v4435 = vmul.f32 %v4428, %v4434
        %v4436 = vadd.f32 %v4435, 0.18741608
        %v4437 = vmul.f32 %v4428, %v4436
        %v4438 = vadd.f32 %v4437, 1.1283791
        %v4439 = vmul.f32 %v4294, %v4438
        %v4440 = vmul.f32 %v4428, 3.8918573e-05
        %v4441 = vadd.f32 %v4440, 0.001143296
        %v4442 = vmul.f32 %v4428, %v4441
        %v4443 = vadd.f32 %v4442, 0.014752088
        %v4444 = vmul.f32 %v4428, %v4443
        %v4445 = vadd.f32 %v4444, 0.112945676
        %v4446 = vmul.f32 %v4428, %v4445
        %v4447 = vadd.f32 %v4446, 0.4994258
        %v4448 = vmul.f32 %v4428, %v4447
        %v4449 = vadd.f32 %v4448, 1.0
        %v4450 = vrcp.pop %v4449
        %v4451 = vmul.f32 %v4449, %v4450
        %v4452 = vsub.f32 1.0, %v4451
        %v4453 = vmul.f32 %v4450, %v4452
        %v4454 = vadd.f32 %v4450, %v4453
        %vm4455 = vweird.f32 %v4449
        %vm4456 = vweird.f32 %v4450
        %vm4457 = vmor %vm4455, %vm4456
        %v4458 = vsel %vm4457, %v4450, %v4454
        %v4459 = vand.u32 2147483647, %v4449
        %vm4460 = vcmp.eq.f32.partialorder %v4459, 8.507059e+37
        %v4461 = vand.u32 %v4449, 2147483648
        %v4462 = vor.u32 1.1754944e-38, %v4461
        %v4463 = vsel %vm4460, %v4462, %v4458
        %v4464 = vmul.f32 %v4439, %v4463
        %v4465 = vmin.f32 %v4464, 1.0
        %v4466 = vmax.f32 %v4465, -1.0
        %v4467 = vmul.f32 %v4295, %v4295
        %v4468 = vmin.f32 16.0, %v4467
        %v4469 = vmul.f32 %v4468, 2.1237322e-06
        %v4470 = vadd.f32 %v4469, 0.00028619796
        %v4471 = vmul.f32 %v4468, %v4470
        %v4472 = vadd.f32 %v4471, 0.0036580483
        %v4473 = vmul.f32 %v4468, %v4472
        %v4474 = vadd.f32 %v4473, 0.05243302
        %v4475 = vmul.f32 %v4468, %v4474
        %v4476 = vadd.f32 %v4475, 0.18741608
        %v4477 = vmul.f32 %v4468, %v4476
        %v4478 = vadd.f32 %v4477, 1.1283791
        %v4479 = vmul.f32 %v4295, %v4478
        %v4480 = vmul.f32 %v4468, 3.8918573e-05
        %v4481 = vadd.f32 %v4480, 0.001143296
        %v4482 = vmul.f32 %v4468, %v4481
        %v4483 = vadd.f32 %v4482, 0.014752088
        %v4484 = vmul.f32 %v4468, %v4483
        %v4485 = vadd.f32 %v4484, 0.112945676
        %v4486 = vmul.f32 %v4468, %v4485
        %v4487 = vadd.f32 %v4486, 0.4994258
        %v4488 = vmul.f32 %v4468, %v4487
        %v4489 = vadd.f32 %v4488, 1.0
        %v4490 = vrcp.pop %v4489
        %v4491 = vmul.f32 %v4489, %v4490
        %v4492 = vsub.f32 1.0, %v4491
        %v4493 = vmul.f32 %v4490, %v4492
        %v4494 = vadd.f32 %v4490, %v4493
        %vm4495 = vweird.f32 %v4489
        %vm4496 = vweird.f32 %v4490
        %vm4497 = vmor %vm4495, %vm4496
        %v4498 = vsel %vm4497, %v4490, %v4494
        %v4499 = vand.u32 2147483647, %v4489
        %vm4500 = vcmp.eq.f32.partialorder %v4499, 8.507059e+37
        %v4501 = vand.u32 %v4489, 2147483648
        %v4502 = vor.u32 1.1754944e-38, %v4501
        %v4503 = vsel %vm4500, %v4502, %v4498
        %v4504 = vmul.f32 %v4479, %v4503
        %v4505 = vmin.f32 %v4504, 1.0
        %v4506 = vmax.f32 %v4505, -1.0
        %v4507 = vmul.f32 %v4296, %v4296
        %v4508 = vmin.f32 16.0, %v4507
        %v4509 = vmul.f32 %v4508, 2.1237322e-06
        %v4510 = vadd.f32 %v4509, 0.00028619796
        %v4511 = vmul.f32 %v4508, %v4510
        %v4512 = vadd.f32 %v4511, 0.0036580483
        %v4513 = vmul.f32 %v4508, %v4512
        %v4514 = vadd.f32 %v4513, 0.05243302
        %v4515 = vmul.f32 %v4508, %v4514
        %v4516 = vadd.f32 %v4515, 0.18741608
        %v4517 = vmul.f32 %v4508, %v4516
        %v4518 = vadd.f32 %v4517, 1.1283791
        %v4519 = vmul.f32 %v4296, %v4518
        %v4520 = vmul.f32 %v4508, 3.8918573e-05
        %v4521 = vadd.f32 %v4520, 0.001143296
        %v4522 = vmul.f32 %v4508, %v4521
        %v4523 = vadd.f32 %v4522, 0.014752088
        %v4524 = vmul.f32 %v4508, %v4523
        %v4525 = vadd.f32 %v4524, 0.112945676
        %v4526 = vmul.f32 %v4508, %v4525
        %v4527 = vadd.f32 %v4526, 0.4994258
        %v4528 = vmul.f32 %v4508, %v4527
        %v4529 = vadd.f32 %v4528, 1.0
        %v4530 = vrcp.pop %v4529
        %v4531 = vmul.f32 %v4529, %v4530
        %v4532 = vsub.f32 1.0, %v4531
        %v4533 = vmul.f32 %v4530, %v4532
        %v4534 = vadd.f32 %v4530, %v4533
        %vm4535 = vweird.f32 %v4529
        %vm4536 = vweird.f32 %v4530
        %vm4537 = vmor %vm4535, %vm4536
        %v4538 = vsel %vm4537, %v4530, %v4534
        %v4539 = vand.u32 2147483647, %v4529
        %vm4540 = vcmp.eq.f32.partialorder %v4539, 8.507059e+37
        %v4541 = vand.u32 %v4529, 2147483648
        %v4542 = vor.u32 1.1754944e-38, %v4541
        %v4543 = vsel %vm4540, %v4542, %v4538
        %v4544 = vmul.f32 %v4519, %v4543
        %v4545 = vmin.f32 %v4544, 1.0
        %v4546 = vmax.f32 %v4545, -1.0
        %v4547 = vmul.f32 %v4297, %v4297
        %v4548 = vmin.f32 16.0, %v4547
        %v4549 = vmul.f32 %v4548, 2.1237322e-06
        %v4550 = vadd.f32 %v4549, 0.00028619796
        %v4551 = vmul.f32 %v4548, %v4550
        %v4552 = vadd.f32 %v4551, 0.0036580483
        %v4553 = vmul.f32 %v4548, %v4552
        %v4554 = vadd.f32 %v4553, 0.05243302
        %v4555 = vmul.f32 %v4548, %v4554
        %v4556 = vadd.f32 %v4555, 0.18741608
        %v4557 = vmul.f32 %v4548, %v4556
        %v4558 = vadd.f32 %v4557, 1.1283791
        %v4559 = vmul.f32 %v4297, %v4558
        %v4560 = vmul.f32 %v4548, 3.8918573e-05
        %v4561 = vadd.f32 %v4560, 0.001143296
        %v4562 = vmul.f32 %v4548, %v4561
        %v4563 = vadd.f32 %v4562, 0.014752088
        %v4564 = vmul.f32 %v4548, %v4563
        %v4565 = vadd.f32 %v4564, 0.112945676
        %v4566 = vmul.f32 %v4548, %v4565
        %v4567 = vadd.f32 %v4566, 0.4994258
        %v4568 = vmul.f32 %v4548, %v4567
        %v4569 = vadd.f32 %v4568, 1.0
        %v4570 = vrcp.pop %v4569
        %v4571 = vmul.f32 %v4569, %v4570
        %v4572 = vsub.f32 1.0, %v4571
        %v4573 = vmul.f32 %v4570, %v4572
        %v4574 = vadd.f32 %v4570, %v4573
        %vm4575 = vweird.f32 %v4569
        %vm4576 = vweird.f32 %v4570
        %vm4577 = vmor %vm4575, %vm4576
        %v4578 = vsel %vm4577, %v4570, %v4574
        %v4579 = vand.u32 2147483647, %v4569
        %vm4580 = vcmp.eq.f32.partialorder %v4579, 8.507059e+37
        %v4581 = vand.u32 %v4569, 2147483648
        %v4582 = vor.u32 1.1754944e-38, %v4581
        %v4583 = vsel %vm4580, %v4582, %v4578
        %v4584 = vmul.f32 %v4559, %v4583
        %v4585 = vmin.f32 %v4584, 1.0
        %v4586 = vmax.f32 %v4585, -1.0
        %v4587 = vmul.f32 %v4298, %v4298
        %v4588 = vmin.f32 16.0, %v4587
        %v4589 = vmul.f32 %v4588, 2.1237322e-06
        %v4590 = vadd.f32 %v4589, 0.00028619796
        %v4591 = vmul.f32 %v4588, %v4590
        %v4592 = vadd.f32 %v4591, 0.0036580483
        %v4593 = vmul.f32 %v4588, %v4592
        %v4594 = vadd.f32 %v4593, 0.05243302
        %v4595 = vmul.f32 %v4588, %v4594
        %v4596 = vadd.f32 %v4595, 0.18741608
        %v4597 = vmul.f32 %v4588, %v4596
        %v4598 = vadd.f32 %v4597, 1.1283791
        %v4599 = vmul.f32 %v4298, %v4598
        %v4600 = vmul.f32 %v4588, 3.8918573e-05
        %v4601 = vadd.f32 %v4600, 0.001143296
        %v4602 = vmul.f32 %v4588, %v4601
        %v4603 = vadd.f32 %v4602, 0.014752088
        %v4604 = vmul.f32 %v4588, %v4603
        %v4605 = vadd.f32 %v4604, 0.112945676
        %v4606 = vmul.f32 %v4588, %v4605
        %v4607 = vadd.f32 %v4606, 0.4994258
        %v4608 = vmul.f32 %v4588, %v4607
        %v4609 = vadd.f32 %v4608, 1.0
        %v4610 = vrcp.pop %v4609
        %v4611 = vmul.f32 %v4609, %v4610
        %v4612 = vsub.f32 1.0, %v4611
        %v4613 = vmul.f32 %v4610, %v4612
        %v4614 = vadd.f32 %v4610, %v4613
        %vm4615 = vweird.f32 %v4609
        %vm4616 = vweird.f32 %v4610
        %vm4617 = vmor %vm4615, %vm4616
        %v4618 = vsel %vm4617, %v4610, %v4614
        %v4619 = vand.u32 2147483647, %v4609
        %vm4620 = vcmp.eq.f32.partialorder %v4619, 8.507059e+37
        %v4621 = vand.u32 %v4609, 2147483648
        %v4622 = vor.u32 1.1754944e-38, %v4621
        %v4623 = vsel %vm4620, %v4622, %v4618
        %v4624 = vmul.f32 %v4599, %v4623
        %v4625 = vmin.f32 %v4624, 1.0
        %v4626 = vmax.f32 %v4625, -1.0
        %v4627 = vmul.f32 %v4299, %v4299
        %v4628 = vmin.f32 16.0, %v4627
        %v4629 = vmul.f32 %v4628, 2.1237322e-06
        %v4630 = vadd.f32 %v4629, 0.00028619796
        %v4631 = vmul.f32 %v4628, %v4630
        %v4632 = vadd.f32 %v4631, 0.0036580483
        %v4633 = vmul.f32 %v4628, %v4632
        %v4634 = vadd.f32 %v4633, 0.05243302
        %v4635 = vmul.f32 %v4628, %v4634
        %v4636 = vadd.f32 %v4635, 0.18741608
        %v4637 = vmul.f32 %v4628, %v4636
        %v4638 = vadd.f32 %v4637, 1.1283791
        %v4639 = vmul.f32 %v4299, %v4638
        %v4640 = vmul.f32 %v4628, 3.8918573e-05
        %v4641 = vadd.f32 %v4640, 0.001143296
        %v4642 = vmul.f32 %v4628, %v4641
        %v4643 = vadd.f32 %v4642, 0.014752088
        %v4644 = vmul.f32 %v4628, %v4643
        %v4645 = vadd.f32 %v4644, 0.112945676
        %v4646 = vmul.f32 %v4628, %v4645
        %v4647 = vadd.f32 %v4646, 0.4994258
        %v4648 = vmul.f32 %v4628, %v4647
        %v4649 = vadd.f32 %v4648, 1.0
        %v4650 = vrcp.pop %v4649
        %v4651 = vmul.f32 %v4649, %v4650
        %v4652 = vsub.f32 1.0, %v4651
        %v4653 = vmul.f32 %v4650, %v4652
        %v4654 = vadd.f32 %v4650, %v4653
        %vm4655 = vweird.f32 %v4649
        %vm4656 = vweird.f32 %v4650
        %vm4657 = vmor %vm4655, %vm4656
        %v4658 = vsel %vm4657, %v4650, %v4654
        %v4659 = vand.u32 2147483647, %v4649
        %vm4660 = vcmp.eq.f32.partialorder %v4659, 8.507059e+37
        %v4661 = vand.u32 %v4649, 2147483648
        %v4662 = vor.u32 1.1754944e-38, %v4661
        %v4663 = vsel %vm4660, %v4662, %v4658
        %v4664 = vmul.f32 %v4639, %v4663
        %v4665 = vmin.f32 %v4664, 1.0
        %v4666 = vmax.f32 %v4665, -1.0
        %v4667 = vmul.f32 %v4300, %v4300
        %v4668 = vmin.f32 16.0, %v4667
        %v4669 = vmul.f32 %v4668, 2.1237322e-06
        %v4670 = vadd.f32 %v4669, 0.00028619796
        %v4671 = vmul.f32 %v4668, %v4670
        %v4672 = vadd.f32 %v4671, 0.0036580483
        %v4673 = vmul.f32 %v4668, %v4672
        %v4674 = vadd.f32 %v4673, 0.05243302
        %v4675 = vmul.f32 %v4668, %v4674
        %v4676 = vadd.f32 %v4675, 0.18741608
        %v4677 = vmul.f32 %v4668, %v4676
        %v4678 = vadd.f32 %v4677, 1.1283791
        %v4679 = vmul.f32 %v4300, %v4678
        %v4680 = vmul.f32 %v4668, 3.8918573e-05
        %v4681 = vadd.f32 %v4680, 0.001143296
        %v4682 = vmul.f32 %v4668, %v4681
        %v4683 = vadd.f32 %v4682, 0.014752088
        %v4684 = vmul.f32 %v4668, %v4683
        %v4685 = vadd.f32 %v4684, 0.112945676
        %v4686 = vmul.f32 %v4668, %v4685
        %v4687 = vadd.f32 %v4686, 0.4994258
        %v4688 = vmul.f32 %v4668, %v4687
        %v4689 = vadd.f32 %v4688, 1.0
        %v4690 = vrcp.pop %v4689
        %v4691 = vmul.f32 %v4689, %v4690
        %v4692 = vsub.f32 1.0, %v4691
        %v4693 = vmul.f32 %v4690, %v4692
        %v4694 = vadd.f32 %v4690, %v4693
        %vm4695 = vweird.f32 %v4689
        %vm4696 = vweird.f32 %v4690
        %vm4697 = vmor %vm4695, %vm4696
        %v4698 = vsel %vm4697, %v4690, %v4694
        %v4699 = vand.u32 2147483647, %v4689
        %vm4700 = vcmp.eq.f32.partialorder %v4699, 8.507059e+37
        %v4701 = vand.u32 %v4689, 2147483648
        %v4702 = vor.u32 1.1754944e-38, %v4701
        %v4703 = vsel %vm4700, %v4702, %v4698
        %v4704 = vmul.f32 %v4679, %v4703
        %v4705 = vmin.f32 %v4704, 1.0
        %v4706 = vmax.f32 %v4705, -1.0
        %v4707 = vmul.f32 %v4301, %v4301
        %v4708 = vmin.f32 16.0, %v4707
        %v4709 = vmul.f32 %v4708, 2.1237322e-06
        %v4710 = vadd.f32 %v4709, 0.00028619796
        %v4711 = vmul.f32 %v4708, %v4710
        %v4712 = vadd.f32 %v4711, 0.0036580483
        %v4713 = vmul.f32 %v4708, %v4712
        %v4714 = vadd.f32 %v4713, 0.05243302
        %v4715 = vmul.f32 %v4708, %v4714
        %v4716 = vadd.f32 %v4715, 0.18741608
        %v4717 = vmul.f32 %v4708, %v4716
        %v4718 = vadd.f32 %v4717, 1.1283791
        %v4719 = vmul.f32 %v4301, %v4718
        %v4720 = vmul.f32 %v4708, 3.8918573e-05
        %v4721 = vadd.f32 %v4720, 0.001143296
        %v4722 = vmul.f32 %v4708, %v4721
        %v4723 = vadd.f32 %v4722, 0.014752088
        %v4724 = vmul.f32 %v4708, %v4723
        %v4725 = vadd.f32 %v4724, 0.112945676
        %v4726 = vmul.f32 %v4708, %v4725
        %v4727 = vadd.f32 %v4726, 0.4994258
        %v4728 = vmul.f32 %v4708, %v4727
        %v4729 = vadd.f32 %v4728, 1.0
        %v4730 = vrcp.pop %v4729
        %v4731 = vmul.f32 %v4729, %v4730
        %v4732 = vsub.f32 1.0, %v4731
        %v4733 = vmul.f32 %v4730, %v4732
        %v4734 = vadd.f32 %v4730, %v4733
        %vm4735 = vweird.f32 %v4729
        %vm4736 = vweird.f32 %v4730
        %vm4737 = vmor %vm4735, %vm4736
        %v4738 = vsel %vm4737, %v4730, %v4734
        %v4739 = vand.u32 2147483647, %v4729
        %vm4740 = vcmp.eq.f32.partialorder %v4739, 8.507059e+37
        %v4741 = vand.u32 %v4729, 2147483648
        %v4742 = vor.u32 1.1754944e-38, %v4741
        %v4743 = vsel %vm4740, %v4742, %v4738
        %v4744 = vmul.f32 %v4719, %v4743
        %v4745 = vmin.f32 %v4744, 1.0
        %v4746 = vmax.f32 %v4745, -1.0
        %v4747 = vmul.f32 %v4302, %v4302
        %v4748 = vmin.f32 16.0, %v4747
        %v4749 = vmul.f32 %v4748, 2.1237322e-06
        %v4750 = vadd.f32 %v4749, 0.00028619796
        %v4751 = vmul.f32 %v4748, %v4750
        %v4752 = vadd.f32 %v4751, 0.0036580483
        %v4753 = vmul.f32 %v4748, %v4752
        %v4754 = vadd.f32 %v4753, 0.05243302
        %v4755 = vmul.f32 %v4748, %v4754
        %v4756 = vadd.f32 %v4755, 0.18741608
        %v4757 = vmul.f32 %v4748, %v4756
        %v4758 = vadd.f32 %v4757, 1.1283791
        %v4759 = vmul.f32 %v4302, %v4758
        %v4760 = vmul.f32 %v4748, 3.8918573e-05
        %v4761 = vadd.f32 %v4760, 0.001143296
        %v4762 = vmul.f32 %v4748, %v4761
        %v4763 = vadd.f32 %v4762, 0.014752088
        %v4764 = vmul.f32 %v4748, %v4763
        %v4765 = vadd.f32 %v4764, 0.112945676
        %v4766 = vmul.f32 %v4748, %v4765
        %v4767 = vadd.f32 %v4766, 0.4994258
        %v4768 = vmul.f32 %v4748, %v4767
        %v4769 = vadd.f32 %v4768, 1.0
        %v4770 = vrcp.pop %v4769
        %v4771 = vmul.f32 %v4769, %v4770
        %v4772 = vsub.f32 1.0, %v4771
        %v4773 = vmul.f32 %v4770, %v4772
        %v4774 = vadd.f32 %v4770, %v4773
        %vm4775 = vweird.f32 %v4769
        %vm4776 = vweird.f32 %v4770
        %vm4777 = vmor %vm4775, %vm4776
        %v4778 = vsel %vm4777, %v4770, %v4774
        %v4779 = vand.u32 2147483647, %v4769
        %vm4780 = vcmp.eq.f32.partialorder %v4779, 8.507059e+37
        %v4781 = vand.u32 %v4769, 2147483648
        %v4782 = vor.u32 1.1754944e-38, %v4781
        %v4783 = vsel %vm4780, %v4782, %v4778
        %v4784 = vmul.f32 %v4759, %v4783
        %v4785 = vmin.f32 %v4784, 1.0
        %v4786 = vmax.f32 %v4785, -1.0
        %v4787 = vmul.f32 %v4303, %v4303
        %v4788 = vmin.f32 16.0, %v4787
        %v4789 = vmul.f32 %v4788, 2.1237322e-06
        %v4790 = vadd.f32 %v4789, 0.00028619796
        %v4791 = vmul.f32 %v4788, %v4790
        %v4792 = vadd.f32 %v4791, 0.0036580483
        %v4793 = vmul.f32 %v4788, %v4792
        %v4794 = vadd.f32 %v4793, 0.05243302
        %v4795 = vmul.f32 %v4788, %v4794
        %v4796 = vadd.f32 %v4795, 0.18741608
        %v4797 = vmul.f32 %v4788, %v4796
        %v4798 = vadd.f32 %v4797, 1.1283791
        %v4799 = vmul.f32 %v4303, %v4798
        %v4800 = vmul.f32 %v4788, 3.8918573e-05
        %v4801 = vadd.f32 %v4800, 0.001143296
        %v4802 = vmul.f32 %v4788, %v4801
        %v4803 = vadd.f32 %v4802, 0.014752088
        %v4804 = vmul.f32 %v4788, %v4803
        %v4805 = vadd.f32 %v4804, 0.112945676
        %v4806 = vmul.f32 %v4788, %v4805
        %v4807 = vadd.f32 %v4806, 0.4994258
        %v4808 = vmul.f32 %v4788, %v4807
        %v4809 = vadd.f32 %v4808, 1.0
        %v4810 = vrcp.pop %v4809
        %v4811 = vmul.f32 %v4809, %v4810
        %v4812 = vsub.f32 1.0, %v4811
        %v4813 = vmul.f32 %v4810, %v4812
        %v4814 = vadd.f32 %v4810, %v4813
        %vm4815 = vweird.f32 %v4809
        %vm4816 = vweird.f32 %v4810
        %vm4817 = vmor %vm4815, %vm4816
        %v4818 = vsel %vm4817, %v4810, %v4814
        %v4819 = vand.u32 2147483647, %v4809
        %vm4820 = vcmp.eq.f32.partialorder %v4819, 8.507059e+37
        %v4821 = vand.u32 %v4809, 2147483648
        %v4822 = vor.u32 1.1754944e-38, %v4821
        %v4823 = vsel %vm4820, %v4822, %v4818
        %v4824 = vmul.f32 %v4799, %v4823
        %v4825 = vmin.f32 %v4824, 1.0
        %v4826 = vmax.f32 %v4825, -1.0
        %v4827 = vmul.f32 %v4304, %v4304
        %v4828 = vmin.f32 16.0, %v4827
        %v4829 = vmul.f32 %v4828, 2.1237322e-06
        %v4830 = vadd.f32 %v4829, 0.00028619796
        %v4831 = vmul.f32 %v4828, %v4830
        %v4832 = vadd.f32 %v4831, 0.0036580483
        %v4833 = vmul.f32 %v4828, %v4832
        %v4834 = vadd.f32 %v4833, 0.05243302
        %v4835 = vmul.f32 %v4828, %v4834
        %v4836 = vadd.f32 %v4835, 0.18741608
        %v4837 = vmul.f32 %v4828, %v4836
        %v4838 = vadd.f32 %v4837, 1.1283791
        %v4839 = vmul.f32 %v4304, %v4838
        %v4840 = vmul.f32 %v4828, 3.8918573e-05
        %v4841 = vadd.f32 %v4840, 0.001143296
        %v4842 = vmul.f32 %v4828, %v4841
        %v4843 = vadd.f32 %v4842, 0.014752088
        %v4844 = vmul.f32 %v4828, %v4843
        %v4845 = vadd.f32 %v4844, 0.112945676
        %v4846 = vmul.f32 %v4828, %v4845
        %v4847 = vadd.f32 %v4846, 0.4994258
        %v4848 = vmul.f32 %v4828, %v4847
        %v4849 = vadd.f32 %v4848, 1.0
        %v4850 = vrcp.pop %v4849
        %v4851 = vmul.f32 %v4849, %v4850
        %v4852 = vsub.f32 1.0, %v4851
        %v4853 = vmul.f32 %v4850, %v4852
        %v4854 = vadd.f32 %v4850, %v4853
        %vm4855 = vweird.f32 %v4849
        %vm4856 = vweird.f32 %v4850
        %vm4857 = vmor %vm4855, %vm4856
        %v4858 = vsel %vm4857, %v4850, %v4854
        %v4859 = vand.u32 2147483647, %v4849
        %vm4860 = vcmp.eq.f32.partialorder %v4859, 8.507059e+37
        %v4861 = vand.u32 %v4849, 2147483648
        %v4862 = vor.u32 1.1754944e-38, %v4861
        %v4863 = vsel %vm4860, %v4862, %v4858
        %v4864 = vmul.f32 %v4839, %v4863
        %v4865 = vmin.f32 %v4864, 1.0
        %v4866 = vmax.f32 %v4865, -1.0
        %v4867 = vmul.f32 %v4305, %v4305
        %v4868 = vmin.f32 16.0, %v4867
        %v4869 = vmul.f32 %v4868, 2.1237322e-06
        %v4870 = vadd.f32 %v4869, 0.00028619796
        %v4871 = vmul.f32 %v4868, %v4870
        %v4872 = vadd.f32 %v4871, 0.0036580483
        %v4873 = vmul.f32 %v4868, %v4872
        %v4874 = vadd.f32 %v4873, 0.05243302
        %v4875 = vmul.f32 %v4868, %v4874
        %v4876 = vadd.f32 %v4875, 0.18741608
        %v4877 = vmul.f32 %v4868, %v4876
        %v4878 = vadd.f32 %v4877, 1.1283791
        %v4879 = vmul.f32 %v4305, %v4878
        %v4880 = vmul.f32 %v4868, 3.8918573e-05
        %v4881 = vadd.f32 %v4880, 0.001143296
        %v4882 = vmul.f32 %v4868, %v4881
        %v4883 = vadd.f32 %v4882, 0.014752088
        %v4884 = vmul.f32 %v4868, %v4883
        %v4885 = vadd.f32 %v4884, 0.112945676
        %v4886 = vmul.f32 %v4868, %v4885
        %v4887 = vadd.f32 %v4886, 0.4994258
        %v4888 = vmul.f32 %v4868, %v4887
        %v4889 = vadd.f32 %v4888, 1.0
        %v4890 = vrcp.pop %v4889
        %v4891 = vmul.f32 %v4889, %v4890
        %v4892 = vsub.f32 1.0, %v4891
        %v4893 = vmul.f32 %v4890, %v4892
        %v4894 = vadd.f32 %v4890, %v4893
        %vm4895 = vweird.f32 %v4889
        %vm4896 = vweird.f32 %v4890
        %vm4897 = vmor %vm4895, %vm4896
        %v4898 = vsel %vm4897, %v4890, %v4894
        %v4899 = vand.u32 2147483647, %v4889
        %vm4900 = vcmp.eq.f32.partialorder %v4899, 8.507059e+37
        %v4901 = vand.u32 %v4889, 2147483648
        %v4902 = vor.u32 1.1754944e-38, %v4901
        %v4903 = vsel %vm4900, %v4902, %v4898
        %v4904 = vmul.f32 %v4879, %v4903
        %v4905 = vmin.f32 %v4904, 1.0
        %v4906 = vmax.f32 %v4905, -1.0
        %v4907 = vmul.f32 %v4306, %v4306
        %v4908 = vmin.f32 16.0, %v4907
        %v4909 = vmul.f32 %v4908, 2.1237322e-06
        %v4910 = vadd.f32 %v4909, 0.00028619796
        %v4911 = vmul.f32 %v4908, %v4910
        %v4912 = vadd.f32 %v4911, 0.0036580483
        %v4913 = vmul.f32 %v4908, %v4912
        %v4914 = vadd.f32 %v4913, 0.05243302
        %v4915 = vmul.f32 %v4908, %v4914
        %v4916 = vadd.f32 %v4915, 0.18741608
        %v4917 = vmul.f32 %v4908, %v4916
        %v4918 = vadd.f32 %v4917, 1.1283791
        %v4919 = vmul.f32 %v4306, %v4918
        %v4920 = vmul.f32 %v4908, 3.8918573e-05
        %v4921 = vadd.f32 %v4920, 0.001143296
        %v4922 = vmul.f32 %v4908, %v4921
        %v4923 = vadd.f32 %v4922, 0.014752088
        %v4924 = vmul.f32 %v4908, %v4923
        %v4925 = vadd.f32 %v4924, 0.112945676
        %v4926 = vmul.f32 %v4908, %v4925
        %v4927 = vadd.f32 %v4926, 0.4994258
        %v4928 = vmul.f32 %v4908, %v4927
        %v4929 = vadd.f32 %v4928, 1.0
        %v4930 = vrcp.pop %v4929
        %v4931 = vmul.f32 %v4929, %v4930
        %v4932 = vsub.f32 1.0, %v4931
        %v4933 = vmul.f32 %v4930, %v4932
        %v4934 = vadd.f32 %v4930, %v4933
        %vm4935 = vweird.f32 %v4929
        %vm4936 = vweird.f32 %v4930
        %vm4937 = vmor %vm4935, %vm4936
        %v4938 = vsel %vm4937, %v4930, %v4934
        %v4939 = vand.u32 2147483647, %v4929
        %vm4940 = vcmp.eq.f32.partialorder %v4939, 8.507059e+37
        %v4941 = vand.u32 %v4929, 2147483648
        %v4942 = vor.u32 1.1754944e-38, %v4941
        %v4943 = vsel %vm4940, %v4942, %v4938
        %v4944 = vmul.f32 %v4919, %v4943
        %v4945 = vmin.f32 %v4944, 1.0
        %v4946 = vmax.f32 %v4945, -1.0
        %v4947 = vadd.f32 %v4346, 1.0
        %v4948 = vadd.f32 %v4386, 1.0
        %v4949 = vadd.f32 %v4426, 1.0
        %v4950 = vadd.f32 %v4466, 1.0
        %v4951 = vadd.f32 %v4506, 1.0
        %v4952 = vadd.f32 %v4546, 1.0
        %v4953 = vadd.f32 %v4586, 1.0
        %v4954 = vadd.f32 %v4626, 1.0
        %v4955 = vadd.f32 %v4666, 1.0
        %v4956 = vadd.f32 %v4706, 1.0
        %v4957 = vadd.f32 %v4746, 1.0
        %v4958 = vadd.f32 %v4786, 1.0
        %v4959 = vadd.f32 %v4826, 1.0
        %v4960 = vadd.f32 %v4866, 1.0
        %v4961 = vadd.f32 %v4906, 1.0
        %v4962 = vadd.f32 %v4946, 1.0
        %v4963 = vmul.f32 %v4275, %v4947
        %v4964 = vmul.f32 %v4276, %v4948
        %v4965 = vmul.f32 %v4277, %v4949
        %v4966 = vmul.f32 %v4278, %v4950
        %v4967 = vmul.f32 %v4279, %v4951
        %v4968 = vmul.f32 %v4280, %v4952
        %v4969 = vmul.f32 %v4281, %v4953
        %v4970 = vmul.f32 %v4282, %v4954
        %v4971 = vmul.f32 %v4283, %v4955
        %v4972 = vmul.f32 %v4284, %v4956
        %v4973 = vmul.f32 %v4285, %v4957
        %v4974 = vmul.f32 %v4286, %v4958
        %v4975 = vmul.f32 %v4287, %v4959
        %v4976 = vmul.f32 %v4288, %v4960
        %v4977 = vmul.f32 %v4289, %v4961
        %v4978 = vmul.f32 %v4290, %v4962
        %v4979 = vpack.c.bf16 %v4967, %v4963
        %v4980 = vpack.c.bf16 %v4968, %v4964
        %v4981 = vpack.c.bf16 %v4969, %v4965
        %v4982 = vpack.c.bf16 %v4970, %v4966
        %v4983 = vpack.c.bf16 %v4975, %v4971
        %v4984 = vpack.c.bf16 %v4976, %v4972
        %v4985 = vpack.c.bf16 %v4977, %v4973
        %v4986 = vpack.c.bf16 %v4978, %v4974
        %v4987 = vld [vmem:[%s755] sm:$0xf]
        %v4988 = vld [vmem:[%s755 + $0x4] sm:$0xf]
        %v4989 = vld [vmem:[%s755 + $0x8] sm:$0xf]
        %v4990 = vld [vmem:[%s755 + $0xc] sm:$0xf]
        %v4991 = vld [vmem:[%s755 + $0x10] sm:$0xf]
        %v4992 = vld [vmem:[%s755 + $0x14] sm:$0xf]
        %v4993 = vld [vmem:[%s755 + $0x18] sm:$0xf]
        %v4994 = vld [vmem:[%s755 + $0x1c] sm:$0xf]
        %v4995 = vld [vmem:[%s755 + $0x20] sm:$0xf]
        %v4996 = vld [vmem:[%s755 + $0x24] sm:$0xf]
        %v4997 = vld [vmem:[%s755 + $0x28] sm:$0xf]
        %v4998 = vld [vmem:[%s755 + $0x2c] sm:$0xf]
        %v4999 = vld [vmem:[%s755 + $0x30] sm:$0xf]
        %v5000 = vld [vmem:[%s755 + $0x34] sm:$0xf]
        %v5001 = vld [vmem:[%s755 + $0x38] sm:$0xf]
        %v5002 = vld [vmem:[%s755 + $0x3c] sm:$0xf]
        %v5003 = vld [vmem:[%s755 + $0x40] sm:$0xf]
        %v5004 = vld [vmem:[%s755 + $0x44] sm:$0xf]
        %v5005 = vld [vmem:[%s755 + $0x48] sm:$0xf]
        %v5006 = vld [vmem:[%s755 + $0x4c] sm:$0xf]
        %v5007 = vld [vmem:[%s755 + $0x50] sm:$0xf]
        %v5008 = vld [vmem:[%s755 + $0x54] sm:$0xf]
        %v5009 = vld [vmem:[%s755 + $0x58] sm:$0xf]
        %v5010 = vld [vmem:[%s755 + $0x5c] sm:$0xf]
        %v5011 = vld [vmem:[%s755 + $0x60] sm:$0xf]
        %v5012 = vld [vmem:[%s755 + $0x64] sm:$0xf]
        %v5013 = vld [vmem:[%s755 + $0x68] sm:$0xf]
        %v5014 = vld [vmem:[%s755 + $0x6c] sm:$0xf]
        %v5015 = vld [vmem:[%s755 + $0x70] sm:$0xf]
        %v5016 = vld [vmem:[%s755 + $0x74] sm:$0xf]
        %v5017 = vld [vmem:[%s755 + $0x78] sm:$0xf]
        %v5018 = vld [vmem:[%s755 + $0x7c] sm:$0xf]
        %v5019 = vld [vmem:[%s755 + $0x80] sm:$0xf]
        %v5020 = vld [vmem:[%s755 + $0x84] sm:$0xf]
        %v5021 = vld [vmem:[%s755 + $0x88] sm:$0xf]
        %v5022 = vld [vmem:[%s755 + $0x8c] sm:$0xf]
        %v5023 = vld [vmem:[%s755 + $0x90] sm:$0xf]
        %v5024 = vld [vmem:[%s755 + $0x94] sm:$0xf]
        %v5025 = vld [vmem:[%s755 + $0x98] sm:$0xf]
        %v5026 = vld [vmem:[%s755 + $0x9c] sm:$0xf]
        %v5027 = vld [vmem:[%s755 + $0xa0] sm:$0xf]
        %v5028 = vld [vmem:[%s755 + $0xa4] sm:$0xf]
        %v5029 = vld [vmem:[%s755 + $0xa8] sm:$0xf]
        %v5030 = vld [vmem:[%s755 + $0xac] sm:$0xf]
        %v5031 = vld [vmem:[%s755 + $0xb0] sm:$0xf]
        %v5032 = vld [vmem:[%s755 + $0xb4] sm:$0xf]
        %v5033 = vld [vmem:[%s755 + $0xb8] sm:$0xf]
        %v5034 = vld [vmem:[%s755 + $0xbc] sm:$0xf]
        %v5035 = vld [vmem:[%s755 + $0xc0] sm:$0xf]
        %v5036 = vld [vmem:[%s755 + $0xc4] sm:$0xf]
        %v5037 = vld [vmem:[%s755 + $0xc8] sm:$0xf]
        %v5038 = vld [vmem:[%s755 + $0xcc] sm:$0xf]
        %v5039 = vld [vmem:[%s755 + $0xd0] sm:$0xf]
        %v5040 = vld [vmem:[%s755 + $0xd4] sm:$0xf]
        %v5041 = vld [vmem:[%s755 + $0xd8] sm:$0xf]
        %v5042 = vld [vmem:[%s755 + $0xdc] sm:$0xf]
        %v5043 = vld [vmem:[%s755 + $0xe0] sm:$0xf]
        %v5044 = vld [vmem:[%s755 + $0xe4] sm:$0xf]
        %v5045 = vld [vmem:[%s755 + $0xe8] sm:$0xf]
        %v5046 = vld [vmem:[%s755 + $0xec] sm:$0xf]
        %v5047 = vld [vmem:[%s755 + $0xf0] sm:$0xf]
        %v5048 = vld [vmem:[%s755 + $0xf4] sm:$0xf]
        %v5049 = vld [vmem:[%s755 + $0xf8] sm:$0xf]
        %v5050 = vld [vmem:[%s755 + $0xfc] sm:$0xf]
        %v5051 = vld [vmem:[%s848] sm:$0x1]
        %v5053 = vperm.slane %v5051, 0
        %v5119 = vunpack.c.l.b16 %v4987
        %v5120 = vunpack.c.l.b16 %v4988
        %v5121 = vunpack.c.l.b16 %v4989
        %v5122 = vunpack.c.l.b16 %v4990
        %v5123 = vunpack.c.l.b16 %v4991
        %v5124 = vunpack.c.l.b16 %v4992
        %v5125 = vunpack.c.l.b16 %v4993
        %v5126 = vunpack.c.l.b16 %v4994
        %v5127 = vunpack.c.l.b16 %v4995
        %v5128 = vunpack.c.l.b16 %v4996
        %v5129 = vunpack.c.l.b16 %v4997
        %v5130 = vunpack.c.l.b16 %v4998
        %v5131 = vunpack.c.l.b16 %v4999
        %v5132 = vunpack.c.l.b16 %v5000
        %v5133 = vunpack.c.l.b16 %v5001
        %v5134 = vunpack.c.l.b16 %v5002
        %v5135 = vunpack.c.l.b16 %v5003
        %v5136 = vunpack.c.l.b16 %v5004
        %v5137 = vunpack.c.l.b16 %v5005
        %v5138 = vunpack.c.l.b16 %v5006
        %v5139 = vunpack.c.l.b16 %v5007
        %v5140 = vunpack.c.l.b16 %v5008
        %v5141 = vunpack.c.l.b16 %v5009
        %v5142 = vunpack.c.l.b16 %v5010
        %v5143 = vunpack.c.l.b16 %v5011
        %v5144 = vunpack.c.l.b16 %v5012
        %v5145 = vunpack.c.l.b16 %v5013
        %v5146 = vunpack.c.l.b16 %v5014
        %v5147 = vunpack.c.l.b16 %v5015
        %v5148 = vunpack.c.l.b16 %v5016
        %v5149 = vunpack.c.l.b16 %v5017
        %v5150 = vunpack.c.l.b16 %v5018
        %v5151 = vunpack.c.l.b16 %v5019
        %v5152 = vunpack.c.l.b16 %v5020
        %v5153 = vunpack.c.l.b16 %v5021
        %v5154 = vunpack.c.l.b16 %v5022
        %v5155 = vunpack.c.l.b16 %v5023
        %v5156 = vunpack.c.l.b16 %v5024
        %v5157 = vunpack.c.l.b16 %v5025
        %v5158 = vunpack.c.l.b16 %v5026
        %v5159 = vunpack.c.l.b16 %v5027
        %v5160 = vunpack.c.l.b16 %v5028
        %v5161 = vunpack.c.l.b16 %v5029
        %v5162 = vunpack.c.l.b16 %v5030
        %v5163 = vunpack.c.l.b16 %v5031
        %v5164 = vunpack.c.l.b16 %v5032
        %v5165 = vunpack.c.l.b16 %v5033
        %v5166 = vunpack.c.l.b16 %v5034
        %v5167 = vunpack.c.l.b16 %v5035
        %v5168 = vunpack.c.l.b16 %v5036
        %v5169 = vunpack.c.l.b16 %v5037
        %v5170 = vunpack.c.l.b16 %v5038
        %v5171 = vunpack.c.l.b16 %v5039
        %v5172 = vunpack.c.l.b16 %v5040
        %v5173 = vunpack.c.l.b16 %v5041
        %v5174 = vunpack.c.l.b16 %v5042
        %v5175 = vunpack.c.l.b16 %v5043
        %v5176 = vunpack.c.l.b16 %v5044
        %v5177 = vunpack.c.l.b16 %v5045
        %v5178 = vunpack.c.l.b16 %v5046
        %v5179 = vunpack.c.l.b16 %v5047
        %v5180 = vunpack.c.l.b16 %v5048
        %v5181 = vunpack.c.l.b16 %v5049
        %v5182 = vunpack.c.l.b16 %v5050
        %v5183 = vpack.c.b16 %v5120, %v5119
        %v5184 = vpack.c.b16 %v5122, %v5121
        %v5185 = vpack.c.b16 %v5124, %v5123
        %v5186 = vpack.c.b16 %v5126, %v5125
        %v5187 = vpack.c.b16 %v5128, %v5127
        %v5188 = vpack.c.b16 %v5130, %v5129
        %v5189 = vpack.c.b16 %v5132, %v5131
        %v5190 = vpack.c.b16 %v5134, %v5133
        %v5191 = vpack.c.b16 %v5136, %v5135
        %v5192 = vpack.c.b16 %v5138, %v5137
        %v5193 = vpack.c.b16 %v5140, %v5139
        %v5194 = vpack.c.b16 %v5142, %v5141
        %v5195 = vpack.c.b16 %v5144, %v5143
        %v5196 = vpack.c.b16 %v5146, %v5145
        %v5197 = vpack.c.b16 %v5148, %v5147
        %v5198 = vpack.c.b16 %v5150, %v5149
        %v5199 = vpack.c.b16 %v5152, %v5151
        %v5200 = vpack.c.b16 %v5154, %v5153
        %v5201 = vpack.c.b16 %v5156, %v5155
        %v5202 = vpack.c.b16 %v5158, %v5157
        %v5203 = vpack.c.b16 %v5160, %v5159
        %v5204 = vpack.c.b16 %v5162, %v5161
        %v5205 = vpack.c.b16 %v5164, %v5163
        %v5206 = vpack.c.b16 %v5166, %v5165
        %v5207 = vpack.c.b16 %v5168, %v5167
        %v5208 = vpack.c.b16 %v5170, %v5169
        %v5209 = vpack.c.b16 %v5172, %v5171
        %v5210 = vpack.c.b16 %v5174, %v5173
        %v5211 = vpack.c.b16 %v5176, %v5175
        %v5212 = vpack.c.b16 %v5178, %v5177
        %v5213 = vpack.c.b16 %v5180, %v5179
        %v5214 = vpack.c.b16 %v5182, %v5181
        %5247 = vmatpush.bf16.msra.mxu0 %v5190
        %5248 = vmatpush.bf16.msra.mxu0 %v5189
        %5249 = vmatpush.bf16.msra.mxu0 %v5188
        %5250 = vmatpush.bf16.msra.mxu0 %v5187
        %5251 = vmatpush.bf16.msra.mxu0 %v5186
        %5252 = vmatpush.bf16.msra.mxu0 %v5185
        %5253 = vmatpush.bf16.msra.mxu0 %v5184
        %5254 = vmatpush.bf16.msra.mxu0 %v5183
        %5255 = vmatmul.bf16.gmra.mxu0 %v4979
        %v5256 = vpop.f32.mrf.mxu0
        %v5257 = vadd.f32 %v5053, %v5256
        %v5258 = vpop.f32.mrf.mxu0
        %v5259 = vadd.f32 %v5053, %v5258
        %5260 = vmatmul.bf16.gmra.mxu0 %v4983
        %v5261 = vpop.f32.mrf.mxu0
        %v5262 = vadd.f32 %v5053, %v5261
        %v5263 = vpop.f32.mrf.mxu0
        %v5264 = vadd.f32 %v5053, %v5263
        %5265 = vdwg.mxu0
        %5266 = vmatpush.bf16.msra.mxu0 %v5198
        %5267 = vmatpush.bf16.msra.mxu0 %v5197
        %5268 = vmatpush.bf16.msra.mxu0 %v5196
        %5269 = vmatpush.bf16.msra.mxu0 %v5195
        %5270 = vmatpush.bf16.msra.mxu0 %v5194
        %5271 = vmatpush.bf16.msra.mxu0 %v5193
        %5272 = vmatpush.bf16.msra.mxu0 %v5192
        %5273 = vmatpush.bf16.msra.mxu0 %v5191
        %5274 = vmatmul.bf16.gmra.mxu0 %v4980
        %v5275 = vpop.f32.mrf.mxu0
        %v5276 = vadd.f32 %v5257, %v5275
        %v5277 = vpop.f32.mrf.mxu0
        %v5278 = vadd.f32 %v5259, %v5277
        %5279 = vmatmul.bf16.gmra.mxu0 %v4984
        %v5280 = vpop.f32.mrf.mxu0
        %v5281 = vadd.f32 %v5262, %v5280
        %v5282 = vpop.f32.mrf.mxu0
        %v5283 = vadd.f32 %v5264, %v5282
        %5284 = vdwg.mxu0
        %5285 = vmatpush.bf16.msra.mxu0 %v5206
        %5286 = vmatpush.bf16.msra.mxu0 %v5205
        %5287 = vmatpush.bf16.msra.mxu0 %v5204
        %5288 = vmatpush.bf16.msra.mxu0 %v5203
        %5289 = vmatpush.bf16.msra.mxu0 %v5202
        %5290 = vmatpush.bf16.msra.mxu0 %v5201
        %5291 = vmatpush.bf16.msra.mxu0 %v5200
        %5292 = vmatpush.bf16.msra.mxu0 %v5199
        %5293 = vmatmul.bf16.gmra.mxu0 %v4981
        %v5294 = vpop.f32.mrf.mxu0
        %v5295 = vadd.f32 %v5276, %v5294
        %v5296 = vpop.f32.mrf.mxu0
        %v5297 = vadd.f32 %v5278, %v5296
        %5298 = vmatmul.bf16.gmra.mxu0 %v4985
        %v5299 = vpop.f32.mrf.mxu0
        %v5300 = vadd.f32 %v5281, %v5299
        %v5301 = vpop.f32.mrf.mxu0
        %v5302 = vadd.f32 %v5283, %v5301
        %5303 = vdwg.mxu0
        %5304 = vmatpush.bf16.msra.mxu0 %v5214
        %5305 = vmatpush.bf16.msra.mxu0 %v5213
        %5306 = vmatpush.bf16.msra.mxu0 %v5212
        %5307 = vmatpush.bf16.msra.mxu0 %v5211
        %5308 = vmatpush.bf16.msra.mxu0 %v5210
        %5309 = vmatpush.bf16.msra.mxu0 %v5209
        %5310 = vmatpush.bf16.msra.mxu0 %v5208
        %5311 = vmatpush.bf16.msra.mxu0 %v5207
        %5312 = vmatmul.bf16.gmra.mxu0 %v4982
        %v5313 = vpop.f32.mrf.mxu0
        %v5314 = vadd.f32 %v5295, %v5313
        %v5315 = vpop.f32.mrf.mxu0
        %v5316 = vadd.f32 %v5297, %v5315
        %5317 = vmatmul.bf16.gmra.mxu0 %v4986
        %v5318 = vpop.f32.mrf.mxu0
        %v5319 = vadd.f32 %v5300, %v5318
        %v5320 = vpop.f32.mrf.mxu0
        %v5321 = vadd.f32 %v5302, %v5320
        %5322 = vdwg.mxu0
        %v5323 = vadd.f32 %v3895, %v5314
        %v5324 = vadd.f32 %v3896, %v5316
        %v5325 = vadd.f32 %v3897, %v5319
        %v5326 = vadd.f32 %v3898, %v5321
        %5327 = vst [vmem:[#allocation2] sm:$0xff] %v5323
        %5328 = vst [vmem:[#allocation2 + $0x8] sm:$0xff] %v5324
        %5329 = vst [vmem:[#allocation2 + $0x10] sm:$0xff] %v5325
        %5330 = vst [vmem:[#allocation2 + $0x18] sm:$0xff] %v5326
        %p5331 = scmp.eq.s32.totalorder %s46, 1
        // Predicated region
        $region121: #{tpu_custom_call.1} parent=71 // pred_check
          %p5332 = pneg %p5331
        $region122: #{tpu_custom_call.1} parent=71 // pred_check_branch
          %5334 = sbr.rel (%p5332) target = $region124
        $region123: #{tpu_custom_call.1} parent=71 // pred_region
          %5335 = vst [vmem:[#allocation21] sm:$0xff] %v5323
          %5336 = vst [vmem:[#allocation21 + $0x8] sm:$0xff] %v5324
          %5337 = vst [vmem:[#allocation21 + $0x10] sm:$0xff] %v5325
          %5338 = vst [vmem:[#allocation21 + $0x18] sm:$0xff] %v5326
        $region124: #{tpu_custom_call.1} parent=71 // pred_fallthru
          _
        // Predicated region
        $region125: #{tpu_custom_call.1} parent=71 // pred_check
          %p5339 = pneg %p409
        $region126: #{tpu_custom_call.1} parent=71 // pred_check_branch
          %5341 = sbr.rel (%p5339) target = $region128
        $region127: #{tpu_custom_call.1} parent=71 // pred_region
          %s5342 = smul.u32 2, %s45
          %5344 = vsyncadd [#allocation5], 0
          %s5345 = smul.addr %s5342, 2
          %s5346 = smul.addr %s5345, 8
          %s5347 = scalar_lea.hbm %s13, %s5346
          %s5348 = sshll.u32 [#allocation21], 4
          %s5349 = int_to_ptr.vmem [resolvable:$true] %s5348
          %s5350 = sshll.u32 %s5347, 4
          %s5351 = int_to_ptr.hbm [resolvable:$true] %s5350
          %5356 = dma.vmem_to_hbm [thread:$0]  %s5349, 512, %s5351, [#allocation5], 128, 128, 8
        $region128: #{tpu_custom_call.1} parent=71 // pred_fallthru
          _
        // Predicated region
        $region129: #{tpu_custom_call.1} parent=71 // pred_check
          %p5357 = pneg %p409
        $region130: #{tpu_custom_call.1} parent=71 // pred_check_branch
          %5359 = sbr.rel (%p5357) target = $region132
        $region131: #{tpu_custom_call.1} parent=71 // pred_region
          %5361 = dma.done [#allocation5], 512
        $region132: #{tpu_custom_call.1} parent=71 // pred_fallthru
          _
      $region72: #{tpu_custom_call.1} parent=5 // pred_fallthru
        _
      %p5362 = scmp.le.s32.totalorder 2, %s36
      // Predicated region
      $region133: #{tpu_custom_call.1} parent=5 // pred_check
        %p5363 = pneg %p5362
      $region134: #{tpu_custom_call.1} parent=5 // pred_check_branch
        %5365 = sbr.rel (%p5363) target = $region136
      $region135: #{tpu_custom_call.1} parent=5 // pred_region
        %s5366 = ssub.s32 %s36, 2
      $region136: #{tpu_custom_call.1} parent=5 // pred_fallthru
        _
    $region6: #{tpu_custom_call.1} parent=1 // loop_footer
      %s40 = sadd.s32 1, %s36
    $region7: #{tpu_custom_call.1} parent=1 // loop_footer_branch
      %35 = sbr.rel target = $region3
    $region8: #{tpu_custom_call.1} parent=1 // loop_exit
      _
    %5367 = vsyncpa [#allocation4], 1
    %s5368 = scalar_lea.sflag [#allocation4], 1
    %5369 = vsyncpa %s5368, 1
    %5370 = vsyncpa [#allocation7], 1
    %s5371 = scalar_lea.sflag [#allocation7], 1
    %5372 = vsyncpa %s5371, 1
    %5373 = vsyncpa [#allocation10], 1
    %s5374 = scalar_lea.sflag [#allocation10], 1
    %5375 = vsyncpa %s5374, 1
    %5376 = vsyncpa [#allocation13], 1
    %s5377 = scalar_lea.sflag [#allocation13], 1
    %5378 = vsyncpa %s5377, 1
    %5379 = vsyncpa [#allocation16], 1
    %s5380 = scalar_lea.sflag [#allocation16], 1
    %5381 = vsyncpa %s5380, 1
    %5382 = vsyncpa [#allocation19], 1
    %s5383 = scalar_lea.sflag [#allocation19], 1
    %5384 = vsyncpa %s5383, 1
    %5385 = vsyncpa [#allocation5], 1
    %s5386 = scalar_lea.sflag [#allocation5], 1
    %5387 = vsyncpa %s5386, 1

// kernel: tpu_custom_call.1
$region0: #{tpu_custom_call.1}
  #allocation0 [shape = 'u32[]', space=smem, size = 0x4, offset = 0x4, fixed_abs, tag = 'smem constant byte address 0x4 - core index']
  #allocation1 [shape = 'u32[72,128]{1,0:T(1,128)}', space=vmem, size = 0x9000, scoped, tag = 'internal scratch']
  #allocation2 [shape = 'f32[2,16,128]{2,1,0:T(8,128)}', space=vmem, size = 0x4000, scoped, tag = 'scratch operand']
  %s0 = inlined_call_operand.hbm [shape: f32[2,16,128], index: 0, kind: input, shape index: {}]
  %s1 = inlined_call_operand.hbm [shape: f32[2,1,128], index: 1, kind: input, shape index: {}]
  %s2 = inlined_call_operand.hbm [shape: f32[2,1,128], index: 2, kind: input, shape index: {}]
  %s3 = inlined_call_operand.hbm [shape: bf16[2,128,384], index: 3, kind: input, shape index: {}]
  %s4 = inlined_call_operand.hbm [shape: f32[2,1,384], index: 4, kind: input, shape index: {}]
  %s5 = inlined_call_operand.hbm [shape: bf16[2,128,128], index: 5, kind: input, shape index: {}]
  %s6 = inlined_call_operand.hbm [shape: f32[2,1,128], index: 6, kind: input, shape index: {}]
  %s7 = inlined_call_operand.hbm [shape: f32[2,1,128], index: 7, kind: input, shape index: {}]
  %s8 = inlined_call_operand.hbm [shape: f32[2,1,128], index: 8, kind: input, shape index: {}]
  %s9 = inlined_call_operand.hbm [shape: bf16[2,128,512], index: 9, kind: input, shape index: {}]
  %s10 = inlined_call_operand.vmem [shape: f32[2,1,512], index: 10, kind: input, shape index: {}]
  %s11 = inlined_call_operand.hbm [shape: bf16[2,512,128], index: 11, kind: input, shape index: {}]
  %s12 = inlined_call_operand.vmem [shape: f32[2,1,128], index: 12, kind: input, shape index: {}]
  %s13 = inlined_call_operand.hbm [shape: f32[2,16,128], index: 13, kind: output, shape index: {}]
  %s14 = sld [smem:[#allocation0]]
  $region137: #{tpu_custom_call.1} parent=0
    _
  %s16 = ssub.s32 1, %s14
  %s17 = scalar_select 0, %s16, %s14
  $region1: #{tpu_custom_call.1} parent=0
    #allocation3 [shape = 'u8[16384]{0}', space=vmem, size = 0x4000, scoped, tag = 'input window, operand 0, single buffered']
    #allocation4 [shape = 's32[2]{0}', space=sflag, size = 0x8, scoped, tag = 'scoped memory for tpu_custom_call.1']
    #allocation5 [shape = 's32[2]{0}', space=sflag, size = 0x8, scoped, tag = 'scoped memory for tpu_custom_call.1']
    #allocation6 [shape = 'u8[1024]{0}', space=vmem, size = 0x400, scoped, tag = 'input window, operand 1']
    #allocation7 [shape = 's32[2]{0}', space=sflag, size = 0x8, scoped, tag = 'scoped memory for tpu_custom_call.1']
    #allocation8 [shape = 'u8[1024]{0}', space=vmem, size = 0x400, scoped, tag = 'input window, operand 2']
    #allocation9 [shape = 'u8[196608]{0}', space=vmem, size = 0x30000, scoped, tag = 'input window, operand 3']
    #allocation10 [shape = 's32[2]{0}', space=sflag, size = 0x8, scoped, tag = 'scoped memory for tpu_custom_call.1']
    #allocation11 [shape = 'u8[3072]{0}', space=vmem, size = 0xc00, scoped, tag = 'input window, operand 4']
    #allocation12 [shape = 'u8[65536]{0}', space=vmem, size = 0x10000, scoped, tag = 'input window, operand 5']
    #allocation13 [shape = 's32[2]{0}', space=sflag, size = 0x8, scoped, tag = 'scoped memory for tpu_custom_call.1']
    #allocation14 [shape = 'u8[1024]{0}', space=vmem, size = 0x400, scoped, tag = 'input window, operand 6']
    #allocation15 [shape = 'u8[1024]{0}', space=vmem, size = 0x400, scoped, tag = 'input window, operand 7']
    #allocation16 [shape = 's32[2]{0}', space=sflag, size = 0x8, scoped, tag = 'scoped memory for tpu_custom_call.1']
    #allocation17 [shape = 'u8[1024]{0}', space=vmem, size = 0x400, scoped, tag = 'input window, operand 8']
    #allocation18 [shape = 'u8[262144]{0}', space=vmem, size = 0x40000, scoped, tag = 'input window, operand 9']
    #allocation19 [shape = 's32[2]{0}', space=sflag, size = 0x8, scoped, tag = 'scoped memory for tpu_custom_call.1']
    #allocation20 [shape = 'u8[262144]{0}', space=vmem, size = 0x40000, scoped, tag = 'input window, operand 11']
    #allocation21 [shape = 'u8[16384]{0}', space=vmem, size = 0x4000, scoped, tag = 'output window, operand 0, single buffered']
    %18 = vsyncpa [#allocation4], 0
    %19 = vsyncpa [#allocation7], 0
    %s20 = scalar_lea.sflag [#allocation7], 1
    %21 = vsyncpa %s20, 0
    %22 = vsyncpa [#allocation10], 0
    %s23 = scalar_lea.sflag [#allocation10], 1
    %24 = vsyncpa %s23, 0
    %25 = vsyncpa [#allocation13], 0
    %s26 = scalar_lea.sflag [#allocation13], 1
    %27 = vsyncpa %s26, 0
    %28 = vsyncpa [#allocation16], 0
    %s29 = scalar_lea.sflag [#allocation16], 1
    %30 = vsyncpa %s29, 0
    %31 = vsyncpa [#allocation19], 0
    %s32 = scalar_lea.sflag [#allocation19], 1
    %33 = vsyncpa %s32, 0
    %34 = vsyncpa [#allocation5], 0
    loop: start=0, step=1, limit=4
    $region2: #{tpu_custom_call.1} parent=1 // loop_pre_header
      _
    $region3: #{tpu_custom_call.1} parent=1 // loop_header
      %s36 = sphi 0, %s40
      %p37 = scmp.ge.s32.totalorder %s36, 4
      %s43 = sphi 0, %s55
      %s44 = sphi 0, %s51
      %s45 = sphi 0, %s43
      %s46 = sphi 0, %s44
      %s47 = sphi 0, %s45
      %s48 = sphi 0, %s46
      %s58 = sphi 0, %s60
      %s61 = sphi 0, %s58
      %s62 = sphi 0, %s61
      %s78 = sphi 0, %s62
      %s84 = sphi 0, %s86
      %s87 = sphi 0, %s84
      %s88 = sphi 0, %s87
      %s104 = sphi 0, %s88
      %s110 = sphi 0, %s112
      %s113 = sphi 0, %s110
      %s114 = sphi 0, %s113
      %s130 = sphi 0, %s114
      %s136 = sphi 0, %s138
      %s139 = sphi 0, %s136
      %s140 = sphi 0, %s139
      %s156 = sphi 0, %s140
      %s162 = sphi 0, %s164
      %s165 = sphi 0, %s162
      %s166 = sphi 0, %s165
      %s182 = sphi 0, %s166
      %s188 = sphi 0, %s190
      %s191 = sphi 0, %s188
      %s192 = sphi 0, %s191
      %s208 = sphi 0, %s192
      %s214 = sphi 0, %s216
      %s217 = sphi 0, %s214
      %s218 = sphi 0, %s217
      %s234 = sphi 0, %s218
      %s240 = sphi 0, %s242
      %s243 = sphi 0, %s240
      %s244 = sphi 0, %s243
      %s260 = sphi 0, %s244
      %s266 = sphi 0, %s268
      %s269 = sphi 0, %s266
      %s270 = sphi 0, %s269
      %s286 = sphi 0, %s270
      %s292 = sphi 0, %s294
      %s295 = sphi 0, %s292
      %s296 = sphi 0, %s295
      %s312 = sphi 0, %s296
      %s318 = sphi 0, %s320
      %s321 = sphi 0, %s318
      %s322 = sphi 0, %s321
      %s338 = sphi 0, %s322
      %s344 = sphi 0, %s346
      %s347 = sphi 0, %s344
      %s348 = sphi 0, %s347
      %s364 = sphi 0, %s348
      %s370 = sphi 0, %s372
      %s373 = sphi 0, %s370
      %s374 = sphi 0, %s373
      %s390 = sphi 0, %s374
      %s396 = sphi 0, %s398
      %s399 = sphi 0, %s396
      %s400 = sphi 0, %s399
      %s416 = sphi 0, %s400
    $region4: #{tpu_custom_call.1} parent=1 // loop_header_branch
      %39 = sbr.rel (%p37) target = $region8
    $region5: #{tpu_custom_call.1} parent=1 // loop_body
      %s41 = ssub.s32 %s36, 1
      %s42 = ssub.s32 %s36, 2
      %s49 = sadd.s32 1, %s44
      %p50 = scmp.ge.s32.totalorder %s49, 2
      %s51 = scalar_select %p50, 0, %s49
      %s52 = sadd.s32 1, %s43
      %s53 = scalar_select %p50, %s52, %s43
      %p54 = scmp.ge.s32.totalorder %s53, 1
      %s55 = scalar_select %p54, 0, %s53
      %s56 = ssub.s32 %s43, %s55
      %p57 = scmp.eq.s32.totalorder %s56, 0
      %s59 = sadd.s32 %s58, 1
      %s60 = scalar_select %p57, %s58, %s59
      %p63 = pneg %p57
      %p64 = scmp.eq.s32.totalorder %s36, 1
      %p65 = por %p63, %p64
      %p66 = scmp.ne.s32.totalorder %s58, %s61
      %p67 = scmp.eq.s32.totalorder %s36, 0
      %p68 = por %p66, %p67
      %p69 = scmp.ne.s32.totalorder %s58, %s61
      %p70 = scmp.eq.s32.totalorder %s41, 1
      %p71 = por %p69, %p70
      %p72 = scmp.ne.s32.totalorder %s61, %s62
      %p73 = scmp.eq.s32.totalorder %s41, 0
      %p74 = por %p72, %p73
      %p75 = scmp.ne.s32.totalorder %s61, %s62
      %p76 = scmp.eq.s32.totalorder %s42, 1
      %p77 = por %p75, %p76
      %p79 = scmp.ne.s32.totalorder %s62, %s78
      %p80 = scmp.eq.s32.totalorder %s42, 0
      %p81 = por %p79, %p80
      %s82 = ssub.s32 %s44, %s51
      %p83 = scmp.eq.s32.totalorder %s82, 0
      %s85 = sadd.s32 %s84, 1
      %s86 = scalar_select %p83, %s84, %s85
      %p89 = pneg %p83
      %p90 = scmp.eq.s32.totalorder %s36, 1
      %p91 = por %p89, %p90
      %p92 = scmp.ne.s32.totalorder %s84, %s87
      %p93 = scmp.eq.s32.totalorder %s36, 0
      %p94 = por %p92, %p93
      %p95 = scmp.ne.s32.totalorder %s84, %s87
      %p96 = scmp.eq.s32.totalorder %s41, 1
      %p97 = por %p95, %p96
      %p98 = scmp.ne.s32.totalorder %s87, %s88
      %p99 = scmp.eq.s32.totalorder %s41, 0
      %p100 = por %p98, %p99
      %p101 = scmp.ne.s32.totalorder %s87, %s88
      %p102 = scmp.eq.s32.totalorder %s42, 1
      %p103 = por %p101, %p102
      %p105 = scmp.ne.s32.totalorder %s88, %s104
      %p106 = scmp.eq.s32.totalorder %s42, 0
      %p107 = por %p105, %p106
      %s108 = ssub.s32 %s44, %s51
      %p109 = scmp.eq.s32.totalorder %s108, 0
      %s111 = sadd.s32 %s110, 1
      %s112 = scalar_select %p109, %s110, %s111
      %p115 = pneg %p109
      %p116 = scmp.eq.s32.totalorder %s36, 1
      %p117 = por %p115, %p116
      %p118 = scmp.ne.s32.totalorder %s110, %s113
      %p119 = scmp.eq.s32.totalorder %s36, 0
      %p120 = por %p118, %p119
      %p121 = scmp.ne.s32.totalorder %s110, %s113
      %p122 = scmp.eq.s32.totalorder %s41, 1
      %p123 = por %p121, %p122
      %p124 = scmp.ne.s32.totalorder %s113, %s114
      %p125 = scmp.eq.s32.totalorder %s41, 0
      %p126 = por %p124, %p125
      %p127 = scmp.ne.s32.totalorder %s113, %s114
      %p128 = scmp.eq.s32.totalorder %s42, 1
      %p129 = por %p127, %p128
      %p131 = scmp.ne.s32.totalorder %s114, %s130
      %p132 = scmp.eq.s32.totalorder %s42, 0
      %p133 = por %p131, %p132
      %s134 = ssub.s32 %s44, %s51
      %p135 = scmp.eq.s32.totalorder %s134, 0
      %s137 = sadd.s32 %s136, 1
      %s138 = scalar_select %p135, %s136, %s137
      %p141 = pneg %p135
      %p142 = scmp.eq.s32.totalorder %s36, 1
      %p143 = por %p141, %p142
      %p144 = scmp.ne.s32.totalorder %s136, %s139
      %p145 = scmp.eq.s32.totalorder %s36, 0
      %p146 = por %p144, %p145
      %p147 = scmp.ne.s32.totalorder %s136, %s139
      %p148 = scmp.eq.s32.totalorder %s41, 1
      %p149 = por %p147, %p148
      %p150 = scmp.ne.s32.totalorder %s139, %s140
      %p151 = scmp.eq.s32.totalorder %s41, 0
      %p152 = por %p150, %p151
      %p153 = scmp.ne.s32.totalorder %s139, %s140
      %p154 = scmp.eq.s32.totalorder %s42, 1
      %p155 = por %p153, %p154
      %p157 = scmp.ne.s32.totalorder %s140, %s156
      %p158 = scmp.eq.s32.totalorder %s42, 0
      %p159 = por %p157, %p158
      %s160 = ssub.s32 %s44, %s51
      %p161 = scmp.eq.s32.totalorder %s160, 0
      %s163 = sadd.s32 %s162, 1
      %s164 = scalar_select %p161, %s162, %s163
      %p167 = pneg %p161
      %p168 = scmp.eq.s32.totalorder %s36, 1
      %p169 = por %p167, %p168
      %p170 = scmp.ne.s32.totalorder %s162, %s165
      %p171 = scmp.eq.s32.totalorder %s36, 0
      %p172 = por %p170, %p171
      %p173 = scmp.ne.s32.totalorder %s162, %s165
      %p174 = scmp.eq.s32.totalorder %s41, 1
      %p175 = por %p173, %p174
      %p176 = scmp.ne.s32.totalorder %s165, %s166
      %p177 = scmp.eq.s32.totalorder %s41, 0
      %p178 = por %p176, %p177
      %p179 = scmp.ne.s32.totalorder %s165, %s166
      %p180 = scmp.eq.s32.totalorder %s42, 1
      %p181 = por %p179, %p180
      %p183 = scmp.ne.s32.totalorder %s166, %s182
      %p184 = scmp.eq.s32.totalorder %s42, 0
      %p185 = por %p183, %p184
      %s186 = ssub.s32 %s44, %s51
      %p187 = scmp.eq.s32.totalorder %s186, 0
      %s189 = sadd.s32 %s188, 1
      %s190 = scalar_select %p187, %s188, %s189
      %p193 = pneg %p187
      %p194 = scmp.eq.s32.totalorder %s36, 1
      %p195 = por %p193, %p194
      %p196 = scmp.ne.s32.totalorder %s188, %s191
      %p197 = scmp.eq.s32.totalorder %s36, 0
      %p198 = por %p196, %p197
      %p199 = scmp.ne.s32.totalorder %s188, %s191
      %p200 = scmp.eq.s32.totalorder %s41, 1
      %p201 = por %p199, %p200
      %p202 = scmp.ne.s32.totalorder %s191, %s192
      %p203 = scmp.eq.s32.totalorder %s41, 0
      %p204 = por %p202, %p203
      %p205 = scmp.ne.s32.totalorder %s191, %s192
      %p206 = scmp.eq.s32.totalorder %s42, 1
      %p207 = por %p205, %p206
      %p209 = scmp.ne.s32.totalorder %s192, %s208
      %p210 = scmp.eq.s32.totalorder %s42, 0
      %p211 = por %p209, %p210
      %s212 = ssub.s32 %s44, %s51
      %p213 = scmp.eq.s32.totalorder %s212, 0
      %s215 = sadd.s32 %s214, 1
      %s216 = scalar_select %p213, %s214, %s215
      %p219 = pneg %p213
      %p220 = scmp.eq.s32.totalorder %s36, 1
      %p221 = por %p219, %p220
      %p222 = scmp.ne.s32.totalorder %s214, %s217
      %p223 = scmp.eq.s32.totalorder %s36, 0
      %p224 = por %p222, %p223
      %p225 = scmp.ne.s32.totalorder %s214, %s217
      %p226 = scmp.eq.s32.totalorder %s41, 1
      %p227 = por %p225, %p226
      %p228 = scmp.ne.s32.totalorder %s217, %s218
      %p229 = scmp.eq.s32.totalorder %s41, 0
      %p230 = por %p228, %p229
      %p231 = scmp.ne.s32.totalorder %s217, %s218
      %p232 = scmp.eq.s32.totalorder %s42, 1
      %p233 = por %p231, %p232
      %p235 = scmp.ne.s32.totalorder %s218, %s234
      %p236 = scmp.eq.s32.totalorder %s42, 0
      %p237 = por %p235, %p236
      %s238 = ssub.s32 %s44, %s51
      %p239 = scmp.eq.s32.totalorder %s238, 0
      %s241 = sadd.s32 %s240, 1
      %s242 = scalar_select %p239, %s240, %s241
      %p245 = pneg %p239
      %p246 = scmp.eq.s32.totalorder %s36, 1
      %p247 = por %p245, %p246
      %p248 = scmp.ne.s32.totalorder %s240, %s243
      %p249 = scmp.eq.s32.totalorder %s36, 0
      %p250 = por %p248, %p249
      %p251 = scmp.ne.s32.totalorder %s240, %s243
      %p252 = scmp.eq.s32.totalorder %s41, 1
      %p253 = por %p251, %p252
      %p254 = scmp.ne.s32.totalorder %s243, %s244
      %p255 = scmp.eq.s32.totalorder %s41, 0
      %p256 = por %p254, %p255
      %p257 = scmp.ne.s32.totalorder %s243, %s244
      %p258 = scmp.eq.s32.totalorder %s42, 1
      %p259 = por %p257, %p258
      %p261 = scmp.ne.s32.totalorder %s244, %s260
      %p262 = scmp.eq.s32.totalorder %s42, 0
      %p263 = por %p261, %p262
      %s264 = ssub.s32 %s44, %s51
      %p265 = scmp.eq.s32.totalorder %s264, 0
      %s267 = sadd.s32 %s266, 1
      %s268 = scalar_select %p265, %s266, %s267
      %p271 = pneg %p265
      %p272 = scmp.eq.s32.totalorder %s36, 1
      %p273 = por %p271, %p272
      %p274 = scmp.ne.s32.totalorder %s266, %s269
      %p275 = scmp.eq.s32.totalorder %s36, 0
      %p276 = por %p274, %p275
      %p277 = scmp.ne.s32.totalorder %s266, %s269
      %p278 = scmp.eq.s32.totalorder %s41, 1
      %p279 = por %p277, %p278
      %p280 = scmp.ne.s32.totalorder %s269, %s270
      %p281 = scmp.eq.s32.totalorder %s41, 0
      %p282 = por %p280, %p281
      %p283 = scmp.ne.s32.totalorder %s269, %s270
      %p284 = scmp.eq.s32.totalorder %s42, 1
      %p285 = por %p283, %p284
      %p287 = scmp.ne.s32.totalorder %s270, %s286
      %p288 = scmp.eq.s32.totalorder %s42, 0
      %p289 = por %p287, %p288
      %s290 = ssub.s32 %s44, %s51
      %p291 = scmp.eq.s32.totalorder %s290, 0
      %s293 = sadd.s32 %s292, 1
      %s294 = scalar_select %p291, %s292, %s293
      %p297 = pneg %p291
      %p298 = scmp.eq.s32.totalorder %s36, 1
      %p299 = por %p297, %p298
      %p300 = scmp.ne.s32.totalorder %s292, %s295
      %p301 = scmp.eq.s32.totalorder %s36, 0
      %p302 = por %p300, %p301
      %p303 = scmp.ne.s32.totalorder %s292, %s295
      %p304 = scmp.eq.s32.totalorder %s41, 1
      %p305 = por %p303, %p304
      %p306 = scmp.ne.s32.totalorder %s295, %s296
      %p307 = scmp.eq.s32.totalorder %s41, 0
      %p308 = por %p306, %p307
      %p309 = scmp.ne.s32.totalorder %s295, %s296
      %p310 = scmp.eq.s32.totalorder %s42, 1
      %p311 = por %p309, %p310
      %p313 = scmp.ne.s32.totalorder %s296, %s312
      %p314 = scmp.eq.s32.totalorder %s42, 0
      %p315 = por %p313, %p314
      %s316 = ssub.s32 %s44, %s51
      %p317 = scmp.eq.s32.totalorder %s316, 0
      %s319 = sadd.s32 %s318, 1
      %s320 = scalar_select %p317, %s318, %s319
      %p323 = pneg %p317
      %p324 = scmp.eq.s32.totalorder %s36, 1
      %p325 = por %p323, %p324
      %p326 = scmp.ne.s32.totalorder %s318, %s321
      %p327 = scmp.eq.s32.totalorder %s36, 0
      %p328 = por %p326, %p327
      %p329 = scmp.ne.s32.totalorder %s318, %s321
      %p330 = scmp.eq.s32.totalorder %s41, 1
      %p331 = por %p329, %p330
      %p332 = scmp.ne.s32.totalorder %s321, %s322
      %p333 = scmp.eq.s32.totalorder %s41, 0
      %p334 = por %p332, %p333
      %p335 = scmp.ne.s32.totalorder %s321, %s322
      %p336 = scmp.eq.s32.totalorder %s42, 1
      %p337 = por %p335, %p336
      %p339 = scmp.ne.s32.totalorder %s322, %s338
      %p340 = scmp.eq.s32.totalorder %s42, 0
      %p341 = por %p339, %p340
      %s342 = ssub.s32 %s44, %s51
      %p343 = scmp.eq.s32.totalorder %s342, 0
      %s345 = sadd.s32 %s344, 1
      %s346 = scalar_select %p343, %s344, %s345
      %p349 = pneg %p343
      %p350 = scmp.eq.s32.totalorder %s36, 1
      %p351 = por %p349, %p350
      %p352 = scmp.ne.s32.totalorder %s344, %s347
      %p353 = scmp.eq.s32.totalorder %s36, 0
      %p354 = por %p352, %p353
      %p355 = scmp.ne.s32.totalorder %s344, %s347
      %p356 = scmp.eq.s32.totalorder %s41, 1
      %p357 = por %p355, %p356
      %p358 = scmp.ne.s32.totalorder %s347, %s348
      %p359 = scmp.eq.s32.totalorder %s41, 0
      %p360 = por %p358, %p359
      %p361 = scmp.ne.s32.totalorder %s347, %s348
      %p362 = scmp.eq.s32.totalorder %s42, 1
      %p363 = por %p361, %p362
      %p365 = scmp.ne.s32.totalorder %s348, %s364
      %p366 = scmp.eq.s32.totalorder %s42, 0
      %p367 = por %p365, %p366
      %s368 = ssub.s32 %s44, %s51
      %p369 = scmp.eq.s32.totalorder %s368, 0
      %s371 = sadd.s32 %s370, 1
      %s372 = scalar_select %p369, %s370, %s371
      %p375 = pneg %p369
      %p376 = scmp.eq.s32.totalorder %s36, 1
      %p377 = por %p375, %p376
      %p378 = scmp.ne.s32.totalorder %s370, %s373
      %p379 = scmp.eq.s32.totalorder %s36, 0
      %p380 = por %p378, %p379
      %p381 = scmp.ne.s32.totalorder %s370, %s373
      %p382 = scmp.eq.s32.totalorder %s41, 1
      %p383 = por %p381, %p382
      %p384 = scmp.ne.s32.totalorder %s373, %s374
      %p385 = scmp.eq.s32.totalorder %s41, 0
      %p386 = por %p384, %p385
      %p387 = scmp.ne.s32.totalorder %s373, %s374
      %p388 = scmp.eq.s32.totalorder %s42, 1
      %p389 = por %p387, %p388
      %p391 = scmp.ne.s32.totalorder %s374, %s390
      %p392 = scmp.eq.s32.totalorder %s42, 0
      %p393 = por %p391, %p392
      %s394 = ssub.s32 %s43, %s55
      %p395 = scmp.eq.s32.totalorder %s394, 0
      %s397 = sadd.s32 %s396, 1
      %s398 = scalar_select %p395, %s396, %s397
      %p401 = pneg %p395
      %p402 = scmp.eq.s32.totalorder %s36, 1
      %p403 = por %p401, %p402
      %p404 = scmp.ne.s32.totalorder %s396, %s399
      %p405 = scmp.eq.s32.totalorder %s36, 0
      %p406 = por %p404, %p405
      %p407 = scmp.ne.s32.totalorder %s396, %s399
      %p408 = scmp.eq.s32.totalorder %s41, 1
      %p409 = por %p407, %p408
      %p410 = scmp.ne.s32.totalorder %s399, %s400
      %p411 = scmp.eq.s32.totalorder %s41, 0
      %p412 = por %p410, %p411
      %p413 = scmp.ne.s32.totalorder %s399, %s400
      %p414 = scmp.eq.s32.totalorder %s42, 1
      %p415 = por %p413, %p414
      %p417 = scmp.ne.s32.totalorder %s400, %s416
      %p418 = scmp.eq.s32.totalorder %s42, 0
      %p419 = por %p417, %p418
      %p420 = scmp.le.s32.totalorder 1, %s36
      %p421 = scmp.lt.s32.totalorder %s36, 3
      %p422 = pnand %p420, %p421
      %p423 = pneg %p422
      // Predicated region
      $region9: #{tpu_custom_call.1} parent=5 // pred_check
        _
      $region10: #{tpu_custom_call.1} parent=5 // pred_check_branch
        %425 = sbr.rel (%p422) target = $region12
      $region11: #{tpu_custom_call.1} parent=5 // pred_region
        %s426 = ssub.s32 %s36, 1
        // Predicated region
        $region13: #{tpu_custom_call.1} parent=11 // pred_check
          %p427 = pneg %p74
        $region14: #{tpu_custom_call.1} parent=11 // pred_check_branch
          %429 = sbr.rel (%p427) target = $region16
        $region15: #{tpu_custom_call.1} parent=11 // pred_region
          %s430 = smul.u32 2, %s45
          %432 = vsyncadd [#allocation4], 0
          %s433 = smul.addr %s430, 2
          %s434 = smul.addr %s433, 8
          %s435 = scalar_lea.hbm %s0, %s434
          %s436 = sshll.u32 %s435, 4
          %s437 = int_to_ptr.hbm [resolvable:$true] %s436
          %s438 = sshll.u32 [#allocation3], 4
          %s439 = int_to_ptr.vmem [resolvable:$true] %s438
          %444 = dma.hbm_to_vmem [thread:$0]  %s437, 512, %s439, [#allocation4], 128, 128, 8
        $region16: #{tpu_custom_call.1} parent=11 // pred_fallthru
          _
      $region12: #{tpu_custom_call.1} parent=5 // pred_fallthru
        _
      %p445 = scmp.lt.s32.totalorder %s36, 2
      // Predicated region
      $region17: #{tpu_custom_call.1} parent=5 // pred_check
        %p446 = pneg %p445
      $region18: #{tpu_custom_call.1} parent=5 // pred_check_branch
        %448 = sbr.rel (%p446) target = $region20
      $region19: #{tpu_custom_call.1} parent=5 // pred_region
        // Predicated region
        $region21: #{tpu_custom_call.1} parent=19 // pred_check
          %p449 = pneg %p94
        $region22: #{tpu_custom_call.1} parent=19 // pred_check_branch
          %451 = sbr.rel (%p449) target = $region24
        $region23: #{tpu_custom_call.1} parent=19 // pred_region
          %s452 = sand.u32 %s36, 1
          %s453 = scalar_lea.sflag [#allocation7], %s452
          %s454 = sand.u32 %s84, 1
          %s455 = scalar_lea.vmem [#allocation6], %s454
          %457 = vsyncadd %s453, 0
          %s458 = scalar_lea.hbm %s1, %s44
          %s460 = sshll.u32 %s458, 4
          %s461 = int_to_ptr.hbm [resolvable:$true] %s460
          %s462 = sshll.u32 %s455, 4
          %s463 = int_to_ptr.vmem [resolvable:$true] %s462
          %465 = dma.hbm_to_vmem [thread:$0]  %s461, 16, %s463, %s453
        $region24: #{tpu_custom_call.1} parent=19 // pred_fallthru
          _
        // Predicated region
        $region25: #{tpu_custom_call.1} parent=19 // pred_check
          %p466 = pneg %p120
        $region26: #{tpu_custom_call.1} parent=19 // pred_check_branch
          %468 = sbr.rel (%p466) target = $region28
        $region27: #{tpu_custom_call.1} parent=19 // pred_region
          %s469 = sand.u32 %s36, 1
          %s470 = scalar_lea.sflag [#allocation7], %s469
          %s471 = sand.u32 %s110, 1
          %s472 = scalar_lea.vmem [#allocation8], %s471
          %474 = vsyncadd %s470, 0
          %s475 = scalar_lea.hbm %s2, %s44
          %s477 = sshll.u32 %s475, 4
          %s478 = int_to_ptr.hbm [resolvable:$true] %s477
          %s479 = sshll.u32 %s472, 4
          %s480 = int_to_ptr.vmem [resolvable:$true] %s479
          %482 = dma.hbm_to_vmem [thread:$0]  %s478, 16, %s480, %s470
        $region28: #{tpu_custom_call.1} parent=19 // pred_fallthru
          _
        // Predicated region
        $region29: #{tpu_custom_call.1} parent=19 // pred_check
          %p483 = pneg %p146
        $region30: #{tpu_custom_call.1} parent=19 // pred_check_branch
          %485 = sbr.rel (%p483) target = $region32
        $region31: #{tpu_custom_call.1} parent=19 // pred_region
          %s486 = sand.u32 %s36, 1
          %s487 = scalar_lea.sflag [#allocation10], %s486
          %s488 = sand.u32 %s136, 1
          %s489 = smul.addr %s488, 192
          %s490 = scalar_lea.vmem [#allocation9], %s489
          %492 = vsyncadd %s487, 0
          %s493 = smul.addr %s44, 48
          %s494 = smul.addr %s493, 4
          %s495 = scalar_lea.hbm %s3, %s494
          %s496 = sshll.u32 %s495, 4
          %s497 = int_to_ptr.hbm [resolvable:$true] %s496
          %s498 = sshll.u32 %s490, 4
          %s499 = int_to_ptr.vmem [resolvable:$true] %s498
          %504 = dma.hbm_to_vmem [thread:$0]  %s497, 3072, %s499, %s487, 192, 192, 12
        $region32: #{tpu_custom_call.1} parent=19 // pred_fallthru
          _
        // Predicated region
        $region33: #{tpu_custom_call.1} parent=19 // pred_check
          %p505 = pneg %p172
        $region34: #{tpu_custom_call.1} parent=19 // pred_check_branch
          %507 = sbr.rel (%p505) target = $region36
        $region35: #{tpu_custom_call.1} parent=19 // pred_region
          %s508 = sand.u32 %s36, 1
          %s509 = scalar_lea.sflag [#allocation10], %s508
          %s510 = sand.u32 %s162, 1
          %s511 = smul.addr %s510, 3
          %s512 = scalar_lea.vmem [#allocation11], %s511
          %514 = vsyncadd %s509, 0
          %s515 = smul.addr %s44, 3
          %s516 = scalar_lea.hbm %s4, %s515
          %s518 = sshll.u32 %s516, 4
          %s519 = int_to_ptr.hbm [resolvable:$true] %s518
          %s520 = sshll.u32 %s512, 4
          %s521 = int_to_ptr.vmem [resolvable:$true] %s520
          %523 = dma.hbm_to_vmem [thread:$0]  %s519, 48, %s521, %s509
        $region36: #{tpu_custom_call.1} parent=19 // pred_fallthru
          _
        // Predicated region
        $region37: #{tpu_custom_call.1} parent=19 // pred_check
          %p524 = pneg %p198
        $region38: #{tpu_custom_call.1} parent=19 // pred_check_branch
          %526 = sbr.rel (%p524) target = $region40
        $region39: #{tpu_custom_call.1} parent=19 // pred_region
          %s527 = sand.u32 %s36, 1
          %s528 = scalar_lea.sflag [#allocation13], %s527
          %s529 = sand.u32 %s188, 1
          %s530 = smul.addr %s529, 64
          %s531 = scalar_lea.vmem [#allocation12], %s530
          %533 = vsyncadd %s528, 0
          %s534 = smul.addr %s44, 16
          %s535 = smul.addr %s534, 4
          %s536 = scalar_lea.hbm %s5, %s535
          %s537 = sshll.u32 %s536, 4
          %s538 = int_to_ptr.hbm [resolvable:$true] %s537
          %s539 = sshll.u32 %s531, 4
          %s540 = int_to_ptr.vmem [resolvable:$true] %s539
          %545 = dma.hbm_to_vmem [thread:$0]  %s538, 1024, %s540, %s528, 64, 64, 4
        $region40: #{tpu_custom_call.1} parent=19 // pred_fallthru
          _
        // Predicated region
        $region41: #{tpu_custom_call.1} parent=19 // pred_check
          %p546 = pneg %p224
        $region42: #{tpu_custom_call.1} parent=19 // pred_check_branch
          %548 = sbr.rel (%p546) target = $region44
        $region43: #{tpu_custom_call.1} parent=19 // pred_region
          %s549 = sand.u32 %s36, 1
          %s550 = scalar_lea.sflag [#allocation13], %s549
          %s551 = sand.u32 %s214, 1
          %s552 = scalar_lea.vmem [#allocation14], %s551
          %554 = vsyncadd %s550, 0
          %s555 = scalar_lea.hbm %s6, %s44
          %s557 = sshll.u32 %s555, 4
          %s558 = int_to_ptr.hbm [resolvable:$true] %s557
          %s559 = sshll.u32 %s552, 4
          %s560 = int_to_ptr.vmem [resolvable:$true] %s559
          %562 = dma.hbm_to_vmem [thread:$0]  %s558, 16, %s560, %s550
        $region44: #{tpu_custom_call.1} parent=19 // pred_fallthru
          _
        // Predicated region
        $region45: #{tpu_custom_call.1} parent=19 // pred_check
          %p563 = pneg %p250
        $region46: #{tpu_custom_call.1} parent=19 // pred_check_branch
          %565 = sbr.rel (%p563) target = $region48
        $region47: #{tpu_custom_call.1} parent=19 // pred_region
          %s566 = sand.u32 %s36, 1
          %s567 = scalar_lea.sflag [#allocation16], %s566
          %s568 = sand.u32 %s240, 1
          %s569 = scalar_lea.vmem [#allocation15], %s568
          %571 = vsyncadd %s567, 0
          %s572 = scalar_lea.hbm %s7, %s44
          %s574 = sshll.u32 %s572, 4
          %s575 = int_to_ptr.hbm [resolvable:$true] %s574
          %s576 = sshll.u32 %s569, 4
          %s577 = int_to_ptr.vmem [resolvable:$true] %s576
          %579 = dma.hbm_to_vmem [thread:$0]  %s575, 16, %s577, %s567
        $region48: #{tpu_custom_call.1} parent=19 // pred_fallthru
          _
        // Predicated region
        $region49: #{tpu_custom_call.1} parent=19 // pred_check
          %p580 = pneg %p276
        $region50: #{tpu_custom_call.1} parent=19 // pred_check_branch
          %582 = sbr.rel (%p580) target = $region52
        $region51: #{tpu_custom_call.1} parent=19 // pred_region
          %s583 = sand.u32 %s36, 1
          %s584 = scalar_lea.sflag [#allocation16], %s583
          %s585 = sand.u32 %s266, 1
          %s586 = scalar_lea.vmem [#allocation17], %s585
          %588 = vsyncadd %s584, 0
          %s589 = scalar_lea.hbm %s8, %s44
          %s591 = sshll.u32 %s589, 4
          %s592 = int_to_ptr.hbm [resolvable:$true] %s591
          %s593 = sshll.u32 %s586, 4
          %s594 = int_to_ptr.vmem [resolvable:$true] %s593
          %596 = dma.hbm_to_vmem [thread:$0]  %s592, 16, %s594, %s584
        $region52: #{tpu_custom_call.1} parent=19 // pred_fallthru
          _
        // Predicated region
        $region53: #{tpu_custom_call.1} parent=19 // pred_check
          %p597 = pneg %p302
        $region54: #{tpu_custom_call.1} parent=19 // pred_check_branch
          %599 = sbr.rel (%p597) target = $region56
        $region55: #{tpu_custom_call.1} parent=19 // pred_region
          %s600 = sand.u32 %s36, 1
          %s601 = scalar_lea.sflag [#allocation19], %s600
          %s602 = sand.u32 %s292, 1
          %s603 = smul.addr %s602, 256
          %s604 = scalar_lea.vmem [#allocation18], %s603
          %606 = vsyncadd %s601, 0
          %s607 = smul.addr %s44, 64
          %s608 = smul.addr %s607, 4
          %s609 = scalar_lea.hbm %s9, %s608
          %s610 = sshll.u32 %s609, 4
          %s611 = int_to_ptr.hbm [resolvable:$true] %s610
          %s612 = sshll.u32 %s604, 4
          %s613 = int_to_ptr.vmem [resolvable:$true] %s612
          %618 = dma.hbm_to_vmem [thread:$0]  %s611, 4096, %s613, %s601, 256, 256, 16
        $region56: #{tpu_custom_call.1} parent=19 // pred_fallthru
          _
        // Predicated region
        $region57: #{tpu_custom_call.1} parent=19 // pred_check
          %p619 = pneg %p328
        $region58: #{tpu_custom_call.1} parent=19 // pred_check_branch
          %621 = sbr.rel (%p619) target = $region60
        $region59: #{tpu_custom_call.1} parent=19 // pred_region
          %p622 = scmp.lt.s32.totalorder %s44, 1
          %s623 = scalar_select %p622, %s44, 1
          %s624 = smul.addr %s623, 4
          %s625 = scalar_lea.vmem %s10, %s624
        $region60: #{tpu_custom_call.1} parent=19 // pred_fallthru
          _
        // Predicated region
        $region61: #{tpu_custom_call.1} parent=19 // pred_check
          %p626 = pneg %p354
        $region62: #{tpu_custom_call.1} parent=19 // pred_check_branch
          %628 = sbr.rel (%p626) target = $region64
        $region63: #{tpu_custom_call.1} parent=19 // pred_region
          %s629 = sand.u32 %s36, 1
          %s630 = scalar_lea.sflag [#allocation19], %s629
          %s631 = sand.u32 %s344, 1
          %s632 = smul.addr %s631, 256
          %s633 = scalar_lea.vmem [#allocation20], %s632
          %635 = vsyncadd %s630, 0
          %s636 = smul.addr %s44, 64
          %s637 = smul.addr %s636, 4
          %s638 = scalar_lea.hbm %s11, %s637
          %s639 = sshll.u32 %s638, 4
          %s640 = int_to_ptr.hbm [resolvable:$true] %s639
          %s641 = sshll.u32 %s633, 4
          %s642 = int_to_ptr.vmem [resolvable:$true] %s641
          %647 = dma.hbm_to_vmem [thread:$0]  %s640, 4096, %s642, %s630, 64, 64, 4
        $region64: #{tpu_custom_call.1} parent=19 // pred_fallthru
          _
        // Predicated region
        $region65: #{tpu_custom_call.1} parent=19 // pred_check
          %p648 = pneg %p380
        $region66: #{tpu_custom_call.1} parent=19 // pred_check_branch
          %650 = sbr.rel (%p648) target = $region68
        $region67: #{tpu_custom_call.1} parent=19 // pred_region
          %p651 = scmp.lt.s32.totalorder %s44, 1
          %s652 = scalar_select %p651, %s44, 1
          %s653 = scalar_lea.vmem %s12, %s652
        $region68: #{tpu_custom_call.1} parent=19 // pred_fallthru
          _
      $region20: #{tpu_custom_call.1} parent=5 // pred_fallthru
        _
      %p654 = scmp.le.s32.totalorder 1, %s36
      %p655 = scmp.lt.s32.totalorder %s36, 3
      %p656 = pnand %p654, %p655
      %p657 = pneg %p656
      // Predicated region
      $region69: #{tpu_custom_call.1} parent=5 // pred_check
        _
      $region70: #{tpu_custom_call.1} parent=5 // pred_check_branch
        %659 = sbr.rel (%p656) target = $region72
      $region71: #{tpu_custom_call.1} parent=5 // pred_region
        %s660 = ssub.s32 %s36, 1
        // Predicated region
        $region73: #{tpu_custom_call.1} parent=71 // pred_check
          %p661 = pneg %p74
        $region74: #{tpu_custom_call.1} parent=71 // pred_check_branch
          %663 = sbr.rel (%p661) target = $region76
        $region75: #{tpu_custom_call.1} parent=71 // pred_region
          %665 = dma.done [#allocation4], 512
        $region76: #{tpu_custom_call.1} parent=71 // pred_fallthru
          _
        %s666 = sand.u32 %s41, 1
        %s667 = scalar_lea.sflag [#allocation7], %s666
        %s668 = sand.u32 %s87, 1
        %s669 = scalar_lea.vmem [#allocation6], %s668
        // Predicated region
        $region77: #{tpu_custom_call.1} parent=71 // pred_check
          %p670 = pneg %p100
        $region78: #{tpu_custom_call.1} parent=71 // pred_check_branch
          %672 = sbr.rel (%p670) target = $region80
        $region79: #{tpu_custom_call.1} parent=71 // pred_region
          %674 = dma.done %s667, 16
        $region80: #{tpu_custom_call.1} parent=71 // pred_fallthru
          _
        %s675 = sand.u32 %s41, 1
        %s676 = scalar_lea.sflag [#allocation7], %s675
        %s677 = sand.u32 %s113, 1
        %s678 = scalar_lea.vmem [#allocation8], %s677
        // Predicated region
        $region81: #{tpu_custom_call.1} parent=71 // pred_check
          %p679 = pneg %p126
        $region82: #{tpu_custom_call.1} parent=71 // pred_check_branch
          %681 = sbr.rel (%p679) target = $region84
        $region83: #{tpu_custom_call.1} parent=71 // pred_region
          %683 = dma.done %s676, 16
        $region84: #{tpu_custom_call.1} parent=71 // pred_fallthru
          _
        %s684 = sand.u32 %s41, 1
        %s685 = scalar_lea.sflag [#allocation10], %s684
        %s686 = sand.u32 %s139, 1
        %s687 = smul.addr %s686, 192
        %s688 = scalar_lea.vmem [#allocation9], %s687
        // Predicated region
        $region85: #{tpu_custom_call.1} parent=71 // pred_check
          %p689 = pneg %p152
        $region86: #{tpu_custom_call.1} parent=71 // pred_check_branch
          %691 = sbr.rel (%p689) target = $region88
        $region87: #{tpu_custom_call.1} parent=71 // pred_region
          %693 = dma.done %s685, 3072
        $region88: #{tpu_custom_call.1} parent=71 // pred_fallthru
          _
        %s694 = sand.u32 %s41, 1
        %s695 = scalar_lea.sflag [#allocation10], %s694
        %s696 = sand.u32 %s165, 1
        %s697 = smul.addr %s696, 3
        %s698 = scalar_lea.vmem [#allocation11], %s697
        // Predicated region
        $region89: #{tpu_custom_call.1} parent=71 // pred_check
          %p699 = pneg %p178
        $region90: #{tpu_custom_call.1} parent=71 // pred_check_branch
          %701 = sbr.rel (%p699) target = $region92
        $region91: #{tpu_custom_call.1} parent=71 // pred_region
          %703 = dma.done %s695, 48
        $region92: #{tpu_custom_call.1} parent=71 // pred_fallthru
          _
        %s704 = sand.u32 %s41, 1
        %s705 = scalar_lea.sflag [#allocation13], %s704
        %s706 = sand.u32 %s191, 1
        %s707 = smul.addr %s706, 64
        %s708 = scalar_lea.vmem [#allocation12], %s707
        // Predicated region
        $region93: #{tpu_custom_call.1} parent=71 // pred_check
          %p709 = pneg %p204
        $region94: #{tpu_custom_call.1} parent=71 // pred_check_branch
          %711 = sbr.rel (%p709) target = $region96
        $region95: #{tpu_custom_call.1} parent=71 // pred_region
          %713 = dma.done %s705, 1024
        $region96: #{tpu_custom_call.1} parent=71 // pred_fallthru
          _
        %s714 = sand.u32 %s41, 1
        %s715 = scalar_lea.sflag [#allocation13], %s714
        %s716 = sand.u32 %s217, 1
        %s717 = scalar_lea.vmem [#allocation14], %s716
        // Predicated region
        $region97: #{tpu_custom_call.1} parent=71 // pred_check
          %p718 = pneg %p230
        $region98: #{tpu_custom_call.1} parent=71 // pred_check_branch
          %720 = sbr.rel (%p718) target = $region100
        $region99: #{tpu_custom_call.1} parent=71 // pred_region
          %722 = dma.done %s715, 16
        $region100: #{tpu_custom_call.1} parent=71 // pred_fallthru
          _
        %s723 = sand.u32 %s41, 1
        %s724 = scalar_lea.sflag [#allocation16], %s723
        %s725 = sand.u32 %s243, 1
        %s726 = scalar_lea.vmem [#allocation15], %s725
        // Predicated region
        $region101: #{tpu_custom_call.1} parent=71 // pred_check
          %p727 = pneg %p256
        $region102: #{tpu_custom_call.1} parent=71 // pred_check_branch
          %729 = sbr.rel (%p727) target = $region104
        $region103: #{tpu_custom_call.1} parent=71 // pred_region
          %731 = dma.done %s724, 16
        $region104: #{tpu_custom_call.1} parent=71 // pred_fallthru
          _
        %s732 = sand.u32 %s41, 1
        %s733 = scalar_lea.sflag [#allocation16], %s732
        %s734 = sand.u32 %s269, 1
        %s735 = scalar_lea.vmem [#allocation17], %s734
        // Predicated region
        $region105: #{tpu_custom_call.1} parent=71 // pred_check
          %p736 = pneg %p282
        $region106: #{tpu_custom_call.1} parent=71 // pred_check_branch
          %738 = sbr.rel (%p736) target = $region108
        $region107: #{tpu_custom_call.1} parent=71 // pred_region
          %740 = dma.done %s733, 16
        $region108: #{tpu_custom_call.1} parent=71 // pred_fallthru
          _
        %s741 = sand.u32 %s41, 1
        %s742 = scalar_lea.sflag [#allocation19], %s741
        %s743 = sand.u32 %s295, 1
        %s744 = smul.addr %s743, 256
        %s745 = scalar_lea.vmem [#allocation18], %s744
        // Predicated region
        $region109: #{tpu_custom_call.1} parent=71 // pred_check
          %p746 = pneg %p308
        $region110: #{tpu_custom_call.1} parent=71 // pred_check_branch
          %748 = sbr.rel (%p746) target = $region112
        $region111: #{tpu_custom_call.1} parent=71 // pred_region
          %750 = dma.done %s742, 4096
        $region112: #{tpu_custom_call.1} parent=71 // pred_fallthru
          _
        %s751 = sand.u32 %s41, 1
        %s752 = scalar_lea.sflag [#allocation19], %s751
        %s753 = sand.u32 %s347, 1
        %s754 = smul.addr %s753, 256
        %s755 = scalar_lea.vmem [#allocation20], %s754
        // Predicated region
        $region113: #{tpu_custom_call.1} parent=71 // pred_check
          %p756 = pneg %p360
        $region114: #{tpu_custom_call.1} parent=71 // pred_check_branch
          %758 = sbr.rel (%p756) target = $region116
        $region115: #{tpu_custom_call.1} parent=71 // pred_region
          %760 = dma.done %s752, 4096
        $region116: #{tpu_custom_call.1} parent=71 // pred_fallthru
          _
        %p761 = pneg %p74
        %p762 = pneg %p71
        %s763 = sand.u32 %s41, 1
        %s764 = scalar_lea.sflag [#allocation7], %s763
        %s765 = sand.u32 %s87, 1
        %s766 = scalar_lea.vmem [#allocation6], %s765
        %p767 = pneg %p100
        %p768 = pneg %p97
        %s769 = sand.u32 %s41, 1
        %s770 = scalar_lea.sflag [#allocation7], %s769
        %s771 = sand.u32 %s113, 1
        %s772 = scalar_lea.vmem [#allocation8], %s771
        %p773 = pneg %p126
        %p774 = pneg %p123
        %s775 = sand.u32 %s41, 1
        %s776 = scalar_lea.sflag [#allocation10], %s775
        %s777 = sand.u32 %s139, 1
        %s778 = smul.addr %s777, 192
        %s779 = scalar_lea.vmem [#allocation9], %s778
        %p780 = pneg %p152
        %p781 = pneg %p149
        %s782 = sand.u32 %s41, 1
        %s783 = scalar_lea.sflag [#allocation10], %s782
        %s784 = sand.u32 %s165, 1
        %s785 = smul.addr %s784, 3
        %s786 = scalar_lea.vmem [#allocation11], %s785
        %p787 = pneg %p178
        %p788 = pneg %p175
        %s789 = sand.u32 %s41, 1
        %s790 = scalar_lea.sflag [#allocation13], %s789
        %s791 = sand.u32 %s191, 1
        %s792 = smul.addr %s791, 64
        %s793 = scalar_lea.vmem [#allocation12], %s792
        %p794 = pneg %p204
        %p795 = pneg %p201
        %s796 = sand.u32 %s41, 1
        %s797 = scalar_lea.sflag [#allocation13], %s796
        %s798 = sand.u32 %s217, 1
        %s799 = scalar_lea.vmem [#allocation14], %s798
        %p800 = pneg %p230
        %p801 = pneg %p227
        %s802 = sand.u32 %s41, 1
        %s803 = scalar_lea.sflag [#allocation16], %s802
        %s804 = sand.u32 %s243, 1
        %s805 = scalar_lea.vmem [#allocation15], %s804
        %p806 = pneg %p256
        %p807 = pneg %p253
        %s808 = sand.u32 %s41, 1
        %s809 = scalar_lea.sflag [#allocation16], %s808
        %s810 = sand.u32 %s269, 1
        %s811 = scalar_lea.vmem [#allocation17], %s810
        %p812 = pneg %p282
        %p813 = pneg %p279
        %s814 = sand.u32 %s41, 1
        %s815 = scalar_lea.sflag [#allocation19], %s814
        %s816 = sand.u32 %s295, 1
        %s817 = smul.addr %s816, 256
        %s818 = scalar_lea.vmem [#allocation18], %s817
        %p819 = pneg %p308
        %p820 = pneg %p305
        %p821 = scmp.lt.s32.totalorder %s46, 1
        %s822 = scalar_select %p821, %s46, 1
        %s823 = smul.addr %s822, 4
        %s824 = scalar_lea.vmem %s10, %s823
        %p825 = pneg %p334
        %p826 = pneg %p331
        %s827 = sand.u32 %s41, 1
        %s828 = scalar_lea.sflag [#allocation19], %s827
        %s829 = sand.u32 %s347, 1
        %s830 = smul.addr %s829, 256
        %s831 = scalar_lea.vmem [#allocation20], %s830
        %p832 = pneg %p360
        %p833 = pneg %p357
        %p834 = scmp.lt.s32.totalorder %s46, 1
        %s835 = scalar_select %p834, %s46, 1
        %s836 = scalar_lea.vmem %s12, %s835
        %p837 = pneg %p386
        %p838 = pneg %p383
        %p839 = pneg %p412
        %p840 = pneg %p409
        %s841 = smul.u32 2, %s45
        %p842 = scmp.lt.s32.totalorder %s46, 1
        %s843 = scalar_select %p842, %s46, 1
        %s844 = smul.addr %s843, 4
        %s845 = scalar_lea.vmem %s10, %s844
        %p846 = scmp.lt.s32.totalorder %s46, 1
        %s847 = scalar_select %p846, %s46, 1
        %s848 = scalar_lea.vmem %s12, %s847
        %s849 = smul.u32 2, %s45
        %p851 = scmp.eq.s32.totalorder %s46, 0
        // Predicated region
        $region117: #{tpu_custom_call.1} parent=71 // pred_check
          %p852 = pneg %p851
        $region118: #{tpu_custom_call.1} parent=71 // pred_check_branch
          %854 = sbr.rel (%p852) target = $region120
        $region119: #{tpu_custom_call.1} parent=71 // pred_region
          %v855 = vld [vmem:[#allocation3] sm:$0xff]
          %v856 = vld [vmem:[#allocation3 + $0x8] sm:$0xff]
          %v857 = vld [vmem:[#allocation3 + $0x10] sm:$0xff]
          %v858 = vld [vmem:[#allocation3 + $0x18] sm:$0xff]
          %859 = vst [vmem:[#allocation2] sm:$0xff] %v855
          %860 = vst [vmem:[#allocation2 + $0x8] sm:$0xff] %v856
          %861 = vst [vmem:[#allocation2 + $0x10] sm:$0xff] %v857
          %862 = vst [vmem:[#allocation2 + $0x18] sm:$0xff] %v858
        $region120: #{tpu_custom_call.1} parent=71 // pred_fallthru
          _
        %v863 = vld [vmem:[#allocation2] sm:$0xff]
        %v864 = vld [vmem:[#allocation2 + $0x8] sm:$0xff]
        %v865 = vld [vmem:[#allocation2 + $0x10] sm:$0xff]
        %v866 = vld [vmem:[#allocation2 + $0x18] sm:$0xff]
        %v867 = vld [vmem:[%s669] sm:$0x1]
        %v868 = vld [vmem:[%s678] sm:$0x1]
        %869 = vadd.xlane.f32.xlu0 %v863
        %v870 = vpop.xlane.xlu0 %869
        %871 = vadd.xlane.f32.xlu0 %v864
        %v872 = vpop.xlane.xlu0 %871
        %873 = vadd.xlane.f32.xlu0 %v865
        %v874 = vpop.xlane.xlu0 %873
        %875 = vadd.xlane.f32.xlu0 %v866
        %v876 = vpop.xlane.xlu0 %875
        %v877 = vrcp.pop 128.0
        %v878 = vmul.f32 128.0, %v877
        %v879 = vsub.f32 1.0, %v878
        %v880 = vmul.f32 %v877, %v879
        %v881 = vadd.f32 %v877, %v880
        %vm882 = vweird.f32 %v877
        %v883 = vsel %vm882, %v877, %v881
        %v884 = vmul.f32 %v870, %v883
        %v885 = vmul.f32 %v872, %v883
        %v886 = vmul.f32 %v874, %v883
        %v887 = vmul.f32 %v876, %v883
        %v888 = vsub.f32 %v863, %v884
        %v889 = vsub.f32 %v864, %v885
        %v890 = vsub.f32 %v865, %v886
        %v891 = vsub.f32 %v866, %v887
        %v892 = vmul.f32 %v888, %v888
        %v893 = vmul.f32 %v889, %v889
        %v894 = vmul.f32 %v890, %v890
        %v895 = vmul.f32 %v891, %v891
        %896 = vadd.xlane.f32.xlu0 %v892
        %v897 = vpop.xlane.xlu0 %896
        %898 = vadd.xlane.f32.xlu0 %v893
        %v899 = vpop.xlane.xlu0 %898
        %900 = vadd.xlane.f32.xlu0 %v894
        %v901 = vpop.xlane.xlu0 %900
        %902 = vadd.xlane.f32.xlu0 %v895
        %v903 = vpop.xlane.xlu0 %902
        %v904 = vmul.f32 %v897, %v883
        %v905 = vmul.f32 %v899, %v883
        %v906 = vmul.f32 %v901, %v883
        %v907 = vmul.f32 %v903, %v883
        %v908 = vadd.f32 %v904, 1e-05
        %v909 = vadd.f32 %v905, 1e-05
        %v910 = vadd.f32 %v906, 1e-05
        %v911 = vadd.f32 %v907, 1e-05
        %v912 = vrsqrt.pop %v908
        %v913 = vmul.f32 %v912, %v908
        %v914 = vmul.f32 %v913, %v912
        %v915 = vmul.f32 0.5, %v914
        %v916 = vsub.f32 1.5, %v915
        %v917 = vmul.f32 %v912, %v916
        %vm918 = vweird.f32 %v908
        %vm919 = vweird.f32 %v912
        %vm920 = vmor %vm918, %vm919
        %v921 = vsel %vm920, %v912, %v917
        %v922 = vrsqrt.pop %v909
        %v923 = vmul.f32 %v922, %v909
        %v924 = vmul.f32 %v923, %v922
        %v925 = vmul.f32 0.5, %v924
        %v926 = vsub.f32 1.5, %v925
        %v927 = vmul.f32 %v922, %v926
        %vm928 = vweird.f32 %v909
        %vm929 = vweird.f32 %v922
        %vm930 = vmor %vm928, %vm929
        %v931 = vsel %vm930, %v922, %v927
        %v932 = vrsqrt.pop %v910
        %v933 = vmul.f32 %v932, %v910
        %v934 = vmul.f32 %v933, %v932
        %v935 = vmul.f32 0.5, %v934
        %v936 = vsub.f32 1.5, %v935
        %v937 = vmul.f32 %v932, %v936
        %vm938 = vweird.f32 %v910
        %vm939 = vweird.f32 %v932
        %vm940 = vmor %vm938, %vm939
        %v941 = vsel %vm940, %v932, %v937
        %v942 = vrsqrt.pop %v911
        %v943 = vmul.f32 %v942, %v911
        %v944 = vmul.f32 %v943, %v942
        %v945 = vmul.f32 0.5, %v944
        %v946 = vsub.f32 1.5, %v945
        %v947 = vmul.f32 %v942, %v946
        %vm948 = vweird.f32 %v911
        %vm949 = vweird.f32 %v942
        %vm950 = vmor %vm948, %vm949
        %v951 = vsel %vm950, %v942, %v947
        %v952 = vmul.f32 %v888, %v921
        %v953 = vmul.f32 %v889, %v931
        %v954 = vmul.f32 %v890, %v941
        %v955 = vmul.f32 %v891, %v951
        %v957 = vperm.slane %v867, 0
        %v959 = vmul.f32 %v952, %v957
        %v960 = vmul.f32 %v953, %v957
        %v961 = vmul.f32 %v954, %v957
        %v962 = vmul.f32 %v955, %v957
        %v964 = vperm.slane %v868, 0
        %v966 = vadd.f32 %v959, %v964
        %v967 = vadd.f32 %v960, %v964
        %v968 = vadd.f32 %v961, %v964
        %v969 = vadd.f32 %v962, %v964
        %v970 = vpack.c.bf16 %v967, %v966
        %v971 = vpack.c.bf16 %v969, %v968
        %v972 = vld [vmem:[%s688] sm:$0xff]
        %v973 = vld [vmem:[%s688 + $0x8] sm:$0xf]
        %v974 = vld [vmem:[%s688 + $0xc] sm:$0xff]
        %v975 = vld [vmem:[%s688 + $0x14] sm:$0xf]
        %v976 = vld [vmem:[%s688 + $0x18] sm:$0xff]
        %v977 = vld [vmem:[%s688 + $0x20] sm:$0xf]
        %v978 = vld [vmem:[%s688 + $0x24] sm:$0xff]
        %v979 = vld [vmem:[%s688 + $0x2c] sm:$0xf]
        %v980 = vld [vmem:[%s688 + $0x30] sm:$0xff]
        %v981 = vld [vmem:[%s688 + $0x38] sm:$0xf]
        %v982 = vld [vmem:[%s688 + $0x3c] sm:$0xff]
        %v983 = vld [vmem:[%s688 + $0x44] sm:$0xf]
        %v984 = vld [vmem:[%s688 + $0x48] sm:$0xff]
        %v985 = vld [vmem:[%s688 + $0x50] sm:$0xf]
        %v986 = vld [vmem:[%s688 + $0x54] sm:$0xff]
        %v987 = vld [vmem:[%s688 + $0x5c] sm:$0xf]
        %v988 = vld [vmem:[%s688 + $0x60] sm:$0xff]
        %v989 = vld [vmem:[%s688 + $0x68] sm:$0xf]
        %v990 = vld [vmem:[%s688 + $0x6c] sm:$0xff]
        %v991 = vld [vmem:[%s688 + $0x74] sm:$0xf]
        %v992 = vld [vmem:[%s688 + $0x78] sm:$0xff]
        %v993 = vld [vmem:[%s688 + $0x80] sm:$0xf]
        %v994 = vld [vmem:[%s688 + $0x84] sm:$0xff]
        %v995 = vld [vmem:[%s688 + $0x8c] sm:$0xf]
        %v996 = vld [vmem:[%s688 + $0x90] sm:$0xff]
        %v997 = vld [vmem:[%s688 + $0x98] sm:$0xf]
        %v998 = vld [vmem:[%s688 + $0x9c] sm:$0xff]
        %v999 = vld [vmem:[%s688 + $0xa4] sm:$0xf]
        %v1000 = vld [vmem:[%s688 + $0xa8] sm:$0xff]
        %v1001 = vld [vmem:[%s688 + $0xb0] sm:$0xf]
        %v1002 = vld [vmem:[%s688 + $0xb4] sm:$0xff]
        %v1003 = vld [vmem:[%s688 + $0xbc] sm:$0xf]
        %v1004 = vld [vmem:[%s698] sm:$0x7]
        %v1006 = vperm.slane %v1004, 0
        %v1007 = vperm.slane %v1004, 1
        %v1008 = vperm.slane %v1004, 2
        %v1044 = vunpack.c.l.b16 %v972
        %v1045 = vunpack.c.h.b16 %v972
        %v1046 = vunpack.c.l.b16 %v973
        %v1047 = vunpack.c.l.b16 %v974
        %v1048 = vunpack.c.h.b16 %v974
        %v1049 = vunpack.c.l.b16 %v975
        %v1050 = vunpack.c.l.b16 %v976
        %v1051 = vunpack.c.h.b16 %v976
        %v1052 = vunpack.c.l.b16 %v977
        %v1053 = vunpack.c.l.b16 %v978
        %v1054 = vunpack.c.h.b16 %v978
        %v1055 = vunpack.c.l.b16 %v979
        %v1056 = vunpack.c.l.b16 %v980
        %v1057 = vunpack.c.h.b16 %v980
        %v1058 = vunpack.c.l.b16 %v981
        %v1059 = vunpack.c.l.b16 %v982
        %v1060 = vunpack.c.h.b16 %v982
        %v1061 = vunpack.c.l.b16 %v983
        %v1062 = vunpack.c.l.b16 %v984
        %v1063 = vunpack.c.h.b16 %v984
        %v1064 = vunpack.c.l.b16 %v985
        %v1065 = vunpack.c.l.b16 %v986
        %v1066 = vunpack.c.h.b16 %v986
        %v1067 = vunpack.c.l.b16 %v987
        %v1068 = vunpack.c.l.b16 %v988
        %v1069 = vunpack.c.h.b16 %v988
        %v1070 = vunpack.c.l.b16 %v989
        %v1071 = vunpack.c.l.b16 %v990
        %v1072 = vunpack.c.h.b16 %v990
        %v1073 = vunpack.c.l.b16 %v991
        %v1074 = vunpack.c.l.b16 %v992
        %v1075 = vunpack.c.h.b16 %v992
        %v1076 = vunpack.c.l.b16 %v993
        %v1077 = vunpack.c.l.b16 %v994
        %v1078 = vunpack.c.h.b16 %v994
        %v1079 = vunpack.c.l.b16 %v995
        %v1080 = vunpack.c.l.b16 %v996
        %v1081 = vunpack.c.h.b16 %v996
        %v1082 = vunpack.c.l.b16 %v997
        %v1083 = vunpack.c.l.b16 %v998
        %v1084 = vunpack.c.h.b16 %v998
        %v1085 = vunpack.c.l.b16 %v999
        %v1086 = vunpack.c.l.b16 %v1000
        %v1087 = vunpack.c.h.b16 %v1000
        %v1088 = vunpack.c.l.b16 %v1001
        %v1089 = vunpack.c.l.b16 %v1002
        %v1090 = vunpack.c.h.b16 %v1002
        %v1091 = vunpack.c.l.b16 %v1003
        %v1092 = vpack.c.b16 %v1047, %v1044
        %v1093 = vpack.c.b16 %v1048, %v1045
        %v1094 = vpack.c.b16 %v1049, %v1046
        %v1095 = vpack.c.b16 %v1053, %v1050
        %v1096 = vpack.c.b16 %v1054, %v1051
        %v1097 = vpack.c.b16 %v1055, %v1052
        %v1098 = vpack.c.b16 %v1059, %v1056
        %v1099 = vpack.c.b16 %v1060, %v1057
        %v1100 = vpack.c.b16 %v1061, %v1058
        %v1101 = vpack.c.b16 %v1065, %v1062
        %v1102 = vpack.c.b16 %v1066, %v1063
        %v1103 = vpack.c.b16 %v1067, %v1064
        %v1104 = vpack.c.b16 %v1071, %v1068
        %v1105 = vpack.c.b16 %v1072, %v1069
        %v1106 = vpack.c.b16 %v1073, %v1070
        %v1107 = vpack.c.b16 %v1077, %v1074
        %v1108 = vpack.c.b16 %v1078, %v1075
        %v1109 = vpack.c.b16 %v1079, %v1076
        %v1110 = vpack.c.b16 %v1083, %v1080
        %v1111 = vpack.c.b16 %v1084, %v1081
        %v1112 = vpack.c.b16 %v1085, %v1082
        %v1113 = vpack.c.b16 %v1089, %v1086
        %v1114 = vpack.c.b16 %v1090, %v1087
        %v1115 = vpack.c.b16 %v1091, %v1088
        %1140 = vmatpush.bf16.msra.mxu0 %v1113
        %1141 = vmatpush.bf16.msra.mxu0 %v1110
        %1142 = vmatpush.bf16.msra.mxu0 %v1107
        %1143 = vmatpush.bf16.msra.mxu0 %v1104
        %1144 = vmatpush.bf16.msra.mxu0 %v1101
        %1145 = vmatpush.bf16.msra.mxu0 %v1098
        %1146 = vmatpush.bf16.msra.mxu0 %v1095
        %1147 = vmatpush.bf16.msra.mxu0 %v1092
        %1148 = vmatmul.bf16.gmra.mxu0 %v970
        %v1149 = vpop.f32.mrf.mxu0
        %v1150 = vadd.f32 %v1006, %v1149
        %v1151 = vpop.f32.mrf.mxu0
        %v1152 = vadd.f32 %v1006, %v1151
        %1153 = vmatmul.bf16.gmra.mxu0 %v971
        %v1154 = vpop.f32.mrf.mxu0
        %v1155 = vadd.f32 %v1006, %v1154
        %v1156 = vpop.f32.mrf.mxu0
        %v1157 = vadd.f32 %v1006, %v1156
        %1158 = vdwg.mxu0
        %1159 = vmatpush.bf16.msra.mxu0 %v1114
        %1160 = vmatpush.bf16.msra.mxu0 %v1111
        %1161 = vmatpush.bf16.msra.mxu0 %v1108
        %1162 = vmatpush.bf16.msra.mxu0 %v1105
        %1163 = vmatpush.bf16.msra.mxu0 %v1102
        %1164 = vmatpush.bf16.msra.mxu0 %v1099
        %1165 = vmatpush.bf16.msra.mxu0 %v1096
        %1166 = vmatpush.bf16.msra.mxu0 %v1093
        %1167 = vmatmul.bf16.gmra.mxu0 %v970
        %v1168 = vpop.f32.mrf.mxu0
        %v1169 = vadd.f32 %v1007, %v1168
        %v1170 = vpop.f32.mrf.mxu0
        %v1171 = vadd.f32 %v1007, %v1170
        %1172 = vmatmul.bf16.gmra.mxu0 %v971
        %v1173 = vpop.f32.mrf.mxu0
        %v1174 = vadd.f32 %v1007, %v1173
        %v1175 = vpop.f32.mrf.mxu0
        %v1176 = vadd.f32 %v1007, %v1175
        %1177 = vdwg.mxu0
        %1178 = vmatpush.bf16.msra.mxu0 %v1115
        %1179 = vmatpush.bf16.msra.mxu0 %v1112
        %1180 = vmatpush.bf16.msra.mxu0 %v1109
        %1181 = vmatpush.bf16.msra.mxu0 %v1106
        %1182 = vmatpush.bf16.msra.mxu0 %v1103
        %1183 = vmatpush.bf16.msra.mxu0 %v1100
        %1184 = vmatpush.bf16.msra.mxu0 %v1097
        %1185 = vmatpush.bf16.msra.mxu0 %v1094
        %1186 = vmatmul.bf16.gmra.mxu0 %v970
        %v1187 = vpop.f32.mrf.mxu0
        %v1188 = vadd.f32 %v1008, %v1187
        %v1189 = vpop.f32.mrf.mxu0
        %v1190 = vadd.f32 %v1008, %v1189
        %1191 = vmatmul.bf16.gmra.mxu0 %v971
        %v1192 = vpop.f32.mrf.mxu0
        %v1193 = vadd.f32 %v1008, %v1192
        %v1194 = vpop.f32.mrf.mxu0
        %v1195 = vadd.f32 %v1008, %v1194
        %1196 = vdwg.mxu0
        %v1197 = vmul.f32 %v1150, 0.17677669
        %v1198 = vmul.f32 %v1152, 0.17677669
        %v1199 = vmul.f32 %v1155, 0.17677669
        %v1200 = vmul.f32 %v1157, 0.17677669
        %v1201 = vpack.c.bf16 %v1197, %v1197
        %v1202 = vpack.c.bf16 %v1198, %v1198
        %v1203 = vpack.c.bf16 %v1199, %v1199
        %v1204 = vpack.c.bf16 %v1200, %v1200
        %v1205 = vpack.c.bf16 %v1169, %v1169
        %v1206 = vpack.c.bf16 %v1171, %v1171
        %v1207 = vpack.c.bf16 %v1174, %v1174
        %v1208 = vpack.c.bf16 %v1176, %v1176
        %v1209 = vpack.c.bf16 %v1188, %v1188
        %v1210 = vpack.c.bf16 %v1190, %v1190
        %v1211 = vpack.c.bf16 %v1193, %v1193
        %v1212 = vpack.c.bf16 %v1195, %v1195
        %1217 = vrot.lane.b32.xlu0 %v1201, 96
        %v1218 = vpop.permute.xlu0 %1217
        %1219 = vrot.lane.b32.xlu0 %v1202, 96
        %v1220 = vpop.permute.xlu0 %1219
        %1221 = vrot.lane.b32.xlu0 %v1203, 96
        %v1222 = vpop.permute.xlu0 %1221
        %1223 = vrot.lane.b32.xlu0 %v1204, 96
        %v1224 = vpop.permute.xlu0 %1223
        %1225 = vrot.lane.b32.xlu0 %v1201, 64
        %v1226 = vpop.permute.xlu0 %1225
        %1227 = vrot.lane.b32.xlu0 %v1202, 64
        %v1228 = vpop.permute.xlu0 %1227
        %1229 = vrot.lane.b32.xlu0 %v1203, 64
        %v1230 = vpop.permute.xlu0 %1229
        %1231 = vrot.lane.b32.xlu0 %v1204, 64
        %v1232 = vpop.permute.xlu0 %1231
        %1233 = vrot.lane.b32.xlu0 %v1201, 32
        %v1234 = vpop.permute.xlu0 %1233
        %1235 = vrot.lane.b32.xlu0 %v1202, 32
        %v1236 = vpop.permute.xlu0 %1235
        %1237 = vrot.lane.b32.xlu0 %v1203, 32
        %v1238 = vpop.permute.xlu0 %1237
        %1239 = vrot.lane.b32.xlu0 %v1204, 32
        %v1240 = vpop.permute.xlu0 %1239
        %1245 = vrot.lane.b32.xlu0 %v1205, 96
        %v1246 = vpop.permute.xlu0 %1245
        %1247 = vrot.lane.b32.xlu0 %v1206, 96
        %v1248 = vpop.permute.xlu0 %1247
        %1249 = vrot.lane.b32.xlu0 %v1207, 96
        %v1250 = vpop.permute.xlu0 %1249
        %1251 = vrot.lane.b32.xlu0 %v1208, 96
        %v1252 = vpop.permute.xlu0 %1251
        %1253 = vrot.lane.b32.xlu0 %v1205, 64
        %v1254 = vpop.permute.xlu0 %1253
        %1255 = vrot.lane.b32.xlu0 %v1206, 64
        %v1256 = vpop.permute.xlu0 %1255
        %1257 = vrot.lane.b32.xlu0 %v1207, 64
        %v1258 = vpop.permute.xlu0 %1257
        %1259 = vrot.lane.b32.xlu0 %v1208, 64
        %v1260 = vpop.permute.xlu0 %1259
        %1261 = vrot.lane.b32.xlu0 %v1205, 32
        %v1262 = vpop.permute.xlu0 %1261
        %1263 = vrot.lane.b32.xlu0 %v1206, 32
        %v1264 = vpop.permute.xlu0 %1263
        %1265 = vrot.lane.b32.xlu0 %v1207, 32
        %v1266 = vpop.permute.xlu0 %1265
        %1267 = vrot.lane.b32.xlu0 %v1208, 32
        %v1268 = vpop.permute.xlu0 %1267
        %1273 = vrot.lane.b32.xlu0 %v1209, 96
        %v1274 = vpop.permute.xlu0 %1273
        %1275 = vrot.lane.b32.xlu0 %v1210, 96
        %v1276 = vpop.permute.xlu0 %1275
        %1277 = vrot.lane.b32.xlu0 %v1211, 96
        %v1278 = vpop.permute.xlu0 %1277
        %1279 = vrot.lane.b32.xlu0 %v1212, 96
        %v1280 = vpop.permute.xlu0 %1279
        %1281 = vrot.lane.b32.xlu0 %v1209, 64
        %v1282 = vpop.permute.xlu0 %1281
        %1283 = vrot.lane.b32.xlu0 %v1210, 64
        %v1284 = vpop.permute.xlu0 %1283
        %1285 = vrot.lane.b32.xlu0 %v1211, 64
        %v1286 = vpop.permute.xlu0 %1285
        %1287 = vrot.lane.b32.xlu0 %v1212, 64
        %v1288 = vpop.permute.xlu0 %1287
        %1289 = vrot.lane.b32.xlu0 %v1209, 32
        %v1290 = vpop.permute.xlu0 %1289
        %1291 = vrot.lane.b32.xlu0 %v1210, 32
        %v1292 = vpop.permute.xlu0 %1291
        %1293 = vrot.lane.b32.xlu0 %v1211, 32
        %v1294 = vpop.permute.xlu0 %1293
        %1295 = vrot.lane.b32.xlu0 %v1212, 32
        %v1296 = vpop.permute.xlu0 %1295
        %v1297 = vunpack.c.l.b16 %v1201
        %v1298 = vunpack.c.l.b16 %v1202
        %v1299 = vpack.c.b16 %v1298, %v1297
        %v1300 = vunpack.c.l.b16 %v1205
        %v1301 = vunpack.c.l.b16 %v1206
        %v1302 = vpack.c.b16 %v1301, %v1300
        %vm1303 = vcmask 261120
        %v1305 = vsel %vm1303, %v1299, 0
        %v1308 = vsel %vm1303, %v1302, 0
        %1310 = vmatpush.bf16.xpose.msra.mxu0 0
        %1311 = vmatpush.bf16.xpose.msra.mxu0 0
        %1312 = vmatpush.bf16.xpose.msra.mxu0 0
        %1313 = vmatpush.bf16.xpose.msra.mxu0 0
        %1314 = vmatpush.bf16.xpose.msra.mxu0 0
        %1315 = vmatpush.bf16.xpose.msra.mxu0 0
        %1316 = vmatpush.bf16.xpose.msra.mxu0 0
        %1317 = vmatpush.bf16.xpose.msra.mxu0 %v1308
        %1318 = vmatmul.bf16.gmra.mxu0 %v1305
        %v1319 = vpop.f32.mrf.mxu0
        %v1320 = vadd.f32 0.0, %v1319
        %v1321 = vpop.f32.mrf.mxu0
        %v1322 = vadd.f32 0.0, %v1321
        %1323 = vdwg.mxu0
        %v1324 = vunpack.c.l.b16 %v1203
        %v1325 = vunpack.c.l.b16 %v1204
        %v1326 = vpack.c.b16 %v1325, %v1324
        %v1327 = vunpack.c.l.b16 %v1207
        %v1328 = vunpack.c.l.b16 %v1208
        %v1329 = vpack.c.b16 %v1328, %v1327
        %v1331 = vsel %vm1303, %v1326, 0
        %v1334 = vsel %vm1303, %v1329, 0
        %1336 = vmatpush.bf16.xpose.msra.mxu0 0
        %1337 = vmatpush.bf16.xpose.msra.mxu0 0
        %1338 = vmatpush.bf16.xpose.msra.mxu0 0
        %1339 = vmatpush.bf16.xpose.msra.mxu0 0
        %1340 = vmatpush.bf16.xpose.msra.mxu0 0
        %1341 = vmatpush.bf16.xpose.msra.mxu0 0
        %1342 = vmatpush.bf16.xpose.msra.mxu0 0
        %1343 = vmatpush.bf16.xpose.msra.mxu0 %v1334
        %1344 = vmatmul.bf16.gmra.mxu0 %v1331
        %v1345 = vpop.f32.mrf.mxu0
        %v1346 = vadd.f32 0.0, %v1345
        %v1347 = vpop.f32.mrf.mxu0
        %v1348 = vadd.f32 0.0, %v1347
        %1349 = vdwg.mxu0
        %v1350 = vunpack.c.l.b16 %v1218
        %v1351 = vunpack.c.l.b16 %v1220
        %v1352 = vpack.c.b16 %v1351, %v1350
        %v1353 = vunpack.c.l.b16 %v1246
        %v1354 = vunpack.c.l.b16 %v1248
        %v1355 = vpack.c.b16 %v1354, %v1353
        %v1357 = vsel %vm1303, %v1352, 0
        %v1360 = vsel %vm1303, %v1355, 0
        %1362 = vmatpush.bf16.xpose.msra.mxu0 0
        %1363 = vmatpush.bf16.xpose.msra.mxu0 0
        %1364 = vmatpush.bf16.xpose.msra.mxu0 0
        %1365 = vmatpush.bf16.xpose.msra.mxu0 0
        %1366 = vmatpush.bf16.xpose.msra.mxu0 0
        %1367 = vmatpush.bf16.xpose.msra.mxu0 0
        %1368 = vmatpush.bf16.xpose.msra.mxu0 0
        %1369 = vmatpush.bf16.xpose.msra.mxu0 %v1360
        %1370 = vmatmul.bf16.gmra.mxu0 %v1357
        %v1371 = vpop.f32.mrf.mxu0
        %v1372 = vadd.f32 0.0, %v1371
        %v1373 = vpop.f32.mrf.mxu0
        %v1374 = vadd.f32 0.0, %v1373
        %1375 = vdwg.mxu0
        %v1376 = vunpack.c.l.b16 %v1222
        %v1377 = vunpack.c.l.b16 %v1224
        %v1378 = vpack.c.b16 %v1377, %v1376
        %v1379 = vunpack.c.l.b16 %v1250
        %v1380 = vunpack.c.l.b16 %v1252
        %v1381 = vpack.c.b16 %v1380, %v1379
        %v1383 = vsel %vm1303, %v1378, 0
        %v1386 = vsel %vm1303, %v1381, 0
        %1388 = vmatpush.bf16.xpose.msra.mxu0 0
        %1389 = vmatpush.bf16.xpose.msra.mxu0 0
        %1390 = vmatpush.bf16.xpose.msra.mxu0 0
        %1391 = vmatpush.bf16.xpose.msra.mxu0 0
        %1392 = vmatpush.bf16.xpose.msra.mxu0 0
        %1393 = vmatpush.bf16.xpose.msra.mxu0 0
        %1394 = vmatpush.bf16.xpose.msra.mxu0 0
        %1395 = vmatpush.bf16.xpose.msra.mxu0 %v1386
        %1396 = vmatmul.bf16.gmra.mxu0 %v1383
        %v1397 = vpop.f32.mrf.mxu0
        %v1398 = vadd.f32 0.0, %v1397
        %v1399 = vpop.f32.mrf.mxu0
        %v1400 = vadd.f32 0.0, %v1399
        %1401 = vdwg.mxu0
        %v1402 = vunpack.c.l.b16 %v1226
        %v1403 = vunpack.c.l.b16 %v1228
        %v1404 = vpack.c.b16 %v1403, %v1402
        %v1405 = vunpack.c.l.b16 %v1254
        %v1406 = vunpack.c.l.b16 %v1256
        %v1407 = vpack.c.b16 %v1406, %v1405
        %v1409 = vsel %vm1303, %v1404, 0
        %v1412 = vsel %vm1303, %v1407, 0
        %1414 = vmatpush.bf16.xpose.msra.mxu0 0
        %1415 = vmatpush.bf16.xpose.msra.mxu0 0
        %1416 = vmatpush.bf16.xpose.msra.mxu0 0
        %1417 = vmatpush.bf16.xpose.msra.mxu0 0
        %1418 = vmatpush.bf16.xpose.msra.mxu0 0
        %1419 = vmatpush.bf16.xpose.msra.mxu0 0
        %1420 = vmatpush.bf16.xpose.msra.mxu0 0
        %1421 = vmatpush.bf16.xpose.msra.mxu0 %v1412
        %1422 = vmatmul.bf16.gmra.mxu0 %v1409
        %v1423 = vpop.f32.mrf.mxu0
        %v1424 = vadd.f32 0.0, %v1423
        %v1425 = vpop.f32.mrf.mxu0
        %v1426 = vadd.f32 0.0, %v1425
        %1427 = vdwg.mxu0
        %v1428 = vunpack.c.l.b16 %v1230
        %v1429 = vunpack.c.l.b16 %v1232
        %v1430 = vpack.c.b16 %v1429, %v1428
        %v1431 = vunpack.c.l.b16 %v1258
        %v1432 = vunpack.c.l.b16 %v1260
        %v1433 = vpack.c.b16 %v1432, %v1431
        %v1435 = vsel %vm1303, %v1430, 0
        %v1438 = vsel %vm1303, %v1433, 0
        %1440 = vmatpush.bf16.xpose.msra.mxu0 0
        %1441 = vmatpush.bf16.xpose.msra.mxu0 0
        %1442 = vmatpush.bf16.xpose.msra.mxu0 0
        %1443 = vmatpush.bf16.xpose.msra.mxu0 0
        %1444 = vmatpush.bf16.xpose.msra.mxu0 0
        %1445 = vmatpush.bf16.xpose.msra.mxu0 0
        %1446 = vmatpush.bf16.xpose.msra.mxu0 0
        %1447 = vmatpush.bf16.xpose.msra.mxu0 %v1438
        %1448 = vmatmul.bf16.gmra.mxu0 %v1435
        %v1449 = vpop.f32.mrf.mxu0
        %v1450 = vadd.f32 0.0, %v1449
        %v1451 = vpop.f32.mrf.mxu0
        %v1452 = vadd.f32 0.0, %v1451
        %1453 = vdwg.mxu0
        %v1454 = vunpack.c.l.b16 %v1234
        %v1455 = vunpack.c.l.b16 %v1236
        %v1456 = vpack.c.b16 %v1455, %v1454
        %v1457 = vunpack.c.l.b16 %v1262
        %v1458 = vunpack.c.l.b16 %v1264
        %v1459 = vpack.c.b16 %v1458, %v1457
        %v1461 = vsel %vm1303, %v1456, 0
        %v1464 = vsel %vm1303, %v1459, 0
        %1466 = vmatpush.bf16.xpose.msra.mxu0 0
        %1467 = vmatpush.bf16.xpose.msra.mxu0 0
        %1468 = vmatpush.bf16.xpose.msra.mxu0 0
        %1469 = vmatpush.bf16.xpose.msra.mxu0 0
        %1470 = vmatpush.bf16.xpose.msra.mxu0 0
        %1471 = vmatpush.bf16.xpose.msra.mxu0 0
        %1472 = vmatpush.bf16.xpose.msra.mxu0 0
        %1473 = vmatpush.bf16.xpose.msra.mxu0 %v1464
        %1474 = vmatmul.bf16.gmra.mxu0 %v1461
        %v1475 = vpop.f32.mrf.mxu0
        %v1476 = vadd.f32 0.0, %v1475
        %v1477 = vpop.f32.mrf.mxu0
        %v1478 = vadd.f32 0.0, %v1477
        %1479 = vdwg.mxu0
        %v1480 = vunpack.c.l.b16 %v1238
        %v1481 = vunpack.c.l.b16 %v1240
        %v1482 = vpack.c.b16 %v1481, %v1480
        %v1483 = vunpack.c.l.b16 %v1266
        %v1484 = vunpack.c.l.b16 %v1268
        %v1485 = vpack.c.b16 %v1484, %v1483
        %v1487 = vsel %vm1303, %v1482, 0
        %v1490 = vsel %vm1303, %v1485, 0
        %1492 = vmatpush.bf16.xpose.msra.mxu0 0
        %1493 = vmatpush.bf16.xpose.msra.mxu0 0
        %1494 = vmatpush.bf16.xpose.msra.mxu0 0
        %1495 = vmatpush.bf16.xpose.msra.mxu0 0
        %1496 = vmatpush.bf16.xpose.msra.mxu0 0
        %1497 = vmatpush.bf16.xpose.msra.mxu0 0
        %1498 = vmatpush.bf16.xpose.msra.mxu0 0
        %1499 = vmatpush.bf16.xpose.msra.mxu0 %v1490
        %1500 = vmatmul.bf16.gmra.mxu0 %v1487
        %v1501 = vpop.f32.mrf.mxu0
        %v1502 = vadd.f32 0.0, %v1501
        %v1503 = vpop.f32.mrf.mxu0
        %v1504 = vadd.f32 0.0, %v1503
        %1505 = vdwg.mxu0
        %v1506 = vlaneseq
        %v1507 = vshrl.u32 %v1506, 7
        %v1508 = vadd.s32 %v1507, 8
        %v1509 = vlaneseq
        %v1510 = vand.u32 %v1509, 127
        %vm1511 = vcmp.le.s32.totalorder %v1510, %v1507
        %vm1512 = vcmp.le.s32.totalorder %v1510, %v1508
        %v1513 = vsel %vm1511, 1, 0
        %v1514 = vsel %vm1512, 1, 0
        %vm1515 = vcmp.eq.s32.totalorder %v1513, 1
        %vm1516 = vcmp.eq.s32.totalorder %v1514, 1
        %v1517 = vsel %vm1515, %v1320, -1e+30
        %v1518 = vsel %vm1516, %v1322, -1e+30
        %v1519 = vsel %vm1515, %v1346, -1e+30
        %v1520 = vsel %vm1516, %v1348, -1e+30
        %v1521 = vsel %vm1515, %v1372, -1e+30
        %v1522 = vsel %vm1516, %v1374, -1e+30
        %v1523 = vsel %vm1515, %v1398, -1e+30
        %v1524 = vsel %vm1516, %v1400, -1e+30
        %v1525 = vsel %vm1515, %v1424, -1e+30
        %v1526 = vsel %vm1516, %v1426, -1e+30
        %v1527 = vsel %vm1515, %v1450, -1e+30
        %v1528 = vsel %vm1516, %v1452, -1e+30
        %v1529 = vsel %vm1515, %v1476, -1e+30
        %v1530 = vsel %vm1516, %v1478, -1e+30
        %v1531 = vsel %vm1515, %v1502, -1e+30
        %v1532 = vsel %vm1516, %v1504, -1e+30
        %vm1533 = vcmask 130048
        %v1534 = vsel %vm1533, %v1517, -inf
        %1535 = vmax.xlane.f32.xlu0 %v1534
        %v1536 = vpop.xlane.xlu0 %1535
        %v1537 = vsel %vm1533, %v1518, -inf
        %1538 = vmax.xlane.f32.xlu0 %v1537
        %v1539 = vpop.xlane.xlu0 %1538
        %v1540 = vsel %vm1533, %v1519, -inf
        %1541 = vmax.xlane.f32.xlu0 %v1540
        %v1542 = vpop.xlane.xlu0 %1541
        %v1543 = vsel %vm1533, %v1520, -inf
        %1544 = vmax.xlane.f32.xlu0 %v1543
        %v1545 = vpop.xlane.xlu0 %1544
        %v1546 = vsel %vm1533, %v1521, -inf
        %1547 = vmax.xlane.f32.xlu0 %v1546
        %v1548 = vpop.xlane.xlu0 %1547
        %v1549 = vsel %vm1533, %v1522, -inf
        %1550 = vmax.xlane.f32.xlu0 %v1549
        %v1551 = vpop.xlane.xlu0 %1550
        %v1552 = vsel %vm1533, %v1523, -inf
        %1553 = vmax.xlane.f32.xlu0 %v1552
        %v1554 = vpop.xlane.xlu0 %1553
        %v1555 = vsel %vm1533, %v1524, -inf
        %1556 = vmax.xlane.f32.xlu0 %v1555
        %v1557 = vpop.xlane.xlu0 %1556
        %v1558 = vsel %vm1533, %v1525, -inf
        %1559 = vmax.xlane.f32.xlu0 %v1558
        %v1560 = vpop.xlane.xlu0 %1559
        %v1561 = vsel %vm1533, %v1526, -inf
        %1562 = vmax.xlane.f32.xlu0 %v1561
        %v1563 = vpop.xlane.xlu0 %1562
        %v1564 = vsel %vm1533, %v1527, -inf
        %1565 = vmax.xlane.f32.xlu0 %v1564
        %v1566 = vpop.xlane.xlu0 %1565
        %v1567 = vsel %vm1533, %v1528, -inf
        %1568 = vmax.xlane.f32.xlu0 %v1567
        %v1569 = vpop.xlane.xlu0 %1568
        %v1570 = vsel %vm1533, %v1529, -inf
        %1571 = vmax.xlane.f32.xlu0 %v1570
        %v1572 = vpop.xlane.xlu0 %1571
        %v1573 = vsel %vm1533, %v1530, -inf
        %1574 = vmax.xlane.f32.xlu0 %v1573
        %v1575 = vpop.xlane.xlu0 %1574
        %v1576 = vsel %vm1533, %v1531, -inf
        %1577 = vmax.xlane.f32.xlu0 %v1576
        %v1578 = vpop.xlane.xlu0 %1577
        %v1579 = vsel %vm1533, %v1532, -inf
        %1580 = vmax.xlane.f32.xlu0 %v1579
        %v1581 = vpop.xlane.xlu0 %1580
        %v1582 = vsub.f32 %v1517, %v1536
        %v1583 = vsub.f32 %v1518, %v1539
        %v1584 = vsub.f32 %v1519, %v1542
        %v1585 = vsub.f32 %v1520, %v1545
        %v1586 = vsub.f32 %v1521, %v1548
        %v1587 = vsub.f32 %v1522, %v1551
        %v1588 = vsub.f32 %v1523, %v1554
        %v1589 = vsub.f32 %v1524, %v1557
        %v1590 = vsub.f32 %v1525, %v1560
        %v1591 = vsub.f32 %v1526, %v1563
        %v1592 = vsub.f32 %v1527, %v1566
        %v1593 = vsub.f32 %v1528, %v1569
        %v1594 = vsub.f32 %v1529, %v1572
        %v1595 = vsub.f32 %v1530, %v1575
        %v1596 = vsub.f32 %v1531, %v1578
        %v1597 = vsub.f32 %v1532, %v1581
        %v1598 = vmul.f32 %v1582, 1.442695
        %v1599 = vpow.pop %v1598
        %v1600 = vmul.f32 %v1583, 1.442695
        %v1601 = vpow.pop %v1600
        %v1602 = vmul.f32 %v1584, 1.442695
        %v1603 = vpow.pop %v1602
        %v1604 = vmul.f32 %v1585, 1.442695
        %v1605 = vpow.pop %v1604
        %v1606 = vmul.f32 %v1586, 1.442695
        %v1607 = vpow.pop %v1606
        %v1608 = vmul.f32 %v1587, 1.442695
        %v1609 = vpow.pop %v1608
        %v1610 = vmul.f32 %v1588, 1.442695
        %v1611 = vpow.pop %v1610
        %v1612 = vmul.f32 %v1589, 1.442695
        %v1613 = vpow.pop %v1612
        %v1614 = vmul.f32 %v1590, 1.442695
        %v1615 = vpow.pop %v1614
        %v1616 = vmul.f32 %v1591, 1.442695
        %v1617 = vpow.pop %v1616
        %v1618 = vmul.f32 %v1592, 1.442695
        %v1619 = vpow.pop %v1618
        %v1620 = vmul.f32 %v1593, 1.442695
        %v1621 = vpow.pop %v1620
        %v1622 = vmul.f32 %v1594, 1.442695
        %v1623 = vpow.pop %v1622
        %v1624 = vmul.f32 %v1595, 1.442695
        %v1625 = vpow.pop %v1624
        %v1626 = vmul.f32 %v1596, 1.442695
        %v1627 = vpow.pop %v1626
        %v1628 = vmul.f32 %v1597, 1.442695
        %v1629 = vpow.pop %v1628
        %v1630 = vsel %vm1533, %v1599, 0.0
        %1631 = vadd.xlane.f32.xlu0 %v1630
        %v1632 = vpop.xlane.xlu0 %1631
        %v1633 = vsel %vm1533, %v1601, 0.0
        %1634 = vadd.xlane.f32.xlu0 %v1633
        %v1635 = vpop.xlane.xlu0 %1634
        %v1636 = vsel %vm1533, %v1603, 0.0
        %1637 = vadd.xlane.f32.xlu0 %v1636
        %v1638 = vpop.xlane.xlu0 %1637
        %v1639 = vsel %vm1533, %v1605, 0.0
        %1640 = vadd.xlane.f32.xlu0 %v1639
        %v1641 = vpop.xlane.xlu0 %1640
        %v1642 = vsel %vm1533, %v1607, 0.0
        %1643 = vadd.xlane.f32.xlu0 %v1642
        %v1644 = vpop.xlane.xlu0 %1643
        %v1645 = vsel %vm1533, %v1609, 0.0
        %1646 = vadd.xlane.f32.xlu0 %v1645
        %v1647 = vpop.xlane.xlu0 %1646
        %v1648 = vsel %vm1533, %v1611, 0.0
        %1649 = vadd.xlane.f32.xlu0 %v1648
        %v1650 = vpop.xlane.xlu0 %1649
        %v1651 = vsel %vm1533, %v1613, 0.0
        %1652 = vadd.xlane.f32.xlu0 %v1651
        %v1653 = vpop.xlane.xlu0 %1652
        %v1654 = vsel %vm1533, %v1615, 0.0
        %1655 = vadd.xlane.f32.xlu0 %v1654
        %v1656 = vpop.xlane.xlu0 %1655
        %v1657 = vsel %vm1533, %v1617, 0.0
        %1658 = vadd.xlane.f32.xlu0 %v1657
        %v1659 = vpop.xlane.xlu0 %1658
        %v1660 = vsel %vm1533, %v1619, 0.0
        %1661 = vadd.xlane.f32.xlu0 %v1660
        %v1662 = vpop.xlane.xlu0 %1661
        %v1663 = vsel %vm1533, %v1621, 0.0
        %1664 = vadd.xlane.f32.xlu0 %v1663
        %v1665 = vpop.xlane.xlu0 %1664
        %v1666 = vsel %vm1533, %v1623, 0.0
        %1667 = vadd.xlane.f32.xlu0 %v1666
        %v1668 = vpop.xlane.xlu0 %1667
        %v1669 = vsel %vm1533, %v1625, 0.0
        %1670 = vadd.xlane.f32.xlu0 %v1669
        %v1671 = vpop.xlane.xlu0 %1670
        %v1672 = vsel %vm1533, %v1627, 0.0
        %1673 = vadd.xlane.f32.xlu0 %v1672
        %v1674 = vpop.xlane.xlu0 %1673
        %v1675 = vsel %vm1533, %v1629, 0.0
        %1676 = vadd.xlane.f32.xlu0 %v1675
        %v1677 = vpop.xlane.xlu0 %1676
        %v1678 = vrcp.pop %v1632
        %v1679 = vrcp.pop %v1635
        %v1680 = vrcp.pop %v1638
        %v1681 = vrcp.pop %v1641
        %v1682 = vrcp.pop %v1644
        %v1683 = vrcp.pop %v1647
        %v1684 = vrcp.pop %v1650
        %v1685 = vrcp.pop %v1653
        %v1686 = vrcp.pop %v1656
        %v1687 = vrcp.pop %v1659
        %v1688 = vrcp.pop %v1662
        %v1689 = vrcp.pop %v1665
        %v1690 = vrcp.pop %v1668
        %v1691 = vrcp.pop %v1671
        %v1692 = vrcp.pop %v1674
        %v1693 = vrcp.pop %v1677
        %v1694 = vmul.f32 %v1599, %v1678
        %v1695 = vmul.f32 %v1601, %v1679
        %v1696 = vmul.f32 %v1603, %v1680
        %v1697 = vmul.f32 %v1605, %v1681
        %v1698 = vmul.f32 %v1607, %v1682
        %v1699 = vmul.f32 %v1609, %v1683
        %v1700 = vmul.f32 %v1611, %v1684
        %v1701 = vmul.f32 %v1613, %v1685
        %v1702 = vmul.f32 %v1615, %v1686
        %v1703 = vmul.f32 %v1617, %v1687
        %v1704 = vmul.f32 %v1619, %v1688
        %v1705 = vmul.f32 %v1621, %v1689
        %v1706 = vmul.f32 %v1623, %v1690
        %v1707 = vmul.f32 %v1625, %v1691
        %v1708 = vmul.f32 %v1627, %v1692
        %v1709 = vmul.f32 %v1629, %v1693
        %v1710 = vpack.c.bf16 %v1694, %v1694
        %v1711 = vpack.c.bf16 %v1695, %v1695
        %v1712 = vpack.c.bf16 %v1696, %v1696
        %v1713 = vpack.c.bf16 %v1697, %v1697
        %v1714 = vpack.c.bf16 %v1698, %v1698
        %v1715 = vpack.c.bf16 %v1699, %v1699
        %v1716 = vpack.c.bf16 %v1700, %v1700
        %v1717 = vpack.c.bf16 %v1701, %v1701
        %v1718 = vpack.c.bf16 %v1702, %v1702
        %v1719 = vpack.c.bf16 %v1703, %v1703
        %v1720 = vpack.c.bf16 %v1704, %v1704
        %v1721 = vpack.c.bf16 %v1705, %v1705
        %v1722 = vpack.c.bf16 %v1706, %v1706
        %v1723 = vpack.c.bf16 %v1707, %v1707
        %v1724 = vpack.c.bf16 %v1708, %v1708
        %v1725 = vpack.c.bf16 %v1709, %v1709
        %v1728 = vunpack.c.l.b16 %v1710
        %v1729 = vunpack.c.l.b16 %v1711
        %v1730 = vpack.c.b16 %v1729, %v1728
        %v1731 = vunpack.c.l.b16 %v1209
        %v1732 = vunpack.c.l.b16 %v1210
        %v1733 = vpack.c.b16 %v1732, %v1731
        %v1736 = vsel %vm1533, %v1730, 0
        %1738 = vmatpush.bf16.msra.mxu0 0
        %1739 = vmatpush.bf16.msra.mxu0 0
        %1740 = vmatpush.bf16.msra.mxu0 0
        %1741 = vmatpush.bf16.msra.mxu0 0
        %1742 = vmatpush.bf16.msra.mxu0 0
        %1743 = vmatpush.bf16.msra.mxu0 0
        %1744 = vmatpush.bf16.msra.mxu0 0
        %1745 = vmatpush.bf16.msra.mxu0 %v1733
        %1746 = vmatmul.bf16.gmra.mxu0 %v1736
        %v1747 = vpop.f32.mrf.mxu0
        %v1748 = vadd.f32 0.0, %v1747
        %v1749 = vpop.f32.mrf.mxu0
        %v1750 = vadd.f32 0.0, %v1749
        %1751 = vdwg.mxu0
        %v1754 = vunpack.c.l.b16 %v1712
        %v1755 = vunpack.c.l.b16 %v1713
        %v1756 = vpack.c.b16 %v1755, %v1754
        %v1757 = vunpack.c.l.b16 %v1211
        %v1758 = vunpack.c.l.b16 %v1212
        %v1759 = vpack.c.b16 %v1758, %v1757
        %v1762 = vsel %vm1533, %v1756, 0
        %1764 = vmatpush.bf16.msra.mxu0 0
        %1765 = vmatpush.bf16.msra.mxu0 0
        %1766 = vmatpush.bf16.msra.mxu0 0
        %1767 = vmatpush.bf16.msra.mxu0 0
        %1768 = vmatpush.bf16.msra.mxu0 0
        %1769 = vmatpush.bf16.msra.mxu0 0
        %1770 = vmatpush.bf16.msra.mxu0 0
        %1771 = vmatpush.bf16.msra.mxu0 %v1759
        %1772 = vmatmul.bf16.gmra.mxu0 %v1762
        %v1773 = vpop.f32.mrf.mxu0
        %v1774 = vadd.f32 0.0, %v1773
        %v1775 = vpop.f32.mrf.mxu0
        %v1776 = vadd.f32 0.0, %v1775
        %1777 = vdwg.mxu0
        %v1780 = vunpack.c.l.b16 %v1714
        %v1781 = vunpack.c.l.b16 %v1715
        %v1782 = vpack.c.b16 %v1781, %v1780
        %v1783 = vunpack.c.l.b16 %v1274
        %v1784 = vunpack.c.l.b16 %v1276
        %v1785 = vpack.c.b16 %v1784, %v1783
        %v1788 = vsel %vm1533, %v1782, 0
        %1790 = vmatpush.bf16.msra.mxu0 0
        %1791 = vmatpush.bf16.msra.mxu0 0
        %1792 = vmatpush.bf16.msra.mxu0 0
        %1793 = vmatpush.bf16.msra.mxu0 0
        %1794 = vmatpush.bf16.msra.mxu0 0
        %1795 = vmatpush.bf16.msra.mxu0 0
        %1796 = vmatpush.bf16.msra.mxu0 0
        %1797 = vmatpush.bf16.msra.mxu0 %v1785
        %1798 = vmatmul.bf16.gmra.mxu0 %v1788
        %v1799 = vpop.f32.mrf.mxu0
        %v1800 = vadd.f32 0.0, %v1799
        %v1801 = vpop.f32.mrf.mxu0
        %v1802 = vadd.f32 0.0, %v1801
        %1803 = vdwg.mxu0
        %v1806 = vunpack.c.l.b16 %v1716
        %v1807 = vunpack.c.l.b16 %v1717
        %v1808 = vpack.c.b16 %v1807, %v1806
        %v1809 = vunpack.c.l.b16 %v1278
        %v1810 = vunpack.c.l.b16 %v1280
        %v1811 = vpack.c.b16 %v1810, %v1809
        %v1814 = vsel %vm1533, %v1808, 0
        %1816 = vmatpush.bf16.msra.mxu0 0
        %1817 = vmatpush.bf16.msra.mxu0 0
        %1818 = vmatpush.bf16.msra.mxu0 0
        %1819 = vmatpush.bf16.msra.mxu0 0
        %1820 = vmatpush.bf16.msra.mxu0 0
        %1821 = vmatpush.bf16.msra.mxu0 0
        %1822 = vmatpush.bf16.msra.mxu0 0
        %1823 = vmatpush.bf16.msra.mxu0 %v1811
        %1824 = vmatmul.bf16.gmra.mxu0 %v1814
        %v1825 = vpop.f32.mrf.mxu0
        %v1826 = vadd.f32 0.0, %v1825
        %v1827 = vpop.f32.mrf.mxu0
        %v1828 = vadd.f32 0.0, %v1827
        %1829 = vdwg.mxu0
        %v1832 = vunpack.c.l.b16 %v1718
        %v1833 = vunpack.c.l.b16 %v1719
        %v1834 = vpack.c.b16 %v1833, %v1832
        %v1835 = vunpack.c.l.b16 %v1282
        %v1836 = vunpack.c.l.b16 %v1284
        %v1837 = vpack.c.b16 %v1836, %v1835
        %v1840 = vsel %vm1533, %v1834, 0
        %1842 = vmatpush.bf16.msra.mxu0 0
        %1843 = vmatpush.bf16.msra.mxu0 0
        %1844 = vmatpush.bf16.msra.mxu0 0
        %1845 = vmatpush.bf16.msra.mxu0 0
        %1846 = vmatpush.bf16.msra.mxu0 0
        %1847 = vmatpush.bf16.msra.mxu0 0
        %1848 = vmatpush.bf16.msra.mxu0 0
        %1849 = vmatpush.bf16.msra.mxu0 %v1837
        %1850 = vmatmul.bf16.gmra.mxu0 %v1840
        %v1851 = vpop.f32.mrf.mxu0
        %v1852 = vadd.f32 0.0, %v1851
        %v1853 = vpop.f32.mrf.mxu0
        %v1854 = vadd.f32 0.0, %v1853
        %1855 = vdwg.mxu0
        %v1858 = vunpack.c.l.b16 %v1720
        %v1859 = vunpack.c.l.b16 %v1721
        %v1860 = vpack.c.b16 %v1859, %v1858
        %v1861 = vunpack.c.l.b16 %v1286
        %v1862 = vunpack.c.l.b16 %v1288
        %v1863 = vpack.c.b16 %v1862, %v1861
        %v1866 = vsel %vm1533, %v1860, 0
        %1868 = vmatpush.bf16.msra.mxu0 0
        %1869 = vmatpush.bf16.msra.mxu0 0
        %1870 = vmatpush.bf16.msra.mxu0 0
        %1871 = vmatpush.bf16.msra.mxu0 0
        %1872 = vmatpush.bf16.msra.mxu0 0
        %1873 = vmatpush.bf16.msra.mxu0 0
        %1874 = vmatpush.bf16.msra.mxu0 0
        %1875 = vmatpush.bf16.msra.mxu0 %v1863
        %1876 = vmatmul.bf16.gmra.mxu0 %v1866
        %v1877 = vpop.f32.mrf.mxu0
        %v1878 = vadd.f32 0.0, %v1877
        %v1879 = vpop.f32.mrf.mxu0
        %v1880 = vadd.f32 0.0, %v1879
        %1881 = vdwg.mxu0
        %v1884 = vunpack.c.l.b16 %v1722
        %v1885 = vunpack.c.l.b16 %v1723
        %v1886 = vpack.c.b16 %v1885, %v1884
        %v1887 = vunpack.c.l.b16 %v1290
        %v1888 = vunpack.c.l.b16 %v1292
        %v1889 = vpack.c.b16 %v1888, %v1887
        %v1892 = vsel %vm1533, %v1886, 0
        %1894 = vmatpush.bf16.msra.mxu0 0
        %1895 = vmatpush.bf16.msra.mxu0 0
        %1896 = vmatpush.bf16.msra.mxu0 0
        %1897 = vmatpush.bf16.msra.mxu0 0
        %1898 = vmatpush.bf16.msra.mxu0 0
        %1899 = vmatpush.bf16.msra.mxu0 0
        %1900 = vmatpush.bf16.msra.mxu0 0
        %1901 = vmatpush.bf16.msra.mxu0 %v1889
        %1902 = vmatmul.bf16.gmra.mxu0 %v1892
        %v1903 = vpop.f32.mrf.mxu0
        %v1904 = vadd.f32 0.0, %v1903
        %v1905 = vpop.f32.mrf.mxu0
        %v1906 = vadd.f32 0.0, %v1905
        %1907 = vdwg.mxu0
        %v1910 = vunpack.c.l.b16 %v1724
        %v1911 = vunpack.c.l.b16 %v1725
        %v1912 = vpack.c.b16 %v1911, %v1910
        %v1913 = vunpack.c.l.b16 %v1294
        %v1914 = vunpack.c.l.b16 %v1296
        %v1915 = vpack.c.b16 %v1914, %v1913
        %v1918 = vsel %vm1533, %v1912, 0
        %1920 = vmatpush.bf16.msra.mxu0 0
        %1921 = vmatpush.bf16.msra.mxu0 0
        %1922 = vmatpush.bf16.msra.mxu0 0
        %1923 = vmatpush.bf16.msra.mxu0 0
        %1924 = vmatpush.bf16.msra.mxu0 0
        %1925 = vmatpush.bf16.msra.mxu0 0
        %1926 = vmatpush.bf16.msra.mxu0 0
        %1927 = vmatpush.bf16.msra.mxu0 %v1915
        %1928 = vmatmul.bf16.gmra.mxu0 %v1918
        %v1929 = vpop.f32.mrf.mxu0
        %v1930 = vadd.f32 0.0, %v1929
        %v1931 = vpop.f32.mrf.mxu0
        %v1932 = vadd.f32 0.0, %v1931
        %1933 = vdwg.mxu0
        %1938 = vrot.lane.b32.xlu0 %v1800, 32
        %v1939 = vpop.permute.xlu0 %1938
        %1940 = vrot.lane.b32.xlu0 %v1802, 32
        %v1941 = vpop.permute.xlu0 %1940
        %1942 = vrot.lane.b32.xlu0 %v1826, 32
        %v1943 = vpop.permute.xlu0 %1942
        %1944 = vrot.lane.b32.xlu0 %v1828, 32
        %v1945 = vpop.permute.xlu0 %1944
        %1954 = vrot.lane.b32.xlu0 %v1852, 64
        %v1955 = vpop.permute.xlu0 %1954
        %1956 = vrot.lane.b32.xlu0 %v1854, 64
        %v1957 = vpop.permute.xlu0 %1956
        %1958 = vrot.lane.b32.xlu0 %v1878, 64
        %v1959 = vpop.permute.xlu0 %1958
        %1960 = vrot.lane.b32.xlu0 %v1880, 64
        %v1961 = vpop.permute.xlu0 %1960
        %1970 = vrot.lane.b32.xlu0 %v1904, 96
        %v1971 = vpop.permute.xlu0 %1970
        %1972 = vrot.lane.b32.xlu0 %v1906, 96
        %v1973 = vpop.permute.xlu0 %1972
        %1974 = vrot.lane.b32.xlu0 %v1930, 96
        %v1975 = vpop.permute.xlu0 %1974
        %1976 = vrot.lane.b32.xlu0 %v1932, 96
        %v1977 = vpop.permute.xlu0 %1976
        %v1982 = vsel %vm1303, %v1748, %v1939
        %v1983 = vsel %vm1303, %v1750, %v1941
        %v1984 = vsel %vm1303, %v1774, %v1943
        %v1985 = vsel %vm1303, %v1776, %v1945
        %vm1986 = vcmask 523264
        %v1987 = vsel %vm1986, %v1982, %v1955
        %v1988 = vsel %vm1986, %v1983, %v1957
        %v1989 = vsel %vm1986, %v1984, %v1959
        %v1990 = vsel %vm1986, %v1985, %v1961
        %vm1991 = vcmask 785408
        %v1992 = vsel %vm1991, %v1987, %v1971
        %v1993 = vsel %vm1991, %v1988, %v1973
        %v1994 = vsel %vm1991, %v1989, %v1975
        %v1995 = vsel %vm1991, %v1990, %v1977
        %v1996 = vpack.c.bf16 %v1993, %v1992
        %v1997 = vpack.c.bf16 %v1995, %v1994
        %v1998 = vld [vmem:[%s708] sm:$0xf]
        %v1999 = vld [vmem:[%s708 + $0x4] sm:$0xf]
        %v2000 = vld [vmem:[%s708 + $0x8] sm:$0xf]
        %v2001 = vld [vmem:[%s708 + $0xc] sm:$0xf]
        %v2002 = vld [vmem:[%s708 + $0x10] sm:$0xf]
        %v2003 = vld [vmem:[%s708 + $0x14] sm:$0xf]
        %v2004 = vld [vmem:[%s708 + $0x18] sm:$0xf]
        %v2005 = vld [vmem:[%s708 + $0x1c] sm:$0xf]
        %v2006 = vld [vmem:[%s708 + $0x20] sm:$0xf]
        %v2007 = vld [vmem:[%s708 + $0x24] sm:$0xf]
        %v2008 = vld [vmem:[%s708 + $0x28] sm:$0xf]
        %v2009 = vld [vmem:[%s708 + $0x2c] sm:$0xf]
        %v2010 = vld [vmem:[%s708 + $0x30] sm:$0xf]
        %v2011 = vld [vmem:[%s708 + $0x34] sm:$0xf]
        %v2012 = vld [vmem:[%s708 + $0x38] sm:$0xf]
        %v2013 = vld [vmem:[%s708 + $0x3c] sm:$0xf]
        %v2014 = vld [vmem:[%s717] sm:$0x1]
        %v2016 = vperm.slane %v2014, 0
        %v2034 = vunpack.c.l.b16 %v1998
        %v2035 = vunpack.c.l.b16 %v1999
        %v2036 = vunpack.c.l.b16 %v2000
        %v2037 = vunpack.c.l.b16 %v2001
        %v2038 = vunpack.c.l.b16 %v2002
        %v2039 = vunpack.c.l.b16 %v2003
        %v2040 = vunpack.c.l.b16 %v2004
        %v2041 = vunpack.c.l.b16 %v2005
        %v2042 = vunpack.c.l.b16 %v2006
        %v2043 = vunpack.c.l.b16 %v2007
        %v2044 = vunpack.c.l.b16 %v2008
        %v2045 = vunpack.c.l.b16 %v2009
        %v2046 = vunpack.c.l.b16 %v2010
        %v2047 = vunpack.c.l.b16 %v2011
        %v2048 = vunpack.c.l.b16 %v2012
        %v2049 = vunpack.c.l.b16 %v2013
        %v2050 = vpack.c.b16 %v2035, %v2034
        %v2051 = vpack.c.b16 %v2037, %v2036
        %v2052 = vpack.c.b16 %v2039, %v2038
        %v2053 = vpack.c.b16 %v2041, %v2040
        %v2054 = vpack.c.b16 %v2043, %v2042
        %v2055 = vpack.c.b16 %v2045, %v2044
        %v2056 = vpack.c.b16 %v2047, %v2046
        %v2057 = vpack.c.b16 %v2049, %v2048
        %2066 = vmatpush.bf16.msra.mxu0 %v2057
        %2067 = vmatpush.bf16.msra.mxu0 %v2056
        %2068 = vmatpush.bf16.msra.mxu0 %v2055
        %2069 = vmatpush.bf16.msra.mxu0 %v2054
        %2070 = vmatpush.bf16.msra.mxu0 %v2053
        %2071 = vmatpush.bf16.msra.mxu0 %v2052
        %2072 = vmatpush.bf16.msra.mxu0 %v2051
        %2073 = vmatpush.bf16.msra.mxu0 %v2050
        %2074 = vmatmul.bf16.gmra.mxu0 %v1996
        %v2075 = vpop.f32.mrf.mxu0
        %v2076 = vadd.f32 %v2016, %v2075
        %v2077 = vpop.f32.mrf.mxu0
        %v2078 = vadd.f32 %v2016, %v2077
        %2079 = vmatmul.bf16.gmra.mxu0 %v1997
        %v2080 = vpop.f32.mrf.mxu0
        %v2081 = vadd.f32 %v2016, %v2080
        %v2082 = vpop.f32.mrf.mxu0
        %v2083 = vadd.f32 %v2016, %v2082
        %2084 = vdwg.mxu0
        %v2085 = vadd.f32 %v863, %v2076
        %v2086 = vadd.f32 %v864, %v2078
        %v2087 = vadd.f32 %v865, %v2081
        %v2088 = vadd.f32 %v866, %v2083
        %v2089 = vld [vmem:[%s726] sm:$0x1]
        %v2090 = vld [vmem:[%s735] sm:$0x1]
        %2091 = vadd.xlane.f32.xlu0 %v2085
        %v2092 = vpop.xlane.xlu0 %2091
        %2093 = vadd.xlane.f32.xlu0 %v2086
        %v2094 = vpop.xlane.xlu0 %2093
        %2095 = vadd.xlane.f32.xlu0 %v2087
        %v2096 = vpop.xlane.xlu0 %2095
        %2097 = vadd.xlane.f32.xlu0 %v2088
        %v2098 = vpop.xlane.xlu0 %2097
        %v2099 = vmul.f32 %v2092, %v883
        %v2100 = vmul.f32 %v2094, %v883
        %v2101 = vmul.f32 %v2096, %v883
        %v2102 = vmul.f32 %v2098, %v883
        %v2103 = vsub.f32 %v2085, %v2099
        %v2104 = vsub.f32 %v2086, %v2100
        %v2105 = vsub.f32 %v2087, %v2101
        %v2106 = vsub.f32 %v2088, %v2102
        %v2107 = vmul.f32 %v2103, %v2103
        %v2108 = vmul.f32 %v2104, %v2104
        %v2109 = vmul.f32 %v2105, %v2105
        %v2110 = vmul.f32 %v2106, %v2106
        %2111 = vadd.xlane.f32.xlu0 %v2107
        %v2112 = vpop.xlane.xlu0 %2111
        %2113 = vadd.xlane.f32.xlu0 %v2108
        %v2114 = vpop.xlane.xlu0 %2113
        %2115 = vadd.xlane.f32.xlu0 %v2109
        %v2116 = vpop.xlane.xlu0 %2115
        %2117 = vadd.xlane.f32.xlu0 %v2110
        %v2118 = vpop.xlane.xlu0 %2117
        %v2119 = vmul.f32 %v2112, %v883
        %v2120 = vmul.f32 %v2114, %v883
        %v2121 = vmul.f32 %v2116, %v883
        %v2122 = vmul.f32 %v2118, %v883
        %v2123 = vadd.f32 %v2119, 1e-05
        %v2124 = vadd.f32 %v2120, 1e-05
        %v2125 = vadd.f32 %v2121, 1e-05
        %v2126 = vadd.f32 %v2122, 1e-05
        %v2127 = vrsqrt.pop %v2123
        %v2128 = vmul.f32 %v2127, %v2123
        %v2129 = vmul.f32 %v2128, %v2127
        %v2130 = vmul.f32 0.5, %v2129
        %v2131 = vsub.f32 1.5, %v2130
        %v2132 = vmul.f32 %v2127, %v2131
        %vm2133 = vweird.f32 %v2123
        %vm2134 = vweird.f32 %v2127
        %vm2135 = vmor %vm2133, %vm2134
        %v2136 = vsel %vm2135, %v2127, %v2132
        %v2137 = vrsqrt.pop %v2124
        %v2138 = vmul.f32 %v2137, %v2124
        %v2139 = vmul.f32 %v2138, %v2137
        %v2140 = vmul.f32 0.5, %v2139
        %v2141 = vsub.f32 1.5, %v2140
        %v2142 = vmul.f32 %v2137, %v2141
        %vm2143 = vweird.f32 %v2124
        %vm2144 = vweird.f32 %v2137
        %vm2145 = vmor %vm2143, %vm2144
        %v2146 = vsel %vm2145, %v2137, %v2142
        %v2147 = vrsqrt.pop %v2125
        %v2148 = vmul.f32 %v2147, %v2125
        %v2149 = vmul.f32 %v2148, %v2147
        %v2150 = vmul.f32 0.5, %v2149
        %v2151 = vsub.f32 1.5, %v2150
        %v2152 = vmul.f32 %v2147, %v2151
        %vm2153 = vweird.f32 %v2125
        %vm2154 = vweird.f32 %v2147
        %vm2155 = vmor %vm2153, %vm2154
        %v2156 = vsel %vm2155, %v2147, %v2152
        %v2157 = vrsqrt.pop %v2126
        %v2158 = vmul.f32 %v2157, %v2126
        %v2159 = vmul.f32 %v2158, %v2157
        %v2160 = vmul.f32 0.5, %v2159
        %v2161 = vsub.f32 1.5, %v2160
        %v2162 = vmul.f32 %v2157, %v2161
        %vm2163 = vweird.f32 %v2126
        %vm2164 = vweird.f32 %v2157
        %vm2165 = vmor %vm2163, %vm2164
        %v2166 = vsel %vm2165, %v2157, %v2162
        %v2167 = vmul.f32 %v2103, %v2136
        %v2168 = vmul.f32 %v2104, %v2146
        %v2169 = vmul.f32 %v2105, %v2156
        %v2170 = vmul.f32 %v2106, %v2166
        %v2172 = vperm.slane %v2089, 0
        %v2174 = vmul.f32 %v2167, %v2172
        %v2175 = vmul.f32 %v2168, %v2172
        %v2176 = vmul.f32 %v2169, %v2172
        %v2177 = vmul.f32 %v2170, %v2172
        %v2179 = vperm.slane %v2090, 0
        %v2181 = vadd.f32 %v2174, %v2179
        %v2182 = vadd.f32 %v2175, %v2179
        %v2183 = vadd.f32 %v2176, %v2179
        %v2184 = vadd.f32 %v2177, %v2179
        %v2185 = vpack.c.bf16 %v2182, %v2181
        %v2186 = vpack.c.bf16 %v2184, %v2183
        %v2187 = vld [vmem:[%s745] sm:$0xff]
        %v2188 = vld [vmem:[%s745 + $0x8] sm:$0xff]
        %v2189 = vld [vmem:[%s745 + $0x10] sm:$0xff]
        %v2190 = vld [vmem:[%s745 + $0x18] sm:$0xff]
        %v2191 = vld [vmem:[%s745 + $0x20] sm:$0xff]
        %v2192 = vld [vmem:[%s745 + $0x28] sm:$0xff]
        %v2193 = vld [vmem:[%s745 + $0x30] sm:$0xff]
        %v2194 = vld [vmem:[%s745 + $0x38] sm:$0xff]
        %v2195 = vld [vmem:[%s745 + $0x40] sm:$0xff]
        %v2196 = vld [vmem:[%s745 + $0x48] sm:$0xff]
        %v2197 = vld [vmem:[%s745 + $0x50] sm:$0xff]
        %v2198 = vld [vmem:[%s745 + $0x58] sm:$0xff]
        %v2199 = vld [vmem:[%s745 + $0x60] sm:$0xff]
        %v2200 = vld [vmem:[%s745 + $0x68] sm:$0xff]
        %v2201 = vld [vmem:[%s745 + $0x70] sm:$0xff]
        %v2202 = vld [vmem:[%s745 + $0x78] sm:$0xff]
        %v2203 = vld [vmem:[%s745 + $0x80] sm:$0xff]
        %v2204 = vld [vmem:[%s745 + $0x88] sm:$0xff]
        %v2205 = vld [vmem:[%s745 + $0x90] sm:$0xff]
        %v2206 = vld [vmem:[%s745 + $0x98] sm:$0xff]
        %v2207 = vld [vmem:[%s745 + $0xa0] sm:$0xff]
        %v2208 = vld [vmem:[%s745 + $0xa8] sm:$0xff]
        %v2209 = vld [vmem:[%s745 + $0xb0] sm:$0xff]
        %v2210 = vld [vmem:[%s745 + $0xb8] sm:$0xff]
        %v2211 = vld [vmem:[%s745 + $0xc0] sm:$0xff]
        %v2212 = vld [vmem:[%s745 + $0xc8] sm:$0xff]
        %v2213 = vld [vmem:[%s745 + $0xd0] sm:$0xff]
        %v2214 = vld [vmem:[%s745 + $0xd8] sm:$0xff]
        %v2215 = vld [vmem:[%s745 + $0xe0] sm:$0xff]
        %v2216 = vld [vmem:[%s745 + $0xe8] sm:$0xff]
        %v2217 = vld [vmem:[%s745 + $0xf0] sm:$0xff]
        %v2218 = vld [vmem:[%s745 + $0xf8] sm:$0xff]
        %v2219 = vld [vmem:[%s845] sm:$0xf]
        %v2221 = vperm.slane %v2219, 0
        %v2222 = vperm.slane %v2219, 1
        %v2223 = vperm.slane %v2219, 2
        %v2224 = vperm.slane %v2219, 3
        %v2261 = vunpack.c.l.b16 %v2187
        %v2262 = vunpack.c.h.b16 %v2187
        %v2263 = vunpack.c.l.b16 %v2188
        %v2264 = vunpack.c.h.b16 %v2188
        %v2265 = vunpack.c.l.b16 %v2189
        %v2266 = vunpack.c.h.b16 %v2189
        %v2267 = vunpack.c.l.b16 %v2190
        %v2268 = vunpack.c.h.b16 %v2190
        %v2269 = vunpack.c.l.b16 %v2191
        %v2270 = vunpack.c.h.b16 %v2191
        %v2271 = vunpack.c.l.b16 %v2192
        %v2272 = vunpack.c.h.b16 %v2192
        %v2273 = vunpack.c.l.b16 %v2193
        %v2274 = vunpack.c.h.b16 %v2193
        %v2275 = vunpack.c.l.b16 %v2194
        %v2276 = vunpack.c.h.b16 %v2194
        %v2277 = vunpack.c.l.b16 %v2195
        %v2278 = vunpack.c.h.b16 %v2195
        %v2279 = vunpack.c.l.b16 %v2196
        %v2280 = vunpack.c.h.b16 %v2196
        %v2281 = vunpack.c.l.b16 %v2197
        %v2282 = vunpack.c.h.b16 %v2197
        %v2283 = vunpack.c.l.b16 %v2198
        %v2284 = vunpack.c.h.b16 %v2198
        %v2285 = vunpack.c.l.b16 %v2199
        %v2286 = vunpack.c.h.b16 %v2199
        %v2287 = vunpack.c.l.b16 %v2200
        %v2288 = vunpack.c.h.b16 %v2200
        %v2289 = vunpack.c.l.b16 %v2201
        %v2290 = vunpack.c.h.b16 %v2201
        %v2291 = vunpack.c.l.b16 %v2202
        %v2292 = vunpack.c.h.b16 %v2202
        %v2293 = vunpack.c.l.b16 %v2203
        %v2294 = vunpack.c.h.b16 %v2203
        %v2295 = vunpack.c.l.b16 %v2204
        %v2296 = vunpack.c.h.b16 %v2204
        %v2297 = vunpack.c.l.b16 %v2205
        %v2298 = vunpack.c.h.b16 %v2205
        %v2299 = vunpack.c.l.b16 %v2206
        %v2300 = vunpack.c.h.b16 %v2206
        %v2301 = vunpack.c.l.b16 %v2207
        %v2302 = vunpack.c.h.b16 %v2207
        %v2303 = vunpack.c.l.b16 %v2208
        %v2304 = vunpack.c.h.b16 %v2208
        %v2305 = vunpack.c.l.b16 %v2209
        %v2306 = vunpack.c.h.b16 %v2209
        %v2307 = vunpack.c.l.b16 %v2210
        %v2308 = vunpack.c.h.b16 %v2210
        %v2309 = vunpack.c.l.b16 %v2211
        %v2310 = vunpack.c.h.b16 %v2211
        %v2311 = vunpack.c.l.b16 %v2212
        %v2312 = vunpack.c.h.b16 %v2212
        %v2313 = vunpack.c.l.b16 %v2213
        %v2314 = vunpack.c.h.b16 %v2213
        %v2315 = vunpack.c.l.b16 %v2214
        %v2316 = vunpack.c.h.b16 %v2214
        %v2317 = vunpack.c.l.b16 %v2215
        %v2318 = vunpack.c.h.b16 %v2215
        %v2319 = vunpack.c.l.b16 %v2216
        %v2320 = vunpack.c.h.b16 %v2216
        %v2321 = vunpack.c.l.b16 %v2217
        %v2322 = vunpack.c.h.b16 %v2217
        %v2323 = vunpack.c.l.b16 %v2218
        %v2324 = vunpack.c.h.b16 %v2218
        %v2325 = vpack.c.b16 %v2265, %v2261
        %v2326 = vpack.c.b16 %v2266, %v2262
        %v2327 = vpack.c.b16 %v2267, %v2263
        %v2328 = vpack.c.b16 %v2268, %v2264
        %v2329 = vpack.c.b16 %v2273, %v2269
        %v2330 = vpack.c.b16 %v2274, %v2270
        %v2331 = vpack.c.b16 %v2275, %v2271
        %v2332 = vpack.c.b16 %v2276, %v2272
        %v2333 = vpack.c.b16 %v2281, %v2277
        %v2334 = vpack.c.b16 %v2282, %v2278
        %v2335 = vpack.c.b16 %v2283, %v2279
        %v2336 = vpack.c.b16 %v2284, %v2280
        %v2337 = vpack.c.b16 %v2289, %v2285
        %v2338 = vpack.c.b16 %v2290, %v2286
        %v2339 = vpack.c.b16 %v2291, %v2287
        %v2340 = vpack.c.b16 %v2292, %v2288
        %v2341 = vpack.c.b16 %v2297, %v2293
        %v2342 = vpack.c.b16 %v2298, %v2294
        %v2343 = vpack.c.b16 %v2299, %v2295
        %v2344 = vpack.c.b16 %v2300, %v2296
        %v2345 = vpack.c.b16 %v2305, %v2301
        %v2346 = vpack.c.b16 %v2306, %v2302
        %v2347 = vpack.c.b16 %v2307, %v2303
        %v2348 = vpack.c.b16 %v2308, %v2304
        %v2349 = vpack.c.b16 %v2313, %v2309
        %v2350 = vpack.c.b16 %v2314, %v2310
        %v2351 = vpack.c.b16 %v2315, %v2311
        %v2352 = vpack.c.b16 %v2316, %v2312
        %v2353 = vpack.c.b16 %v2321, %v2317
        %v2354 = vpack.c.b16 %v2322, %v2318
        %v2355 = vpack.c.b16 %v2323, %v2319
        %v2356 = vpack.c.b16 %v2324, %v2320
        %2389 = vmatpush.bf16.msra.mxu0 %v2353
        %2390 = vmatpush.bf16.msra.mxu0 %v2349
        %2391 = vmatpush.bf16.msra.mxu0 %v2345
        %2392 = vmatpush.bf16.msra.mxu0 %v2341
        %2393 = vmatpush.bf16.msra.mxu0 %v2337
        %2394 = vmatpush.bf16.msra.mxu0 %v2333
        %2395 = vmatpush.bf16.msra.mxu0 %v2329
        %2396 = vmatpush.bf16.msra.mxu0 %v2325
        %2397 = vmatmul.bf16.gmra.mxu0 %v2185
        %v2398 = vpop.f32.mrf.mxu0
        %v2399 = vadd.f32 %v2221, %v2398
        %v2400 = vpop.f32.mrf.mxu0
        %v2401 = vadd.f32 %v2221, %v2400
        %2402 = vmatmul.bf16.gmra.mxu0 %v2186
        %v2403 = vpop.f32.mrf.mxu0
        %v2404 = vadd.f32 %v2221, %v2403
        %v2405 = vpop.f32.mrf.mxu0
        %v2406 = vadd.f32 %v2221, %v2405
        %2407 = vdwg.mxu0
        %2408 = vmatpush.bf16.msra.mxu0 %v2354
        %2409 = vmatpush.bf16.msra.mxu0 %v2350
        %2410 = vmatpush.bf16.msra.mxu0 %v2346
        %2411 = vmatpush.bf16.msra.mxu0 %v2342
        %2412 = vmatpush.bf16.msra.mxu0 %v2338
        %2413 = vmatpush.bf16.msra.mxu0 %v2334
        %2414 = vmatpush.bf16.msra.mxu0 %v2330
        %2415 = vmatpush.bf16.msra.mxu0 %v2326
        %2416 = vmatmul.bf16.gmra.mxu0 %v2185
        %v2417 = vpop.f32.mrf.mxu0
        %v2418 = vadd.f32 %v2222, %v2417
        %v2419 = vpop.f32.mrf.mxu0
        %v2420 = vadd.f32 %v2222, %v2419
        %2421 = vmatmul.bf16.gmra.mxu0 %v2186
        %v2422 = vpop.f32.mrf.mxu0
        %v2423 = vadd.f32 %v2222, %v2422
        %v2424 = vpop.f32.mrf.mxu0
        %v2425 = vadd.f32 %v2222, %v2424
        %2426 = vdwg.mxu0
        %2427 = vmatpush.bf16.msra.mxu0 %v2355
        %2428 = vmatpush.bf16.msra.mxu0 %v2351
        %2429 = vmatpush.bf16.msra.mxu0 %v2347
        %2430 = vmatpush.bf16.msra.mxu0 %v2343
        %2431 = vmatpush.bf16.msra.mxu0 %v2339
        %2432 = vmatpush.bf16.msra.mxu0 %v2335
        %2433 = vmatpush.bf16.msra.mxu0 %v2331
        %2434 = vmatpush.bf16.msra.mxu0 %v2327
        %2435 = vmatmul.bf16.gmra.mxu0 %v2185
        %v2436 = vpop.f32.mrf.mxu0
        %v2437 = vadd.f32 %v2223, %v2436
        %v2438 = vpop.f32.mrf.mxu0
        %v2439 = vadd.f32 %v2223, %v2438
        %2440 = vmatmul.bf16.gmra.mxu0 %v2186
        %v2441 = vpop.f32.mrf.mxu0
        %v2442 = vadd.f32 %v2223, %v2441
        %v2443 = vpop.f32.mrf.mxu0
        %v2444 = vadd.f32 %v2223, %v2443
        %2445 = vdwg.mxu0
        %2446 = vmatpush.bf16.msra.mxu0 %v2356
        %2447 = vmatpush.bf16.msra.mxu0 %v2352
        %2448 = vmatpush.bf16.msra.mxu0 %v2348
        %2449 = vmatpush.bf16.msra.mxu0 %v2344
        %2450 = vmatpush.bf16.msra.mxu0 %v2340
        %2451 = vmatpush.bf16.msra.mxu0 %v2336
        %2452 = vmatpush.bf16.msra.mxu0 %v2332
        %2453 = vmatpush.bf16.msra.mxu0 %v2328
        %2454 = vmatmul.bf16.gmra.mxu0 %v2185
        %v2455 = vpop.f32.mrf.mxu0
        %v2456 = vadd.f32 %v2224, %v2455
        %v2457 = vpop.f32.mrf.mxu0
        %v2458 = vadd.f32 %v2224, %v2457
        %2459 = vmatmul.bf16.gmra.mxu0 %v2186
        %v2460 = vpop.f32.mrf.mxu0
        %v2461 = vadd.f32 %v2224, %v2460
        %v2462 = vpop.f32.mrf.mxu0
        %v2463 = vadd.f32 %v2224, %v2462
        %2464 = vdwg.mxu0
        %v2465 = vmul.f32 %v2399, 0.5
        %v2466 = vmul.f32 %v2418, 0.5
        %v2467 = vmul.f32 %v2437, 0.5
        %v2468 = vmul.f32 %v2456, 0.5
        %v2469 = vmul.f32 %v2401, 0.5
        %v2470 = vmul.f32 %v2420, 0.5
        %v2471 = vmul.f32 %v2439, 0.5
        %v2472 = vmul.f32 %v2458, 0.5
        %v2473 = vmul.f32 %v2404, 0.5
        %v2474 = vmul.f32 %v2423, 0.5
        %v2475 = vmul.f32 %v2442, 0.5
        %v2476 = vmul.f32 %v2461, 0.5
        %v2477 = vmul.f32 %v2406, 0.5
        %v2478 = vmul.f32 %v2425, 0.5
        %v2479 = vmul.f32 %v2444, 0.5
        %v2480 = vmul.f32 %v2463, 0.5
        %v2481 = vmul.f32 %v2399, 0.70710677
        %v2482 = vmul.f32 %v2418, 0.70710677
        %v2483 = vmul.f32 %v2437, 0.70710677
        %v2484 = vmul.f32 %v2456, 0.70710677
        %v2485 = vmul.f32 %v2401, 0.70710677
        %v2486 = vmul.f32 %v2420, 0.70710677
        %v2487 = vmul.f32 %v2439, 0.70710677
        %v2488 = vmul.f32 %v2458, 0.70710677
        %v2489 = vmul.f32 %v2404, 0.70710677
        %v2490 = vmul.f32 %v2423, 0.70710677
        %v2491 = vmul.f32 %v2442, 0.70710677
        %v2492 = vmul.f32 %v2461, 0.70710677
        %v2493 = vmul.f32 %v2406, 0.70710677
        %v2494 = vmul.f32 %v2425, 0.70710677
        %v2495 = vmul.f32 %v2444, 0.70710677
        %v2496 = vmul.f32 %v2463, 0.70710677
        %v2497 = vmul.f32 %v2481, %v2481
        %v2498 = vmin.f32 16.0, %v2497
        %v2499 = vmul.f32 %v2498, 2.1237322e-06
        %v2500 = vadd.f32 %v2499, 0.00028619796
        %v2501 = vmul.f32 %v2498, %v2500
        %v2502 = vadd.f32 %v2501, 0.0036580483
        %v2503 = vmul.f32 %v2498, %v2502
        %v2504 = vadd.f32 %v2503, 0.05243302
        %v2505 = vmul.f32 %v2498, %v2504
        %v2506 = vadd.f32 %v2505, 0.18741608
        %v2507 = vmul.f32 %v2498, %v2506
        %v2508 = vadd.f32 %v2507, 1.1283791
        %v2509 = vmul.f32 %v2481, %v2508
        %v2510 = vmul.f32 %v2498, 3.8918573e-05
        %v2511 = vadd.f32 %v2510, 0.001143296
        %v2512 = vmul.f32 %v2498, %v2511
        %v2513 = vadd.f32 %v2512, 0.014752088
        %v2514 = vmul.f32 %v2498, %v2513
        %v2515 = vadd.f32 %v2514, 0.112945676
        %v2516 = vmul.f32 %v2498, %v2515
        %v2517 = vadd.f32 %v2516, 0.4994258
        %v2518 = vmul.f32 %v2498, %v2517
        %v2519 = vadd.f32 %v2518, 1.0
        %v2520 = vrcp.pop %v2519
        %v2521 = vmul.f32 %v2519, %v2520
        %v2522 = vsub.f32 1.0, %v2521
        %v2523 = vmul.f32 %v2520, %v2522
        %v2524 = vadd.f32 %v2520, %v2523
        %vm2525 = vweird.f32 %v2519
        %vm2526 = vweird.f32 %v2520
        %vm2527 = vmor %vm2525, %vm2526
        %v2528 = vsel %vm2527, %v2520, %v2524
        %v2529 = vand.u32 2147483647, %v2519
        %vm2530 = vcmp.eq.f32.partialorder %v2529, 8.507059e+37
        %v2531 = vand.u32 %v2519, 2147483648
        %v2532 = vor.u32 1.1754944e-38, %v2531
        %v2533 = vsel %vm2530, %v2532, %v2528
        %v2534 = vmul.f32 %v2509, %v2533
        %v2535 = vmin.f32 %v2534, 1.0
        %v2536 = vmax.f32 %v2535, -1.0
        %v2537 = vmul.f32 %v2482, %v2482
        %v2538 = vmin.f32 16.0, %v2537
        %v2539 = vmul.f32 %v2538, 2.1237322e-06
        %v2540 = vadd.f32 %v2539, 0.00028619796
        %v2541 = vmul.f32 %v2538, %v2540
        %v2542 = vadd.f32 %v2541, 0.0036580483
        %v2543 = vmul.f32 %v2538, %v2542
        %v2544 = vadd.f32 %v2543, 0.05243302
        %v2545 = vmul.f32 %v2538, %v2544
        %v2546 = vadd.f32 %v2545, 0.18741608
        %v2547 = vmul.f32 %v2538, %v2546
        %v2548 = vadd.f32 %v2547, 1.1283791
        %v2549 = vmul.f32 %v2482, %v2548
        %v2550 = vmul.f32 %v2538, 3.8918573e-05
        %v2551 = vadd.f32 %v2550, 0.001143296
        %v2552 = vmul.f32 %v2538, %v2551
        %v2553 = vadd.f32 %v2552, 0.014752088
        %v2554 = vmul.f32 %v2538, %v2553
        %v2555 = vadd.f32 %v2554, 0.112945676
        %v2556 = vmul.f32 %v2538, %v2555
        %v2557 = vadd.f32 %v2556, 0.4994258
        %v2558 = vmul.f32 %v2538, %v2557
        %v2559 = vadd.f32 %v2558, 1.0
        %v2560 = vrcp.pop %v2559
        %v2561 = vmul.f32 %v2559, %v2560
        %v2562 = vsub.f32 1.0, %v2561
        %v2563 = vmul.f32 %v2560, %v2562
        %v2564 = vadd.f32 %v2560, %v2563
        %vm2565 = vweird.f32 %v2559
        %vm2566 = vweird.f32 %v2560
        %vm2567 = vmor %vm2565, %vm2566
        %v2568 = vsel %vm2567, %v2560, %v2564
        %v2569 = vand.u32 2147483647, %v2559
        %vm2570 = vcmp.eq.f32.partialorder %v2569, 8.507059e+37
        %v2571 = vand.u32 %v2559, 2147483648
        %v2572 = vor.u32 1.1754944e-38, %v2571
        %v2573 = vsel %vm2570, %v2572, %v2568
        %v2574 = vmul.f32 %v2549, %v2573
        %v2575 = vmin.f32 %v2574, 1.0
        %v2576 = vmax.f32 %v2575, -1.0
        %v2577 = vmul.f32 %v2483, %v2483
        %v2578 = vmin.f32 16.0, %v2577
        %v2579 = vmul.f32 %v2578, 2.1237322e-06
        %v2580 = vadd.f32 %v2579, 0.00028619796
        %v2581 = vmul.f32 %v2578, %v2580
        %v2582 = vadd.f32 %v2581, 0.0036580483
        %v2583 = vmul.f32 %v2578, %v2582
        %v2584 = vadd.f32 %v2583, 0.05243302
        %v2585 = vmul.f32 %v2578, %v2584
        %v2586 = vadd.f32 %v2585, 0.18741608
        %v2587 = vmul.f32 %v2578, %v2586
        %v2588 = vadd.f32 %v2587, 1.1283791
        %v2589 = vmul.f32 %v2483, %v2588
        %v2590 = vmul.f32 %v2578, 3.8918573e-05
        %v2591 = vadd.f32 %v2590, 0.001143296
        %v2592 = vmul.f32 %v2578, %v2591
        %v2593 = vadd.f32 %v2592, 0.014752088
        %v2594 = vmul.f32 %v2578, %v2593
        %v2595 = vadd.f32 %v2594, 0.112945676
        %v2596 = vmul.f32 %v2578, %v2595
        %v2597 = vadd.f32 %v2596, 0.4994258
        %v2598 = vmul.f32 %v2578, %v2597
        %v2599 = vadd.f32 %v2598, 1.0
        %v2600 = vrcp.pop %v2599
        %v2601 = vmul.f32 %v2599, %v2600
        %v2602 = vsub.f32 1.0, %v2601
        %v2603 = vmul.f32 %v2600, %v2602
        %v2604 = vadd.f32 %v2600, %v2603
        %vm2605 = vweird.f32 %v2599
        %vm2606 = vweird.f32 %v2600
        %vm2607 = vmor %vm2605, %vm2606
        %v2608 = vsel %vm2607, %v2600, %v2604
        %v2609 = vand.u32 2147483647, %v2599
        %vm2610 = vcmp.eq.f32.partialorder %v2609, 8.507059e+37
        %v2611 = vand.u32 %v2599, 2147483648
        %v2612 = vor.u32 1.1754944e-38, %v2611
        %v2613 = vsel %vm2610, %v2612, %v2608
        %v2614 = vmul.f32 %v2589, %v2613
        %v2615 = vmin.f32 %v2614, 1.0
        %v2616 = vmax.f32 %v2615, -1.0
        %v2617 = vmul.f32 %v2484, %v2484
        %v2618 = vmin.f32 16.0, %v2617
        %v2619 = vmul.f32 %v2618, 2.1237322e-06
        %v2620 = vadd.f32 %v2619, 0.00028619796
        %v2621 = vmul.f32 %v2618, %v2620
        %v2622 = vadd.f32 %v2621, 0.0036580483
        %v2623 = vmul.f32 %v2618, %v2622
        %v2624 = vadd.f32 %v2623, 0.05243302
        %v2625 = vmul.f32 %v2618, %v2624
        %v2626 = vadd.f32 %v2625, 0.18741608
        %v2627 = vmul.f32 %v2618, %v2626
        %v2628 = vadd.f32 %v2627, 1.1283791
        %v2629 = vmul.f32 %v2484, %v2628
        %v2630 = vmul.f32 %v2618, 3.8918573e-05
        %v2631 = vadd.f32 %v2630, 0.001143296
        %v2632 = vmul.f32 %v2618, %v2631
        %v2633 = vadd.f32 %v2632, 0.014752088
        %v2634 = vmul.f32 %v2618, %v2633
        %v2635 = vadd.f32 %v2634, 0.112945676
        %v2636 = vmul.f32 %v2618, %v2635
        %v2637 = vadd.f32 %v2636, 0.4994258
        %v2638 = vmul.f32 %v2618, %v2637
        %v2639 = vadd.f32 %v2638, 1.0
        %v2640 = vrcp.pop %v2639
        %v2641 = vmul.f32 %v2639, %v2640
        %v2642 = vsub.f32 1.0, %v2641
        %v2643 = vmul.f32 %v2640, %v2642
        %v2644 = vadd.f32 %v2640, %v2643
        %vm2645 = vweird.f32 %v2639
        %vm2646 = vweird.f32 %v2640
        %vm2647 = vmor %vm2645, %vm2646
        %v2648 = vsel %vm2647, %v2640, %v2644
        %v2649 = vand.u32 2147483647, %v2639
        %vm2650 = vcmp.eq.f32.partialorder %v2649, 8.507059e+37
        %v2651 = vand.u32 %v2639, 2147483648
        %v2652 = vor.u32 1.1754944e-38, %v2651
        %v2653 = vsel %vm2650, %v2652, %v2648
        %v2654 = vmul.f32 %v2629, %v2653
        %v2655 = vmin.f32 %v2654, 1.0
        %v2656 = vmax.f32 %v2655, -1.0
        %v2657 = vmul.f32 %v2485, %v2485
        %v2658 = vmin.f32 16.0, %v2657
        %v2659 = vmul.f32 %v2658, 2.1237322e-06
        %v2660 = vadd.f32 %v2659, 0.00028619796
        %v2661 = vmul.f32 %v2658, %v2660
        %v2662 = vadd.f32 %v2661, 0.0036580483
        %v2663 = vmul.f32 %v2658, %v2662
        %v2664 = vadd.f32 %v2663, 0.05243302
        %v2665 = vmul.f32 %v2658, %v2664
        %v2666 = vadd.f32 %v2665, 0.18741608
        %v2667 = vmul.f32 %v2658, %v2666
        %v2668 = vadd.f32 %v2667, 1.1283791
        %v2669 = vmul.f32 %v2485, %v2668
        %v2670 = vmul.f32 %v2658, 3.8918573e-05
        %v2671 = vadd.f32 %v2670, 0.001143296
        %v2672 = vmul.f32 %v2658, %v2671
        %v2673 = vadd.f32 %v2672, 0.014752088
        %v2674 = vmul.f32 %v2658, %v2673
        %v2675 = vadd.f32 %v2674, 0.112945676
        %v2676 = vmul.f32 %v2658, %v2675
        %v2677 = vadd.f32 %v2676, 0.4994258
        %v2678 = vmul.f32 %v2658, %v2677
        %v2679 = vadd.f32 %v2678, 1.0
        %v2680 = vrcp.pop %v2679
        %v2681 = vmul.f32 %v2679, %v2680
        %v2682 = vsub.f32 1.0, %v2681
        %v2683 = vmul.f32 %v2680, %v2682
        %v2684 = vadd.f32 %v2680, %v2683
        %vm2685 = vweird.f32 %v2679
        %vm2686 = vweird.f32 %v2680
        %vm2687 = vmor %vm2685, %vm2686
        %v2688 = vsel %vm2687, %v2680, %v2684
        %v2689 = vand.u32 2147483647, %v2679
        %vm2690 = vcmp.eq.f32.partialorder %v2689, 8.507059e+37
        %v2691 = vand.u32 %v2679, 2147483648
        %v2692 = vor.u32 1.1754944e-38, %v2691
        %v2693 = vsel %vm2690, %v2692, %v2688
        %v2694 = vmul.f32 %v2669, %v2693
        %v2695 = vmin.f32 %v2694, 1.0
        %v2696 = vmax.f32 %v2695, -1.0
        %v2697 = vmul.f32 %v2486, %v2486
        %v2698 = vmin.f32 16.0, %v2697
        %v2699 = vmul.f32 %v2698, 2.1237322e-06
        %v2700 = vadd.f32 %v2699, 0.00028619796
        %v2701 = vmul.f32 %v2698, %v2700
        %v2702 = vadd.f32 %v2701, 0.0036580483
        %v2703 = vmul.f32 %v2698, %v2702
        %v2704 = vadd.f32 %v2703, 0.05243302
        %v2705 = vmul.f32 %v2698, %v2704
        %v2706 = vadd.f32 %v2705, 0.18741608
        %v2707 = vmul.f32 %v2698, %v2706
        %v2708 = vadd.f32 %v2707, 1.1283791
        %v2709 = vmul.f32 %v2486, %v2708
        %v2710 = vmul.f32 %v2698, 3.8918573e-05
        %v2711 = vadd.f32 %v2710, 0.001143296
        %v2712 = vmul.f32 %v2698, %v2711
        %v2713 = vadd.f32 %v2712, 0.014752088
        %v2714 = vmul.f32 %v2698, %v2713
        %v2715 = vadd.f32 %v2714, 0.112945676
        %v2716 = vmul.f32 %v2698, %v2715
        %v2717 = vadd.f32 %v2716, 0.4994258
        %v2718 = vmul.f32 %v2698, %v2717
        %v2719 = vadd.f32 %v2718, 1.0
        %v2720 = vrcp.pop %v2719
        %v2721 = vmul.f32 %v2719, %v2720
        %v2722 = vsub.f32 1.0, %v2721
        %v2723 = vmul.f32 %v2720, %v2722
        %v2724 = vadd.f32 %v2720, %v2723
        %vm2725 = vweird.f32 %v2719
        %vm2726 = vweird.f32 %v2720
        %vm2727 = vmor %vm2725, %vm2726
        %v2728 = vsel %vm2727, %v2720, %v2724
        %v2729 = vand.u32 2147483647, %v2719
        %vm2730 = vcmp.eq.f32.partialorder %v2729, 8.507059e+37
        %v2731 = vand.u32 %v2719, 2147483648
        %v2732 = vor.u32 1.1754944e-38, %v2731
        %v2733 = vsel %vm2730, %v2732, %v2728
        %v2734 = vmul.f32 %v2709, %v2733
        %v2735 = vmin.f32 %v2734, 1.0
        %v2736 = vmax.f32 %v2735, -1.0
        %v2737 = vmul.f32 %v2487, %v2487
        %v2738 = vmin.f32 16.0, %v2737
        %v2739 = vmul.f32 %v2738, 2.1237322e-06
        %v2740 = vadd.f32 %v2739, 0.00028619796
        %v2741 = vmul.f32 %v2738, %v2740
        %v2742 = vadd.f32 %v2741, 0.0036580483
        %v2743 = vmul.f32 %v2738, %v2742
        %v2744 = vadd.f32 %v2743, 0.05243302
        %v2745 = vmul.f32 %v2738, %v2744
        %v2746 = vadd.f32 %v2745, 0.18741608
        %v2747 = vmul.f32 %v2738, %v2746
        %v2748 = vadd.f32 %v2747, 1.1283791
        %v2749 = vmul.f32 %v2487, %v2748
        %v2750 = vmul.f32 %v2738, 3.8918573e-05
        %v2751 = vadd.f32 %v2750, 0.001143296
        %v2752 = vmul.f32 %v2738, %v2751
        %v2753 = vadd.f32 %v2752, 0.014752088
        %v2754 = vmul.f32 %v2738, %v2753
        %v2755 = vadd.f32 %v2754, 0.112945676
        %v2756 = vmul.f32 %v2738, %v2755
        %v2757 = vadd.f32 %v2756, 0.4994258
        %v2758 = vmul.f32 %v2738, %v2757
        %v2759 = vadd.f32 %v2758, 1.0
        %v2760 = vrcp.pop %v2759
        %v2761 = vmul.f32 %v2759, %v2760
        %v2762 = vsub.f32 1.0, %v2761
        %v2763 = vmul.f32 %v2760, %v2762
        %v2764 = vadd.f32 %v2760, %v2763
        %vm2765 = vweird.f32 %v2759
        %vm2766 = vweird.f32 %v2760
        %vm2767 = vmor %vm2765, %vm2766
        %v2768 = vsel %vm2767, %v2760, %v2764
        %v2769 = vand.u32 2147483647, %v2759
        %vm2770 = vcmp.eq.f32.partialorder %v2769, 8.507059e+37
        %v2771 = vand.u32 %v2759, 2147483648
        %v2772 = vor.u32 1.1754944e-38, %v2771
        %v2773 = vsel %vm2770, %v2772, %v2768
        %v2774 = vmul.f32 %v2749, %v2773
        %v2775 = vmin.f32 %v2774, 1.0
        %v2776 = vmax.f32 %v2775, -1.0
        %v2777 = vmul.f32 %v2488, %v2488
        %v2778 = vmin.f32 16.0, %v2777
        %v2779 = vmul.f32 %v2778, 2.1237322e-06
        %v2780 = vadd.f32 %v2779, 0.00028619796
        %v2781 = vmul.f32 %v2778, %v2780
        %v2782 = vadd.f32 %v2781, 0.0036580483
        %v2783 = vmul.f32 %v2778, %v2782
        %v2784 = vadd.f32 %v2783, 0.05243302
        %v2785 = vmul.f32 %v2778, %v2784
        %v2786 = vadd.f32 %v2785, 0.18741608
        %v2787 = vmul.f32 %v2778, %v2786
        %v2788 = vadd.f32 %v2787, 1.1283791
        %v2789 = vmul.f32 %v2488, %v2788
        %v2790 = vmul.f32 %v2778, 3.8918573e-05
        %v2791 = vadd.f32 %v2790, 0.001143296
        %v2792 = vmul.f32 %v2778, %v2791
        %v2793 = vadd.f32 %v2792, 0.014752088
        %v2794 = vmul.f32 %v2778, %v2793
        %v2795 = vadd.f32 %v2794, 0.112945676
        %v2796 = vmul.f32 %v2778, %v2795
        %v2797 = vadd.f32 %v2796, 0.4994258
        %v2798 = vmul.f32 %v2778, %v2797
        %v2799 = vadd.f32 %v2798, 1.0
        %v2800 = vrcp.pop %v2799
        %v2801 = vmul.f32 %v2799, %v2800
        %v2802 = vsub.f32 1.0, %v2801
        %v2803 = vmul.f32 %v2800, %v2802
        %v2804 = vadd.f32 %v2800, %v2803
        %vm2805 = vweird.f32 %v2799
        %vm2806 = vweird.f32 %v2800
        %vm2807 = vmor %vm2805, %vm2806
        %v2808 = vsel %vm2807, %v2800, %v2804
        %v2809 = vand.u32 2147483647, %v2799
        %vm2810 = vcmp.eq.f32.partialorder %v2809, 8.507059e+37
        %v2811 = vand.u32 %v2799, 2147483648
        %v2812 = vor.u32 1.1754944e-38, %v2811
        %v2813 = vsel %vm2810, %v2812, %v2808
        %v2814 = vmul.f32 %v2789, %v2813
        %v2815 = vmin.f32 %v2814, 1.0
        %v2816 = vmax.f32 %v2815, -1.0
        %v2817 = vmul.f32 %v2489, %v2489
        %v2818 = vmin.f32 16.0, %v2817
        %v2819 = vmul.f32 %v2818, 2.1237322e-06
        %v2820 = vadd.f32 %v2819, 0.00028619796
        %v2821 = vmul.f32 %v2818, %v2820
        %v2822 = vadd.f32 %v2821, 0.0036580483
        %v2823 = vmul.f32 %v2818, %v2822
        %v2824 = vadd.f32 %v2823, 0.05243302
        %v2825 = vmul.f32 %v2818, %v2824
        %v2826 = vadd.f32 %v2825, 0.18741608
        %v2827 = vmul.f32 %v2818, %v2826
        %v2828 = vadd.f32 %v2827, 1.1283791
        %v2829 = vmul.f32 %v2489, %v2828
        %v2830 = vmul.f32 %v2818, 3.8918573e-05
        %v2831 = vadd.f32 %v2830, 0.001143296
        %v2832 = vmul.f32 %v2818, %v2831
        %v2833 = vadd.f32 %v2832, 0.014752088
        %v2834 = vmul.f32 %v2818, %v2833
        %v2835 = vadd.f32 %v2834, 0.112945676
        %v2836 = vmul.f32 %v2818, %v2835
        %v2837 = vadd.f32 %v2836, 0.4994258
        %v2838 = vmul.f32 %v2818, %v2837
        %v2839 = vadd.f32 %v2838, 1.0
        %v2840 = vrcp.pop %v2839
        %v2841 = vmul.f32 %v2839, %v2840
        %v2842 = vsub.f32 1.0, %v2841
        %v2843 = vmul.f32 %v2840, %v2842
        %v2844 = vadd.f32 %v2840, %v2843
        %vm2845 = vweird.f32 %v2839
        %vm2846 = vweird.f32 %v2840
        %vm2847 = vmor %vm2845, %vm2846
        %v2848 = vsel %vm2847, %v2840, %v2844
        %v2849 = vand.u32 2147483647, %v2839
        %vm2850 = vcmp.eq.f32.partialorder %v2849, 8.507059e+37
        %v2851 = vand.u32 %v2839, 2147483648
        %v2852 = vor.u32 1.1754944e-38, %v2851
        %v2853 = vsel %vm2850, %v2852, %v2848
        %v2854 = vmul.f32 %v2829, %v2853
        %v2855 = vmin.f32 %v2854, 1.0
        %v2856 = vmax.f32 %v2855, -1.0
        %v2857 = vmul.f32 %v2490, %v2490
        %v2858 = vmin.f32 16.0, %v2857
        %v2859 = vmul.f32 %v2858, 2.1237322e-06
        %v2860 = vadd.f32 %v2859, 0.00028619796
        %v2861 = vmul.f32 %v2858, %v2860
        %v2862 = vadd.f32 %v2861, 0.0036580483
        %v2863 = vmul.f32 %v2858, %v2862
        %v2864 = vadd.f32 %v2863, 0.05243302
        %v2865 = vmul.f32 %v2858, %v2864
        %v2866 = vadd.f32 %v2865, 0.18741608
        %v2867 = vmul.f32 %v2858, %v2866
        %v2868 = vadd.f32 %v2867, 1.1283791
        %v2869 = vmul.f32 %v2490, %v2868
        %v2870 = vmul.f32 %v2858, 3.8918573e-05
        %v2871 = vadd.f32 %v2870, 0.001143296
        %v2872 = vmul.f32 %v2858, %v2871
        %v2873 = vadd.f32 %v2872, 0.014752088
        %v2874 = vmul.f32 %v2858, %v2873
        %v2875 = vadd.f32 %v2874, 0.112945676
        %v2876 = vmul.f32 %v2858, %v2875
        %v2877 = vadd.f32 %v2876, 0.4994258
        %v2878 = vmul.f32 %v2858, %v2877
        %v2879 = vadd.f32 %v2878, 1.0
        %v2880 = vrcp.pop %v2879
        %v2881 = vmul.f32 %v2879, %v2880
        %v2882 = vsub.f32 1.0, %v2881
        %v2883 = vmul.f32 %v2880, %v2882
        %v2884 = vadd.f32 %v2880, %v2883
        %vm2885 = vweird.f32 %v2879
        %vm2886 = vweird.f32 %v2880
        %vm2887 = vmor %vm2885, %vm2886
        %v2888 = vsel %vm2887, %v2880, %v2884
        %v2889 = vand.u32 2147483647, %v2879
        %vm2890 = vcmp.eq.f32.partialorder %v2889, 8.507059e+37
        %v2891 = vand.u32 %v2879, 2147483648
        %v2892 = vor.u32 1.1754944e-38, %v2891
        %v2893 = vsel %vm2890, %v2892, %v2888
        %v2894 = vmul.f32 %v2869, %v2893
        %v2895 = vmin.f32 %v2894, 1.0
        %v2896 = vmax.f32 %v2895, -1.0
        %v2897 = vmul.f32 %v2491, %v2491
        %v2898 = vmin.f32 16.0, %v2897
        %v2899 = vmul.f32 %v2898, 2.1237322e-06
        %v2900 = vadd.f32 %v2899, 0.00028619796
        %v2901 = vmul.f32 %v2898, %v2900
        %v2902 = vadd.f32 %v2901, 0.0036580483
        %v2903 = vmul.f32 %v2898, %v2902
        %v2904 = vadd.f32 %v2903, 0.05243302
        %v2905 = vmul.f32 %v2898, %v2904
        %v2906 = vadd.f32 %v2905, 0.18741608
        %v2907 = vmul.f32 %v2898, %v2906
        %v2908 = vadd.f32 %v2907, 1.1283791
        %v2909 = vmul.f32 %v2491, %v2908
        %v2910 = vmul.f32 %v2898, 3.8918573e-05
        %v2911 = vadd.f32 %v2910, 0.001143296
        %v2912 = vmul.f32 %v2898, %v2911
        %v2913 = vadd.f32 %v2912, 0.014752088
        %v2914 = vmul.f32 %v2898, %v2913
        %v2915 = vadd.f32 %v2914, 0.112945676
        %v2916 = vmul.f32 %v2898, %v2915
        %v2917 = vadd.f32 %v2916, 0.4994258
        %v2918 = vmul.f32 %v2898, %v2917
        %v2919 = vadd.f32 %v2918, 1.0
        %v2920 = vrcp.pop %v2919
        %v2921 = vmul.f32 %v2919, %v2920
        %v2922 = vsub.f32 1.0, %v2921
        %v2923 = vmul.f32 %v2920, %v2922
        %v2924 = vadd.f32 %v2920, %v2923
        %vm2925 = vweird.f32 %v2919
        %vm2926 = vweird.f32 %v2920
        %vm2927 = vmor %vm2925, %vm2926
        %v2928 = vsel %vm2927, %v2920, %v2924
        %v2929 = vand.u32 2147483647, %v2919
        %vm2930 = vcmp.eq.f32.partialorder %v2929, 8.507059e+37
        %v2931 = vand.u32 %v2919, 2147483648
        %v2932 = vor.u32 1.1754944e-38, %v2931
        %v2933 = vsel %vm2930, %v2932, %v2928
        %v2934 = vmul.f32 %v2909, %v2933
        %v2935 = vmin.f32 %v2934, 1.0
        %v2936 = vmax.f32 %v2935, -1.0
        %v2937 = vmul.f32 %v2492, %v2492
        %v2938 = vmin.f32 16.0, %v2937
        %v2939 = vmul.f32 %v2938, 2.1237322e-06
        %v2940 = vadd.f32 %v2939, 0.00028619796
        %v2941 = vmul.f32 %v2938, %v2940
        %v2942 = vadd.f32 %v2941, 0.0036580483
        %v2943 = vmul.f32 %v2938, %v2942
        %v2944 = vadd.f32 %v2943, 0.05243302
        %v2945 = vmul.f32 %v2938, %v2944
        %v2946 = vadd.f32 %v2945, 0.18741608
        %v2947 = vmul.f32 %v2938, %v2946
        %v2948 = vadd.f32 %v2947, 1.1283791
        %v2949 = vmul.f32 %v2492, %v2948
        %v2950 = vmul.f32 %v2938, 3.8918573e-05
        %v2951 = vadd.f32 %v2950, 0.001143296
        %v2952 = vmul.f32 %v2938, %v2951
        %v2953 = vadd.f32 %v2952, 0.014752088
        %v2954 = vmul.f32 %v2938, %v2953
        %v2955 = vadd.f32 %v2954, 0.112945676
        %v2956 = vmul.f32 %v2938, %v2955
        %v2957 = vadd.f32 %v2956, 0.4994258
        %v2958 = vmul.f32 %v2938, %v2957
        %v2959 = vadd.f32 %v2958, 1.0
        %v2960 = vrcp.pop %v2959
        %v2961 = vmul.f32 %v2959, %v2960
        %v2962 = vsub.f32 1.0, %v2961
        %v2963 = vmul.f32 %v2960, %v2962
        %v2964 = vadd.f32 %v2960, %v2963
        %vm2965 = vweird.f32 %v2959
        %vm2966 = vweird.f32 %v2960
        %vm2967 = vmor %vm2965, %vm2966
        %v2968 = vsel %vm2967, %v2960, %v2964
        %v2969 = vand.u32 2147483647, %v2959
        %vm2970 = vcmp.eq.f32.partialorder %v2969, 8.507059e+37
        %v2971 = vand.u32 %v2959, 2147483648
        %v2972 = vor.u32 1.1754944e-38, %v2971
        %v2973 = vsel %vm2970, %v2972, %v2968
        %v2974 = vmul.f32 %v2949, %v2973
        %v2975 = vmin.f32 %v2974, 1.0
        %v2976 = vmax.f32 %v2975, -1.0
        %v2977 = vmul.f32 %v2493, %v2493
        %v2978 = vmin.f32 16.0, %v2977
        %v2979 = vmul.f32 %v2978, 2.1237322e-06
        %v2980 = vadd.f32 %v2979, 0.00028619796
        %v2981 = vmul.f32 %v2978, %v2980
        %v2982 = vadd.f32 %v2981, 0.0036580483
        %v2983 = vmul.f32 %v2978, %v2982
        %v2984 = vadd.f32 %v2983, 0.05243302
        %v2985 = vmul.f32 %v2978, %v2984
        %v2986 = vadd.f32 %v2985, 0.18741608
        %v2987 = vmul.f32 %v2978, %v2986
        %v2988 = vadd.f32 %v2987, 1.1283791
        %v2989 = vmul.f32 %v2493, %v2988
        %v2990 = vmul.f32 %v2978, 3.8918573e-05
        %v2991 = vadd.f32 %v2990, 0.001143296
        %v2992 = vmul.f32 %v2978, %v2991
        %v2993 = vadd.f32 %v2992, 0.014752088
        %v2994 = vmul.f32 %v2978, %v2993
        %v2995 = vadd.f32 %v2994, 0.112945676
        %v2996 = vmul.f32 %v2978, %v2995
        %v2997 = vadd.f32 %v2996, 0.4994258
        %v2998 = vmul.f32 %v2978, %v2997
        %v2999 = vadd.f32 %v2998, 1.0
        %v3000 = vrcp.pop %v2999
        %v3001 = vmul.f32 %v2999, %v3000
        %v3002 = vsub.f32 1.0, %v3001
        %v3003 = vmul.f32 %v3000, %v3002
        %v3004 = vadd.f32 %v3000, %v3003
        %vm3005 = vweird.f32 %v2999
        %vm3006 = vweird.f32 %v3000
        %vm3007 = vmor %vm3005, %vm3006
        %v3008 = vsel %vm3007, %v3000, %v3004
        %v3009 = vand.u32 2147483647, %v2999
        %vm3010 = vcmp.eq.f32.partialorder %v3009, 8.507059e+37
        %v3011 = vand.u32 %v2999, 2147483648
        %v3012 = vor.u32 1.1754944e-38, %v3011
        %v3013 = vsel %vm3010, %v3012, %v3008
        %v3014 = vmul.f32 %v2989, %v3013
        %v3015 = vmin.f32 %v3014, 1.0
        %v3016 = vmax.f32 %v3015, -1.0
        %v3017 = vmul.f32 %v2494, %v2494
        %v3018 = vmin.f32 16.0, %v3017
        %v3019 = vmul.f32 %v3018, 2.1237322e-06
        %v3020 = vadd.f32 %v3019, 0.00028619796
        %v3021 = vmul.f32 %v3018, %v3020
        %v3022 = vadd.f32 %v3021, 0.0036580483
        %v3023 = vmul.f32 %v3018, %v3022
        %v3024 = vadd.f32 %v3023, 0.05243302
        %v3025 = vmul.f32 %v3018, %v3024
        %v3026 = vadd.f32 %v3025, 0.18741608
        %v3027 = vmul.f32 %v3018, %v3026
        %v3028 = vadd.f32 %v3027, 1.1283791
        %v3029 = vmul.f32 %v2494, %v3028
        %v3030 = vmul.f32 %v3018, 3.8918573e-05
        %v3031 = vadd.f32 %v3030, 0.001143296
        %v3032 = vmul.f32 %v3018, %v3031
        %v3033 = vadd.f32 %v3032, 0.014752088
        %v3034 = vmul.f32 %v3018, %v3033
        %v3035 = vadd.f32 %v3034, 0.112945676
        %v3036 = vmul.f32 %v3018, %v3035
        %v3037 = vadd.f32 %v3036, 0.4994258
        %v3038 = vmul.f32 %v3018, %v3037
        %v3039 = vadd.f32 %v3038, 1.0
        %v3040 = vrcp.pop %v3039
        %v3041 = vmul.f32 %v3039, %v3040
        %v3042 = vsub.f32 1.0, %v3041
        %v3043 = vmul.f32 %v3040, %v3042
        %v3044 = vadd.f32 %v3040, %v3043
        %vm3045 = vweird.f32 %v3039
        %vm3046 = vweird.f32 %v3040
        %vm3047 = vmor %vm3045, %vm3046
        %v3048 = vsel %vm3047, %v3040, %v3044
        %v3049 = vand.u32 2147483647, %v3039
        %vm3050 = vcmp.eq.f32.partialorder %v3049, 8.507059e+37
        %v3051 = vand.u32 %v3039, 2147483648
        %v3052 = vor.u32 1.1754944e-38, %v3051
        %v3053 = vsel %vm3050, %v3052, %v3048
        %v3054 = vmul.f32 %v3029, %v3053
        %v3055 = vmin.f32 %v3054, 1.0
        %v3056 = vmax.f32 %v3055, -1.0
        %v3057 = vmul.f32 %v2495, %v2495
        %v3058 = vmin.f32 16.0, %v3057
        %v3059 = vmul.f32 %v3058, 2.1237322e-06
        %v3060 = vadd.f32 %v3059, 0.00028619796
        %v3061 = vmul.f32 %v3058, %v3060
        %v3062 = vadd.f32 %v3061, 0.0036580483
        %v3063 = vmul.f32 %v3058, %v3062
        %v3064 = vadd.f32 %v3063, 0.05243302
        %v3065 = vmul.f32 %v3058, %v3064
        %v3066 = vadd.f32 %v3065, 0.18741608
        %v3067 = vmul.f32 %v3058, %v3066
        %v3068 = vadd.f32 %v3067, 1.1283791
        %v3069 = vmul.f32 %v2495, %v3068
        %v3070 = vmul.f32 %v3058, 3.8918573e-05
        %v3071 = vadd.f32 %v3070, 0.001143296
        %v3072 = vmul.f32 %v3058, %v3071
        %v3073 = vadd.f32 %v3072, 0.014752088
        %v3074 = vmul.f32 %v3058, %v3073
        %v3075 = vadd.f32 %v3074, 0.112945676
        %v3076 = vmul.f32 %v3058, %v3075
        %v3077 = vadd.f32 %v3076, 0.4994258
        %v3078 = vmul.f32 %v3058, %v3077
        %v3079 = vadd.f32 %v3078, 1.0
        %v3080 = vrcp.pop %v3079
        %v3081 = vmul.f32 %v3079, %v3080
        %v3082 = vsub.f32 1.0, %v3081
        %v3083 = vmul.f32 %v3080, %v3082
        %v3084 = vadd.f32 %v3080, %v3083
        %vm3085 = vweird.f32 %v3079
        %vm3086 = vweird.f32 %v3080
        %vm3087 = vmor %vm3085, %vm3086
        %v3088 = vsel %vm3087, %v3080, %v3084
        %v3089 = vand.u32 2147483647, %v3079
        %vm3090 = vcmp.eq.f32.partialorder %v3089, 8.507059e+37
        %v3091 = vand.u32 %v3079, 2147483648
        %v3092 = vor.u32 1.1754944e-38, %v3091
        %v3093 = vsel %vm3090, %v3092, %v3088
        %v3094 = vmul.f32 %v3069, %v3093
        %v3095 = vmin.f32 %v3094, 1.0
        %v3096 = vmax.f32 %v3095, -1.0
        %v3097 = vmul.f32 %v2496, %v2496
        %v3098 = vmin.f32 16.0, %v3097
        %v3099 = vmul.f32 %v3098, 2.1237322e-06
        %v3100 = vadd.f32 %v3099, 0.00028619796
        %v3101 = vmul.f32 %v3098, %v3100
        %v3102 = vadd.f32 %v3101, 0.0036580483
        %v3103 = vmul.f32 %v3098, %v3102
        %v3104 = vadd.f32 %v3103, 0.05243302
        %v3105 = vmul.f32 %v3098, %v3104
        %v3106 = vadd.f32 %v3105, 0.18741608
        %v3107 = vmul.f32 %v3098, %v3106
        %v3108 = vadd.f32 %v3107, 1.1283791
        %v3109 = vmul.f32 %v2496, %v3108
        %v3110 = vmul.f32 %v3098, 3.8918573e-05
        %v3111 = vadd.f32 %v3110, 0.001143296
        %v3112 = vmul.f32 %v3098, %v3111
        %v3113 = vadd.f32 %v3112, 0.014752088
        %v3114 = vmul.f32 %v3098, %v3113
        %v3115 = vadd.f32 %v3114, 0.112945676
        %v3116 = vmul.f32 %v3098, %v3115
        %v3117 = vadd.f32 %v3116, 0.4994258
        %v3118 = vmul.f32 %v3098, %v3117
        %v3119 = vadd.f32 %v3118, 1.0
        %v3120 = vrcp.pop %v3119
        %v3121 = vmul.f32 %v3119, %v3120
        %v3122 = vsub.f32 1.0, %v3121
        %v3123 = vmul.f32 %v3120, %v3122
        %v3124 = vadd.f32 %v3120, %v3123
        %vm3125 = vweird.f32 %v3119
        %vm3126 = vweird.f32 %v3120
        %vm3127 = vmor %vm3125, %vm3126
        %v3128 = vsel %vm3127, %v3120, %v3124
        %v3129 = vand.u32 2147483647, %v3119
        %vm3130 = vcmp.eq.f32.partialorder %v3129, 8.507059e+37
        %v3131 = vand.u32 %v3119, 2147483648
        %v3132 = vor.u32 1.1754944e-38, %v3131
        %v3133 = vsel %vm3130, %v3132, %v3128
        %v3134 = vmul.f32 %v3109, %v3133
        %v3135 = vmin.f32 %v3134, 1.0
        %v3136 = vmax.f32 %v3135, -1.0
        %v3137 = vadd.f32 %v2536, 1.0
        %v3138 = vadd.f32 %v2576, 1.0
        %v3139 = vadd.f32 %v2616, 1.0
        %v3140 = vadd.f32 %v2656, 1.0
        %v3141 = vadd.f32 %v2696, 1.0
        %v3142 = vadd.f32 %v2736, 1.0
        %v3143 = vadd.f32 %v2776, 1.0
        %v3144 = vadd.f32 %v2816, 1.0
        %v3145 = vadd.f32 %v2856, 1.0
        %v3146 = vadd.f32 %v2896, 1.0
        %v3147 = vadd.f32 %v2936, 1.0
        %v3148 = vadd.f32 %v2976, 1.0
        %v3149 = vadd.f32 %v3016, 1.0
        %v3150 = vadd.f32 %v3056, 1.0
        %v3151 = vadd.f32 %v3096, 1.0
        %v3152 = vadd.f32 %v3136, 1.0
        %v3153 = vmul.f32 %v2465, %v3137
        %v3154 = vmul.f32 %v2466, %v3138
        %v3155 = vmul.f32 %v2467, %v3139
        %v3156 = vmul.f32 %v2468, %v3140
        %v3157 = vmul.f32 %v2469, %v3141
        %v3158 = vmul.f32 %v2470, %v3142
        %v3159 = vmul.f32 %v2471, %v3143
        %v3160 = vmul.f32 %v2472, %v3144
        %v3161 = vmul.f32 %v2473, %v3145
        %v3162 = vmul.f32 %v2474, %v3146
        %v3163 = vmul.f32 %v2475, %v3147
        %v3164 = vmul.f32 %v2476, %v3148
        %v3165 = vmul.f32 %v2477, %v3149
        %v3166 = vmul.f32 %v2478, %v3150
        %v3167 = vmul.f32 %v2479, %v3151
        %v3168 = vmul.f32 %v2480, %v3152
        %v3169 = vpack.c.bf16 %v3157, %v3153
        %v3170 = vpack.c.bf16 %v3158, %v3154
        %v3171 = vpack.c.bf16 %v3159, %v3155
        %v3172 = vpack.c.bf16 %v3160, %v3156
        %v3173 = vpack.c.bf16 %v3165, %v3161
        %v3174 = vpack.c.bf16 %v3166, %v3162
        %v3175 = vpack.c.bf16 %v3167, %v3163
        %v3176 = vpack.c.bf16 %v3168, %v3164
        %v3177 = vld [vmem:[%s755] sm:$0xf]
        %v3178 = vld [vmem:[%s755 + $0x4] sm:$0xf]
        %v3179 = vld [vmem:[%s755 + $0x8] sm:$0xf]
        %v3180 = vld [vmem:[%s755 + $0xc] sm:$0xf]
        %v3181 = vld [vmem:[%s755 + $0x10] sm:$0xf]
        %v3182 = vld [vmem:[%s755 + $0x14] sm:$0xf]
        %v3183 = vld [vmem:[%s755 + $0x18] sm:$0xf]
        %v3184 = vld [vmem:[%s755 + $0x1c] sm:$0xf]
        %v3185 = vld [vmem:[%s755 + $0x20] sm:$0xf]
        %v3186 = vld [vmem:[%s755 + $0x24] sm:$0xf]
        %v3187 = vld [vmem:[%s755 + $0x28] sm:$0xf]
        %v3188 = vld [vmem:[%s755 + $0x2c] sm:$0xf]
        %v3189 = vld [vmem:[%s755 + $0x30] sm:$0xf]
        %v3190 = vld [vmem:[%s755 + $0x34] sm:$0xf]
        %v3191 = vld [vmem:[%s755 + $0x38] sm:$0xf]
        %v3192 = vld [vmem:[%s755 + $0x3c] sm:$0xf]
        %v3193 = vld [vmem:[%s755 + $0x40] sm:$0xf]
        %v3194 = vld [vmem:[%s755 + $0x44] sm:$0xf]
        %v3195 = vld [vmem:[%s755 + $0x48] sm:$0xf]
        %v3196 = vld [vmem:[%s755 + $0x4c] sm:$0xf]
        %v3197 = vld [vmem:[%s755 + $0x50] sm:$0xf]
        %v3198 = vld [vmem:[%s755 + $0x54] sm:$0xf]
        %v3199 = vld [vmem:[%s755 + $0x58] sm:$0xf]
        %v3200 = vld [vmem:[%s755 + $0x5c] sm:$0xf]
        %v3201 = vld [vmem:[%s755 + $0x60] sm:$0xf]
        %v3202 = vld [vmem:[%s755 + $0x64] sm:$0xf]
        %v3203 = vld [vmem:[%s755 + $0x68] sm:$0xf]
        %v3204 = vld [vmem:[%s755 + $0x6c] sm:$0xf]
        %v3205 = vld [vmem:[%s755 + $0x70] sm:$0xf]
        %v3206 = vld [vmem:[%s755 + $0x74] sm:$0xf]
        %v3207 = vld [vmem:[%s755 + $0x78] sm:$0xf]
        %v3208 = vld [vmem:[%s755 + $0x7c] sm:$0xf]
        %v3209 = vld [vmem:[%s755 + $0x80] sm:$0xf]
        %v3210 = vld [vmem:[%s755 + $0x84] sm:$0xf]
        %v3211 = vld [vmem:[%s755 + $0x88] sm:$0xf]
        %v3212 = vld [vmem:[%s755 + $0x8c] sm:$0xf]
        %v3213 = vld [vmem:[%s755 + $0x90] sm:$0xf]
        %v3214 = vld [vmem:[%s755 + $0x94] sm:$0xf]
        %v3215 = vld [vmem:[%s755 + $0x98] sm:$0xf]
        %v3216 = vld [vmem:[%s755 + $0x9c] sm:$0xf]
        %v3217 = vld [vmem:[%s755 + $0xa0] sm:$0xf]
        %v3218 = vld [vmem:[%s755 + $0xa4] sm:$0xf]
        %v3219 = vld [vmem:[%s755 + $0xa8] sm:$0xf]
        %v3220 = vld [vmem:[%s755 + $0xac] sm:$0xf]
        %v3221 = vld [vmem:[%s755 + $0xb0] sm:$0xf]
        %v3222 = vld [vmem:[%s755 + $0xb4] sm:$0xf]
        %v3223 = vld [vmem:[%s755 + $0xb8] sm:$0xf]
        %v3224 = vld [vmem:[%s755 + $0xbc] sm:$0xf]
        %v3225 = vld [vmem:[%s755 + $0xc0] sm:$0xf]
        %v3226 = vld [vmem:[%s755 + $0xc4] sm:$0xf]
        %v3227 = vld [vmem:[%s755 + $0xc8] sm:$0xf]
        %v3228 = vld [vmem:[%s755 + $0xcc] sm:$0xf]
        %v3229 = vld [vmem:[%s755 + $0xd0] sm:$0xf]
        %v3230 = vld [vmem:[%s755 + $0xd4] sm:$0xf]
        %v3231 = vld [vmem:[%s755 + $0xd8] sm:$0xf]
        %v3232 = vld [vmem:[%s755 + $0xdc] sm:$0xf]
        %v3233 = vld [vmem:[%s755 + $0xe0] sm:$0xf]
        %v3234 = vld [vmem:[%s755 + $0xe4] sm:$0xf]
        %v3235 = vld [vmem:[%s755 + $0xe8] sm:$0xf]
        %v3236 = vld [vmem:[%s755 + $0xec] sm:$0xf]
        %v3237 = vld [vmem:[%s755 + $0xf0] sm:$0xf]
        %v3238 = vld [vmem:[%s755 + $0xf4] sm:$0xf]
        %v3239 = vld [vmem:[%s755 + $0xf8] sm:$0xf]
        %v3240 = vld [vmem:[%s755 + $0xfc] sm:$0xf]
        %v3241 = vld [vmem:[%s848] sm:$0x1]
        %v3243 = vperm.slane %v3241, 0
        %v3309 = vunpack.c.l.b16 %v3177
        %v3310 = vunpack.c.l.b16 %v3178
        %v3311 = vunpack.c.l.b16 %v3179
        %v3312 = vunpack.c.l.b16 %v3180
        %v3313 = vunpack.c.l.b16 %v3181
        %v3314 = vunpack.c.l.b16 %v3182
        %v3315 = vunpack.c.l.b16 %v3183
        %v3316 = vunpack.c.l.b16 %v3184
        %v3317 = vunpack.c.l.b16 %v3185
        %v3318 = vunpack.c.l.b16 %v3186
        %v3319 = vunpack.c.l.b16 %v3187
        %v3320 = vunpack.c.l.b16 %v3188
        %v3321 = vunpack.c.l.b16 %v3189
        %v3322 = vunpack.c.l.b16 %v3190
        %v3323 = vunpack.c.l.b16 %v3191
        %v3324 = vunpack.c.l.b16 %v3192
        %v3325 = vunpack.c.l.b16 %v3193
        %v3326 = vunpack.c.l.b16 %v3194
        %v3327 = vunpack.c.l.b16 %v3195
        %v3328 = vunpack.c.l.b16 %v3196
        %v3329 = vunpack.c.l.b16 %v3197
        %v3330 = vunpack.c.l.b16 %v3198
        %v3331 = vunpack.c.l.b16 %v3199
        %v3332 = vunpack.c.l.b16 %v3200
        %v3333 = vunpack.c.l.b16 %v3201
        %v3334 = vunpack.c.l.b16 %v3202
        %v3335 = vunpack.c.l.b16 %v3203
        %v3336 = vunpack.c.l.b16 %v3204
        %v3337 = vunpack.c.l.b16 %v3205
        %v3338 = vunpack.c.l.b16 %v3206
        %v3339 = vunpack.c.l.b16 %v3207
        %v3340 = vunpack.c.l.b16 %v3208
        %v3341 = vunpack.c.l.b16 %v3209
        %v3342 = vunpack.c.l.b16 %v3210
        %v3343 = vunpack.c.l.b16 %v3211
        %v3344 = vunpack.c.l.b16 %v3212
        %v3345 = vunpack.c.l.b16 %v3213
        %v3346 = vunpack.c.l.b16 %v3214
        %v3347 = vunpack.c.l.b16 %v3215
        %v3348 = vunpack.c.l.b16 %v3216
        %v3349 = vunpack.c.l.b16 %v3217
        %v3350 = vunpack.c.l.b16 %v3218
        %v3351 = vunpack.c.l.b16 %v3219
        %v3352 = vunpack.c.l.b16 %v3220
        %v3353 = vunpack.c.l.b16 %v3221
        %v3354 = vunpack.c.l.b16 %v3222
        %v3355 = vunpack.c.l.b16 %v3223
        %v3356 = vunpack.c.l.b16 %v3224
        %v3357 = vunpack.c.l.b16 %v3225
        %v3358 = vunpack.c.l.b16 %v3226
        %v3359 = vunpack.c.l.b16 %v3227
        %v3360 = vunpack.c.l.b16 %v3228
        %v3361 = vunpack.c.l.b16 %v3229
        %v3362 = vunpack.c.l.b16 %v3230
        %v3363 = vunpack.c.l.b16 %v3231
        %v3364 = vunpack.c.l.b16 %v3232
        %v3365 = vunpack.c.l.b16 %v3233
        %v3366 = vunpack.c.l.b16 %v3234
        %v3367 = vunpack.c.l.b16 %v3235
        %v3368 = vunpack.c.l.b16 %v3236
        %v3369 = vunpack.c.l.b16 %v3237
        %v3370 = vunpack.c.l.b16 %v3238
        %v3371 = vunpack.c.l.b16 %v3239
        %v3372 = vunpack.c.l.b16 %v3240
        %v3373 = vpack.c.b16 %v3310, %v3309
        %v3374 = vpack.c.b16 %v3312, %v3311
        %v3375 = vpack.c.b16 %v3314, %v3313
        %v3376 = vpack.c.b16 %v3316, %v3315
        %v3377 = vpack.c.b16 %v3318, %v3317
        %v3378 = vpack.c.b16 %v3320, %v3319
        %v3379 = vpack.c.b16 %v3322, %v3321
        %v3380 = vpack.c.b16 %v3324, %v3323
        %v3381 = vpack.c.b16 %v3326, %v3325
        %v3382 = vpack.c.b16 %v3328, %v3327
        %v3383 = vpack.c.b16 %v3330, %v3329
        %v3384 = vpack.c.b16 %v3332, %v3331
        %v3385 = vpack.c.b16 %v3334, %v3333
        %v3386 = vpack.c.b16 %v3336, %v3335
        %v3387 = vpack.c.b16 %v3338, %v3337
        %v3388 = vpack.c.b16 %v3340, %v3339
        %v3389 = vpack.c.b16 %v3342, %v3341
        %v3390 = vpack.c.b16 %v3344, %v3343
        %v3391 = vpack.c.b16 %v3346, %v3345
        %v3392 = vpack.c.b16 %v3348, %v3347
        %v3393 = vpack.c.b16 %v3350, %v3349
        %v3394 = vpack.c.b16 %v3352, %v3351
        %v3395 = vpack.c.b16 %v3354, %v3353
        %v3396 = vpack.c.b16 %v3356, %v3355
        %v3397 = vpack.c.b16 %v3358, %v3357
        %v3398 = vpack.c.b16 %v3360, %v3359
        %v3399 = vpack.c.b16 %v3362, %v3361
        %v3400 = vpack.c.b16 %v3364, %v3363
        %v3401 = vpack.c.b16 %v3366, %v3365
        %v3402 = vpack.c.b16 %v3368, %v3367
        %v3403 = vpack.c.b16 %v3370, %v3369
        %v3404 = vpack.c.b16 %v3372, %v3371
        %3437 = vmatpush.bf16.msra.mxu0 %v3380
        %3438 = vmatpush.bf16.msra.mxu0 %v3379
        %3439 = vmatpush.bf16.msra.mxu0 %v3378
        %3440 = vmatpush.bf16.msra.mxu0 %v3377
        %3441 = vmatpush.bf16.msra.mxu0 %v3376
        %3442 = vmatpush.bf16.msra.mxu0 %v3375
        %3443 = vmatpush.bf16.msra.mxu0 %v3374
        %3444 = vmatpush.bf16.msra.mxu0 %v3373
        %3445 = vmatmul.bf16.gmra.mxu0 %v3169
        %v3446 = vpop.f32.mrf.mxu0
        %v3447 = vadd.f32 %v3243, %v3446
        %v3448 = vpop.f32.mrf.mxu0
        %v3449 = vadd.f32 %v3243, %v3448
        %3450 = vmatmul.bf16.gmra.mxu0 %v3173
        %v3451 = vpop.f32.mrf.mxu0
        %v3452 = vadd.f32 %v3243, %v3451
        %v3453 = vpop.f32.mrf.mxu0
        %v3454 = vadd.f32 %v3243, %v3453
        %3455 = vdwg.mxu0
        %3456 = vmatpush.bf16.msra.mxu0 %v3388
        %3457 = vmatpush.bf16.msra.mxu0 %v3387
        %3458 = vmatpush.bf16.msra.mxu0 %v3386
        %3459 = vmatpush.bf16.msra.mxu0 %v3385
        %3460 = vmatpush.bf16.msra.mxu0 %v3384
        %3461 = vmatpush.bf16.msra.mxu0 %v3383
        %3462 = vmatpush.bf16.msra.mxu0 %v3382
        %3463 = vmatpush.bf16.msra.mxu0 %v3381
        %3464 = vmatmul.bf16.gmra.mxu0 %v3170
        %v3465 = vpop.f32.mrf.mxu0
        %v3466 = vadd.f32 %v3447, %v3465
        %v3467 = vpop.f32.mrf.mxu0
        %v3468 = vadd.f32 %v3449, %v3467
        %3469 = vmatmul.bf16.gmra.mxu0 %v3174
        %v3470 = vpop.f32.mrf.mxu0
        %v3471 = vadd.f32 %v3452, %v3470
        %v3472 = vpop.f32.mrf.mxu0
        %v3473 = vadd.f32 %v3454, %v3472
        %3474 = vdwg.mxu0
        %3475 = vmatpush.bf16.msra.mxu0 %v3396
        %3476 = vmatpush.bf16.msra.mxu0 %v3395
        %3477 = vmatpush.bf16.msra.mxu0 %v3394
        %3478 = vmatpush.bf16.msra.mxu0 %v3393
        %3479 = vmatpush.bf16.msra.mxu0 %v3392
        %3480 = vmatpush.bf16.msra.mxu0 %v3391
        %3481 = vmatpush.bf16.msra.mxu0 %v3390
        %3482 = vmatpush.bf16.msra.mxu0 %v3389
        %3483 = vmatmul.bf16.gmra.mxu0 %v3171
        %v3484 = vpop.f32.mrf.mxu0
        %v3485 = vadd.f32 %v3466, %v3484
        %v3486 = vpop.f32.mrf.mxu0
        %v3487 = vadd.f32 %v3468, %v3486
        %3488 = vmatmul.bf16.gmra.mxu0 %v3175
        %v3489 = vpop.f32.mrf.mxu0
        %v3490 = vadd.f32 %v3471, %v3489
        %v3491 = vpop.f32.mrf.mxu0
        %v3492 = vadd.f32 %v3473, %v3491
        %3493 = vdwg.mxu0
        %3494 = vmatpush.bf16.msra.mxu0 %v3404
        %3495 = vmatpush.bf16.msra.mxu0 %v3403
        %3496 = vmatpush.bf16.msra.mxu0 %v3402
        %3497 = vmatpush.bf16.msra.mxu0 %v3401
        %3498 = vmatpush.bf16.msra.mxu0 %v3400
        %3499 = vmatpush.bf16.msra.mxu0 %v3399
        %3500 = vmatpush.bf16.msra.mxu0 %v3398
        %3501 = vmatpush.bf16.msra.mxu0 %v3397
        %3502 = vmatmul.bf16.gmra.mxu0 %v3172
        %v3503 = vpop.f32.mrf.mxu0
        %v3504 = vadd.f32 %v3485, %v3503
        %v3505 = vpop.f32.mrf.mxu0
        %v3506 = vadd.f32 %v3487, %v3505
        %3507 = vmatmul.bf16.gmra.mxu0 %v3176
        %v3508 = vpop.f32.mrf.mxu0
        %v3509 = vadd.f32 %v3490, %v3508
        %v3510 = vpop.f32.mrf.mxu0
        %v3511 = vadd.f32 %v3492, %v3510
        %3512 = vdwg.mxu0
        %v3513 = vadd.f32 %v2085, %v3504
        %v3514 = vadd.f32 %v2086, %v3506
        %v3515 = vadd.f32 %v2087, %v3509
        %v3516 = vadd.f32 %v2088, %v3511
        %3517 = vst [vmem:[#allocation2] sm:$0xff] %v3513
        %3518 = vst [vmem:[#allocation2 + $0x8] sm:$0xff] %v3514
        %3519 = vst [vmem:[#allocation2 + $0x10] sm:$0xff] %v3515
        %3520 = vst [vmem:[#allocation2 + $0x18] sm:$0xff] %v3516
        %p3521 = scmp.eq.s32.totalorder %s46, 1
        // Predicated region
        $region121: #{tpu_custom_call.1} parent=71 // pred_check
          %p3522 = pneg %p3521
        $region122: #{tpu_custom_call.1} parent=71 // pred_check_branch
          %3524 = sbr.rel (%p3522) target = $region124
        $region123: #{tpu_custom_call.1} parent=71 // pred_region
          %3525 = vst [vmem:[#allocation21] sm:$0xff] %v3513
          %3526 = vst [vmem:[#allocation21 + $0x8] sm:$0xff] %v3514
          %3527 = vst [vmem:[#allocation21 + $0x10] sm:$0xff] %v3515
          %3528 = vst [vmem:[#allocation21 + $0x18] sm:$0xff] %v3516
        $region124: #{tpu_custom_call.1} parent=71 // pred_fallthru
          _
        // Predicated region
        $region125: #{tpu_custom_call.1} parent=71 // pred_check
          %p3529 = pneg %p409
        $region126: #{tpu_custom_call.1} parent=71 // pred_check_branch
          %3531 = sbr.rel (%p3529) target = $region128
        $region127: #{tpu_custom_call.1} parent=71 // pred_region
          %s3532 = smul.u32 2, %s45
          %3534 = vsyncadd [#allocation5], 0
          %s3535 = smul.addr %s3532, 2
          %s3536 = smul.addr %s3535, 8
          %s3537 = scalar_lea.hbm %s13, %s3536
          %s3538 = sshll.u32 [#allocation21], 4
          %s3539 = int_to_ptr.vmem [resolvable:$true] %s3538
          %s3540 = sshll.u32 %s3537, 4
          %s3541 = int_to_ptr.hbm [resolvable:$true] %s3540
          %3546 = dma.vmem_to_hbm [thread:$0]  %s3539, 512, %s3541, [#allocation5], 128, 128, 8
        $region128: #{tpu_custom_call.1} parent=71 // pred_fallthru
          _
        // Predicated region
        $region129: #{tpu_custom_call.1} parent=71 // pred_check
          %p3547 = pneg %p409
        $region130: #{tpu_custom_call.1} parent=71 // pred_check_branch
          %3549 = sbr.rel (%p3547) target = $region132
        $region131: #{tpu_custom_call.1} parent=71 // pred_region
          %3551 = dma.done [#allocation5], 512
        $region132: #{tpu_custom_call.1} parent=71 // pred_fallthru
          _
      $region72: #{tpu_custom_call.1} parent=5 // pred_fallthru
        _
      %p3552 = scmp.le.s32.totalorder 2, %s36
      // Predicated region
      $region133: #{tpu_custom_call.1} parent=5 // pred_check
        %p3553 = pneg %p3552
      $region134: #{tpu_custom_call.1} parent=5 // pred_check_branch
        %3555 = sbr.rel (%p3553) target = $region136
      $region135: #{tpu_custom_call.1} parent=5 // pred_region
        %s3556 = ssub.s32 %s36, 2
      $region136: #{tpu_custom_call.1} parent=5 // pred_fallthru
        _
    $region6: #{tpu_custom_call.1} parent=1 // loop_footer
      %s40 = sadd.s32 1, %s36
    $region7: #{tpu_custom_call.1} parent=1 // loop_footer_branch
      %35 = sbr.rel target = $region3
    $region8: #{tpu_custom_call.1} parent=1 // loop_exit
      _
    %3557 = vsyncpa [#allocation4], 1
    %s3558 = scalar_lea.sflag [#allocation4], 1
    %3559 = vsyncpa %s3558, 1
    %3560 = vsyncpa [#allocation7], 1
    %s3561 = scalar_lea.sflag [#allocation7], 1
    %3562 = vsyncpa %s3561, 1
    %3563 = vsyncpa [#allocation10], 1
    %s3564 = scalar_lea.sflag [#allocation10], 1
    %3565 = vsyncpa %s3564, 1
    %3566 = vsyncpa [#allocation13], 1
    %s3567 = scalar_lea.sflag [#allocation13], 1
    %3568 = vsyncpa %s3567, 1
    %3569 = vsyncpa [#allocation16], 1
    %s3570 = scalar_lea.sflag [#allocation16], 1
    %3571 = vsyncpa %s3570, 1
    %3572 = vsyncpa [#allocation19], 1
    %s3573 = scalar_lea.sflag [#allocation19], 1
    %3574 = vsyncpa %s3573, 1
    %3575 = vsyncpa [#allocation5], 1
    %s3576 = scalar_lea.sflag [#allocation5], 1
    %3577 = vsyncpa %s3576, 1

</llo_original>
